<compile_context>
chip_gen: v6e
topology: v6e:2x2x1
jax: 0.10.0
libtpu: 0.0.40
codegen_flags: <defaults>
</compile_context>

<pallas_src>
import jax
import jax.numpy as jnp
import numpy as np
from jax.experimental import pallas as pl
from jax.experimental.pallas import tpu as pltpu

KSIZE = 9                       # nn.Conv1d kernel_size=9, padding=0, stride=1
_HIGHEST = jax.lax.Precision.HIGHEST


def _pick_bt(batch, cap=8):
    """Largest divisor of `batch` that is <= cap (samples per grid step)."""
    for bt in range(min(batch, cap), 0, -1):
        if batch % bt == 0:
            return bt
    return 1


def _make_kernel(Bt, S, L3, hid):
    R_act = Bt * S + (KSIZE - 1)   # padded activation rows (stride S + tap headroom)
    R_conv = Bt * S                # conv2 / conv3 output rows (stride S)

    def kernel(x1_ref, sel1_ref, sel2_ref, sel3_ref,
               w1_ref, b1_ref, w2_ref, b2_ref, w3_ref, b3_ref,
               wl_ref, bl_ref, o_ref):
        # ---- stage 1: conv1 (wrapper-side im2col, one deep matmul) -> pool1 -> ReLU
        c1 = jnp.dot(x1_ref[...], w1_ref[...],
                     preferred_element_type=jnp.float32) + b1_ref[...]
        # MaxPool1d(2) via exact 0/1 selection matmuls (even rows / odd rows).
        pe = jnp.dot(sel1_ref[0], c1, preferred_element_type=jnp.float32,
                     precision=_HIGHEST)
        po = jnp.dot(sel1_ref[1], c1, preferred_element_type=jnp.float32,
                     precision=_HIGHEST)
        a1 = jnp.maximum(jnp.maximum(pe, po), 0.0)           # (R_act, hid)

        def conv_taps(a, w_ref, b_ref):
            # valid 1-D conv over the stride-S flat layout: 9 shifted tap matmuls,
            # each at the full batched M = R_conv rows.
            acc = jnp.zeros((R_conv, hid), jnp.float32)
            for k in range(KSIZE):                            # static unrolled loop
                acc += jnp.dot(a[k:k + R_conv, :], w_ref[k],
                               preferred_element_type=jnp.float32)
            return acc + b_ref[...]

        # ---- stage 2: conv2 -> pool2 -> ReLU
        c2 = conv_taps(a1, w2_ref, b2_ref)                    # (R_conv, hid)
        pe = jnp.dot(sel2_ref[0], c2, preferred_element_type=jnp.float32,
                     precision=_HIGHEST)
        po = jnp.dot(sel2_ref[1], c2, preferred_element_type=jnp.float32,
                     precision=_HIGHEST)
        a2 = jnp.maximum(jnp.maximum(pe, po), 0.0)            # (R_act, hid)

        # ---- stage 3: conv3 -> AdaptiveMaxPool1d(1) -> ReLU
        c3 = conv_taps(a2, w3_ref, b3_ref)                    # (R_conv, hid)
        h = jnp.dot(sel3_ref[0], c3, preferred_element_type=jnp.float32,
                    precision=_HIGHEST)                       # (Bt, hid)
        for j in range(1, L3):
            h = jnp.maximum(
                h, jnp.dot(sel3_ref[j], c3, preferred_element_type=jnp.float32,
                           precision=_HIGHEST))
        h = jnp.maximum(h, 0.0)

        # ---- linear + sigmoid (whole Bt block written at once)
        y = jnp.dot(h, wl_ref[...],
                    preferred_element_type=jnp.float32) + bl_ref[...]
        # exact sigmoid; pl.reciprocal(..., approx=True) would trim the tail at the
        # cost of ~2^-12 relative error.
        o_ref[...] = pl.reciprocal(1.0 + jnp.exp(-y), approx=False)

    return kernel


def _pool_selectors(bt, n_out, n_in, out_stride, in_stride, lp):
    """(2, n_out, n_in) 0/1 matrices selecting even/odd rows of each pool pair."""
    se = np.zeros((2, n_out, n_in), np.float32)
    for b in range(bt):
        for j in range(lp):
            se[0, b * out_stride + j, b * in_stride + 2 * j] = 1.0
            se[1, b * out_stride + j, b * in_stride + 2 * j + 1] = 1.0
    return se


def _final_selectors(bt, l3, n_in, in_stride):
    """(l3, bt, n_in) 0/1 matrices selecting row (b*in_stride + j) per sample b."""
    sf = np.zeros((l3, bt, n_in), np.float32)
    for j in range(l3):
        for b in range(bt):
            sf[j, b, b * in_stride + j] = 1.0
    return sf


def binary_model_forward(x_ncw, params):
    """x_ncw: (B, C_in, L) float32 in PyTorch NCW layout. Returns (B, out_ch)."""
    w1, b1, w2, b2, w3, b3, wl, bl = params
    B, C_in, L = x_ncw.shape
    hid = w1.shape[0]
    out_ch = wl.shape[0]

    # static shape bookkeeping (valid convs, floor-division pooling)
    L1 = L - (KSIZE - 1)
    Lp1 = L1 // 2
    L2 = Lp1 - (KSIZE - 1)
    Lp2 = L2 // 2
    L3 = Lp2 - (KSIZE - 1)
    assert L3 >= 1, "input length too short for the three valid convs"

    Bt = _pick_bt(B)                         # samples per grid step
    grid = (B // Bt,)
    S = max(8, ((Lp1 + 7) // 8) * 8)         # per-sample row stride, 8-aligned
    R_in = Bt * L1                           # stage-1 rows (dense, stride L1)
    R_conv = Bt * S                          # conv2/conv3 output rows (stride S)
    R_act = Bt * S + (KSIZE - 1)             # pooled activation rows (+ tap headroom)

    # ---- wrapper-side preprocessing (plain XLA, folds under jit) ----
    x_lc = jnp.transpose(x_ncw, (0, 2, 1))                               # (B, L, Cin)
    patches1 = jnp.concatenate(
        [x_lc[:, k:k + L1, :] for k in range(KSIZE)], axis=-1)           # (B, L1, K*Cin)
    patches1 = patches1.reshape(B * L1, KSIZE * C_in)                    # (B*L1, K*Cin)

    w1f = jnp.transpose(w1, (2, 1, 0)).reshape(KSIZE * C_in, hid)        # (K*Cin, hid)
    w2k = jnp.transpose(w2, (2, 1, 0))                                   # (K, hid, hid)
    w3k = jnp.transpose(w3, (2, 1, 0))                                   # (K, hid, hid)
    b1r = b1.reshape(1, hid)
    b2r = b2.reshape(1, hid)
    b3r = b3.reshape(1, hid)
    wlt = wl.T                                                           # (hid, out)
    blr = bl.reshape(1, out_ch)

    # constant 0/1 selection matrices (shape-only, baked in as constants)
    sel1 = jnp.asarray(_pool_selectors(Bt, R_act, R_in, S, L1, Lp1))
    sel2 = jnp.asarray(_pool_selectors(Bt, R_act, R_conv, S, S, Lp2))
    sel3 = jnp.asarray(_final_selectors(Bt, L3, R_conv, S))

    kernel = _make_kernel(Bt, S, L3, hid)

    out = pl.pallas_call(
        kernel,
        out_shape=jax.ShapeDtypeStruct((B, out_ch), jnp.float32),
        grid_spec=pltpu.PrefetchScalarGridSpec(
            num_scalar_prefetch=0,
            grid=grid,
            in_specs=[
                pl.BlockSpec((R_in, KSIZE * C_in), lambda b: (b, 0)),     # im2col'd x
                pl.BlockSpec((2, R_act, R_in), lambda b: (0, 0, 0)),      # pool1 sel
                pl.BlockSpec((2, R_act, R_conv), lambda b: (0, 0, 0)),    # pool2 sel
                pl.BlockSpec((L3, Bt, R_conv), lambda b: (0, 0, 0)),      # pool3 sel
                pl.BlockSpec((KSIZE * C_in, hid), lambda b: (0, 0)),      # w1 (im2col)
                pl.BlockSpec((1, hid), lambda b: (0, 0)),
                pl.BlockSpec((KSIZE, hid, hid), lambda b: (0, 0, 0)),     # w2 taps
                pl.BlockSpec((1, hid), lambda b: (0, 0)),
                pl.BlockSpec((KSIZE, hid, hid), lambda b: (0, 0, 0)),     # w3 taps
                pl.BlockSpec((1, hid), lambda b: (0, 0)),
                pl.BlockSpec((hid, out_ch), lambda b: (0, 0)),            # linear W^T
                pl.BlockSpec((1, out_ch), lambda b: (0, 0)),
            ],
            out_specs=pl.BlockSpec((Bt, out_ch), lambda b: (b, 0)),
        ),
        # ~0.3 MB live per step, so the default scoped VMEM limit is fine on
        # v5e/v6e/v7x; if Bt is ever sized to capacity remember v7x has 64 MiB VMEM
        # (32 MiB default scoped) and each input block is double-buffered.
        compiler_params=pltpu.CompilerParams(
            dimension_semantics=("parallel",)),
    )(patches1, sel1, sel2, sel3, w1f, b1r, w2k, b2r, w3k, b3r, wlt, blr)
    return out


def ref_forward(x, params):
    """Pure-JAX reference mirroring the PyTorch module (eval_mode=False)."""
    w1, b1, w2, b2, w3, b3, wl, bl = params

    def conv(x, w, b):
        y = jax.lax.conv_general_dilated(
            x, w, window_strides=(1,), padding="VALID",
            dimension_numbers=("NCH", "OIH", "NCH"))
        return y + b[None, :, None]

    def pool2(x):
        B, C, L = x.shape
        Lp = L // 2
        return jnp.max(x[..., :2 * Lp].reshape(B, C, Lp, 2), axis=-1)

    h = jax.nn.relu(pool2(conv(x, w1, b1)))
    h = jax.nn.relu(pool2(conv(h, w2, b2)))
    h = conv(h, w3, b3)
    h = jnp.max(h, axis=-1)          # AdaptiveMaxPool1d(1) + flatten
    h = jax.nn.relu(h)
    y = h @ wl.T + bl
    return jax.nn.sigmoid(y)


def init_params(key, in_channels, hid_channels, out_channels):
    ks = jax.random.split(key, 8)
    scale = 0.2
    w1 = scale * jax.random.normal(ks[0], (hid_channels, in_channels, KSIZE), jnp.float32)
    b1 = scale * jax.random.normal(ks[1], (hid_channels,), jnp.float32)
    w2 = scale * jax.random.normal(ks[2], (hid_channels, hid_channels, KSIZE), jnp.float32)
    b2 = scale * jax.random.normal(ks[3], (hid_channels,), jnp.float32)
    w3 = scale * jax.random.normal(ks[4], (hid_channels, hid_channels, KSIZE), jnp.float32)
    b3 = scale * jax.random.normal(ks[5], (hid_channels,), jnp.float32)
    wl = scale * jax.random.normal(ks[6], (out_channels, hid_channels), jnp.float32)
    bl = scale * jax.random.normal(ks[7], (out_channels,), jnp.float32)
    return (w1, b1, w2, b2, w3, b3, wl, bl)


if __name__ == "__main__":
    B, C_in, hid, out_ch, L = 2, 4, 32, 8, 64

    key = jax.random.PRNGKey(0)
    kx, kp = jax.random.split(key)
    x = jax.random.normal(kx, (B, C_in, L), jnp.float32)   # PyTorch NCW input
    params = init_params(kp, C_in, hid, out_ch)

    fwd = jax.jit(binary_model_forward)
    y_kernel = jax.block_until_ready(fwd(x, params))
    y_ref = jax.block_until_ready(ref_forward(x, params))

    assert y_kernel.shape == (B, out_ch)
    np.testing.assert_allclose(np.asarray(y_kernel), np.asarray(y_ref),
                               rtol=2e-4, atol=2e-5)
    print("KERNEL_OK")
</pallas_src>

<mosaic_0001>
module attributes {stable_mosaic.version = 11 : i64} {
  func.func @kernel(%arg0: i32, %arg1: memref<112x36xf32, #tpu.memory_space<vmem>>, %arg2: memref<2x72x112xf32, #tpu.memory_space<vmem>>, %arg3: memref<2x72x64xf32, #tpu.memory_space<vmem>>, %arg4: memref<2x2x64xf32, #tpu.memory_space<vmem>>, %arg5: memref<36x32xf32, #tpu.memory_space<vmem>>, %arg6: memref<1x32xf32, #tpu.memory_space<vmem>>, %arg7: memref<9x32x32xf32, #tpu.memory_space<vmem>>, %arg8: memref<1x32xf32, #tpu.memory_space<vmem>>, %arg9: memref<9x32x32xf32, #tpu.memory_space<vmem>>, %arg10: memref<1x32xf32, #tpu.memory_space<vmem>>, %arg11: memref<32x8xf32, #tpu.memory_space<vmem>>, %arg12: memref<1x8xf32, #tpu.memory_space<vmem>>, %arg13: memref<2x8xf32, #tpu.memory_space<vmem>>) attributes {dimension_semantics = [#tpu.dimension_semantics<parallel>], iteration_bounds = array<i64: 1>, scalar_prefetch = 0 : i64, scratch_operands = 0 : i64, tpu.core_type = #tpu.core_type<tc>, window_params = [{transform_indices = @transform_0, window_bounds = array<i64: 112, 36>}, {pipeline_mode = #tpu.pipeline_mode<synchronous>, transform_indices = @transform_1, window_bounds = array<i64: 2, 72, 112>}, {pipeline_mode = #tpu.pipeline_mode<synchronous>, transform_indices = @transform_2, window_bounds = array<i64: 2, 72, 64>}, {pipeline_mode = #tpu.pipeline_mode<synchronous>, transform_indices = @transform_3, window_bounds = array<i64: 2, 2, 64>}, {pipeline_mode = #tpu.pipeline_mode<synchronous>, transform_indices = @transform_4, window_bounds = array<i64: 36, 32>}, {pipeline_mode = #tpu.pipeline_mode<synchronous>, transform_indices = @transform_5, window_bounds = array<i64: 1, 32>}, {pipeline_mode = #tpu.pipeline_mode<synchronous>, transform_indices = @transform_6, window_bounds = array<i64: 9, 32, 32>}, {pipeline_mode = #tpu.pipeline_mode<synchronous>, transform_indices = @transform_7, window_bounds = array<i64: 1, 32>}, {pipeline_mode = #tpu.pipeline_mode<synchronous>, transform_indices = @transform_8, window_bounds = array<i64: 9, 32, 32>}, {pipeline_mode = #tpu.pipeline_mode<synchronous>, transform_indices = @transform_9, window_bounds = array<i64: 1, 32>}, {pipeline_mode = #tpu.pipeline_mode<synchronous>, transform_indices = @transform_10, window_bounds = array<i64: 32, 8>}, {pipeline_mode = #tpu.pipeline_mode<synchronous>, transform_indices = @transform_11, window_bounds = array<i64: 1, 8>}, {transform_indices = @transform_12, window_bounds = array<i64: 2, 8>}]} {
    %c0 = arith.constant 0 : index
    %c0_0 = arith.constant 0 : index
    %0 = vector.load %arg1[%c0, %c0_0] : memref<112x36xf32, #tpu.memory_space<vmem>>, vector<112x36xf32>
    %c0_1 = arith.constant 0 : index
    %c0_2 = arith.constant 0 : index
    %1 = vector.load %arg5[%c0_1, %c0_2] : memref<36x32xf32, #tpu.memory_space<vmem>>, vector<36x32xf32>
    %cst = arith.constant dense<0.000000e+00> : vector<112x32xf32>
    %2 = tpu.matmul %0, %1, %cst {dimension_numbers = #tpu.dot_dimension_numbers<[1], [0], [0], [1], [0, 0, 1, 1], [], []>} : vector<112x36xf32>, vector<36x32xf32>, vector<112x32xf32> -> vector<112x32xf32>
    %c0_3 = arith.constant 0 : index
    %c0_4 = arith.constant 0 : index
    %3 = vector.load %arg6[%c0_3, %c0_4] : memref<1x32xf32, #tpu.memory_space<vmem>>, vector<1x32xf32>
    %4 = vector.broadcast %3 : vector<1x32xf32> to vector<112x32xf32>
    %5 = arith.addf %2, %4 : vector<112x32xf32>
    %c0_5 = arith.constant 0 : index
    %c0_6 = arith.constant 0 : index
    %c0_7 = arith.constant 0 : index
    %6 = vector.load %arg2[%c0_5, %c0_6, %c0_7] : memref<2x72x112xf32, #tpu.memory_space<vmem>>, vector<1x72x112xf32>
    %7 = vector.shape_cast %6 : vector<1x72x112xf32> to vector<72x112xf32>
    %cst_8 = arith.constant dense<0.000000e+00> : vector<72x32xf32>
    %8 = tpu.matmul %7, %5, %cst_8 {dimension_numbers = #tpu.dot_dimension_numbers<[1], [0], [0], [1], [0, 0, 1, 1], [], []>, precision = #tpu.contract_precision<fp32>} : vector<72x112xf32>, vector<112x32xf32>, vector<72x32xf32> -> vector<72x32xf32>
    %c1 = arith.constant 1 : index
    %c0_9 = arith.constant 0 : index
    %c0_10 = arith.constant 0 : index
    %9 = vector.load %arg2[%c1, %c0_9, %c0_10] : memref<2x72x112xf32, #tpu.memory_space<vmem>>, vector<1x72x112xf32>
    %10 = vector.shape_cast %9 : vector<1x72x112xf32> to vector<72x112xf32>
    %cst_11 = arith.constant dense<0.000000e+00> : vector<72x32xf32>
    %11 = tpu.matmul %10, %5, %cst_11 {dimension_numbers = #tpu.dot_dimension_numbers<[1], [0], [0], [1], [0, 0, 1, 1], [], []>, precision = #tpu.contract_precision<fp32>} : vector<72x112xf32>, vector<112x32xf32>, vector<72x32xf32> -> vector<72x32xf32>
    %12 = arith.maximumf %8, %11 : vector<72x32xf32>
    %cst_12 = arith.constant 0.000000e+00 : f32
    %13 = vector.broadcast %cst_12 : f32 to vector<72x32xf32>
    %14 = arith.maximumf %12, %13 : vector<72x32xf32>
    %cst_13 = arith.constant 0.000000e+00 : f32
    %15 = vector.broadcast %cst_13 : f32 to vector<64x32xf32>
    %16 = vector.extract_strided_slice %14 {offsets = [0, 0], sizes = [64, 32], strides = [1, 1]} : vector<72x32xf32> to vector<64x32xf32>
    %c0_14 = arith.constant 0 : index
    %c0_15 = arith.constant 0 : index
    %c0_16 = arith.constant 0 : index
    %17 = vector.load %arg7[%c0_14, %c0_15, %c0_16] : memref<9x32x32xf32, #tpu.memory_space<vmem>>, vector<1x32x32xf32>
    %18 = vector.shape_cast %17 : vector<1x32x32xf32> to vector<32x32xf32>
    %cst_17 = arith.constant dense<0.000000e+00> : vector<64x32xf32>
    %19 = tpu.matmul %16, %18, %cst_17 {dimension_numbers = #tpu.dot_dimension_numbers<[1], [0], [0], [1], [0, 0, 1, 1], [], []>} : vector<64x32xf32>, vector<32x32xf32>, vector<64x32xf32> -> vector<64x32xf32>
    %20 = arith.addf %15, %19 : vector<64x32xf32>
    %21 = vector.extract_strided_slice %14 {offsets = [1, 0], sizes = [64, 32], strides = [1, 1]} : vector<72x32xf32> to vector<64x32xf32>
    %c1_18 = arith.constant 1 : index
    %c0_19 = arith.constant 0 : index
    %c0_20 = arith.constant 0 : index
    %22 = vector.load %arg7[%c1_18, %c0_19, %c0_20] : memref<9x32x32xf32, #tpu.memory_space<vmem>>, vector<1x32x32xf32>
    %23 = vector.shape_cast %22 : vector<1x32x32xf32> to vector<32x32xf32>
    %cst_21 = arith.constant dense<0.000000e+00> : vector<64x32xf32>
    %24 = tpu.matmul %21, %23, %cst_21 {dimension_numbers = #tpu.dot_dimension_numbers<[1], [0], [0], [1], [0, 0, 1, 1], [], []>} : vector<64x32xf32>, vector<32x32xf32>, vector<64x32xf32> -> vector<64x32xf32>
    %25 = arith.addf %20, %24 : vector<64x32xf32>
    %26 = vector.extract_strided_slice %14 {offsets = [2, 0], sizes = [64, 32], strides = [1, 1]} : vector<72x32xf32> to vector<64x32xf32>
    %c2 = arith.constant 2 : index
    %c0_22 = arith.constant 0 : index
    %c0_23 = arith.constant 0 : index
    %27 = vector.load %arg7[%c2, %c0_22, %c0_23] : memref<9x32x32xf32, #tpu.memory_space<vmem>>, vector<1x32x32xf32>
    %28 = vector.shape_cast %27 : vector<1x32x32xf32> to vector<32x32xf32>
    %cst_24 = arith.constant dense<0.000000e+00> : vector<64x32xf32>
    %29 = tpu.matmul %26, %28, %cst_24 {dimension_numbers = #tpu.dot_dimension_numbers<[1], [0], [0], [1], [0, 0, 1, 1], [], []>} : vector<64x32xf32>, vector<32x32xf32>, vector<64x32xf32> -> vector<64x32xf32>
    %30 = arith.addf %25, %29 : vector<64x32xf32>
    %31 = vector.extract_strided_slice %14 {offsets = [3, 0], sizes = [64, 32], strides = [1, 1]} : vector<72x32xf32> to vector<64x32xf32>
    %c3 = arith.constant 3 : index
    %c0_25 = arith.constant 0 : index
    %c0_26 = arith.constant 0 : index
    %32 = vector.load %arg7[%c3, %c0_25, %c0_26] : memref<9x32x32xf32, #tpu.memory_space<vmem>>, vector<1x32x32xf32>
    %33 = vector.shape_cast %32 : vector<1x32x32xf32> to vector<32x32xf32>
    %cst_27 = arith.constant dense<0.000000e+00> : vector<64x32xf32>
    %34 = tpu.matmul %31, %33, %cst_27 {dimension_numbers = #tpu.dot_dimension_numbers<[1], [0], [0], [1], [0, 0, 1, 1], [], []>} : vector<64x32xf32>, vector<32x32xf32>, vector<64x32xf32> -> vector<64x32xf32>
    %35 = arith.addf %30, %34 : vector<64x32xf32>
    %36 = vector.extract_strided_slice %14 {offsets = [4, 0], sizes = [64, 32], strides = [1, 1]} : vector<72x32xf32> to vector<64x32xf32>
    %c4 = arith.constant 4 : index
    %c0_28 = arith.constant 0 : index
    %c0_29 = arith.constant 0 : index
    %37 = vector.load %arg7[%c4, %c0_28, %c0_29] : memref<9x32x32xf32, #tpu.memory_space<vmem>>, vector<1x32x32xf32>
    %38 = vector.shape_cast %37 : vector<1x32x32xf32> to vector<32x32xf32>
    %cst_30 = arith.constant dense<0.000000e+00> : vector<64x32xf32>
    %39 = tpu.matmul %36, %38, %cst_30 {dimension_numbers = #tpu.dot_dimension_numbers<[1], [0], [0], [1], [0, 0, 1, 1], [], []>} : vector<64x32xf32>, vector<32x32xf32>, vector<64x32xf32> -> vector<64x32xf32>
    %40 = arith.addf %35, %39 : vector<64x32xf32>
    %41 = vector.extract_strided_slice %14 {offsets = [5, 0], sizes = [64, 32], strides = [1, 1]} : vector<72x32xf32> to vector<64x32xf32>
    %c5 = arith.constant 5 : index
    %c0_31 = arith.constant 0 : index
    %c0_32 = arith.constant 0 : index
    %42 = vector.load %arg7[%c5, %c0_31, %c0_32] : memref<9x32x32xf32, #tpu.memory_space<vmem>>, vector<1x32x32xf32>
    %43 = vector.shape_cast %42 : vector<1x32x32xf32> to vector<32x32xf32>
    %cst_33 = arith.constant dense<0.000000e+00> : vector<64x32xf32>
    %44 = tpu.matmul %41, %43, %cst_33 {dimension_numbers = #tpu.dot_dimension_numbers<[1], [0], [0], [1], [0, 0, 1, 1], [], []>} : vector<64x32xf32>, vector<32x32xf32>, vector<64x32xf32> -> vector<64x32xf32>
    %45 = arith.addf %40, %44 : vector<64x32xf32>
    %46 = vector.extract_strided_slice %14 {offsets = [6, 0], sizes = [64, 32], strides = [1, 1]} : vector<72x32xf32> to vector<64x32xf32>
    %c6 = arith.constant 6 : index
    %c0_34 = arith.constant 0 : index
    %c0_35 = arith.constant 0 : index
    %47 = vector.load %arg7[%c6, %c0_34, %c0_35] : memref<9x32x32xf32, #tpu.memory_space<vmem>>, vector<1x32x32xf32>
    %48 = vector.shape_cast %47 : vector<1x32x32xf32> to vector<32x32xf32>
    %cst_36 = arith.constant dense<0.000000e+00> : vector<64x32xf32>
    %49 = tpu.matmul %46, %48, %cst_36 {dimension_numbers = #tpu.dot_dimension_numbers<[1], [0], [0], [1], [0, 0, 1, 1], [], []>} : vector<64x32xf32>, vector<32x32xf32>, vector<64x32xf32> -> vector<64x32xf32>
    %50 = arith.addf %45, %49 : vector<64x32xf32>
    %51 = vector.extract_strided_slice %14 {offsets = [7, 0], sizes = [64, 32], strides = [1, 1]} : vector<72x32xf32> to vector<64x32xf32>
    %c7 = arith.constant 7 : index
    %c0_37 = arith.constant 0 : index
    %c0_38 = arith.constant 0 : index
    %52 = vector.load %arg7[%c7, %c0_37, %c0_38] : memref<9x32x32xf32, #tpu.memory_space<vmem>>, vector<1x32x32xf32>
    %53 = vector.shape_cast %52 : vector<1x32x32xf32> to vector<32x32xf32>
    %cst_39 = arith.constant dense<0.000000e+00> : vector<64x32xf32>
    %54 = tpu.matmul %51, %53, %cst_39 {dimension_numbers = #tpu.dot_dimension_numbers<[1], [0], [0], [1], [0, 0, 1, 1], [], []>} : vector<64x32xf32>, vector<32x32xf32>, vector<64x32xf32> -> vector<64x32xf32>
    %55 = arith.addf %50, %54 : vector<64x32xf32>
    %56 = vector.extract_strided_slice %14 {offsets = [8, 0], sizes = [64, 32], strides = [1, 1]} : vector<72x32xf32> to vector<64x32xf32>
    %c8 = arith.constant 8 : index
    %c0_40 = arith.constant 0 : index
    %c0_41 = arith.constant 0 : index
    %57 = vector.load %arg7[%c8, %c0_40, %c0_41] : memref<9x32x32xf32, #tpu.memory_space<vmem>>, vector<1x32x32xf32>
    %58 = vector.shape_cast %57 : vector<1x32x32xf32> to vector<32x32xf32>
    %cst_42 = arith.constant dense<0.000000e+00> : vector<64x32xf32>
    %59 = tpu.matmul %56, %58, %cst_42 {dimension_numbers = #tpu.dot_dimension_numbers<[1], [0], [0], [1], [0, 0, 1, 1], [], []>} : vector<64x32xf32>, vector<32x32xf32>, vector<64x32xf32> -> vector<64x32xf32>
    %60 = arith.addf %55, %59 : vector<64x32xf32>
    %c0_43 = arith.constant 0 : index
    %c0_44 = arith.constant 0 : index
    %61 = vector.load %arg8[%c0_43, %c0_44] : memref<1x32xf32, #tpu.memory_space<vmem>>, vector<1x32xf32>
    %62 = vector.broadcast %61 : vector<1x32xf32> to vector<64x32xf32>
    %63 = arith.addf %60, %62 : vector<64x32xf32>
    %c0_45 = arith.constant 0 : index
    %c0_46 = arith.constant 0 : index
    %c0_47 = arith.constant 0 : index
    %64 = vector.load %arg3[%c0_45, %c0_46, %c0_47] : memref<2x72x64xf32, #tpu.memory_space<vmem>>, vector<1x72x64xf32>
    %65 = vector.shape_cast %64 : vector<1x72x64xf32> to vector<72x64xf32>
    %cst_48 = arith.constant dense<0.000000e+00> : vector<72x32xf32>
    %66 = tpu.matmul %65, %63, %cst_48 {dimension_numbers = #tpu.dot_dimension_numbers<[1], [0], [0], [1], [0, 0, 1, 1], [], []>, precision = #tpu.contract_precision<fp32>} : vector<72x64xf32>, vector<64x32xf32>, vector<72x32xf32> -> vector<72x32xf32>
    %c1_49 = arith.constant 1 : index
    %c0_50 = arith.constant 0 : index
    %c0_51 = arith.constant 0 : index
    %67 = vector.load %arg3[%c1_49, %c0_50, %c0_51] : memref<2x72x64xf32, #tpu.memory_space<vmem>>, vector<1x72x64xf32>
    %68 = vector.shape_cast %67 : vector<1x72x64xf32> to vector<72x64xf32>
    %cst_52 = arith.constant dense<0.000000e+00> : vector<72x32xf32>
    %69 = tpu.matmul %68, %63, %cst_52 {dimension_numbers = #tpu.dot_dimension_numbers<[1], [0], [0], [1], [0, 0, 1, 1], [], []>, precision = #tpu.contract_precision<fp32>} : vector<72x64xf32>, vector<64x32xf32>, vector<72x32xf32> -> vector<72x32xf32>
    %70 = arith.maximumf %66, %69 : vector<72x32xf32>
    %cst_53 = arith.constant 0.000000e+00 : f32
    %71 = vector.broadcast %cst_53 : f32 to vector<72x32xf32>
    %72 = arith.maximumf %70, %71 : vector<72x32xf32>
    %cst_54 = arith.constant 0.000000e+00 : f32
    %73 = vector.broadcast %cst_54 : f32 to vector<64x32xf32>
    %74 = vector.extract_strided_slice %72 {offsets = [0, 0], sizes = [64, 32], strides = [1, 1]} : vector<72x32xf32> to vector<64x32xf32>
    %c0_55 = arith.constant 0 : index
    %c0_56 = arith.constant 0 : index
    %c0_57 = arith.constant 0 : index
    %75 = vector.load %arg9[%c0_55, %c0_56, %c0_57] : memref<9x32x32xf32, #tpu.memory_space<vmem>>, vector<1x32x32xf32>
    %76 = vector.shape_cast %75 : vector<1x32x32xf32> to vector<32x32xf32>
    %cst_58 = arith.constant dense<0.000000e+00> : vector<64x32xf32>
    %77 = tpu.matmul %74, %76, %cst_58 {dimension_numbers = #tpu.dot_dimension_numbers<[1], [0], [0], [1], [0, 0, 1, 1], [], []>} : vector<64x32xf32>, vector<32x32xf32>, vector<64x32xf32> -> vector<64x32xf32>
    %78 = arith.addf %73, %77 : vector<64x32xf32>
    %79 = vector.extract_strided_slice %72 {offsets = [1, 0], sizes = [64, 32], strides = [1, 1]} : vector<72x32xf32> to vector<64x32xf32>
    %c1_59 = arith.constant 1 : index
    %c0_60 = arith.constant 0 : index
    %c0_61 = arith.constant 0 : index
    %80 = vector.load %arg9[%c1_59, %c0_60, %c0_61] : memref<9x32x32xf32, #tpu.memory_space<vmem>>, vector<1x32x32xf32>
    %81 = vector.shape_cast %80 : vector<1x32x32xf32> to vector<32x32xf32>
    %cst_62 = arith.constant dense<0.000000e+00> : vector<64x32xf32>
    %82 = tpu.matmul %79, %81, %cst_62 {dimension_numbers = #tpu.dot_dimension_numbers<[1], [0], [0], [1], [0, 0, 1, 1], [], []>} : vector<64x32xf32>, vector<32x32xf32>, vector<64x32xf32> -> vector<64x32xf32>
    %83 = arith.addf %78, %82 : vector<64x32xf32>
    %84 = vector.extract_strided_slice %72 {offsets = [2, 0], sizes = [64, 32], strides = [1, 1]} : vector<72x32xf32> to vector<64x32xf32>
    %c2_63 = arith.constant 2 : index
    %c0_64 = arith.constant 0 : index
    %c0_65 = arith.constant 0 : index
    %85 = vector.load %arg9[%c2_63, %c0_64, %c0_65] : memref<9x32x32xf32, #tpu.memory_space<vmem>>, vector<1x32x32xf32>
    %86 = vector.shape_cast %85 : vector<1x32x32xf32> to vector<32x32xf32>
    %cst_66 = arith.constant dense<0.000000e+00> : vector<64x32xf32>
    %87 = tpu.matmul %84, %86, %cst_66 {dimension_numbers = #tpu.dot_dimension_numbers<[1], [0], [0], [1], [0, 0, 1, 1], [], []>} : vector<64x32xf32>, vector<32x32xf32>, vector<64x32xf32> -> vector<64x32xf32>
    %88 = arith.addf %83, %87 : vector<64x32xf32>
    %89 = vector.extract_strided_slice %72 {offsets = [3, 0], sizes = [64, 32], strides = [1, 1]} : vector<72x32xf32> to vector<64x32xf32>
    %c3_67 = arith.constant 3 : index
    %c0_68 = arith.constant 0 : index
    %c0_69 = arith.constant 0 : index
    %90 = vector.load %arg9[%c3_67, %c0_68, %c0_69] : memref<9x32x32xf32, #tpu.memory_space<vmem>>, vector<1x32x32xf32>
    %91 = vector.shape_cast %90 : vector<1x32x32xf32> to vector<32x32xf32>
    %cst_70 = arith.constant dense<0.000000e+00> : vector<64x32xf32>
    %92 = tpu.matmul %89, %91, %cst_70 {dimension_numbers = #tpu.dot_dimension_numbers<[1], [0], [0], [1], [0, 0, 1, 1], [], []>} : vector<64x32xf32>, vector<32x32xf32>, vector<64x32xf32> -> vector<64x32xf32>
    %93 = arith.addf %88, %92 : vector<64x32xf32>
    %94 = vector.extract_strided_slice %72 {offsets = [4, 0], sizes = [64, 32], strides = [1, 1]} : vector<72x32xf32> to vector<64x32xf32>
    %c4_71 = arith.constant 4 : index
    %c0_72 = arith.constant 0 : index
    %c0_73 = arith.constant 0 : index
    %95 = vector.load %arg9[%c4_71, %c0_72, %c0_73] : memref<9x32x32xf32, #tpu.memory_space<vmem>>, vector<1x32x32xf32>
    %96 = vector.shape_cast %95 : vector<1x32x32xf32> to vector<32x32xf32>
    %cst_74 = arith.constant dense<0.000000e+00> : vector<64x32xf32>
    %97 = tpu.matmul %94, %96, %cst_74 {dimension_numbers = #tpu.dot_dimension_numbers<[1], [0], [0], [1], [0, 0, 1, 1], [], []>} : vector<64x32xf32>, vector<32x32xf32>, vector<64x32xf32> -> vector<64x32xf32>
    %98 = arith.addf %93, %97 : vector<64x32xf32>
    %99 = vector.extract_strided_slice %72 {offsets = [5, 0], sizes = [64, 32], strides = [1, 1]} : vector<72x32xf32> to vector<64x32xf32>
    %c5_75 = arith.constant 5 : index
    %c0_76 = arith.constant 0 : index
    %c0_77 = arith.constant 0 : index
    %100 = vector.load %arg9[%c5_75, %c0_76, %c0_77] : memref<9x32x32xf32, #tpu.memory_space<vmem>>, vector<1x32x32xf32>
    %101 = vector.shape_cast %100 : vector<1x32x32xf32> to vector<32x32xf32>
    %cst_78 = arith.constant dense<0.000000e+00> : vector<64x32xf32>
    %102 = tpu.matmul %99, %101, %cst_78 {dimension_numbers = #tpu.dot_dimension_numbers<[1], [0], [0], [1], [0, 0, 1, 1], [], []>} : vector<64x32xf32>, vector<32x32xf32>, vector<64x32xf32> -> vector<64x32xf32>
    %103 = arith.addf %98, %102 : vector<64x32xf32>
    %104 = vector.extract_strided_slice %72 {offsets = [6, 0], sizes = [64, 32], strides = [1, 1]} : vector<72x32xf32> to vector<64x32xf32>
    %c6_79 = arith.constant 6 : index
    %c0_80 = arith.constant 0 : index
    %c0_81 = arith.constant 0 : index
    %105 = vector.load %arg9[%c6_79, %c0_80, %c0_81] : memref<9x32x32xf32, #tpu.memory_space<vmem>>, vector<1x32x32xf32>
    %106 = vector.shape_cast %105 : vector<1x32x32xf32> to vector<32x32xf32>
    %cst_82 = arith.constant dense<0.000000e+00> : vector<64x32xf32>
    %107 = tpu.matmul %104, %106, %cst_82 {dimension_numbers = #tpu.dot_dimension_numbers<[1], [0], [0], [1], [0, 0, 1, 1], [], []>} : vector<64x32xf32>, vector<32x32xf32>, vector<64x32xf32> -> vector<64x32xf32>
    %108 = arith.addf %103, %107 : vector<64x32xf32>
    %109 = vector.extract_strided_slice %72 {offsets = [7, 0], sizes = [64, 32], strides = [1, 1]} : vector<72x32xf32> to vector<64x32xf32>
    %c7_83 = arith.constant 7 : index
    %c0_84 = arith.constant 0 : index
    %c0_85 = arith.constant 0 : index
    %110 = vector.load %arg9[%c7_83, %c0_84, %c0_85] : memref<9x32x32xf32, #tpu.memory_space<vmem>>, vector<1x32x32xf32>
    %111 = vector.shape_cast %110 : vector<1x32x32xf32> to vector<32x32xf32>
    %cst_86 = arith.constant dense<0.000000e+00> : vector<64x32xf32>
    %112 = tpu.matmul %109, %111, %cst_86 {dimension_numbers = #tpu.dot_dimension_numbers<[1], [0], [0], [1], [0, 0, 1, 1], [], []>} : vector<64x32xf32>, vector<32x32xf32>, vector<64x32xf32> -> vector<64x32xf32>
    %113 = arith.addf %108, %112 : vector<64x32xf32>
    %114 = vector.extract_strided_slice %72 {offsets = [8, 0], sizes = [64, 32], strides = [1, 1]} : vector<72x32xf32> to vector<64x32xf32>
    %c8_87 = arith.constant 8 : index
    %c0_88 = arith.constant 0 : index
    %c0_89 = arith.constant 0 : index
    %115 = vector.load %arg9[%c8_87, %c0_88, %c0_89] : memref<9x32x32xf32, #tpu.memory_space<vmem>>, vector<1x32x32xf32>
    %116 = vector.shape_cast %115 : vector<1x32x32xf32> to vector<32x32xf32>
    %cst_90 = arith.constant dense<0.000000e+00> : vector<64x32xf32>
    %117 = tpu.matmul %114, %116, %cst_90 {dimension_numbers = #tpu.dot_dimension_numbers<[1], [0], [0], [1], [0, 0, 1, 1], [], []>} : vector<64x32xf32>, vector<32x32xf32>, vector<64x32xf32> -> vector<64x32xf32>
    %118 = arith.addf %113, %117 : vector<64x32xf32>
    %c0_91 = arith.constant 0 : index
    %c0_92 = arith.constant 0 : index
    %119 = vector.load %arg10[%c0_91, %c0_92] : memref<1x32xf32, #tpu.memory_space<vmem>>, vector<1x32xf32>
    %120 = vector.broadcast %119 : vector<1x32xf32> to vector<64x32xf32>
    %121 = arith.addf %118, %120 : vector<64x32xf32>
    %c0_93 = arith.constant 0 : index
    %c0_94 = arith.constant 0 : index
    %c0_95 = arith.constant 0 : index
    %122 = vector.load %arg4[%c0_93, %c0_94, %c0_95] : memref<2x2x64xf32, #tpu.memory_space<vmem>>, vector<1x2x64xf32>
    %123 = vector.shape_cast %122 : vector<1x2x64xf32> to vector<2x64xf32>
    %cst_96 = arith.constant dense<0.000000e+00> : vector<2x32xf32>
    %124 = tpu.matmul %123, %121, %cst_96 {dimension_numbers = #tpu.dot_dimension_numbers<[1], [0], [0], [1], [0, 0, 1, 1], [], []>, precision = #tpu.contract_precision<fp32>} : vector<2x64xf32>, vector<64x32xf32>, vector<2x32xf32> -> vector<2x32xf32>
    %c1_97 = arith.constant 1 : index
    %c0_98 = arith.constant 0 : index
    %c0_99 = arith.constant 0 : index
    %125 = vector.load %arg4[%c1_97, %c0_98, %c0_99] : memref<2x2x64xf32, #tpu.memory_space<vmem>>, vector<1x2x64xf32>
    %126 = vector.shape_cast %125 : vector<1x2x64xf32> to vector<2x64xf32>
    %cst_100 = arith.constant dense<0.000000e+00> : vector<2x32xf32>
    %127 = tpu.matmul %126, %121, %cst_100 {dimension_numbers = #tpu.dot_dimension_numbers<[1], [0], [0], [1], [0, 0, 1, 1], [], []>, precision = #tpu.contract_precision<fp32>} : vector<2x64xf32>, vector<64x32xf32>, vector<2x32xf32> -> vector<2x32xf32>
    %128 = arith.maximumf %124, %127 : vector<2x32xf32>
    %cst_101 = arith.constant 0.000000e+00 : f32
    %129 = vector.broadcast %cst_101 : f32 to vector<2x32xf32>
    %130 = arith.maximumf %128, %129 : vector<2x32xf32>
    %c0_102 = arith.constant 0 : index
    %c0_103 = arith.constant 0 : index
    %131 = vector.load %arg11[%c0_102, %c0_103] : memref<32x8xf32, #tpu.memory_space<vmem>>, vector<32x8xf32>
    %cst_104 = arith.constant dense<0.000000e+00> : vector<2x8xf32>
    %132 = tpu.matmul %130, %131, %cst_104 {dimension_numbers = #tpu.dot_dimension_numbers<[1], [0], [0], [1], [0, 0, 1, 1], [], []>} : vector<2x32xf32>, vector<32x8xf32>, vector<2x8xf32> -> vector<2x8xf32>
    %c0_105 = arith.constant 0 : index
    %c0_106 = arith.constant 0 : index
    %133 = vector.load %arg12[%c0_105, %c0_106] : memref<1x8xf32, #tpu.memory_space<vmem>>, vector<1x8xf32>
    %134 = vector.broadcast %133 : vector<1x8xf32> to vector<2x8xf32>
    %135 = arith.addf %132, %134 : vector<2x8xf32>
    %cst_107 = arith.constant 0.000000e+00 : f32
    %136 = vector.broadcast %cst_107 : f32 to vector<2x8xf32>
    %137 = arith.subf %136, %135 : vector<2x8xf32>
    %138 = math.exp %137 : vector<2x8xf32>
    %cst_108 = arith.constant 1.000000e+00 : f32
    %139 = vector.broadcast %cst_108 : f32 to vector<2x8xf32>
    %140 = arith.addf %139, %138 : vector<2x8xf32>
    %141 = tpu.reciprocal %140 : vector<2x8xf32> -> vector<2x8xf32>
    %c0_109 = arith.constant 0 : index
    %c0_110 = arith.constant 0 : index
    %142 = vector.load %arg13[%c0_109, %c0_110] : memref<2x8xf32, #tpu.memory_space<vmem>>, vector<2x8xf32>
    tpu.vector_store %arg13[%c0_109, %c0_110], %141 {strides = array<i32>} : memref<2x8xf32, #tpu.memory_space<vmem>>, vector<2x8xf32>,
    return
  }
  func.func @transform_0(%arg0: i32) -> (i32, i32) {
    %c0_i32 = arith.constant 0 : i32
    %c0_i32_0 = arith.constant 0 : i32
    return %arg0, %c0_i32 : i32, i32
  }
  func.func @transform_1(%arg0: i32) -> (i32, i32, i32) {
    %c0_i32 = arith.constant 0 : i32
    %c0_i32_0 = arith.constant 0 : i32
    %c0_i32_1 = arith.constant 0 : i32
    %c0_i32_2 = arith.constant 0 : i32
    return %c0_i32, %c0_i32_0, %c0_i32_1 : i32, i32, i32
  }
  func.func @transform_2(%arg0: i32) -> (i32, i32, i32) {
    %c0_i32 = arith.constant 0 : i32
    %c0_i32_0 = arith.constant 0 : i32
    %c0_i32_1 = arith.constant 0 : i32
    %c0_i32_2 = arith.constant 0 : i32
    return %c0_i32, %c0_i32_0, %c0_i32_1 : i32, i32, i32
  }
  func.func @transform_3(%arg0: i32) -> (i32, i32, i32) {
    %c0_i32 = arith.constant 0 : i32
    %c0_i32_0 = arith.constant 0 : i32
    %c0_i32_1 = arith.constant 0 : i32
    %c0_i32_2 = arith.constant 0 : i32
    return %c0_i32, %c0_i32_0, %c0_i32_1 : i32, i32, i32
  }
  func.func @transform_4(%arg0: i32) -> (i32, i32) {
    %c0_i32 = arith.constant 0 : i32
    %c0_i32_0 = arith.constant 0 : i32
    %c0_i32_1 = arith.constant 0 : i32
    return %c0_i32, %c0_i32_0 : i32, i32
  }
  func.func @transform_5(%arg0: i32) -> (i32, i32) {
    %c0_i32 = arith.constant 0 : i32
    %c0_i32_0 = arith.constant 0 : i32
    %c0_i32_1 = arith.constant 0 : i32
    return %c0_i32, %c0_i32_0 : i32, i32
  }
  func.func @transform_6(%arg0: i32) -> (i32, i32, i32) {
    %c0_i32 = arith.constant 0 : i32
    %c0_i32_0 = arith.constant 0 : i32
    %c0_i32_1 = arith.constant 0 : i32
    %c0_i32_2 = arith.constant 0 : i32
    return %c0_i32, %c0_i32_0, %c0_i32_1 : i32, i32, i32
  }
  func.func @transform_7(%arg0: i32) -> (i32, i32) {
    %c0_i32 = arith.constant 0 : i32
    %c0_i32_0 = arith.constant 0 : i32
    %c0_i32_1 = arith.constant 0 : i32
    return %c0_i32, %c0_i32_0 : i32, i32
  }
  func.func @transform_8(%arg0: i32) -> (i32, i32, i32) {
    %c0_i32 = arith.constant 0 : i32
    %c0_i32_0 = arith.constant 0 : i32
    %c0_i32_1 = arith.constant 0 : i32
    %c0_i32_2 = arith.constant 0 : i32
    return %c0_i32, %c0_i32_0, %c0_i32_1 : i32, i32, i32
  }
  func.func @transform_9(%arg0: i32) -> (i32, i32) {
    %c0_i32 = arith.constant 0 : i32
    %c0_i32_0 = arith.constant 0 : i32
    %c0_i32_1 = arith.constant 0 : i32
    return %c0_i32, %c0_i32_0 : i32, i32
  }
  func.func @transform_10(%arg0: i32) -> (i32, i32) {
    %c0_i32 = arith.constant 0 : i32
    %c0_i32_0 = arith.constant 0 : i32
    %c0_i32_1 = arith.constant 0 : i32
    return %c0_i32, %c0_i32_0 : i32, i32
  }
  func.func @transform_11(%arg0: i32) -> (i32, i32) {
    %c0_i32 = arith.constant 0 : i32
    %c0_i32_0 = arith.constant 0 : i32
    %c0_i32_1 = arith.constant 0 : i32
    return %c0_i32, %c0_i32_0 : i32, i32
  }
  func.func @transform_12(%arg0: i32) -> (i32, i32) {
    %c0_i32 = arith.constant 0 : i32
    %c0_i32_0 = arith.constant 0 : i32
    return %arg0, %c0_i32 : i32, i32
  }
}

</mosaic_0001>

<llo_original>
// kernel: binary_model_forward.1
$region0: #{binary_model_forward.1}
  #allocation0 [shape = 'u32[]', space=smem, size = 0x4, offset = 0x4, fixed_abs, tag = 'smem constant byte address 0x4 - core index']
  #allocation1 [shape = 'u32[144,128]{1,0:T(1,128)}', space=vmem, size = 0x12000, scoped, tag = 'internal scratch']
  %s0 = inlined_call_operand.vmem [shape: f32[112,36], index: 0, kind: input, shape index: {}]
  %s1 = inlined_call_operand.vmem [shape: f32[2,72,112], index: 1, kind: input, shape index: {}]
  %s2 = inlined_call_operand.vmem [shape: f32[2,72,64], index: 2, kind: input, shape index: {}]
  %s3 = inlined_call_operand.vmem [shape: f32[2,2,64], index: 3, kind: input, shape index: {}]
  %s4 = inlined_call_operand.vmem [shape: f32[36,32], index: 4, kind: input, shape index: {}]
  %s5 = inlined_call_operand.vmem [shape: f32[1,32], index: 5, kind: input, shape index: {}]
  %s6 = inlined_call_operand.vmem [shape: f32[9,32,32], index: 6, kind: input, shape index: {}]
  %s7 = inlined_call_operand.vmem [shape: f32[1,32], index: 7, kind: input, shape index: {}]
  %s8 = inlined_call_operand.vmem [shape: f32[9,32,32], index: 8, kind: input, shape index: {}]
  %s9 = inlined_call_operand.vmem [shape: f32[1,32], index: 9, kind: input, shape index: {}]
  %s10 = inlined_call_operand.vmem [shape: f32[32,8], index: 10, kind: input, shape index: {}]
  %s11 = inlined_call_operand.vmem [shape: f32[1,8], index: 11, kind: input, shape index: {}]
  %s12 = inlined_call_operand.hbm [shape: f32[2,8], index: 12, kind: output, shape index: {}]
  %s13 = sld [smem:[#allocation0]]
  $region58: #{binary_model_forward.1} parent=0
    _
  %s15 = ssub.s32 1, %s13
  %s16 = scalar_select 0, %s15, %s13
  $region1: #{binary_model_forward.1} parent=0
    #allocation2 [shape = 'u8[1024]{0}', space=vmem, size = 0x400, scoped, tag = 'output window, operand 0, single buffered']
    #allocation3 [shape = 's32[1]{0}', space=sflag, size = 0x4, scoped, tag = 'scoped memory for binary_model_forward.1']
    %17 = vsyncpa [#allocation3], 0
    // Predicated region
    $region2: #{binary_model_forward.1} parent=1 // pred_check
      _
    $region3: #{binary_model_forward.1} parent=1 // pred_check_branch
      %19 = sbr.rel (0) target = $region5
    $region4: #{binary_model_forward.1} parent=1 // pred_region
      _
    $region5: #{binary_model_forward.1} parent=1 // pred_fallthru
      _
    // Predicated region
    $region6: #{binary_model_forward.1} parent=1 // pred_check
      _
    $region7: #{binary_model_forward.1} parent=1 // pred_check_branch
      %21 = sbr.rel (0) target = $region9
    $region8: #{binary_model_forward.1} parent=1 // pred_region
      _
    $region9: #{binary_model_forward.1} parent=1 // pred_fallthru
      _
    // Predicated region
    $region10: #{binary_model_forward.1} parent=1 // pred_check
      _
    $region11: #{binary_model_forward.1} parent=1 // pred_check_branch
      %23 = sbr.rel (0) target = $region13
    $region12: #{binary_model_forward.1} parent=1 // pred_region
      _
    $region13: #{binary_model_forward.1} parent=1 // pred_fallthru
      _
    // Predicated region
    $region14: #{binary_model_forward.1} parent=1 // pred_check
      _
    $region15: #{binary_model_forward.1} parent=1 // pred_check_branch
      %25 = sbr.rel (0) target = $region17
    $region16: #{binary_model_forward.1} parent=1 // pred_region
      _
    $region17: #{binary_model_forward.1} parent=1 // pred_fallthru
      _
    // Predicated region
    $region18: #{binary_model_forward.1} parent=1 // pred_check
      _
    $region19: #{binary_model_forward.1} parent=1 // pred_check_branch
      %27 = sbr.rel (0) target = $region21
    $region20: #{binary_model_forward.1} parent=1 // pred_region
      _
    $region21: #{binary_model_forward.1} parent=1 // pred_fallthru
      _
    // Predicated region
    $region22: #{binary_model_forward.1} parent=1 // pred_check
      _
    $region23: #{binary_model_forward.1} parent=1 // pred_check_branch
      %29 = sbr.rel (0) target = $region25
    $region24: #{binary_model_forward.1} parent=1 // pred_region
      _
    $region25: #{binary_model_forward.1} parent=1 // pred_fallthru
      _
    // Predicated region
    $region26: #{binary_model_forward.1} parent=1 // pred_check
      _
    $region27: #{binary_model_forward.1} parent=1 // pred_check_branch
      %31 = sbr.rel (0) target = $region29
    $region28: #{binary_model_forward.1} parent=1 // pred_region
      _
    $region29: #{binary_model_forward.1} parent=1 // pred_fallthru
      _
    // Predicated region
    $region30: #{binary_model_forward.1} parent=1 // pred_check
      _
    $region31: #{binary_model_forward.1} parent=1 // pred_check_branch
      %33 = sbr.rel (0) target = $region33
    $region32: #{binary_model_forward.1} parent=1 // pred_region
      _
    $region33: #{binary_model_forward.1} parent=1 // pred_fallthru
      _
    // Predicated region
    $region34: #{binary_model_forward.1} parent=1 // pred_check
      _
    $region35: #{binary_model_forward.1} parent=1 // pred_check_branch
      %35 = sbr.rel (0) target = $region37
    $region36: #{binary_model_forward.1} parent=1 // pred_region
      _
    $region37: #{binary_model_forward.1} parent=1 // pred_fallthru
      _
    // Predicated region
    $region38: #{binary_model_forward.1} parent=1 // pred_check
      _
    $region39: #{binary_model_forward.1} parent=1 // pred_check_branch
      %37 = sbr.rel (0) target = $region41
    $region40: #{binary_model_forward.1} parent=1 // pred_region
      _
    $region41: #{binary_model_forward.1} parent=1 // pred_fallthru
      _
    // Predicated region
    $region42: #{binary_model_forward.1} parent=1 // pred_check
      _
    $region43: #{binary_model_forward.1} parent=1 // pred_check_branch
      %39 = sbr.rel (0) target = $region45
    $region44: #{binary_model_forward.1} parent=1 // pred_region
      _
    $region45: #{binary_model_forward.1} parent=1 // pred_fallthru
      _
    // Predicated region
    $region46: #{binary_model_forward.1} parent=1 // pred_check
      _
    $region47: #{binary_model_forward.1} parent=1 // pred_check_branch
      %41 = sbr.rel (0) target = $region49
    $region48: #{binary_model_forward.1} parent=1 // pred_region
      _
    $region49: #{binary_model_forward.1} parent=1 // pred_fallthru
      _
    %v42 = vld [vmem:[%s0] sm:$0xff]
    %v43 = vld [vmem:[%s0 + $0x8] sm:$0xff]
    %v44 = vld [vmem:[%s0 + $0x10] sm:$0xff]
    %v45 = vld [vmem:[%s0 + $0x18] sm:$0xff]
    %v46 = vld [vmem:[%s0 + $0x20] sm:$0xff]
    %v47 = vld [vmem:[%s0 + $0x28] sm:$0xff]
    %v48 = vld [vmem:[%s0 + $0x30] sm:$0xff]
    %v49 = vld [vmem:[%s0 + $0x38] sm:$0xff]
    %v50 = vld [vmem:[%s0 + $0x40] sm:$0xff]
    %v51 = vld [vmem:[%s0 + $0x48] sm:$0xff]
    %v52 = vld [vmem:[%s0 + $0x50] sm:$0xff]
    %v53 = vld [vmem:[%s0 + $0x58] sm:$0xff]
    %v54 = vld [vmem:[%s0 + $0x60] sm:$0xff]
    %v55 = vld [vmem:[%s0 + $0x68] sm:$0xff]
    %v56 = vld [vmem:[%s4] sm:$0xff]
    %v57 = vld [vmem:[%s4 + $0x8] sm:$0xff]
    %v58 = vld [vmem:[%s4 + $0x10] sm:$0xff]
    %v59 = vld [vmem:[%s4 + $0x18] sm:$0xff]
    %v60 = vld [vmem:[%s4 + $0x20] sm:$0xf]
    %v61 = vld [vmem:[%s5] sm:$0x1]
    %v63 = vlaneseq
    %v64 = vshrl.u32 %v63, 7
    %v65 = vsub.s32 0, %v64
    %v66 = vrot.slane %v61, %v65
    %vm68 = vcmask 293888
    %v70 = vsel %vm68, %v42, 0
    %v73 = vsel %vm68, %v43, 0
    %v76 = vsel %vm68, %v44, 0
    %v79 = vsel %vm68, %v45, 0
    %v82 = vsel %vm68, %v46, 0
    %v85 = vsel %vm68, %v47, 0
    %v88 = vsel %vm68, %v48, 0
    %v91 = vsel %vm68, %v49, 0
    %v94 = vsel %vm68, %v50, 0
    %v97 = vsel %vm68, %v51, 0
    %v100 = vsel %vm68, %v52, 0
    %v103 = vsel %vm68, %v53, 0
    %v106 = vsel %vm68, %v54, 0
    %v109 = vsel %vm68, %v55, 0
    %vm111 = vcmask 1043456
    %v113 = vsel %vm111, %v60, 0
    %115 = vmatprep.subr.mxu0 0.0
    %116 = vmatpush1.msra.mxu0 0.0
    %117 = vmatprep.subr.mxu0 0.0
    %118 = vmatpush1.msra.mxu0 0.0
    %119 = vmatprep.subr.mxu0 0.0
    %120 = vmatpush1.msra.mxu0 0.0
    %121 = vmatprep.subr.mxu0 0.0
    %122 = vmatpush1.msra.mxu0 0.0
    %123 = vmatprep.subr.mxu0 0.0
    %124 = vmatpush1.msra.mxu0 0.0
    %125 = vmatprep.subr.mxu0 0.0
    %126 = vmatpush1.msra.mxu0 0.0
    %127 = vmatprep.subr.mxu0 0.0
    %128 = vmatpush1.msra.mxu0 0.0
    %129 = vmatprep.subr.mxu0 0.0
    %130 = vmatpush1.msra.mxu0 0.0
    %131 = vmatprep.subr.mxu0 0.0
    %132 = vmatpush1.msra.mxu0 0.0
    %133 = vmatprep.subr.mxu0 0.0
    %134 = vmatpush1.msra.mxu0 0.0
    %135 = vmatprep.subr.mxu0 0.0
    %136 = vmatpush1.msra.mxu0 0.0
    %137 = vmatprep.subr.mxu0 0.0
    %138 = vmatpush1.msra.mxu0 %v113
    %139 = vmatprep.subr.mxu0 0.0
    %140 = vmatpush1.msra.mxu0 %v59
    %141 = vmatprep.subr.mxu0 0.0
    %142 = vmatpush1.msra.mxu0 %v58
    %143 = vmatprep.subr.mxu0 0.0
    %144 = vmatpush1.msra.mxu0 %v57
    %145 = vmatprep.subr.mxu0 0.0
    %146 = vmatpush1.msra.mxu0 %v56
    %147 = vmatprep.subr.mxu0 0.0
    %148 = vmatpush2.msra.mxu0 0.0
    %149 = vmatprep.subr.mxu0 0.0
    %150 = vmatpush2.msra.mxu0 0.0
    %151 = vmatprep.subr.mxu0 0.0
    %152 = vmatpush2.msra.mxu0 0.0
    %153 = vmatprep.subr.mxu0 0.0
    %154 = vmatpush2.msra.mxu0 0.0
    %155 = vmatprep.subr.mxu0 0.0
    %156 = vmatpush2.msra.mxu0 0.0
    %157 = vmatprep.subr.mxu0 0.0
    %158 = vmatpush2.msra.mxu0 0.0
    %159 = vmatprep.subr.mxu0 0.0
    %160 = vmatpush2.msra.mxu0 0.0
    %161 = vmatprep.subr.mxu0 0.0
    %162 = vmatpush2.msra.mxu0 0.0
    %163 = vmatprep.subr.mxu0 0.0
    %164 = vmatpush2.msra.mxu0 0.0
    %165 = vmatprep.subr.mxu0 0.0
    %166 = vmatpush2.msra.mxu0 0.0
    %167 = vmatprep.subr.mxu0 0.0
    %168 = vmatpush2.msra.mxu0 0.0
    %169 = vmatprep.subr.mxu0 0.0
    %170 = vmatpush2.msra.mxu0 0.0
    %171 = vmatprep.subr.mxu0 0.0
    %172 = vmatpush2.msra.mxu0 0.0
    %173 = vmatprep.subr.mxu0 0.0
    %174 = vmatpush2.msra.mxu0 0.0
    %175 = vmatprep.subr.mxu0 0.0
    %176 = vmatpush2.msra.mxu0 0.0
    %177 = vmatprep.subr.mxu0 0.0
    %178 = vmatpush2.msra.mxu0 0.0
    %179 = vmatprep.mubr.f32.mxu0 0.0
    %180 = vmatmul.mubr.f32.gmra.mxu0 %v70
    %v181 = vpop.f32.mrf.mxu0
    %v182 = vadd.f32 %v66, %v181
    %v183 = vpop.f32.mrf.mxu0
    %184 = vmatprep.mubr.f32.mxu0 0.0
    %185 = vmatmul.mubr.f32.gmra.mxu0 %v73
    %v186 = vpop.f32.mrf.mxu0
    %v187 = vadd.f32 %v66, %v186
    %v188 = vpop.f32.mrf.mxu0
    %189 = vmatprep.mubr.f32.mxu0 0.0
    %190 = vmatmul.mubr.f32.gmra.mxu0 %v76
    %v191 = vpop.f32.mrf.mxu0
    %v192 = vadd.f32 %v66, %v191
    %v193 = vpop.f32.mrf.mxu0
    %194 = vmatprep.mubr.f32.mxu0 0.0
    %195 = vmatmul.mubr.f32.gmra.mxu0 %v79
    %v196 = vpop.f32.mrf.mxu0
    %v197 = vadd.f32 %v66, %v196
    %v198 = vpop.f32.mrf.mxu0
    %199 = vmatprep.mubr.f32.mxu0 0.0
    %200 = vmatmul.mubr.f32.gmra.mxu0 %v82
    %v201 = vpop.f32.mrf.mxu0
    %v202 = vadd.f32 %v66, %v201
    %v203 = vpop.f32.mrf.mxu0
    %204 = vmatprep.mubr.f32.mxu0 0.0
    %205 = vmatmul.mubr.f32.gmra.mxu0 %v85
    %v206 = vpop.f32.mrf.mxu0
    %v207 = vadd.f32 %v66, %v206
    %v208 = vpop.f32.mrf.mxu0
    %209 = vmatprep.mubr.f32.mxu0 0.0
    %210 = vmatmul.mubr.f32.gmra.mxu0 %v88
    %v211 = vpop.f32.mrf.mxu0
    %v212 = vadd.f32 %v66, %v211
    %v213 = vpop.f32.mrf.mxu0
    %214 = vmatprep.mubr.f32.mxu0 0.0
    %215 = vmatmul.mubr.f32.gmra.mxu0 %v91
    %v216 = vpop.f32.mrf.mxu0
    %v217 = vadd.f32 %v66, %v216
    %v218 = vpop.f32.mrf.mxu0
    %219 = vmatprep.mubr.f32.mxu0 0.0
    %220 = vmatmul.mubr.f32.gmra.mxu0 %v94
    %v221 = vpop.f32.mrf.mxu0
    %v222 = vadd.f32 %v66, %v221
    %v223 = vpop.f32.mrf.mxu0
    %224 = vmatprep.mubr.f32.mxu0 0.0
    %225 = vmatmul.mubr.f32.gmra.mxu0 %v97
    %v226 = vpop.f32.mrf.mxu0
    %v227 = vadd.f32 %v66, %v226
    %v228 = vpop.f32.mrf.mxu0
    %229 = vmatprep.mubr.f32.mxu0 0.0
    %230 = vmatmul.mubr.f32.gmra.mxu0 %v100
    %v231 = vpop.f32.mrf.mxu0
    %v232 = vadd.f32 %v66, %v231
    %v233 = vpop.f32.mrf.mxu0
    %234 = vmatprep.mubr.f32.mxu0 0.0
    %235 = vmatmul.mubr.f32.gmra.mxu0 %v103
    %v236 = vpop.f32.mrf.mxu0
    %v237 = vadd.f32 %v66, %v236
    %v238 = vpop.f32.mrf.mxu0
    %239 = vmatprep.mubr.f32.mxu0 0.0
    %240 = vmatmul.mubr.f32.gmra.mxu0 %v106
    %v241 = vpop.f32.mrf.mxu0
    %v242 = vadd.f32 %v66, %v241
    %v243 = vpop.f32.mrf.mxu0
    %244 = vmatprep.mubr.f32.mxu0 0.0
    %245 = vmatmul.mubr.f32.gmra.mxu0 %v109
    %v246 = vpop.f32.mrf.mxu0
    %v247 = vadd.f32 %v66, %v246
    %v248 = vpop.f32.mrf.mxu0
    %249 = vdwg.mxu0
    %v250 = vld [vmem:[%s1] sm:$0xff]
    %v251 = vld [vmem:[%s1 + $0x8] sm:$0xff]
    %v252 = vld [vmem:[%s1 + $0x10] sm:$0xff]
    %v253 = vld [vmem:[%s1 + $0x18] sm:$0xff]
    %v254 = vld [vmem:[%s1 + $0x20] sm:$0xff]
    %v255 = vld [vmem:[%s1 + $0x28] sm:$0xff]
    %v256 = vld [vmem:[%s1 + $0x30] sm:$0xff]
    %v257 = vld [vmem:[%s1 + $0x38] sm:$0xff]
    %v258 = vld [vmem:[%s1 + $0x40] sm:$0xff]
    %vm259 = vcmask 916480
    %v261 = vsel %vm259, %v250, 0
    %v264 = vsel %vm259, %v251, 0
    %v267 = vsel %vm259, %v252, 0
    %v270 = vsel %vm259, %v253, 0
    %v273 = vsel %vm259, %v254, 0
    %v276 = vsel %vm259, %v255, 0
    %v279 = vsel %vm259, %v256, 0
    %v282 = vsel %vm259, %v257, 0
    %v285 = vsel %vm259, %v258, 0
    %287 = vmatprep.subr.mxu0 0.0
    %288 = vmatpush1.msra.mxu0 0.0
    %289 = vmatprep.subr.mxu0 0.0
    %290 = vmatpush1.msra.mxu0 0.0
    %291 = vmatprep.subr.mxu0 0.0
    %v292 = vand.u32 %v247, 4294901760
    %293 = vmatpush1.msra.mxu0 %v292
    %294 = vmatprep.subr.mxu0 0.0
    %v295 = vand.u32 %v242, 4294901760
    %296 = vmatpush1.msra.mxu0 %v295
    %297 = vmatprep.subr.mxu0 0.0
    %v298 = vand.u32 %v237, 4294901760
    %299 = vmatpush1.msra.mxu0 %v298
    %300 = vmatprep.subr.mxu0 0.0
    %v301 = vand.u32 %v232, 4294901760
    %302 = vmatpush1.msra.mxu0 %v301
    %303 = vmatprep.subr.mxu0 0.0
    %v304 = vand.u32 %v227, 4294901760
    %305 = vmatpush1.msra.mxu0 %v304
    %306 = vmatprep.subr.mxu0 0.0
    %v307 = vand.u32 %v222, 4294901760
    %308 = vmatpush1.msra.mxu0 %v307
    %309 = vmatprep.subr.mxu0 0.0
    %v310 = vand.u32 %v217, 4294901760
    %311 = vmatpush1.msra.mxu0 %v310
    %312 = vmatprep.subr.mxu0 0.0
    %v313 = vand.u32 %v212, 4294901760
    %314 = vmatpush1.msra.mxu0 %v313
    %315 = vmatprep.subr.mxu0 0.0
    %v316 = vand.u32 %v207, 4294901760
    %317 = vmatpush1.msra.mxu0 %v316
    %318 = vmatprep.subr.mxu0 0.0
    %v319 = vand.u32 %v202, 4294901760
    %320 = vmatpush1.msra.mxu0 %v319
    %321 = vmatprep.subr.mxu0 0.0
    %v322 = vand.u32 %v197, 4294901760
    %323 = vmatpush1.msra.mxu0 %v322
    %324 = vmatprep.subr.mxu0 0.0
    %v325 = vand.u32 %v192, 4294901760
    %326 = vmatpush1.msra.mxu0 %v325
    %327 = vmatprep.subr.mxu0 0.0
    %v328 = vand.u32 %v187, 4294901760
    %329 = vmatpush1.msra.mxu0 %v328
    %330 = vmatprep.subr.mxu0 0.0
    %v331 = vand.u32 %v182, 4294901760
    %332 = vmatpush1.msra.mxu0 %v331
    %333 = vmatprep.subr.mxu0 0.0
    %334 = vmatpush2.msra.mxu0 0.0
    %335 = vmatprep.subr.mxu0 0.0
    %336 = vmatpush2.msra.mxu0 0.0
    %337 = vmatprep.subr.mxu0 0.0
    %338 = vmatpush2.msra.mxu0 0.0
    %339 = vmatprep.subr.mxu0 0.0
    %340 = vmatpush2.msra.mxu0 0.0
    %341 = vmatprep.subr.mxu0 0.0
    %342 = vmatpush2.msra.mxu0 0.0
    %343 = vmatprep.subr.mxu0 0.0
    %344 = vmatpush2.msra.mxu0 0.0
    %345 = vmatprep.subr.mxu0 0.0
    %346 = vmatpush2.msra.mxu0 0.0
    %347 = vmatprep.subr.mxu0 0.0
    %348 = vmatpush2.msra.mxu0 0.0
    %349 = vmatprep.subr.mxu0 0.0
    %350 = vmatpush2.msra.mxu0 0.0
    %351 = vmatprep.subr.mxu0 0.0
    %352 = vmatpush2.msra.mxu0 0.0
    %353 = vmatprep.subr.mxu0 0.0
    %354 = vmatpush2.msra.mxu0 0.0
    %355 = vmatprep.subr.mxu0 0.0
    %356 = vmatpush2.msra.mxu0 0.0
    %357 = vmatprep.subr.mxu0 0.0
    %358 = vmatpush2.msra.mxu0 0.0
    %359 = vmatprep.subr.mxu0 0.0
    %360 = vmatpush2.msra.mxu0 0.0
    %361 = vmatprep.subr.mxu0 0.0
    %362 = vmatpush2.msra.mxu0 0.0
    %363 = vmatprep.subr.mxu0 0.0
    %364 = vmatpush2.msra.mxu0 0.0
    %365 = vmatprep.mubr.f32.mxu0 0.0
    %v366 = vand.u32 %v261, 4294901760
    %v367 = vsub.f32 %v261, %v366
    %v368 = vand.u32 %v367, 4294901760
    %v369 = vsub.f32 %v367, %v368
    %v370 = vand.u32 %v369, 4294901760
    %371 = vmatmul.mubr.f32.gmra.mxu0 %v370
    %v372 = vpop.f32.mrf.mxu0
    %v373 = vadd.f32 0.0, %v372
    %v374 = vpop.f32.mrf.mxu0
    %375 = vmatprep.mubr.f32.mxu0 0.0
    %v376 = vand.u32 %v264, 4294901760
    %v377 = vsub.f32 %v264, %v376
    %v378 = vand.u32 %v377, 4294901760
    %v379 = vsub.f32 %v377, %v378
    %v380 = vand.u32 %v379, 4294901760
    %381 = vmatmul.mubr.f32.gmra.mxu0 %v380
    %v382 = vpop.f32.mrf.mxu0
    %v383 = vadd.f32 0.0, %v382
    %v384 = vpop.f32.mrf.mxu0
    %385 = vmatprep.mubr.f32.mxu0 0.0
    %v386 = vand.u32 %v267, 4294901760
    %v387 = vsub.f32 %v267, %v386
    %v388 = vand.u32 %v387, 4294901760
    %v389 = vsub.f32 %v387, %v388
    %v390 = vand.u32 %v389, 4294901760
    %391 = vmatmul.mubr.f32.gmra.mxu0 %v390
    %v392 = vpop.f32.mrf.mxu0
    %v393 = vadd.f32 0.0, %v392
    %v394 = vpop.f32.mrf.mxu0
    %395 = vmatprep.mubr.f32.mxu0 0.0
    %v396 = vand.u32 %v270, 4294901760
    %v397 = vsub.f32 %v270, %v396
    %v398 = vand.u32 %v397, 4294901760
    %v399 = vsub.f32 %v397, %v398
    %v400 = vand.u32 %v399, 4294901760
    %401 = vmatmul.mubr.f32.gmra.mxu0 %v400
    %v402 = vpop.f32.mrf.mxu0
    %v403 = vadd.f32 0.0, %v402
    %v404 = vpop.f32.mrf.mxu0
    %405 = vmatprep.mubr.f32.mxu0 0.0
    %v406 = vand.u32 %v273, 4294901760
    %v407 = vsub.f32 %v273, %v406
    %v408 = vand.u32 %v407, 4294901760
    %v409 = vsub.f32 %v407, %v408
    %v410 = vand.u32 %v409, 4294901760
    %411 = vmatmul.mubr.f32.gmra.mxu0 %v410
    %v412 = vpop.f32.mrf.mxu0
    %v413 = vadd.f32 0.0, %v412
    %v414 = vpop.f32.mrf.mxu0
    %415 = vmatprep.mubr.f32.mxu0 0.0
    %v416 = vand.u32 %v276, 4294901760
    %v417 = vsub.f32 %v276, %v416
    %v418 = vand.u32 %v417, 4294901760
    %v419 = vsub.f32 %v417, %v418
    %v420 = vand.u32 %v419, 4294901760
    %421 = vmatmul.mubr.f32.gmra.mxu0 %v420
    %v422 = vpop.f32.mrf.mxu0
    %v423 = vadd.f32 0.0, %v422
    %v424 = vpop.f32.mrf.mxu0
    %425 = vmatprep.mubr.f32.mxu0 0.0
    %v426 = vand.u32 %v279, 4294901760
    %v427 = vsub.f32 %v279, %v426
    %v428 = vand.u32 %v427, 4294901760
    %v429 = vsub.f32 %v427, %v428
    %v430 = vand.u32 %v429, 4294901760
    %431 = vmatmul.mubr.f32.gmra.mxu0 %v430
    %v432 = vpop.f32.mrf.mxu0
    %v433 = vadd.f32 0.0, %v432
    %v434 = vpop.f32.mrf.mxu0
    %435 = vmatprep.mubr.f32.mxu0 0.0
    %v436 = vand.u32 %v282, 4294901760
    %v437 = vsub.f32 %v282, %v436
    %v438 = vand.u32 %v437, 4294901760
    %v439 = vsub.f32 %v437, %v438
    %v440 = vand.u32 %v439, 4294901760
    %441 = vmatmul.mubr.f32.gmra.mxu0 %v440
    %v442 = vpop.f32.mrf.mxu0
    %v443 = vadd.f32 0.0, %v442
    %v444 = vpop.f32.mrf.mxu0
    %445 = vmatprep.mubr.f32.mxu0 0.0
    %v446 = vand.u32 %v285, 4294901760
    %v447 = vsub.f32 %v285, %v446
    %v448 = vand.u32 %v447, 4294901760
    %v449 = vsub.f32 %v447, %v448
    %v450 = vand.u32 %v449, 4294901760
    %451 = vmatmul.mubr.f32.gmra.mxu0 %v450
    %v452 = vpop.f32.mrf.mxu0
    %v453 = vadd.f32 0.0, %v452
    %v454 = vpop.f32.mrf.mxu0
    %455 = vdwg.mxu0
    %456 = vmatprep.subr.mxu0 0.0
    %457 = vmatpush1.msra.mxu0 0.0
    %458 = vmatprep.subr.mxu0 0.0
    %459 = vmatpush1.msra.mxu0 0.0
    %460 = vmatprep.subr.mxu0 0.0
    %v461 = vand.u32 %v247, 4294901760
    %v462 = vsub.f32 %v247, %v461
    %v463 = vand.u32 %v462, 4294901760
    %v464 = vsub.f32 %v462, %v463
    %v465 = vand.u32 %v464, 4294901760
    %466 = vmatpush1.msra.mxu0 %v465
    %467 = vmatprep.subr.mxu0 0.0
    %v468 = vand.u32 %v242, 4294901760
    %v469 = vsub.f32 %v242, %v468
    %v470 = vand.u32 %v469, 4294901760
    %v471 = vsub.f32 %v469, %v470
    %v472 = vand.u32 %v471, 4294901760
    %473 = vmatpush1.msra.mxu0 %v472
    %474 = vmatprep.subr.mxu0 0.0
    %v475 = vand.u32 %v237, 4294901760
    %v476 = vsub.f32 %v237, %v475
    %v477 = vand.u32 %v476, 4294901760
    %v478 = vsub.f32 %v476, %v477
    %v479 = vand.u32 %v478, 4294901760
    %480 = vmatpush1.msra.mxu0 %v479
    %481 = vmatprep.subr.mxu0 0.0
    %v482 = vand.u32 %v232, 4294901760
    %v483 = vsub.f32 %v232, %v482
    %v484 = vand.u32 %v483, 4294901760
    %v485 = vsub.f32 %v483, %v484
    %v486 = vand.u32 %v485, 4294901760
    %487 = vmatpush1.msra.mxu0 %v486
    %488 = vmatprep.subr.mxu0 0.0
    %v489 = vand.u32 %v227, 4294901760
    %v490 = vsub.f32 %v227, %v489
    %v491 = vand.u32 %v490, 4294901760
    %v492 = vsub.f32 %v490, %v491
    %v493 = vand.u32 %v492, 4294901760
    %494 = vmatpush1.msra.mxu0 %v493
    %495 = vmatprep.subr.mxu0 0.0
    %v496 = vand.u32 %v222, 4294901760
    %v497 = vsub.f32 %v222, %v496
    %v498 = vand.u32 %v497, 4294901760
    %v499 = vsub.f32 %v497, %v498
    %v500 = vand.u32 %v499, 4294901760
    %501 = vmatpush1.msra.mxu0 %v500
    %502 = vmatprep.subr.mxu0 0.0
    %v503 = vand.u32 %v217, 4294901760
    %v504 = vsub.f32 %v217, %v503
    %v505 = vand.u32 %v504, 4294901760
    %v506 = vsub.f32 %v504, %v505
    %v507 = vand.u32 %v506, 4294901760
    %508 = vmatpush1.msra.mxu0 %v507
    %509 = vmatprep.subr.mxu0 0.0
    %v510 = vand.u32 %v212, 4294901760
    %v511 = vsub.f32 %v212, %v510
    %v512 = vand.u32 %v511, 4294901760
    %v513 = vsub.f32 %v511, %v512
    %v514 = vand.u32 %v513, 4294901760
    %515 = vmatpush1.msra.mxu0 %v514
    %516 = vmatprep.subr.mxu0 0.0
    %v517 = vand.u32 %v207, 4294901760
    %v518 = vsub.f32 %v207, %v517
    %v519 = vand.u32 %v518, 4294901760
    %v520 = vsub.f32 %v518, %v519
    %v521 = vand.u32 %v520, 4294901760
    %522 = vmatpush1.msra.mxu0 %v521
    %523 = vmatprep.subr.mxu0 0.0
    %v524 = vand.u32 %v202, 4294901760
    %v525 = vsub.f32 %v202, %v524
    %v526 = vand.u32 %v525, 4294901760
    %v527 = vsub.f32 %v525, %v526
    %v528 = vand.u32 %v527, 4294901760
    %529 = vmatpush1.msra.mxu0 %v528
    %530 = vmatprep.subr.mxu0 0.0
    %v531 = vand.u32 %v197, 4294901760
    %v532 = vsub.f32 %v197, %v531
    %v533 = vand.u32 %v532, 4294901760
    %v534 = vsub.f32 %v532, %v533
    %v535 = vand.u32 %v534, 4294901760
    %536 = vmatpush1.msra.mxu0 %v535
    %537 = vmatprep.subr.mxu0 0.0
    %v538 = vand.u32 %v192, 4294901760
    %v539 = vsub.f32 %v192, %v538
    %v540 = vand.u32 %v539, 4294901760
    %v541 = vsub.f32 %v539, %v540
    %v542 = vand.u32 %v541, 4294901760
    %543 = vmatpush1.msra.mxu0 %v542
    %544 = vmatprep.subr.mxu0 0.0
    %v545 = vand.u32 %v187, 4294901760
    %v546 = vsub.f32 %v187, %v545
    %v547 = vand.u32 %v546, 4294901760
    %v548 = vsub.f32 %v546, %v547
    %v549 = vand.u32 %v548, 4294901760
    %550 = vmatpush1.msra.mxu0 %v549
    %551 = vmatprep.subr.mxu0 0.0
    %v552 = vand.u32 %v182, 4294901760
    %v553 = vsub.f32 %v182, %v552
    %v554 = vand.u32 %v553, 4294901760
    %v555 = vsub.f32 %v553, %v554
    %v556 = vand.u32 %v555, 4294901760
    %557 = vmatpush1.msra.mxu0 %v556
    %558 = vmatprep.subr.mxu0 0.0
    %559 = vmatpush2.msra.mxu0 0.0
    %560 = vmatprep.subr.mxu0 0.0
    %561 = vmatpush2.msra.mxu0 0.0
    %562 = vmatprep.subr.mxu0 0.0
    %563 = vmatpush2.msra.mxu0 0.0
    %564 = vmatprep.subr.mxu0 0.0
    %565 = vmatpush2.msra.mxu0 0.0
    %566 = vmatprep.subr.mxu0 0.0
    %567 = vmatpush2.msra.mxu0 0.0
    %568 = vmatprep.subr.mxu0 0.0
    %569 = vmatpush2.msra.mxu0 0.0
    %570 = vmatprep.subr.mxu0 0.0
    %571 = vmatpush2.msra.mxu0 0.0
    %572 = vmatprep.subr.mxu0 0.0
    %573 = vmatpush2.msra.mxu0 0.0
    %574 = vmatprep.subr.mxu0 0.0
    %575 = vmatpush2.msra.mxu0 0.0
    %576 = vmatprep.subr.mxu0 0.0
    %577 = vmatpush2.msra.mxu0 0.0
    %578 = vmatprep.subr.mxu0 0.0
    %579 = vmatpush2.msra.mxu0 0.0
    %580 = vmatprep.subr.mxu0 0.0
    %581 = vmatpush2.msra.mxu0 0.0
    %582 = vmatprep.subr.mxu0 0.0
    %583 = vmatpush2.msra.mxu0 0.0
    %584 = vmatprep.subr.mxu0 0.0
    %585 = vmatpush2.msra.mxu0 0.0
    %586 = vmatprep.subr.mxu0 0.0
    %587 = vmatpush2.msra.mxu0 0.0
    %588 = vmatprep.subr.mxu0 0.0
    %589 = vmatpush2.msra.mxu0 0.0
    %590 = vmatprep.mubr.f32.mxu0 0.0
    %v591 = vand.u32 %v261, 4294901760
    %592 = vmatmul.mubr.f32.gmra.mxu0 %v591
    %v593 = vpop.f32.mrf.mxu0
    %v594 = vadd.f32 %v373, %v593
    %v595 = vpop.f32.mrf.mxu0
    %596 = vmatprep.mubr.f32.mxu0 0.0
    %v597 = vand.u32 %v264, 4294901760
    %598 = vmatmul.mubr.f32.gmra.mxu0 %v597
    %v599 = vpop.f32.mrf.mxu0
    %v600 = vadd.f32 %v383, %v599
    %v601 = vpop.f32.mrf.mxu0
    %602 = vmatprep.mubr.f32.mxu0 0.0
    %v603 = vand.u32 %v267, 4294901760
    %604 = vmatmul.mubr.f32.gmra.mxu0 %v603
    %v605 = vpop.f32.mrf.mxu0
    %v606 = vadd.f32 %v393, %v605
    %v607 = vpop.f32.mrf.mxu0
    %608 = vmatprep.mubr.f32.mxu0 0.0
    %v609 = vand.u32 %v270, 4294901760
    %610 = vmatmul.mubr.f32.gmra.mxu0 %v609
    %v611 = vpop.f32.mrf.mxu0
    %v612 = vadd.f32 %v403, %v611
    %v613 = vpop.f32.mrf.mxu0
    %614 = vmatprep.mubr.f32.mxu0 0.0
    %v615 = vand.u32 %v273, 4294901760
    %616 = vmatmul.mubr.f32.gmra.mxu0 %v615
    %v617 = vpop.f32.mrf.mxu0
    %v618 = vadd.f32 %v413, %v617
    %v619 = vpop.f32.mrf.mxu0
    %620 = vmatprep.mubr.f32.mxu0 0.0
    %v621 = vand.u32 %v276, 4294901760
    %622 = vmatmul.mubr.f32.gmra.mxu0 %v621
    %v623 = vpop.f32.mrf.mxu0
    %v624 = vadd.f32 %v423, %v623
    %v625 = vpop.f32.mrf.mxu0
    %626 = vmatprep.mubr.f32.mxu0 0.0
    %v627 = vand.u32 %v279, 4294901760
    %628 = vmatmul.mubr.f32.gmra.mxu0 %v627
    %v629 = vpop.f32.mrf.mxu0
    %v630 = vadd.f32 %v433, %v629
    %v631 = vpop.f32.mrf.mxu0
    %632 = vmatprep.mubr.f32.mxu0 0.0
    %v633 = vand.u32 %v282, 4294901760
    %634 = vmatmul.mubr.f32.gmra.mxu0 %v633
    %v635 = vpop.f32.mrf.mxu0
    %v636 = vadd.f32 %v443, %v635
    %v637 = vpop.f32.mrf.mxu0
    %638 = vmatprep.mubr.f32.mxu0 0.0
    %v639 = vand.u32 %v285, 4294901760
    %640 = vmatmul.mubr.f32.gmra.mxu0 %v639
    %v641 = vpop.f32.mrf.mxu0
    %v642 = vadd.f32 %v453, %v641
    %v643 = vpop.f32.mrf.mxu0
    %644 = vdwg.mxu0
    %645 = vmatprep.subr.mxu0 0.0
    %646 = vmatpush1.msra.mxu0 0.0
    %647 = vmatprep.subr.mxu0 0.0
    %648 = vmatpush1.msra.mxu0 0.0
    %649 = vmatprep.subr.mxu0 0.0
    %v650 = vand.u32 %v247, 4294901760
    %v651 = vsub.f32 %v247, %v650
    %652 = vmatpush1.msra.mxu0 %v651
    %653 = vmatprep.subr.mxu0 0.0
    %v654 = vand.u32 %v242, 4294901760
    %v655 = vsub.f32 %v242, %v654
    %656 = vmatpush1.msra.mxu0 %v655
    %657 = vmatprep.subr.mxu0 0.0
    %v658 = vand.u32 %v237, 4294901760
    %v659 = vsub.f32 %v237, %v658
    %660 = vmatpush1.msra.mxu0 %v659
    %661 = vmatprep.subr.mxu0 0.0
    %v662 = vand.u32 %v232, 4294901760
    %v663 = vsub.f32 %v232, %v662
    %664 = vmatpush1.msra.mxu0 %v663
    %665 = vmatprep.subr.mxu0 0.0
    %v666 = vand.u32 %v227, 4294901760
    %v667 = vsub.f32 %v227, %v666
    %668 = vmatpush1.msra.mxu0 %v667
    %669 = vmatprep.subr.mxu0 0.0
    %v670 = vand.u32 %v222, 4294901760
    %v671 = vsub.f32 %v222, %v670
    %672 = vmatpush1.msra.mxu0 %v671
    %673 = vmatprep.subr.mxu0 0.0
    %v674 = vand.u32 %v217, 4294901760
    %v675 = vsub.f32 %v217, %v674
    %676 = vmatpush1.msra.mxu0 %v675
    %677 = vmatprep.subr.mxu0 0.0
    %v678 = vand.u32 %v212, 4294901760
    %v679 = vsub.f32 %v212, %v678
    %680 = vmatpush1.msra.mxu0 %v679
    %681 = vmatprep.subr.mxu0 0.0
    %v682 = vand.u32 %v207, 4294901760
    %v683 = vsub.f32 %v207, %v682
    %684 = vmatpush1.msra.mxu0 %v683
    %685 = vmatprep.subr.mxu0 0.0
    %v686 = vand.u32 %v202, 4294901760
    %v687 = vsub.f32 %v202, %v686
    %688 = vmatpush1.msra.mxu0 %v687
    %689 = vmatprep.subr.mxu0 0.0
    %v690 = vand.u32 %v197, 4294901760
    %v691 = vsub.f32 %v197, %v690
    %692 = vmatpush1.msra.mxu0 %v691
    %693 = vmatprep.subr.mxu0 0.0
    %v694 = vand.u32 %v192, 4294901760
    %v695 = vsub.f32 %v192, %v694
    %696 = vmatpush1.msra.mxu0 %v695
    %697 = vmatprep.subr.mxu0 0.0
    %v698 = vand.u32 %v187, 4294901760
    %v699 = vsub.f32 %v187, %v698
    %700 = vmatpush1.msra.mxu0 %v699
    %701 = vmatprep.subr.mxu0 0.0
    %v702 = vand.u32 %v182, 4294901760
    %v703 = vsub.f32 %v182, %v702
    %704 = vmatpush1.msra.mxu0 %v703
    %705 = vmatprep.subr.mxu0 0.0
    %706 = vmatpush2.msra.mxu0 0.0
    %707 = vmatprep.subr.mxu0 0.0
    %708 = vmatpush2.msra.mxu0 0.0
    %709 = vmatprep.subr.mxu0 0.0
    %710 = vmatpush2.msra.mxu0 0.0
    %711 = vmatprep.subr.mxu0 0.0
    %712 = vmatpush2.msra.mxu0 0.0
    %713 = vmatprep.subr.mxu0 0.0
    %714 = vmatpush2.msra.mxu0 0.0
    %715 = vmatprep.subr.mxu0 0.0
    %716 = vmatpush2.msra.mxu0 0.0
    %717 = vmatprep.subr.mxu0 0.0
    %718 = vmatpush2.msra.mxu0 0.0
    %719 = vmatprep.subr.mxu0 0.0
    %720 = vmatpush2.msra.mxu0 0.0
    %721 = vmatprep.subr.mxu0 0.0
    %722 = vmatpush2.msra.mxu0 0.0
    %723 = vmatprep.subr.mxu0 0.0
    %724 = vmatpush2.msra.mxu0 0.0
    %725 = vmatprep.subr.mxu0 0.0
    %726 = vmatpush2.msra.mxu0 0.0
    %727 = vmatprep.subr.mxu0 0.0
    %728 = vmatpush2.msra.mxu0 0.0
    %729 = vmatprep.subr.mxu0 0.0
    %730 = vmatpush2.msra.mxu0 0.0
    %731 = vmatprep.subr.mxu0 0.0
    %732 = vmatpush2.msra.mxu0 0.0
    %733 = vmatprep.subr.mxu0 0.0
    %734 = vmatpush2.msra.mxu0 0.0
    %735 = vmatprep.subr.mxu0 0.0
    %736 = vmatpush2.msra.mxu0 0.0
    %737 = vmatprep.mubr.f32.mxu0 0.0
    %v738 = vand.u32 %v261, 4294901760
    %v739 = vsub.f32 %v261, %v738
    %740 = vmatmul.mubr.f32.gmra.mxu0 %v739
    %v741 = vpop.f32.mrf.mxu0
    %v742 = vadd.f32 %v594, %v741
    %v743 = vpop.f32.mrf.mxu0
    %744 = vmatprep.mubr.f32.mxu0 0.0
    %v745 = vand.u32 %v264, 4294901760
    %v746 = vsub.f32 %v264, %v745
    %747 = vmatmul.mubr.f32.gmra.mxu0 %v746
    %v748 = vpop.f32.mrf.mxu0
    %v749 = vadd.f32 %v600, %v748
    %v750 = vpop.f32.mrf.mxu0
    %751 = vmatprep.mubr.f32.mxu0 0.0
    %v752 = vand.u32 %v267, 4294901760
    %v753 = vsub.f32 %v267, %v752
    %754 = vmatmul.mubr.f32.gmra.mxu0 %v753
    %v755 = vpop.f32.mrf.mxu0
    %v756 = vadd.f32 %v606, %v755
    %v757 = vpop.f32.mrf.mxu0
    %758 = vmatprep.mubr.f32.mxu0 0.0
    %v759 = vand.u32 %v270, 4294901760
    %v760 = vsub.f32 %v270, %v759
    %761 = vmatmul.mubr.f32.gmra.mxu0 %v760
    %v762 = vpop.f32.mrf.mxu0
    %v763 = vadd.f32 %v612, %v762
    %v764 = vpop.f32.mrf.mxu0
    %765 = vmatprep.mubr.f32.mxu0 0.0
    %v766 = vand.u32 %v273, 4294901760
    %v767 = vsub.f32 %v273, %v766
    %768 = vmatmul.mubr.f32.gmra.mxu0 %v767
    %v769 = vpop.f32.mrf.mxu0
    %v770 = vadd.f32 %v618, %v769
    %v771 = vpop.f32.mrf.mxu0
    %772 = vmatprep.mubr.f32.mxu0 0.0
    %v773 = vand.u32 %v276, 4294901760
    %v774 = vsub.f32 %v276, %v773
    %775 = vmatmul.mubr.f32.gmra.mxu0 %v774
    %v776 = vpop.f32.mrf.mxu0
    %v777 = vadd.f32 %v624, %v776
    %v778 = vpop.f32.mrf.mxu0
    %779 = vmatprep.mubr.f32.mxu0 0.0
    %v780 = vand.u32 %v279, 4294901760
    %v781 = vsub.f32 %v279, %v780
    %782 = vmatmul.mubr.f32.gmra.mxu0 %v781
    %v783 = vpop.f32.mrf.mxu0
    %v784 = vadd.f32 %v630, %v783
    %v785 = vpop.f32.mrf.mxu0
    %786 = vmatprep.mubr.f32.mxu0 0.0
    %v787 = vand.u32 %v282, 4294901760
    %v788 = vsub.f32 %v282, %v787
    %789 = vmatmul.mubr.f32.gmra.mxu0 %v788
    %v790 = vpop.f32.mrf.mxu0
    %v791 = vadd.f32 %v636, %v790
    %v792 = vpop.f32.mrf.mxu0
    %793 = vmatprep.mubr.f32.mxu0 0.0
    %v794 = vand.u32 %v285, 4294901760
    %v795 = vsub.f32 %v285, %v794
    %796 = vmatmul.mubr.f32.gmra.mxu0 %v795
    %v797 = vpop.f32.mrf.mxu0
    %v798 = vadd.f32 %v642, %v797
    %v799 = vpop.f32.mrf.mxu0
    %800 = vdwg.mxu0
    %801 = vmatprep.subr.mxu0 0.0
    %802 = vmatpush1.msra.mxu0 0.0
    %803 = vmatprep.subr.mxu0 0.0
    %804 = vmatpush1.msra.mxu0 0.0
    %805 = vmatprep.subr.mxu0 0.0
    %v806 = vand.u32 %v247, 4294901760
    %807 = vmatpush1.msra.mxu0 %v806
    %808 = vmatprep.subr.mxu0 0.0
    %v809 = vand.u32 %v242, 4294901760
    %810 = vmatpush1.msra.mxu0 %v809
    %811 = vmatprep.subr.mxu0 0.0
    %v812 = vand.u32 %v237, 4294901760
    %813 = vmatpush1.msra.mxu0 %v812
    %814 = vmatprep.subr.mxu0 0.0
    %v815 = vand.u32 %v232, 4294901760
    %816 = vmatpush1.msra.mxu0 %v815
    %817 = vmatprep.subr.mxu0 0.0
    %v818 = vand.u32 %v227, 4294901760
    %819 = vmatpush1.msra.mxu0 %v818
    %820 = vmatprep.subr.mxu0 0.0
    %v821 = vand.u32 %v222, 4294901760
    %822 = vmatpush1.msra.mxu0 %v821
    %823 = vmatprep.subr.mxu0 0.0
    %v824 = vand.u32 %v217, 4294901760
    %825 = vmatpush1.msra.mxu0 %v824
    %826 = vmatprep.subr.mxu0 0.0
    %v827 = vand.u32 %v212, 4294901760
    %828 = vmatpush1.msra.mxu0 %v827
    %829 = vmatprep.subr.mxu0 0.0
    %v830 = vand.u32 %v207, 4294901760
    %831 = vmatpush1.msra.mxu0 %v830
    %832 = vmatprep.subr.mxu0 0.0
    %v833 = vand.u32 %v202, 4294901760
    %834 = vmatpush1.msra.mxu0 %v833
    %835 = vmatprep.subr.mxu0 0.0
    %v836 = vand.u32 %v197, 4294901760
    %837 = vmatpush1.msra.mxu0 %v836
    %838 = vmatprep.subr.mxu0 0.0
    %v839 = vand.u32 %v192, 4294901760
    %840 = vmatpush1.msra.mxu0 %v839
    %841 = vmatprep.subr.mxu0 0.0
    %v842 = vand.u32 %v187, 4294901760
    %843 = vmatpush1.msra.mxu0 %v842
    %844 = vmatprep.subr.mxu0 0.0
    %v845 = vand.u32 %v182, 4294901760
    %846 = vmatpush1.msra.mxu0 %v845
    %847 = vmatprep.subr.mxu0 0.0
    %848 = vmatpush2.msra.mxu0 0.0
    %849 = vmatprep.subr.mxu0 0.0
    %850 = vmatpush2.msra.mxu0 0.0
    %851 = vmatprep.subr.mxu0 0.0
    %852 = vmatpush2.msra.mxu0 0.0
    %853 = vmatprep.subr.mxu0 0.0
    %854 = vmatpush2.msra.mxu0 0.0
    %855 = vmatprep.subr.mxu0 0.0
    %856 = vmatpush2.msra.mxu0 0.0
    %857 = vmatprep.subr.mxu0 0.0
    %858 = vmatpush2.msra.mxu0 0.0
    %859 = vmatprep.subr.mxu0 0.0
    %860 = vmatpush2.msra.mxu0 0.0
    %861 = vmatprep.subr.mxu0 0.0
    %862 = vmatpush2.msra.mxu0 0.0
    %863 = vmatprep.subr.mxu0 0.0
    %864 = vmatpush2.msra.mxu0 0.0
    %865 = vmatprep.subr.mxu0 0.0
    %866 = vmatpush2.msra.mxu0 0.0
    %867 = vmatprep.subr.mxu0 0.0
    %868 = vmatpush2.msra.mxu0 0.0
    %869 = vmatprep.subr.mxu0 0.0
    %870 = vmatpush2.msra.mxu0 0.0
    %871 = vmatprep.subr.mxu0 0.0
    %872 = vmatpush2.msra.mxu0 0.0
    %873 = vmatprep.subr.mxu0 0.0
    %874 = vmatpush2.msra.mxu0 0.0
    %875 = vmatprep.subr.mxu0 0.0
    %876 = vmatpush2.msra.mxu0 0.0
    %877 = vmatprep.subr.mxu0 0.0
    %878 = vmatpush2.msra.mxu0 0.0
    %879 = vmatprep.mubr.f32.mxu0 0.0
    %v880 = vand.u32 %v261, 4294901760
    %v881 = vsub.f32 %v261, %v880
    %v882 = vand.u32 %v881, 4294901760
    %883 = vmatmul.mubr.f32.gmra.mxu0 %v882
    %v884 = vpop.f32.mrf.mxu0
    %v885 = vadd.f32 %v742, %v884
    %v886 = vpop.f32.mrf.mxu0
    %887 = vmatprep.mubr.f32.mxu0 0.0
    %v888 = vand.u32 %v264, 4294901760
    %v889 = vsub.f32 %v264, %v888
    %v890 = vand.u32 %v889, 4294901760
    %891 = vmatmul.mubr.f32.gmra.mxu0 %v890
    %v892 = vpop.f32.mrf.mxu0
    %v893 = vadd.f32 %v749, %v892
    %v894 = vpop.f32.mrf.mxu0
    %895 = vmatprep.mubr.f32.mxu0 0.0
    %v896 = vand.u32 %v267, 4294901760
    %v897 = vsub.f32 %v267, %v896
    %v898 = vand.u32 %v897, 4294901760
    %899 = vmatmul.mubr.f32.gmra.mxu0 %v898
    %v900 = vpop.f32.mrf.mxu0
    %v901 = vadd.f32 %v756, %v900
    %v902 = vpop.f32.mrf.mxu0
    %903 = vmatprep.mubr.f32.mxu0 0.0
    %v904 = vand.u32 %v270, 4294901760
    %v905 = vsub.f32 %v270, %v904
    %v906 = vand.u32 %v905, 4294901760
    %907 = vmatmul.mubr.f32.gmra.mxu0 %v906
    %v908 = vpop.f32.mrf.mxu0
    %v909 = vadd.f32 %v763, %v908
    %v910 = vpop.f32.mrf.mxu0
    %911 = vmatprep.mubr.f32.mxu0 0.0
    %v912 = vand.u32 %v273, 4294901760
    %v913 = vsub.f32 %v273, %v912
    %v914 = vand.u32 %v913, 4294901760
    %915 = vmatmul.mubr.f32.gmra.mxu0 %v914
    %v916 = vpop.f32.mrf.mxu0
    %v917 = vadd.f32 %v770, %v916
    %v918 = vpop.f32.mrf.mxu0
    %919 = vmatprep.mubr.f32.mxu0 0.0
    %v920 = vand.u32 %v276, 4294901760
    %v921 = vsub.f32 %v276, %v920
    %v922 = vand.u32 %v921, 4294901760
    %923 = vmatmul.mubr.f32.gmra.mxu0 %v922
    %v924 = vpop.f32.mrf.mxu0
    %v925 = vadd.f32 %v777, %v924
    %v926 = vpop.f32.mrf.mxu0
    %927 = vmatprep.mubr.f32.mxu0 0.0
    %v928 = vand.u32 %v279, 4294901760
    %v929 = vsub.f32 %v279, %v928
    %v930 = vand.u32 %v929, 4294901760
    %931 = vmatmul.mubr.f32.gmra.mxu0 %v930
    %v932 = vpop.f32.mrf.mxu0
    %v933 = vadd.f32 %v784, %v932
    %v934 = vpop.f32.mrf.mxu0
    %935 = vmatprep.mubr.f32.mxu0 0.0
    %v936 = vand.u32 %v282, 4294901760
    %v937 = vsub.f32 %v282, %v936
    %v938 = vand.u32 %v937, 4294901760
    %939 = vmatmul.mubr.f32.gmra.mxu0 %v938
    %v940 = vpop.f32.mrf.mxu0
    %v941 = vadd.f32 %v791, %v940
    %v942 = vpop.f32.mrf.mxu0
    %943 = vmatprep.mubr.f32.mxu0 0.0
    %v944 = vand.u32 %v285, 4294901760
    %v945 = vsub.f32 %v285, %v944
    %v946 = vand.u32 %v945, 4294901760
    %947 = vmatmul.mubr.f32.gmra.mxu0 %v946
    %v948 = vpop.f32.mrf.mxu0
    %v949 = vadd.f32 %v798, %v948
    %v950 = vpop.f32.mrf.mxu0
    %951 = vdwg.mxu0
    %952 = vmatprep.subr.mxu0 0.0
    %953 = vmatpush1.msra.mxu0 0.0
    %954 = vmatprep.subr.mxu0 0.0
    %955 = vmatpush1.msra.mxu0 0.0
    %956 = vmatprep.subr.mxu0 0.0
    %v957 = vand.u32 %v247, 4294901760
    %v958 = vsub.f32 %v247, %v957
    %v959 = vand.u32 %v958, 4294901760
    %960 = vmatpush1.msra.mxu0 %v959
    %961 = vmatprep.subr.mxu0 0.0
    %v962 = vand.u32 %v242, 4294901760
    %v963 = vsub.f32 %v242, %v962
    %v964 = vand.u32 %v963, 4294901760
    %965 = vmatpush1.msra.mxu0 %v964
    %966 = vmatprep.subr.mxu0 0.0
    %v967 = vand.u32 %v237, 4294901760
    %v968 = vsub.f32 %v237, %v967
    %v969 = vand.u32 %v968, 4294901760
    %970 = vmatpush1.msra.mxu0 %v969
    %971 = vmatprep.subr.mxu0 0.0
    %v972 = vand.u32 %v232, 4294901760
    %v973 = vsub.f32 %v232, %v972
    %v974 = vand.u32 %v973, 4294901760
    %975 = vmatpush1.msra.mxu0 %v974
    %976 = vmatprep.subr.mxu0 0.0
    %v977 = vand.u32 %v227, 4294901760
    %v978 = vsub.f32 %v227, %v977
    %v979 = vand.u32 %v978, 4294901760
    %980 = vmatpush1.msra.mxu0 %v979
    %981 = vmatprep.subr.mxu0 0.0
    %v982 = vand.u32 %v222, 4294901760
    %v983 = vsub.f32 %v222, %v982
    %v984 = vand.u32 %v983, 4294901760
    %985 = vmatpush1.msra.mxu0 %v984
    %986 = vmatprep.subr.mxu0 0.0
    %v987 = vand.u32 %v217, 4294901760
    %v988 = vsub.f32 %v217, %v987
    %v989 = vand.u32 %v988, 4294901760
    %990 = vmatpush1.msra.mxu0 %v989
    %991 = vmatprep.subr.mxu0 0.0
    %v992 = vand.u32 %v212, 4294901760
    %v993 = vsub.f32 %v212, %v992
    %v994 = vand.u32 %v993, 4294901760
    %995 = vmatpush1.msra.mxu0 %v994
    %996 = vmatprep.subr.mxu0 0.0
    %v997 = vand.u32 %v207, 4294901760
    %v998 = vsub.f32 %v207, %v997
    %v999 = vand.u32 %v998, 4294901760
    %1000 = vmatpush1.msra.mxu0 %v999
    %1001 = vmatprep.subr.mxu0 0.0
    %v1002 = vand.u32 %v202, 4294901760
    %v1003 = vsub.f32 %v202, %v1002
    %v1004 = vand.u32 %v1003, 4294901760
    %1005 = vmatpush1.msra.mxu0 %v1004
    %1006 = vmatprep.subr.mxu0 0.0
    %v1007 = vand.u32 %v197, 4294901760
    %v1008 = vsub.f32 %v197, %v1007
    %v1009 = vand.u32 %v1008, 4294901760
    %1010 = vmatpush1.msra.mxu0 %v1009
    %1011 = vmatprep.subr.mxu0 0.0
    %v1012 = vand.u32 %v192, 4294901760
    %v1013 = vsub.f32 %v192, %v1012
    %v1014 = vand.u32 %v1013, 4294901760
    %1015 = vmatpush1.msra.mxu0 %v1014
    %1016 = vmatprep.subr.mxu0 0.0
    %v1017 = vand.u32 %v187, 4294901760
    %v1018 = vsub.f32 %v187, %v1017
    %v1019 = vand.u32 %v1018, 4294901760
    %1020 = vmatpush1.msra.mxu0 %v1019
    %1021 = vmatprep.subr.mxu0 0.0
    %v1022 = vand.u32 %v182, 4294901760
    %v1023 = vsub.f32 %v182, %v1022
    %v1024 = vand.u32 %v1023, 4294901760
    %1025 = vmatpush1.msra.mxu0 %v1024
    %1026 = vmatprep.subr.mxu0 0.0
    %1027 = vmatpush2.msra.mxu0 0.0
    %1028 = vmatprep.subr.mxu0 0.0
    %1029 = vmatpush2.msra.mxu0 0.0
    %1030 = vmatprep.subr.mxu0 0.0
    %1031 = vmatpush2.msra.mxu0 0.0
    %1032 = vmatprep.subr.mxu0 0.0
    %1033 = vmatpush2.msra.mxu0 0.0
    %1034 = vmatprep.subr.mxu0 0.0
    %1035 = vmatpush2.msra.mxu0 0.0
    %1036 = vmatprep.subr.mxu0 0.0
    %1037 = vmatpush2.msra.mxu0 0.0
    %1038 = vmatprep.subr.mxu0 0.0
    %1039 = vmatpush2.msra.mxu0 0.0
    %1040 = vmatprep.subr.mxu0 0.0
    %1041 = vmatpush2.msra.mxu0 0.0
    %1042 = vmatprep.subr.mxu0 0.0
    %1043 = vmatpush2.msra.mxu0 0.0
    %1044 = vmatprep.subr.mxu0 0.0
    %1045 = vmatpush2.msra.mxu0 0.0
    %1046 = vmatprep.subr.mxu0 0.0
    %1047 = vmatpush2.msra.mxu0 0.0
    %1048 = vmatprep.subr.mxu0 0.0
    %1049 = vmatpush2.msra.mxu0 0.0
    %1050 = vmatprep.subr.mxu0 0.0
    %1051 = vmatpush2.msra.mxu0 0.0
    %1052 = vmatprep.subr.mxu0 0.0
    %1053 = vmatpush2.msra.mxu0 0.0
    %1054 = vmatprep.subr.mxu0 0.0
    %1055 = vmatpush2.msra.mxu0 0.0
    %1056 = vmatprep.subr.mxu0 0.0
    %1057 = vmatpush2.msra.mxu0 0.0
    %1058 = vmatprep.mubr.f32.mxu0 0.0
    %v1059 = vand.u32 %v261, 4294901760
    %1060 = vmatmul.mubr.f32.gmra.mxu0 %v1059
    %v1061 = vpop.f32.mrf.mxu0
    %v1062 = vadd.f32 %v885, %v1061
    %v1063 = vpop.f32.mrf.mxu0
    %1064 = vmatprep.mubr.f32.mxu0 0.0
    %v1065 = vand.u32 %v264, 4294901760
    %1066 = vmatmul.mubr.f32.gmra.mxu0 %v1065
    %v1067 = vpop.f32.mrf.mxu0
    %v1068 = vadd.f32 %v893, %v1067
    %v1069 = vpop.f32.mrf.mxu0
    %1070 = vmatprep.mubr.f32.mxu0 0.0
    %v1071 = vand.u32 %v267, 4294901760
    %1072 = vmatmul.mubr.f32.gmra.mxu0 %v1071
    %v1073 = vpop.f32.mrf.mxu0
    %v1074 = vadd.f32 %v901, %v1073
    %v1075 = vpop.f32.mrf.mxu0
    %1076 = vmatprep.mubr.f32.mxu0 0.0
    %v1077 = vand.u32 %v270, 4294901760
    %1078 = vmatmul.mubr.f32.gmra.mxu0 %v1077
    %v1079 = vpop.f32.mrf.mxu0
    %v1080 = vadd.f32 %v909, %v1079
    %v1081 = vpop.f32.mrf.mxu0
    %1082 = vmatprep.mubr.f32.mxu0 0.0
    %v1083 = vand.u32 %v273, 4294901760
    %1084 = vmatmul.mubr.f32.gmra.mxu0 %v1083
    %v1085 = vpop.f32.mrf.mxu0
    %v1086 = vadd.f32 %v917, %v1085
    %v1087 = vpop.f32.mrf.mxu0
    %1088 = vmatprep.mubr.f32.mxu0 0.0
    %v1089 = vand.u32 %v276, 4294901760
    %1090 = vmatmul.mubr.f32.gmra.mxu0 %v1089
    %v1091 = vpop.f32.mrf.mxu0
    %v1092 = vadd.f32 %v925, %v1091
    %v1093 = vpop.f32.mrf.mxu0
    %1094 = vmatprep.mubr.f32.mxu0 0.0
    %v1095 = vand.u32 %v279, 4294901760
    %1096 = vmatmul.mubr.f32.gmra.mxu0 %v1095
    %v1097 = vpop.f32.mrf.mxu0
    %v1098 = vadd.f32 %v933, %v1097
    %v1099 = vpop.f32.mrf.mxu0
    %1100 = vmatprep.mubr.f32.mxu0 0.0
    %v1101 = vand.u32 %v282, 4294901760
    %1102 = vmatmul.mubr.f32.gmra.mxu0 %v1101
    %v1103 = vpop.f32.mrf.mxu0
    %v1104 = vadd.f32 %v941, %v1103
    %v1105 = vpop.f32.mrf.mxu0
    %1106 = vmatprep.mubr.f32.mxu0 0.0
    %v1107 = vand.u32 %v285, 4294901760
    %1108 = vmatmul.mubr.f32.gmra.mxu0 %v1107
    %v1109 = vpop.f32.mrf.mxu0
    %v1110 = vadd.f32 %v949, %v1109
    %v1111 = vpop.f32.mrf.mxu0
    %1112 = vdwg.mxu0
    %1113 = vmatprep.subr.mxu0 0.0
    %1114 = vmatpush1.msra.mxu0 0.0
    %1115 = vmatprep.subr.mxu0 0.0
    %1116 = vmatpush1.msra.mxu0 0.0
    %1117 = vmatprep.subr.mxu0 0.0
    %v1118 = vand.u32 %v247, 4294901760
    %1119 = vmatpush1.msra.mxu0 %v1118
    %1120 = vmatprep.subr.mxu0 0.0
    %v1121 = vand.u32 %v242, 4294901760
    %1122 = vmatpush1.msra.mxu0 %v1121
    %1123 = vmatprep.subr.mxu0 0.0
    %v1124 = vand.u32 %v237, 4294901760
    %1125 = vmatpush1.msra.mxu0 %v1124
    %1126 = vmatprep.subr.mxu0 0.0
    %v1127 = vand.u32 %v232, 4294901760
    %1128 = vmatpush1.msra.mxu0 %v1127
    %1129 = vmatprep.subr.mxu0 0.0
    %v1130 = vand.u32 %v227, 4294901760
    %1131 = vmatpush1.msra.mxu0 %v1130
    %1132 = vmatprep.subr.mxu0 0.0
    %v1133 = vand.u32 %v222, 4294901760
    %1134 = vmatpush1.msra.mxu0 %v1133
    %1135 = vmatprep.subr.mxu0 0.0
    %v1136 = vand.u32 %v217, 4294901760
    %1137 = vmatpush1.msra.mxu0 %v1136
    %1138 = vmatprep.subr.mxu0 0.0
    %v1139 = vand.u32 %v212, 4294901760
    %1140 = vmatpush1.msra.mxu0 %v1139
    %1141 = vmatprep.subr.mxu0 0.0
    %v1142 = vand.u32 %v207, 4294901760
    %1143 = vmatpush1.msra.mxu0 %v1142
    %1144 = vmatprep.subr.mxu0 0.0
    %v1145 = vand.u32 %v202, 4294901760
    %1146 = vmatpush1.msra.mxu0 %v1145
    %1147 = vmatprep.subr.mxu0 0.0
    %v1148 = vand.u32 %v197, 4294901760
    %1149 = vmatpush1.msra.mxu0 %v1148
    %1150 = vmatprep.subr.mxu0 0.0
    %v1151 = vand.u32 %v192, 4294901760
    %1152 = vmatpush1.msra.mxu0 %v1151
    %1153 = vmatprep.subr.mxu0 0.0
    %v1154 = vand.u32 %v187, 4294901760
    %1155 = vmatpush1.msra.mxu0 %v1154
    %1156 = vmatprep.subr.mxu0 0.0
    %v1157 = vand.u32 %v182, 4294901760
    %1158 = vmatpush1.msra.mxu0 %v1157
    %1159 = vmatprep.subr.mxu0 0.0
    %1160 = vmatpush2.msra.mxu0 0.0
    %1161 = vmatprep.subr.mxu0 0.0
    %1162 = vmatpush2.msra.mxu0 0.0
    %1163 = vmatprep.subr.mxu0 0.0
    %1164 = vmatpush2.msra.mxu0 0.0
    %1165 = vmatprep.subr.mxu0 0.0
    %1166 = vmatpush2.msra.mxu0 0.0
    %1167 = vmatprep.subr.mxu0 0.0
    %1168 = vmatpush2.msra.mxu0 0.0
    %1169 = vmatprep.subr.mxu0 0.0
    %1170 = vmatpush2.msra.mxu0 0.0
    %1171 = vmatprep.subr.mxu0 0.0
    %1172 = vmatpush2.msra.mxu0 0.0
    %1173 = vmatprep.subr.mxu0 0.0
    %1174 = vmatpush2.msra.mxu0 0.0
    %1175 = vmatprep.subr.mxu0 0.0
    %1176 = vmatpush2.msra.mxu0 0.0
    %1177 = vmatprep.subr.mxu0 0.0
    %1178 = vmatpush2.msra.mxu0 0.0
    %1179 = vmatprep.subr.mxu0 0.0
    %1180 = vmatpush2.msra.mxu0 0.0
    %1181 = vmatprep.subr.mxu0 0.0
    %1182 = vmatpush2.msra.mxu0 0.0
    %1183 = vmatprep.subr.mxu0 0.0
    %1184 = vmatpush2.msra.mxu0 0.0
    %1185 = vmatprep.subr.mxu0 0.0
    %1186 = vmatpush2.msra.mxu0 0.0
    %1187 = vmatprep.subr.mxu0 0.0
    %1188 = vmatpush2.msra.mxu0 0.0
    %1189 = vmatprep.subr.mxu0 0.0
    %1190 = vmatpush2.msra.mxu0 0.0
    %1191 = vmatprep.mubr.f32.mxu0 0.0
    %v1192 = vand.u32 %v261, 4294901760
    %1193 = vmatmul.mubr.f32.gmra.mxu0 %v1192
    %v1194 = vpop.f32.mrf.mxu0
    %v1195 = vadd.f32 %v1062, %v1194
    %v1196 = vpop.f32.mrf.mxu0
    %1197 = vmatprep.mubr.f32.mxu0 0.0
    %v1198 = vand.u32 %v264, 4294901760
    %1199 = vmatmul.mubr.f32.gmra.mxu0 %v1198
    %v1200 = vpop.f32.mrf.mxu0
    %v1201 = vadd.f32 %v1068, %v1200
    %v1202 = vpop.f32.mrf.mxu0
    %1203 = vmatprep.mubr.f32.mxu0 0.0
    %v1204 = vand.u32 %v267, 4294901760
    %1205 = vmatmul.mubr.f32.gmra.mxu0 %v1204
    %v1206 = vpop.f32.mrf.mxu0
    %v1207 = vadd.f32 %v1074, %v1206
    %v1208 = vpop.f32.mrf.mxu0
    %1209 = vmatprep.mubr.f32.mxu0 0.0
    %v1210 = vand.u32 %v270, 4294901760
    %1211 = vmatmul.mubr.f32.gmra.mxu0 %v1210
    %v1212 = vpop.f32.mrf.mxu0
    %v1213 = vadd.f32 %v1080, %v1212
    %v1214 = vpop.f32.mrf.mxu0
    %1215 = vmatprep.mubr.f32.mxu0 0.0
    %v1216 = vand.u32 %v273, 4294901760
    %1217 = vmatmul.mubr.f32.gmra.mxu0 %v1216
    %v1218 = vpop.f32.mrf.mxu0
    %v1219 = vadd.f32 %v1086, %v1218
    %v1220 = vpop.f32.mrf.mxu0
    %1221 = vmatprep.mubr.f32.mxu0 0.0
    %v1222 = vand.u32 %v276, 4294901760
    %1223 = vmatmul.mubr.f32.gmra.mxu0 %v1222
    %v1224 = vpop.f32.mrf.mxu0
    %v1225 = vadd.f32 %v1092, %v1224
    %v1226 = vpop.f32.mrf.mxu0
    %1227 = vmatprep.mubr.f32.mxu0 0.0
    %v1228 = vand.u32 %v279, 4294901760
    %1229 = vmatmul.mubr.f32.gmra.mxu0 %v1228
    %v1230 = vpop.f32.mrf.mxu0
    %v1231 = vadd.f32 %v1098, %v1230
    %v1232 = vpop.f32.mrf.mxu0
    %1233 = vmatprep.mubr.f32.mxu0 0.0
    %v1234 = vand.u32 %v282, 4294901760
    %1235 = vmatmul.mubr.f32.gmra.mxu0 %v1234
    %v1236 = vpop.f32.mrf.mxu0
    %v1237 = vadd.f32 %v1104, %v1236
    %v1238 = vpop.f32.mrf.mxu0
    %1239 = vmatprep.mubr.f32.mxu0 0.0
    %v1240 = vand.u32 %v285, 4294901760
    %1241 = vmatmul.mubr.f32.gmra.mxu0 %v1240
    %v1242 = vpop.f32.mrf.mxu0
    %v1243 = vadd.f32 %v1110, %v1242
    %v1244 = vpop.f32.mrf.mxu0
    %1245 = vdwg.mxu0
    %s1246 = scalar_lea.vmem %s1, 72
    %v1247 = vld [vmem:[%s1246] sm:$0xff]
    %v1248 = vld [vmem:[%s1246 + $0x8] sm:$0xff]
    %v1249 = vld [vmem:[%s1246 + $0x10] sm:$0xff]
    %v1250 = vld [vmem:[%s1246 + $0x18] sm:$0xff]
    %v1251 = vld [vmem:[%s1246 + $0x20] sm:$0xff]
    %v1252 = vld [vmem:[%s1246 + $0x28] sm:$0xff]
    %v1253 = vld [vmem:[%s1246 + $0x30] sm:$0xff]
    %v1254 = vld [vmem:[%s1246 + $0x38] sm:$0xff]
    %v1255 = vld [vmem:[%s1246 + $0x40] sm:$0xff]
    %v1257 = vsel %vm259, %v1247, 0
    %v1260 = vsel %vm259, %v1248, 0
    %v1263 = vsel %vm259, %v1249, 0
    %v1266 = vsel %vm259, %v1250, 0
    %v1269 = vsel %vm259, %v1251, 0
    %v1272 = vsel %vm259, %v1252, 0
    %v1275 = vsel %vm259, %v1253, 0
    %v1278 = vsel %vm259, %v1254, 0
    %v1281 = vsel %vm259, %v1255, 0
    %1283 = vmatprep.subr.mxu0 0.0
    %1284 = vmatpush1.msra.mxu0 0.0
    %1285 = vmatprep.subr.mxu0 0.0
    %1286 = vmatpush1.msra.mxu0 0.0
    %1287 = vmatprep.subr.mxu0 0.0
    %v1288 = vand.u32 %v247, 4294901760
    %1289 = vmatpush1.msra.mxu0 %v1288
    %1290 = vmatprep.subr.mxu0 0.0
    %v1291 = vand.u32 %v242, 4294901760
    %1292 = vmatpush1.msra.mxu0 %v1291
    %1293 = vmatprep.subr.mxu0 0.0
    %v1294 = vand.u32 %v237, 4294901760
    %1295 = vmatpush1.msra.mxu0 %v1294
    %1296 = vmatprep.subr.mxu0 0.0
    %v1297 = vand.u32 %v232, 4294901760
    %1298 = vmatpush1.msra.mxu0 %v1297
    %1299 = vmatprep.subr.mxu0 0.0
    %v1300 = vand.u32 %v227, 4294901760
    %1301 = vmatpush1.msra.mxu0 %v1300
    %1302 = vmatprep.subr.mxu0 0.0
    %v1303 = vand.u32 %v222, 4294901760
    %1304 = vmatpush1.msra.mxu0 %v1303
    %1305 = vmatprep.subr.mxu0 0.0
    %v1306 = vand.u32 %v217, 4294901760
    %1307 = vmatpush1.msra.mxu0 %v1306
    %1308 = vmatprep.subr.mxu0 0.0
    %v1309 = vand.u32 %v212, 4294901760
    %1310 = vmatpush1.msra.mxu0 %v1309
    %1311 = vmatprep.subr.mxu0 0.0
    %v1312 = vand.u32 %v207, 4294901760
    %1313 = vmatpush1.msra.mxu0 %v1312
    %1314 = vmatprep.subr.mxu0 0.0
    %v1315 = vand.u32 %v202, 4294901760
    %1316 = vmatpush1.msra.mxu0 %v1315
    %1317 = vmatprep.subr.mxu0 0.0
    %v1318 = vand.u32 %v197, 4294901760
    %1319 = vmatpush1.msra.mxu0 %v1318
    %1320 = vmatprep.subr.mxu0 0.0
    %v1321 = vand.u32 %v192, 4294901760
    %1322 = vmatpush1.msra.mxu0 %v1321
    %1323 = vmatprep.subr.mxu0 0.0
    %v1324 = vand.u32 %v187, 4294901760
    %1325 = vmatpush1.msra.mxu0 %v1324
    %1326 = vmatprep.subr.mxu0 0.0
    %v1327 = vand.u32 %v182, 4294901760
    %1328 = vmatpush1.msra.mxu0 %v1327
    %1329 = vmatprep.subr.mxu0 0.0
    %1330 = vmatpush2.msra.mxu0 0.0
    %1331 = vmatprep.subr.mxu0 0.0
    %1332 = vmatpush2.msra.mxu0 0.0
    %1333 = vmatprep.subr.mxu0 0.0
    %1334 = vmatpush2.msra.mxu0 0.0
    %1335 = vmatprep.subr.mxu0 0.0
    %1336 = vmatpush2.msra.mxu0 0.0
    %1337 = vmatprep.subr.mxu0 0.0
    %1338 = vmatpush2.msra.mxu0 0.0
    %1339 = vmatprep.subr.mxu0 0.0
    %1340 = vmatpush2.msra.mxu0 0.0
    %1341 = vmatprep.subr.mxu0 0.0
    %1342 = vmatpush2.msra.mxu0 0.0
    %1343 = vmatprep.subr.mxu0 0.0
    %1344 = vmatpush2.msra.mxu0 0.0
    %1345 = vmatprep.subr.mxu0 0.0
    %1346 = vmatpush2.msra.mxu0 0.0
    %1347 = vmatprep.subr.mxu0 0.0
    %1348 = vmatpush2.msra.mxu0 0.0
    %1349 = vmatprep.subr.mxu0 0.0
    %1350 = vmatpush2.msra.mxu0 0.0
    %1351 = vmatprep.subr.mxu0 0.0
    %1352 = vmatpush2.msra.mxu0 0.0
    %1353 = vmatprep.subr.mxu0 0.0
    %1354 = vmatpush2.msra.mxu0 0.0
    %1355 = vmatprep.subr.mxu0 0.0
    %1356 = vmatpush2.msra.mxu0 0.0
    %1357 = vmatprep.subr.mxu0 0.0
    %1358 = vmatpush2.msra.mxu0 0.0
    %1359 = vmatprep.subr.mxu0 0.0
    %1360 = vmatpush2.msra.mxu0 0.0
    %1361 = vmatprep.mubr.f32.mxu0 0.0
    %v1362 = vand.u32 %v1257, 4294901760
    %v1363 = vsub.f32 %v1257, %v1362
    %v1364 = vand.u32 %v1363, 4294901760
    %v1365 = vsub.f32 %v1363, %v1364
    %v1366 = vand.u32 %v1365, 4294901760
    %1367 = vmatmul.mubr.f32.gmra.mxu0 %v1366
    %v1368 = vpop.f32.mrf.mxu0
    %v1369 = vadd.f32 0.0, %v1368
    %v1370 = vpop.f32.mrf.mxu0
    %1371 = vmatprep.mubr.f32.mxu0 0.0
    %v1372 = vand.u32 %v1260, 4294901760
    %v1373 = vsub.f32 %v1260, %v1372
    %v1374 = vand.u32 %v1373, 4294901760
    %v1375 = vsub.f32 %v1373, %v1374
    %v1376 = vand.u32 %v1375, 4294901760
    %1377 = vmatmul.mubr.f32.gmra.mxu0 %v1376
    %v1378 = vpop.f32.mrf.mxu0
    %v1379 = vadd.f32 0.0, %v1378
    %v1380 = vpop.f32.mrf.mxu0
    %1381 = vmatprep.mubr.f32.mxu0 0.0
    %v1382 = vand.u32 %v1263, 4294901760
    %v1383 = vsub.f32 %v1263, %v1382
    %v1384 = vand.u32 %v1383, 4294901760
    %v1385 = vsub.f32 %v1383, %v1384
    %v1386 = vand.u32 %v1385, 4294901760
    %1387 = vmatmul.mubr.f32.gmra.mxu0 %v1386
    %v1388 = vpop.f32.mrf.mxu0
    %v1389 = vadd.f32 0.0, %v1388
    %v1390 = vpop.f32.mrf.mxu0
    %1391 = vmatprep.mubr.f32.mxu0 0.0
    %v1392 = vand.u32 %v1266, 4294901760
    %v1393 = vsub.f32 %v1266, %v1392
    %v1394 = vand.u32 %v1393, 4294901760
    %v1395 = vsub.f32 %v1393, %v1394
    %v1396 = vand.u32 %v1395, 4294901760
    %1397 = vmatmul.mubr.f32.gmra.mxu0 %v1396
    %v1398 = vpop.f32.mrf.mxu0
    %v1399 = vadd.f32 0.0, %v1398
    %v1400 = vpop.f32.mrf.mxu0
    %1401 = vmatprep.mubr.f32.mxu0 0.0
    %v1402 = vand.u32 %v1269, 4294901760
    %v1403 = vsub.f32 %v1269, %v1402
    %v1404 = vand.u32 %v1403, 4294901760
    %v1405 = vsub.f32 %v1403, %v1404
    %v1406 = vand.u32 %v1405, 4294901760
    %1407 = vmatmul.mubr.f32.gmra.mxu0 %v1406
    %v1408 = vpop.f32.mrf.mxu0
    %v1409 = vadd.f32 0.0, %v1408
    %v1410 = vpop.f32.mrf.mxu0
    %1411 = vmatprep.mubr.f32.mxu0 0.0
    %v1412 = vand.u32 %v1272, 4294901760
    %v1413 = vsub.f32 %v1272, %v1412
    %v1414 = vand.u32 %v1413, 4294901760
    %v1415 = vsub.f32 %v1413, %v1414
    %v1416 = vand.u32 %v1415, 4294901760
    %1417 = vmatmul.mubr.f32.gmra.mxu0 %v1416
    %v1418 = vpop.f32.mrf.mxu0
    %v1419 = vadd.f32 0.0, %v1418
    %v1420 = vpop.f32.mrf.mxu0
    %1421 = vmatprep.mubr.f32.mxu0 0.0
    %v1422 = vand.u32 %v1275, 4294901760
    %v1423 = vsub.f32 %v1275, %v1422
    %v1424 = vand.u32 %v1423, 4294901760
    %v1425 = vsub.f32 %v1423, %v1424
    %v1426 = vand.u32 %v1425, 4294901760
    %1427 = vmatmul.mubr.f32.gmra.mxu0 %v1426
    %v1428 = vpop.f32.mrf.mxu0
    %v1429 = vadd.f32 0.0, %v1428
    %v1430 = vpop.f32.mrf.mxu0
    %1431 = vmatprep.mubr.f32.mxu0 0.0
    %v1432 = vand.u32 %v1278, 4294901760
    %v1433 = vsub.f32 %v1278, %v1432
    %v1434 = vand.u32 %v1433, 4294901760
    %v1435 = vsub.f32 %v1433, %v1434
    %v1436 = vand.u32 %v1435, 4294901760
    %1437 = vmatmul.mubr.f32.gmra.mxu0 %v1436
    %v1438 = vpop.f32.mrf.mxu0
    %v1439 = vadd.f32 0.0, %v1438
    %v1440 = vpop.f32.mrf.mxu0
    %1441 = vmatprep.mubr.f32.mxu0 0.0
    %v1442 = vand.u32 %v1281, 4294901760
    %v1443 = vsub.f32 %v1281, %v1442
    %v1444 = vand.u32 %v1443, 4294901760
    %v1445 = vsub.f32 %v1443, %v1444
    %v1446 = vand.u32 %v1445, 4294901760
    %1447 = vmatmul.mubr.f32.gmra.mxu0 %v1446
    %v1448 = vpop.f32.mrf.mxu0
    %v1449 = vadd.f32 0.0, %v1448
    %v1450 = vpop.f32.mrf.mxu0
    %1451 = vdwg.mxu0
    %1452 = vmatprep.subr.mxu0 0.0
    %1453 = vmatpush1.msra.mxu0 0.0
    %1454 = vmatprep.subr.mxu0 0.0
    %1455 = vmatpush1.msra.mxu0 0.0
    %1456 = vmatprep.subr.mxu0 0.0
    %v1457 = vand.u32 %v247, 4294901760
    %v1458 = vsub.f32 %v247, %v1457
    %v1459 = vand.u32 %v1458, 4294901760
    %v1460 = vsub.f32 %v1458, %v1459
    %v1461 = vand.u32 %v1460, 4294901760
    %1462 = vmatpush1.msra.mxu0 %v1461
    %1463 = vmatprep.subr.mxu0 0.0
    %v1464 = vand.u32 %v242, 4294901760
    %v1465 = vsub.f32 %v242, %v1464
    %v1466 = vand.u32 %v1465, 4294901760
    %v1467 = vsub.f32 %v1465, %v1466
    %v1468 = vand.u32 %v1467, 4294901760
    %1469 = vmatpush1.msra.mxu0 %v1468
    %1470 = vmatprep.subr.mxu0 0.0
    %v1471 = vand.u32 %v237, 4294901760
    %v1472 = vsub.f32 %v237, %v1471
    %v1473 = vand.u32 %v1472, 4294901760
    %v1474 = vsub.f32 %v1472, %v1473
    %v1475 = vand.u32 %v1474, 4294901760
    %1476 = vmatpush1.msra.mxu0 %v1475
    %1477 = vmatprep.subr.mxu0 0.0
    %v1478 = vand.u32 %v232, 4294901760
    %v1479 = vsub.f32 %v232, %v1478
    %v1480 = vand.u32 %v1479, 4294901760
    %v1481 = vsub.f32 %v1479, %v1480
    %v1482 = vand.u32 %v1481, 4294901760
    %1483 = vmatpush1.msra.mxu0 %v1482
    %1484 = vmatprep.subr.mxu0 0.0
    %v1485 = vand.u32 %v227, 4294901760
    %v1486 = vsub.f32 %v227, %v1485
    %v1487 = vand.u32 %v1486, 4294901760
    %v1488 = vsub.f32 %v1486, %v1487
    %v1489 = vand.u32 %v1488, 4294901760
    %1490 = vmatpush1.msra.mxu0 %v1489
    %1491 = vmatprep.subr.mxu0 0.0
    %v1492 = vand.u32 %v222, 4294901760
    %v1493 = vsub.f32 %v222, %v1492
    %v1494 = vand.u32 %v1493, 4294901760
    %v1495 = vsub.f32 %v1493, %v1494
    %v1496 = vand.u32 %v1495, 4294901760
    %1497 = vmatpush1.msra.mxu0 %v1496
    %1498 = vmatprep.subr.mxu0 0.0
    %v1499 = vand.u32 %v217, 4294901760
    %v1500 = vsub.f32 %v217, %v1499
    %v1501 = vand.u32 %v1500, 4294901760
    %v1502 = vsub.f32 %v1500, %v1501
    %v1503 = vand.u32 %v1502, 4294901760
    %1504 = vmatpush1.msra.mxu0 %v1503
    %1505 = vmatprep.subr.mxu0 0.0
    %v1506 = vand.u32 %v212, 4294901760
    %v1507 = vsub.f32 %v212, %v1506
    %v1508 = vand.u32 %v1507, 4294901760
    %v1509 = vsub.f32 %v1507, %v1508
    %v1510 = vand.u32 %v1509, 4294901760
    %1511 = vmatpush1.msra.mxu0 %v1510
    %1512 = vmatprep.subr.mxu0 0.0
    %v1513 = vand.u32 %v207, 4294901760
    %v1514 = vsub.f32 %v207, %v1513
    %v1515 = vand.u32 %v1514, 4294901760
    %v1516 = vsub.f32 %v1514, %v1515
    %v1517 = vand.u32 %v1516, 4294901760
    %1518 = vmatpush1.msra.mxu0 %v1517
    %1519 = vmatprep.subr.mxu0 0.0
    %v1520 = vand.u32 %v202, 4294901760
    %v1521 = vsub.f32 %v202, %v1520
    %v1522 = vand.u32 %v1521, 4294901760
    %v1523 = vsub.f32 %v1521, %v1522
    %v1524 = vand.u32 %v1523, 4294901760
    %1525 = vmatpush1.msra.mxu0 %v1524
    %1526 = vmatprep.subr.mxu0 0.0
    %v1527 = vand.u32 %v197, 4294901760
    %v1528 = vsub.f32 %v197, %v1527
    %v1529 = vand.u32 %v1528, 4294901760
    %v1530 = vsub.f32 %v1528, %v1529
    %v1531 = vand.u32 %v1530, 4294901760
    %1532 = vmatpush1.msra.mxu0 %v1531
    %1533 = vmatprep.subr.mxu0 0.0
    %v1534 = vand.u32 %v192, 4294901760
    %v1535 = vsub.f32 %v192, %v1534
    %v1536 = vand.u32 %v1535, 4294901760
    %v1537 = vsub.f32 %v1535, %v1536
    %v1538 = vand.u32 %v1537, 4294901760
    %1539 = vmatpush1.msra.mxu0 %v1538
    %1540 = vmatprep.subr.mxu0 0.0
    %v1541 = vand.u32 %v187, 4294901760
    %v1542 = vsub.f32 %v187, %v1541
    %v1543 = vand.u32 %v1542, 4294901760
    %v1544 = vsub.f32 %v1542, %v1543
    %v1545 = vand.u32 %v1544, 4294901760
    %1546 = vmatpush1.msra.mxu0 %v1545
    %1547 = vmatprep.subr.mxu0 0.0
    %v1548 = vand.u32 %v182, 4294901760
    %v1549 = vsub.f32 %v182, %v1548
    %v1550 = vand.u32 %v1549, 4294901760
    %v1551 = vsub.f32 %v1549, %v1550
    %v1552 = vand.u32 %v1551, 4294901760
    %1553 = vmatpush1.msra.mxu0 %v1552
    %1554 = vmatprep.subr.mxu0 0.0
    %1555 = vmatpush2.msra.mxu0 0.0
    %1556 = vmatprep.subr.mxu0 0.0
    %1557 = vmatpush2.msra.mxu0 0.0
    %1558 = vmatprep.subr.mxu0 0.0
    %1559 = vmatpush2.msra.mxu0 0.0
    %1560 = vmatprep.subr.mxu0 0.0
    %1561 = vmatpush2.msra.mxu0 0.0
    %1562 = vmatprep.subr.mxu0 0.0
    %1563 = vmatpush2.msra.mxu0 0.0
    %1564 = vmatprep.subr.mxu0 0.0
    %1565 = vmatpush2.msra.mxu0 0.0
    %1566 = vmatprep.subr.mxu0 0.0
    %1567 = vmatpush2.msra.mxu0 0.0
    %1568 = vmatprep.subr.mxu0 0.0
    %1569 = vmatpush2.msra.mxu0 0.0
    %1570 = vmatprep.subr.mxu0 0.0
    %1571 = vmatpush2.msra.mxu0 0.0
    %1572 = vmatprep.subr.mxu0 0.0
    %1573 = vmatpush2.msra.mxu0 0.0
    %1574 = vmatprep.subr.mxu0 0.0
    %1575 = vmatpush2.msra.mxu0 0.0
    %1576 = vmatprep.subr.mxu0 0.0
    %1577 = vmatpush2.msra.mxu0 0.0
    %1578 = vmatprep.subr.mxu0 0.0
    %1579 = vmatpush2.msra.mxu0 0.0
    %1580 = vmatprep.subr.mxu0 0.0
    %1581 = vmatpush2.msra.mxu0 0.0
    %1582 = vmatprep.subr.mxu0 0.0
    %1583 = vmatpush2.msra.mxu0 0.0
    %1584 = vmatprep.subr.mxu0 0.0
    %1585 = vmatpush2.msra.mxu0 0.0
    %1586 = vmatprep.mubr.f32.mxu0 0.0
    %v1587 = vand.u32 %v1257, 4294901760
    %1588 = vmatmul.mubr.f32.gmra.mxu0 %v1587
    %v1589 = vpop.f32.mrf.mxu0
    %v1590 = vadd.f32 %v1369, %v1589
    %v1591 = vpop.f32.mrf.mxu0
    %1592 = vmatprep.mubr.f32.mxu0 0.0
    %v1593 = vand.u32 %v1260, 4294901760
    %1594 = vmatmul.mubr.f32.gmra.mxu0 %v1593
    %v1595 = vpop.f32.mrf.mxu0
    %v1596 = vadd.f32 %v1379, %v1595
    %v1597 = vpop.f32.mrf.mxu0
    %1598 = vmatprep.mubr.f32.mxu0 0.0
    %v1599 = vand.u32 %v1263, 4294901760
    %1600 = vmatmul.mubr.f32.gmra.mxu0 %v1599
    %v1601 = vpop.f32.mrf.mxu0
    %v1602 = vadd.f32 %v1389, %v1601
    %v1603 = vpop.f32.mrf.mxu0
    %1604 = vmatprep.mubr.f32.mxu0 0.0
    %v1605 = vand.u32 %v1266, 4294901760
    %1606 = vmatmul.mubr.f32.gmra.mxu0 %v1605
    %v1607 = vpop.f32.mrf.mxu0
    %v1608 = vadd.f32 %v1399, %v1607
    %v1609 = vpop.f32.mrf.mxu0
    %1610 = vmatprep.mubr.f32.mxu0 0.0
    %v1611 = vand.u32 %v1269, 4294901760
    %1612 = vmatmul.mubr.f32.gmra.mxu0 %v1611
    %v1613 = vpop.f32.mrf.mxu0
    %v1614 = vadd.f32 %v1409, %v1613
    %v1615 = vpop.f32.mrf.mxu0
    %1616 = vmatprep.mubr.f32.mxu0 0.0
    %v1617 = vand.u32 %v1272, 4294901760
    %1618 = vmatmul.mubr.f32.gmra.mxu0 %v1617
    %v1619 = vpop.f32.mrf.mxu0
    %v1620 = vadd.f32 %v1419, %v1619
    %v1621 = vpop.f32.mrf.mxu0
    %1622 = vmatprep.mubr.f32.mxu0 0.0
    %v1623 = vand.u32 %v1275, 4294901760
    %1624 = vmatmul.mubr.f32.gmra.mxu0 %v1623
    %v1625 = vpop.f32.mrf.mxu0
    %v1626 = vadd.f32 %v1429, %v1625
    %v1627 = vpop.f32.mrf.mxu0
    %1628 = vmatprep.mubr.f32.mxu0 0.0
    %v1629 = vand.u32 %v1278, 4294901760
    %1630 = vmatmul.mubr.f32.gmra.mxu0 %v1629
    %v1631 = vpop.f32.mrf.mxu0
    %v1632 = vadd.f32 %v1439, %v1631
    %v1633 = vpop.f32.mrf.mxu0
    %1634 = vmatprep.mubr.f32.mxu0 0.0
    %v1635 = vand.u32 %v1281, 4294901760
    %1636 = vmatmul.mubr.f32.gmra.mxu0 %v1635
    %v1637 = vpop.f32.mrf.mxu0
    %v1638 = vadd.f32 %v1449, %v1637
    %v1639 = vpop.f32.mrf.mxu0
    %1640 = vdwg.mxu0
    %1641 = vmatprep.subr.mxu0 0.0
    %1642 = vmatpush1.msra.mxu0 0.0
    %1643 = vmatprep.subr.mxu0 0.0
    %1644 = vmatpush1.msra.mxu0 0.0
    %1645 = vmatprep.subr.mxu0 0.0
    %v1646 = vand.u32 %v247, 4294901760
    %v1647 = vsub.f32 %v247, %v1646
    %1648 = vmatpush1.msra.mxu0 %v1647
    %1649 = vmatprep.subr.mxu0 0.0
    %v1650 = vand.u32 %v242, 4294901760
    %v1651 = vsub.f32 %v242, %v1650
    %1652 = vmatpush1.msra.mxu0 %v1651
    %1653 = vmatprep.subr.mxu0 0.0
    %v1654 = vand.u32 %v237, 4294901760
    %v1655 = vsub.f32 %v237, %v1654
    %1656 = vmatpush1.msra.mxu0 %v1655
    %1657 = vmatprep.subr.mxu0 0.0
    %v1658 = vand.u32 %v232, 4294901760
    %v1659 = vsub.f32 %v232, %v1658
    %1660 = vmatpush1.msra.mxu0 %v1659
    %1661 = vmatprep.subr.mxu0 0.0
    %v1662 = vand.u32 %v227, 4294901760
    %v1663 = vsub.f32 %v227, %v1662
    %1664 = vmatpush1.msra.mxu0 %v1663
    %1665 = vmatprep.subr.mxu0 0.0
    %v1666 = vand.u32 %v222, 4294901760
    %v1667 = vsub.f32 %v222, %v1666
    %1668 = vmatpush1.msra.mxu0 %v1667
    %1669 = vmatprep.subr.mxu0 0.0
    %v1670 = vand.u32 %v217, 4294901760
    %v1671 = vsub.f32 %v217, %v1670
    %1672 = vmatpush1.msra.mxu0 %v1671
    %1673 = vmatprep.subr.mxu0 0.0
    %v1674 = vand.u32 %v212, 4294901760
    %v1675 = vsub.f32 %v212, %v1674
    %1676 = vmatpush1.msra.mxu0 %v1675
    %1677 = vmatprep.subr.mxu0 0.0
    %v1678 = vand.u32 %v207, 4294901760
    %v1679 = vsub.f32 %v207, %v1678
    %1680 = vmatpush1.msra.mxu0 %v1679
    %1681 = vmatprep.subr.mxu0 0.0
    %v1682 = vand.u32 %v202, 4294901760
    %v1683 = vsub.f32 %v202, %v1682
    %1684 = vmatpush1.msra.mxu0 %v1683
    %1685 = vmatprep.subr.mxu0 0.0
    %v1686 = vand.u32 %v197, 4294901760
    %v1687 = vsub.f32 %v197, %v1686
    %1688 = vmatpush1.msra.mxu0 %v1687
    %1689 = vmatprep.subr.mxu0 0.0
    %v1690 = vand.u32 %v192, 4294901760
    %v1691 = vsub.f32 %v192, %v1690
    %1692 = vmatpush1.msra.mxu0 %v1691
    %1693 = vmatprep.subr.mxu0 0.0
    %v1694 = vand.u32 %v187, 4294901760
    %v1695 = vsub.f32 %v187, %v1694
    %1696 = vmatpush1.msra.mxu0 %v1695
    %1697 = vmatprep.subr.mxu0 0.0
    %v1698 = vand.u32 %v182, 4294901760
    %v1699 = vsub.f32 %v182, %v1698
    %1700 = vmatpush1.msra.mxu0 %v1699
    %1701 = vmatprep.subr.mxu0 0.0
    %1702 = vmatpush2.msra.mxu0 0.0
    %1703 = vmatprep.subr.mxu0 0.0
    %1704 = vmatpush2.msra.mxu0 0.0
    %1705 = vmatprep.subr.mxu0 0.0
    %1706 = vmatpush2.msra.mxu0 0.0
    %1707 = vmatprep.subr.mxu0 0.0
    %1708 = vmatpush2.msra.mxu0 0.0
    %1709 = vmatprep.subr.mxu0 0.0
    %1710 = vmatpush2.msra.mxu0 0.0
    %1711 = vmatprep.subr.mxu0 0.0
    %1712 = vmatpush2.msra.mxu0 0.0
    %1713 = vmatprep.subr.mxu0 0.0
    %1714 = vmatpush2.msra.mxu0 0.0
    %1715 = vmatprep.subr.mxu0 0.0
    %1716 = vmatpush2.msra.mxu0 0.0
    %1717 = vmatprep.subr.mxu0 0.0
    %1718 = vmatpush2.msra.mxu0 0.0
    %1719 = vmatprep.subr.mxu0 0.0
    %1720 = vmatpush2.msra.mxu0 0.0
    %1721 = vmatprep.subr.mxu0 0.0
    %1722 = vmatpush2.msra.mxu0 0.0
    %1723 = vmatprep.subr.mxu0 0.0
    %1724 = vmatpush2.msra.mxu0 0.0
    %1725 = vmatprep.subr.mxu0 0.0
    %1726 = vmatpush2.msra.mxu0 0.0
    %1727 = vmatprep.subr.mxu0 0.0
    %1728 = vmatpush2.msra.mxu0 0.0
    %1729 = vmatprep.subr.mxu0 0.0
    %1730 = vmatpush2.msra.mxu0 0.0
    %1731 = vmatprep.subr.mxu0 0.0
    %1732 = vmatpush2.msra.mxu0 0.0
    %1733 = vmatprep.mubr.f32.mxu0 0.0
    %v1734 = vand.u32 %v1257, 4294901760
    %v1735 = vsub.f32 %v1257, %v1734
    %1736 = vmatmul.mubr.f32.gmra.mxu0 %v1735
    %v1737 = vpop.f32.mrf.mxu0
    %v1738 = vadd.f32 %v1590, %v1737
    %v1739 = vpop.f32.mrf.mxu0
    %1740 = vmatprep.mubr.f32.mxu0 0.0
    %v1741 = vand.u32 %v1260, 4294901760
    %v1742 = vsub.f32 %v1260, %v1741
    %1743 = vmatmul.mubr.f32.gmra.mxu0 %v1742
    %v1744 = vpop.f32.mrf.mxu0
    %v1745 = vadd.f32 %v1596, %v1744
    %v1746 = vpop.f32.mrf.mxu0
    %1747 = vmatprep.mubr.f32.mxu0 0.0
    %v1748 = vand.u32 %v1263, 4294901760
    %v1749 = vsub.f32 %v1263, %v1748
    %1750 = vmatmul.mubr.f32.gmra.mxu0 %v1749
    %v1751 = vpop.f32.mrf.mxu0
    %v1752 = vadd.f32 %v1602, %v1751
    %v1753 = vpop.f32.mrf.mxu0
    %1754 = vmatprep.mubr.f32.mxu0 0.0
    %v1755 = vand.u32 %v1266, 4294901760
    %v1756 = vsub.f32 %v1266, %v1755
    %1757 = vmatmul.mubr.f32.gmra.mxu0 %v1756
    %v1758 = vpop.f32.mrf.mxu0
    %v1759 = vadd.f32 %v1608, %v1758
    %v1760 = vpop.f32.mrf.mxu0
    %1761 = vmatprep.mubr.f32.mxu0 0.0
    %v1762 = vand.u32 %v1269, 4294901760
    %v1763 = vsub.f32 %v1269, %v1762
    %1764 = vmatmul.mubr.f32.gmra.mxu0 %v1763
    %v1765 = vpop.f32.mrf.mxu0
    %v1766 = vadd.f32 %v1614, %v1765
    %v1767 = vpop.f32.mrf.mxu0
    %1768 = vmatprep.mubr.f32.mxu0 0.0
    %v1769 = vand.u32 %v1272, 4294901760
    %v1770 = vsub.f32 %v1272, %v1769
    %1771 = vmatmul.mubr.f32.gmra.mxu0 %v1770
    %v1772 = vpop.f32.mrf.mxu0
    %v1773 = vadd.f32 %v1620, %v1772
    %v1774 = vpop.f32.mrf.mxu0
    %1775 = vmatprep.mubr.f32.mxu0 0.0
    %v1776 = vand.u32 %v1275, 4294901760
    %v1777 = vsub.f32 %v1275, %v1776
    %1778 = vmatmul.mubr.f32.gmra.mxu0 %v1777
    %v1779 = vpop.f32.mrf.mxu0
    %v1780 = vadd.f32 %v1626, %v1779
    %v1781 = vpop.f32.mrf.mxu0
    %1782 = vmatprep.mubr.f32.mxu0 0.0
    %v1783 = vand.u32 %v1278, 4294901760
    %v1784 = vsub.f32 %v1278, %v1783
    %1785 = vmatmul.mubr.f32.gmra.mxu0 %v1784
    %v1786 = vpop.f32.mrf.mxu0
    %v1787 = vadd.f32 %v1632, %v1786
    %v1788 = vpop.f32.mrf.mxu0
    %1789 = vmatprep.mubr.f32.mxu0 0.0
    %v1790 = vand.u32 %v1281, 4294901760
    %v1791 = vsub.f32 %v1281, %v1790
    %1792 = vmatmul.mubr.f32.gmra.mxu0 %v1791
    %v1793 = vpop.f32.mrf.mxu0
    %v1794 = vadd.f32 %v1638, %v1793
    %v1795 = vpop.f32.mrf.mxu0
    %1796 = vdwg.mxu0
    %1797 = vmatprep.subr.mxu0 0.0
    %1798 = vmatpush1.msra.mxu0 0.0
    %1799 = vmatprep.subr.mxu0 0.0
    %1800 = vmatpush1.msra.mxu0 0.0
    %1801 = vmatprep.subr.mxu0 0.0
    %v1802 = vand.u32 %v247, 4294901760
    %1803 = vmatpush1.msra.mxu0 %v1802
    %1804 = vmatprep.subr.mxu0 0.0
    %v1805 = vand.u32 %v242, 4294901760
    %1806 = vmatpush1.msra.mxu0 %v1805
    %1807 = vmatprep.subr.mxu0 0.0
    %v1808 = vand.u32 %v237, 4294901760
    %1809 = vmatpush1.msra.mxu0 %v1808
    %1810 = vmatprep.subr.mxu0 0.0
    %v1811 = vand.u32 %v232, 4294901760
    %1812 = vmatpush1.msra.mxu0 %v1811
    %1813 = vmatprep.subr.mxu0 0.0
    %v1814 = vand.u32 %v227, 4294901760
    %1815 = vmatpush1.msra.mxu0 %v1814
    %1816 = vmatprep.subr.mxu0 0.0
    %v1817 = vand.u32 %v222, 4294901760
    %1818 = vmatpush1.msra.mxu0 %v1817
    %1819 = vmatprep.subr.mxu0 0.0
    %v1820 = vand.u32 %v217, 4294901760
    %1821 = vmatpush1.msra.mxu0 %v1820
    %1822 = vmatprep.subr.mxu0 0.0
    %v1823 = vand.u32 %v212, 4294901760
    %1824 = vmatpush1.msra.mxu0 %v1823
    %1825 = vmatprep.subr.mxu0 0.0
    %v1826 = vand.u32 %v207, 4294901760
    %1827 = vmatpush1.msra.mxu0 %v1826
    %1828 = vmatprep.subr.mxu0 0.0
    %v1829 = vand.u32 %v202, 4294901760
    %1830 = vmatpush1.msra.mxu0 %v1829
    %1831 = vmatprep.subr.mxu0 0.0
    %v1832 = vand.u32 %v197, 4294901760
    %1833 = vmatpush1.msra.mxu0 %v1832
    %1834 = vmatprep.subr.mxu0 0.0
    %v1835 = vand.u32 %v192, 4294901760
    %1836 = vmatpush1.msra.mxu0 %v1835
    %1837 = vmatprep.subr.mxu0 0.0
    %v1838 = vand.u32 %v187, 4294901760
    %1839 = vmatpush1.msra.mxu0 %v1838
    %1840 = vmatprep.subr.mxu0 0.0
    %v1841 = vand.u32 %v182, 4294901760
    %1842 = vmatpush1.msra.mxu0 %v1841
    %1843 = vmatprep.subr.mxu0 0.0
    %1844 = vmatpush2.msra.mxu0 0.0
    %1845 = vmatprep.subr.mxu0 0.0
    %1846 = vmatpush2.msra.mxu0 0.0
    %1847 = vmatprep.subr.mxu0 0.0
    %1848 = vmatpush2.msra.mxu0 0.0
    %1849 = vmatprep.subr.mxu0 0.0
    %1850 = vmatpush2.msra.mxu0 0.0
    %1851 = vmatprep.subr.mxu0 0.0
    %1852 = vmatpush2.msra.mxu0 0.0
    %1853 = vmatprep.subr.mxu0 0.0
    %1854 = vmatpush2.msra.mxu0 0.0
    %1855 = vmatprep.subr.mxu0 0.0
    %1856 = vmatpush2.msra.mxu0 0.0
    %1857 = vmatprep.subr.mxu0 0.0
    %1858 = vmatpush2.msra.mxu0 0.0
    %1859 = vmatprep.subr.mxu0 0.0
    %1860 = vmatpush2.msra.mxu0 0.0
    %1861 = vmatprep.subr.mxu0 0.0
    %1862 = vmatpush2.msra.mxu0 0.0
    %1863 = vmatprep.subr.mxu0 0.0
    %1864 = vmatpush2.msra.mxu0 0.0
    %1865 = vmatprep.subr.mxu0 0.0
    %1866 = vmatpush2.msra.mxu0 0.0
    %1867 = vmatprep.subr.mxu0 0.0
    %1868 = vmatpush2.msra.mxu0 0.0
    %1869 = vmatprep.subr.mxu0 0.0
    %1870 = vmatpush2.msra.mxu0 0.0
    %1871 = vmatprep.subr.mxu0 0.0
    %1872 = vmatpush2.msra.mxu0 0.0
    %1873 = vmatprep.subr.mxu0 0.0
    %1874 = vmatpush2.msra.mxu0 0.0
    %1875 = vmatprep.mubr.f32.mxu0 0.0
    %v1876 = vand.u32 %v1257, 4294901760
    %v1877 = vsub.f32 %v1257, %v1876
    %v1878 = vand.u32 %v1877, 4294901760
    %1879 = vmatmul.mubr.f32.gmra.mxu0 %v1878
    %v1880 = vpop.f32.mrf.mxu0
    %v1881 = vadd.f32 %v1738, %v1880
    %v1882 = vpop.f32.mrf.mxu0
    %1883 = vmatprep.mubr.f32.mxu0 0.0
    %v1884 = vand.u32 %v1260, 4294901760
    %v1885 = vsub.f32 %v1260, %v1884
    %v1886 = vand.u32 %v1885, 4294901760
    %1887 = vmatmul.mubr.f32.gmra.mxu0 %v1886
    %v1888 = vpop.f32.mrf.mxu0
    %v1889 = vadd.f32 %v1745, %v1888
    %v1890 = vpop.f32.mrf.mxu0
    %1891 = vmatprep.mubr.f32.mxu0 0.0
    %v1892 = vand.u32 %v1263, 4294901760
    %v1893 = vsub.f32 %v1263, %v1892
    %v1894 = vand.u32 %v1893, 4294901760
    %1895 = vmatmul.mubr.f32.gmra.mxu0 %v1894
    %v1896 = vpop.f32.mrf.mxu0
    %v1897 = vadd.f32 %v1752, %v1896
    %v1898 = vpop.f32.mrf.mxu0
    %1899 = vmatprep.mubr.f32.mxu0 0.0
    %v1900 = vand.u32 %v1266, 4294901760
    %v1901 = vsub.f32 %v1266, %v1900
    %v1902 = vand.u32 %v1901, 4294901760
    %1903 = vmatmul.mubr.f32.gmra.mxu0 %v1902
    %v1904 = vpop.f32.mrf.mxu0
    %v1905 = vadd.f32 %v1759, %v1904
    %v1906 = vpop.f32.mrf.mxu0
    %1907 = vmatprep.mubr.f32.mxu0 0.0
    %v1908 = vand.u32 %v1269, 4294901760
    %v1909 = vsub.f32 %v1269, %v1908
    %v1910 = vand.u32 %v1909, 4294901760
    %1911 = vmatmul.mubr.f32.gmra.mxu0 %v1910
    %v1912 = vpop.f32.mrf.mxu0
    %v1913 = vadd.f32 %v1766, %v1912
    %v1914 = vpop.f32.mrf.mxu0
    %1915 = vmatprep.mubr.f32.mxu0 0.0
    %v1916 = vand.u32 %v1272, 4294901760
    %v1917 = vsub.f32 %v1272, %v1916
    %v1918 = vand.u32 %v1917, 4294901760
    %1919 = vmatmul.mubr.f32.gmra.mxu0 %v1918
    %v1920 = vpop.f32.mrf.mxu0
    %v1921 = vadd.f32 %v1773, %v1920
    %v1922 = vpop.f32.mrf.mxu0
    %1923 = vmatprep.mubr.f32.mxu0 0.0
    %v1924 = vand.u32 %v1275, 4294901760
    %v1925 = vsub.f32 %v1275, %v1924
    %v1926 = vand.u32 %v1925, 4294901760
    %1927 = vmatmul.mubr.f32.gmra.mxu0 %v1926
    %v1928 = vpop.f32.mrf.mxu0
    %v1929 = vadd.f32 %v1780, %v1928
    %v1930 = vpop.f32.mrf.mxu0
    %1931 = vmatprep.mubr.f32.mxu0 0.0
    %v1932 = vand.u32 %v1278, 4294901760
    %v1933 = vsub.f32 %v1278, %v1932
    %v1934 = vand.u32 %v1933, 4294901760
    %1935 = vmatmul.mubr.f32.gmra.mxu0 %v1934
    %v1936 = vpop.f32.mrf.mxu0
    %v1937 = vadd.f32 %v1787, %v1936
    %v1938 = vpop.f32.mrf.mxu0
    %1939 = vmatprep.mubr.f32.mxu0 0.0
    %v1940 = vand.u32 %v1281, 4294901760
    %v1941 = vsub.f32 %v1281, %v1940
    %v1942 = vand.u32 %v1941, 4294901760
    %1943 = vmatmul.mubr.f32.gmra.mxu0 %v1942
    %v1944 = vpop.f32.mrf.mxu0
    %v1945 = vadd.f32 %v1794, %v1944
    %v1946 = vpop.f32.mrf.mxu0
    %1947 = vdwg.mxu0
    %1948 = vmatprep.subr.mxu0 0.0
    %1949 = vmatpush1.msra.mxu0 0.0
    %1950 = vmatprep.subr.mxu0 0.0
    %1951 = vmatpush1.msra.mxu0 0.0
    %1952 = vmatprep.subr.mxu0 0.0
    %v1953 = vand.u32 %v247, 4294901760
    %v1954 = vsub.f32 %v247, %v1953
    %v1955 = vand.u32 %v1954, 4294901760
    %1956 = vmatpush1.msra.mxu0 %v1955
    %1957 = vmatprep.subr.mxu0 0.0
    %v1958 = vand.u32 %v242, 4294901760
    %v1959 = vsub.f32 %v242, %v1958
    %v1960 = vand.u32 %v1959, 4294901760
    %1961 = vmatpush1.msra.mxu0 %v1960
    %1962 = vmatprep.subr.mxu0 0.0
    %v1963 = vand.u32 %v237, 4294901760
    %v1964 = vsub.f32 %v237, %v1963
    %v1965 = vand.u32 %v1964, 4294901760
    %1966 = vmatpush1.msra.mxu0 %v1965
    %1967 = vmatprep.subr.mxu0 0.0
    %v1968 = vand.u32 %v232, 4294901760
    %v1969 = vsub.f32 %v232, %v1968
    %v1970 = vand.u32 %v1969, 4294901760
    %1971 = vmatpush1.msra.mxu0 %v1970
    %1972 = vmatprep.subr.mxu0 0.0
    %v1973 = vand.u32 %v227, 4294901760
    %v1974 = vsub.f32 %v227, %v1973
    %v1975 = vand.u32 %v1974, 4294901760
    %1976 = vmatpush1.msra.mxu0 %v1975
    %1977 = vmatprep.subr.mxu0 0.0
    %v1978 = vand.u32 %v222, 4294901760
    %v1979 = vsub.f32 %v222, %v1978
    %v1980 = vand.u32 %v1979, 4294901760
    %1981 = vmatpush1.msra.mxu0 %v1980
    %1982 = vmatprep.subr.mxu0 0.0
    %v1983 = vand.u32 %v217, 4294901760
    %v1984 = vsub.f32 %v217, %v1983
    %v1985 = vand.u32 %v1984, 4294901760
    %1986 = vmatpush1.msra.mxu0 %v1985
    %1987 = vmatprep.subr.mxu0 0.0
    %v1988 = vand.u32 %v212, 4294901760
    %v1989 = vsub.f32 %v212, %v1988
    %v1990 = vand.u32 %v1989, 4294901760
    %1991 = vmatpush1.msra.mxu0 %v1990
    %1992 = vmatprep.subr.mxu0 0.0
    %v1993 = vand.u32 %v207, 4294901760
    %v1994 = vsub.f32 %v207, %v1993
    %v1995 = vand.u32 %v1994, 4294901760
    %1996 = vmatpush1.msra.mxu0 %v1995
    %1997 = vmatprep.subr.mxu0 0.0
    %v1998 = vand.u32 %v202, 4294901760
    %v1999 = vsub.f32 %v202, %v1998
    %v2000 = vand.u32 %v1999, 4294901760
    %2001 = vmatpush1.msra.mxu0 %v2000
    %2002 = vmatprep.subr.mxu0 0.0
    %v2003 = vand.u32 %v197, 4294901760
    %v2004 = vsub.f32 %v197, %v2003
    %v2005 = vand.u32 %v2004, 4294901760
    %2006 = vmatpush1.msra.mxu0 %v2005
    %2007 = vmatprep.subr.mxu0 0.0
    %v2008 = vand.u32 %v192, 4294901760
    %v2009 = vsub.f32 %v192, %v2008
    %v2010 = vand.u32 %v2009, 4294901760
    %2011 = vmatpush1.msra.mxu0 %v2010
    %2012 = vmatprep.subr.mxu0 0.0
    %v2013 = vand.u32 %v187, 4294901760
    %v2014 = vsub.f32 %v187, %v2013
    %v2015 = vand.u32 %v2014, 4294901760
    %2016 = vmatpush1.msra.mxu0 %v2015
    %2017 = vmatprep.subr.mxu0 0.0
    %v2018 = vand.u32 %v182, 4294901760
    %v2019 = vsub.f32 %v182, %v2018
    %v2020 = vand.u32 %v2019, 4294901760
    %2021 = vmatpush1.msra.mxu0 %v2020
    %2022 = vmatprep.subr.mxu0 0.0
    %2023 = vmatpush2.msra.mxu0 0.0
    %2024 = vmatprep.subr.mxu0 0.0
    %2025 = vmatpush2.msra.mxu0 0.0
    %2026 = vmatprep.subr.mxu0 0.0
    %2027 = vmatpush2.msra.mxu0 0.0
    %2028 = vmatprep.subr.mxu0 0.0
    %2029 = vmatpush2.msra.mxu0 0.0
    %2030 = vmatprep.subr.mxu0 0.0
    %2031 = vmatpush2.msra.mxu0 0.0
    %2032 = vmatprep.subr.mxu0 0.0
    %2033 = vmatpush2.msra.mxu0 0.0
    %2034 = vmatprep.subr.mxu0 0.0
    %2035 = vmatpush2.msra.mxu0 0.0
    %2036 = vmatprep.subr.mxu0 0.0
    %2037 = vmatpush2.msra.mxu0 0.0
    %2038 = vmatprep.subr.mxu0 0.0
    %2039 = vmatpush2.msra.mxu0 0.0
    %2040 = vmatprep.subr.mxu0 0.0
    %2041 = vmatpush2.msra.mxu0 0.0
    %2042 = vmatprep.subr.mxu0 0.0
    %2043 = vmatpush2.msra.mxu0 0.0
    %2044 = vmatprep.subr.mxu0 0.0
    %2045 = vmatpush2.msra.mxu0 0.0
    %2046 = vmatprep.subr.mxu0 0.0
    %2047 = vmatpush2.msra.mxu0 0.0
    %2048 = vmatprep.subr.mxu0 0.0
    %2049 = vmatpush2.msra.mxu0 0.0
    %2050 = vmatprep.subr.mxu0 0.0
    %2051 = vmatpush2.msra.mxu0 0.0
    %2052 = vmatprep.subr.mxu0 0.0
    %2053 = vmatpush2.msra.mxu0 0.0
    %2054 = vmatprep.mubr.f32.mxu0 0.0
    %v2055 = vand.u32 %v1257, 4294901760
    %2056 = vmatmul.mubr.f32.gmra.mxu0 %v2055
    %v2057 = vpop.f32.mrf.mxu0
    %v2058 = vadd.f32 %v1881, %v2057
    %v2059 = vpop.f32.mrf.mxu0
    %2060 = vmatprep.mubr.f32.mxu0 0.0
    %v2061 = vand.u32 %v1260, 4294901760
    %2062 = vmatmul.mubr.f32.gmra.mxu0 %v2061
    %v2063 = vpop.f32.mrf.mxu0
    %v2064 = vadd.f32 %v1889, %v2063
    %v2065 = vpop.f32.mrf.mxu0
    %2066 = vmatprep.mubr.f32.mxu0 0.0
    %v2067 = vand.u32 %v1263, 4294901760
    %2068 = vmatmul.mubr.f32.gmra.mxu0 %v2067
    %v2069 = vpop.f32.mrf.mxu0
    %v2070 = vadd.f32 %v1897, %v2069
    %v2071 = vpop.f32.mrf.mxu0
    %2072 = vmatprep.mubr.f32.mxu0 0.0
    %v2073 = vand.u32 %v1266, 4294901760
    %2074 = vmatmul.mubr.f32.gmra.mxu0 %v2073
    %v2075 = vpop.f32.mrf.mxu0
    %v2076 = vadd.f32 %v1905, %v2075
    %v2077 = vpop.f32.mrf.mxu0
    %2078 = vmatprep.mubr.f32.mxu0 0.0
    %v2079 = vand.u32 %v1269, 4294901760
    %2080 = vmatmul.mubr.f32.gmra.mxu0 %v2079
    %v2081 = vpop.f32.mrf.mxu0
    %v2082 = vadd.f32 %v1913, %v2081
    %v2083 = vpop.f32.mrf.mxu0
    %2084 = vmatprep.mubr.f32.mxu0 0.0
    %v2085 = vand.u32 %v1272, 4294901760
    %2086 = vmatmul.mubr.f32.gmra.mxu0 %v2085
    %v2087 = vpop.f32.mrf.mxu0
    %v2088 = vadd.f32 %v1921, %v2087
    %v2089 = vpop.f32.mrf.mxu0
    %2090 = vmatprep.mubr.f32.mxu0 0.0
    %v2091 = vand.u32 %v1275, 4294901760
    %2092 = vmatmul.mubr.f32.gmra.mxu0 %v2091
    %v2093 = vpop.f32.mrf.mxu0
    %v2094 = vadd.f32 %v1929, %v2093
    %v2095 = vpop.f32.mrf.mxu0
    %2096 = vmatprep.mubr.f32.mxu0 0.0
    %v2097 = vand.u32 %v1278, 4294901760
    %2098 = vmatmul.mubr.f32.gmra.mxu0 %v2097
    %v2099 = vpop.f32.mrf.mxu0
    %v2100 = vadd.f32 %v1937, %v2099
    %v2101 = vpop.f32.mrf.mxu0
    %2102 = vmatprep.mubr.f32.mxu0 0.0
    %v2103 = vand.u32 %v1281, 4294901760
    %2104 = vmatmul.mubr.f32.gmra.mxu0 %v2103
    %v2105 = vpop.f32.mrf.mxu0
    %v2106 = vadd.f32 %v1945, %v2105
    %v2107 = vpop.f32.mrf.mxu0
    %2108 = vdwg.mxu0
    %2109 = vmatprep.subr.mxu0 0.0
    %2110 = vmatpush1.msra.mxu0 0.0
    %2111 = vmatprep.subr.mxu0 0.0
    %2112 = vmatpush1.msra.mxu0 0.0
    %2113 = vmatprep.subr.mxu0 0.0
    %v2114 = vand.u32 %v247, 4294901760
    %2115 = vmatpush1.msra.mxu0 %v2114
    %2116 = vmatprep.subr.mxu0 0.0
    %v2117 = vand.u32 %v242, 4294901760
    %2118 = vmatpush1.msra.mxu0 %v2117
    %2119 = vmatprep.subr.mxu0 0.0
    %v2120 = vand.u32 %v237, 4294901760
    %2121 = vmatpush1.msra.mxu0 %v2120
    %2122 = vmatprep.subr.mxu0 0.0
    %v2123 = vand.u32 %v232, 4294901760
    %2124 = vmatpush1.msra.mxu0 %v2123
    %2125 = vmatprep.subr.mxu0 0.0
    %v2126 = vand.u32 %v227, 4294901760
    %2127 = vmatpush1.msra.mxu0 %v2126
    %2128 = vmatprep.subr.mxu0 0.0
    %v2129 = vand.u32 %v222, 4294901760
    %2130 = vmatpush1.msra.mxu0 %v2129
    %2131 = vmatprep.subr.mxu0 0.0
    %v2132 = vand.u32 %v217, 4294901760
    %2133 = vmatpush1.msra.mxu0 %v2132
    %2134 = vmatprep.subr.mxu0 0.0
    %v2135 = vand.u32 %v212, 4294901760
    %2136 = vmatpush1.msra.mxu0 %v2135
    %2137 = vmatprep.subr.mxu0 0.0
    %v2138 = vand.u32 %v207, 4294901760
    %2139 = vmatpush1.msra.mxu0 %v2138
    %2140 = vmatprep.subr.mxu0 0.0
    %v2141 = vand.u32 %v202, 4294901760
    %2142 = vmatpush1.msra.mxu0 %v2141
    %2143 = vmatprep.subr.mxu0 0.0
    %v2144 = vand.u32 %v197, 4294901760
    %2145 = vmatpush1.msra.mxu0 %v2144
    %2146 = vmatprep.subr.mxu0 0.0
    %v2147 = vand.u32 %v192, 4294901760
    %2148 = vmatpush1.msra.mxu0 %v2147
    %2149 = vmatprep.subr.mxu0 0.0
    %v2150 = vand.u32 %v187, 4294901760
    %2151 = vmatpush1.msra.mxu0 %v2150
    %2152 = vmatprep.subr.mxu0 0.0
    %v2153 = vand.u32 %v182, 4294901760
    %2154 = vmatpush1.msra.mxu0 %v2153
    %2155 = vmatprep.subr.mxu0 0.0
    %2156 = vmatpush2.msra.mxu0 0.0
    %2157 = vmatprep.subr.mxu0 0.0
    %2158 = vmatpush2.msra.mxu0 0.0
    %2159 = vmatprep.subr.mxu0 0.0
    %2160 = vmatpush2.msra.mxu0 0.0
    %2161 = vmatprep.subr.mxu0 0.0
    %2162 = vmatpush2.msra.mxu0 0.0
    %2163 = vmatprep.subr.mxu0 0.0
    %2164 = vmatpush2.msra.mxu0 0.0
    %2165 = vmatprep.subr.mxu0 0.0
    %2166 = vmatpush2.msra.mxu0 0.0
    %2167 = vmatprep.subr.mxu0 0.0
    %2168 = vmatpush2.msra.mxu0 0.0
    %2169 = vmatprep.subr.mxu0 0.0
    %2170 = vmatpush2.msra.mxu0 0.0
    %2171 = vmatprep.subr.mxu0 0.0
    %2172 = vmatpush2.msra.mxu0 0.0
    %2173 = vmatprep.subr.mxu0 0.0
    %2174 = vmatpush2.msra.mxu0 0.0
    %2175 = vmatprep.subr.mxu0 0.0
    %2176 = vmatpush2.msra.mxu0 0.0
    %2177 = vmatprep.subr.mxu0 0.0
    %2178 = vmatpush2.msra.mxu0 0.0
    %2179 = vmatprep.subr.mxu0 0.0
    %2180 = vmatpush2.msra.mxu0 0.0
    %2181 = vmatprep.subr.mxu0 0.0
    %2182 = vmatpush2.msra.mxu0 0.0
    %2183 = vmatprep.subr.mxu0 0.0
    %2184 = vmatpush2.msra.mxu0 0.0
    %2185 = vmatprep.subr.mxu0 0.0
    %2186 = vmatpush2.msra.mxu0 0.0
    %2187 = vmatprep.mubr.f32.mxu0 0.0
    %v2188 = vand.u32 %v1257, 4294901760
    %2189 = vmatmul.mubr.f32.gmra.mxu0 %v2188
    %v2190 = vpop.f32.mrf.mxu0
    %v2191 = vadd.f32 %v2058, %v2190
    %v2192 = vpop.f32.mrf.mxu0
    %2193 = vmatprep.mubr.f32.mxu0 0.0
    %v2194 = vand.u32 %v1260, 4294901760
    %2195 = vmatmul.mubr.f32.gmra.mxu0 %v2194
    %v2196 = vpop.f32.mrf.mxu0
    %v2197 = vadd.f32 %v2064, %v2196
    %v2198 = vpop.f32.mrf.mxu0
    %2199 = vmatprep.mubr.f32.mxu0 0.0
    %v2200 = vand.u32 %v1263, 4294901760
    %2201 = vmatmul.mubr.f32.gmra.mxu0 %v2200
    %v2202 = vpop.f32.mrf.mxu0
    %v2203 = vadd.f32 %v2070, %v2202
    %v2204 = vpop.f32.mrf.mxu0
    %2205 = vmatprep.mubr.f32.mxu0 0.0
    %v2206 = vand.u32 %v1266, 4294901760
    %2207 = vmatmul.mubr.f32.gmra.mxu0 %v2206
    %v2208 = vpop.f32.mrf.mxu0
    %v2209 = vadd.f32 %v2076, %v2208
    %v2210 = vpop.f32.mrf.mxu0
    %2211 = vmatprep.mubr.f32.mxu0 0.0
    %v2212 = vand.u32 %v1269, 4294901760
    %2213 = vmatmul.mubr.f32.gmra.mxu0 %v2212
    %v2214 = vpop.f32.mrf.mxu0
    %v2215 = vadd.f32 %v2082, %v2214
    %v2216 = vpop.f32.mrf.mxu0
    %2217 = vmatprep.mubr.f32.mxu0 0.0
    %v2218 = vand.u32 %v1272, 4294901760
    %2219 = vmatmul.mubr.f32.gmra.mxu0 %v2218
    %v2220 = vpop.f32.mrf.mxu0
    %v2221 = vadd.f32 %v2088, %v2220
    %v2222 = vpop.f32.mrf.mxu0
    %2223 = vmatprep.mubr.f32.mxu0 0.0
    %v2224 = vand.u32 %v1275, 4294901760
    %2225 = vmatmul.mubr.f32.gmra.mxu0 %v2224
    %v2226 = vpop.f32.mrf.mxu0
    %v2227 = vadd.f32 %v2094, %v2226
    %v2228 = vpop.f32.mrf.mxu0
    %2229 = vmatprep.mubr.f32.mxu0 0.0
    %v2230 = vand.u32 %v1278, 4294901760
    %2231 = vmatmul.mubr.f32.gmra.mxu0 %v2230
    %v2232 = vpop.f32.mrf.mxu0
    %v2233 = vadd.f32 %v2100, %v2232
    %v2234 = vpop.f32.mrf.mxu0
    %2235 = vmatprep.mubr.f32.mxu0 0.0
    %v2236 = vand.u32 %v1281, 4294901760
    %2237 = vmatmul.mubr.f32.gmra.mxu0 %v2236
    %v2238 = vpop.f32.mrf.mxu0
    %v2239 = vadd.f32 %v2106, %v2238
    %v2240 = vpop.f32.mrf.mxu0
    %2241 = vdwg.mxu0
    %v2242 = vmax.f32 %v1195, %v2191
    %v2243 = vmax.f32 %v1201, %v2197
    %v2244 = vmax.f32 %v1207, %v2203
    %v2245 = vmax.f32 %v1213, %v2209
    %v2246 = vmax.f32 %v1219, %v2215
    %v2247 = vmax.f32 %v1225, %v2221
    %v2248 = vmax.f32 %v1231, %v2227
    %v2249 = vmax.f32 %v1237, %v2233
    %v2250 = vmax.f32 %v1243, %v2239
    %v2251 = vmax.f32 %v2242, 0.0
    %v2252 = vmax.f32 %v2243, 0.0
    %v2253 = vmax.f32 %v2244, 0.0
    %v2254 = vmax.f32 %v2245, 0.0
    %v2255 = vmax.f32 %v2246, 0.0
    %v2256 = vmax.f32 %v2247, 0.0
    %v2257 = vmax.f32 %v2248, 0.0
    %v2258 = vmax.f32 %v2249, 0.0
    %v2259 = vmax.f32 %v2250, 0.0
    %v2260 = vld [vmem:[%s6] sm:$0xff]
    %v2261 = vld [vmem:[%s6 + $0x8] sm:$0xff]
    %v2262 = vld [vmem:[%s6 + $0x10] sm:$0xff]
    %v2263 = vld [vmem:[%s6 + $0x18] sm:$0xff]
    %s2264 = scalar_lea.vmem %s6, 32
    %v2265 = vld [vmem:[%s2264] sm:$0xff]
    %v2266 = vld [vmem:[%s2264 + $0x8] sm:$0xff]
    %v2267 = vld [vmem:[%s2264 + $0x10] sm:$0xff]
    %v2268 = vld [vmem:[%s2264 + $0x18] sm:$0xff]
    %vm2278 = vcmask 1046528
    %v2279 = vrot.slane %v2251, 1
    %v2280 = vrot.slane %v2252, 1
    %v2281 = vsel %vm2278, %v2279, %v2280
    %v2282 = vrot.slane %v2253, 1
    %v2283 = vsel %vm2278, %v2280, %v2282
    %v2284 = vrot.slane %v2254, 1
    %v2285 = vsel %vm2278, %v2282, %v2284
    %v2286 = vrot.slane %v2255, 1
    %v2287 = vsel %vm2278, %v2284, %v2286
    %v2288 = vrot.slane %v2256, 1
    %v2289 = vsel %vm2278, %v2286, %v2288
    %v2290 = vrot.slane %v2257, 1
    %v2291 = vsel %vm2278, %v2288, %v2290
    %v2292 = vrot.slane %v2258, 1
    %v2293 = vsel %vm2278, %v2290, %v2292
    %v2294 = vrot.slane %v2259, 1
    %v2295 = vsel %vm2278, %v2292, %v2294
    %vm2296 = vcmask 261120
    %v2297 = vsel %vm2296, %v2281, 0
    %v2299 = vsel %vm2296, %v2283, 0
    %v2301 = vsel %vm2296, %v2285, 0
    %v2303 = vsel %vm2296, %v2287, 0
    %v2305 = vsel %vm2296, %v2289, 0
    %v2307 = vsel %vm2296, %v2291, 0
    %v2309 = vsel %vm2296, %v2293, 0
    %v2311 = vsel %vm2296, %v2295, 0
    %2313 = vmatprep.subr.mxu0 0.0
    %2314 = vmatpush1.msra.mxu0 0.0
    %2315 = vmatprep.subr.mxu0 0.0
    %2316 = vmatpush1.msra.mxu0 0.0
    %2317 = vmatprep.subr.mxu0 0.0
    %2318 = vmatpush1.msra.mxu0 0.0
    %2319 = vmatprep.subr.mxu0 0.0
    %2320 = vmatpush1.msra.mxu0 0.0
    %2321 = vmatprep.subr.mxu0 0.0
    %2322 = vmatpush1.msra.mxu0 0.0
    %2323 = vmatprep.subr.mxu0 0.0
    %2324 = vmatpush1.msra.mxu0 0.0
    %2325 = vmatprep.subr.mxu0 0.0
    %2326 = vmatpush1.msra.mxu0 0.0
    %2327 = vmatprep.subr.mxu0 0.0
    %2328 = vmatpush1.msra.mxu0 0.0
    %2329 = vmatprep.subr.mxu0 0.0
    %2330 = vmatpush1.msra.mxu0 0.0
    %2331 = vmatprep.subr.mxu0 0.0
    %2332 = vmatpush1.msra.mxu0 0.0
    %2333 = vmatprep.subr.mxu0 0.0
    %2334 = vmatpush1.msra.mxu0 0.0
    %2335 = vmatprep.subr.mxu0 0.0
    %2336 = vmatpush1.msra.mxu0 0.0
    %2337 = vmatprep.subr.mxu0 0.0
    %2338 = vmatpush1.msra.mxu0 %v2268
    %2339 = vmatprep.subr.mxu0 0.0
    %2340 = vmatpush1.msra.mxu0 %v2267
    %2341 = vmatprep.subr.mxu0 0.0
    %2342 = vmatpush1.msra.mxu0 %v2266
    %2343 = vmatprep.subr.mxu0 0.0
    %2344 = vmatpush1.msra.mxu0 %v2265
    %2345 = vmatprep.subr.mxu0 0.0
    %2346 = vmatpush2.msra.mxu0 0.0
    %2347 = vmatprep.subr.mxu0 0.0
    %2348 = vmatpush2.msra.mxu0 0.0
    %2349 = vmatprep.subr.mxu0 0.0
    %2350 = vmatpush2.msra.mxu0 0.0
    %2351 = vmatprep.subr.mxu0 0.0
    %2352 = vmatpush2.msra.mxu0 0.0
    %2353 = vmatprep.subr.mxu0 0.0
    %2354 = vmatpush2.msra.mxu0 0.0
    %2355 = vmatprep.subr.mxu0 0.0
    %2356 = vmatpush2.msra.mxu0 0.0
    %2357 = vmatprep.subr.mxu0 0.0
    %2358 = vmatpush2.msra.mxu0 0.0
    %2359 = vmatprep.subr.mxu0 0.0
    %2360 = vmatpush2.msra.mxu0 0.0
    %2361 = vmatprep.subr.mxu0 0.0
    %2362 = vmatpush2.msra.mxu0 0.0
    %2363 = vmatprep.subr.mxu0 0.0
    %2364 = vmatpush2.msra.mxu0 0.0
    %2365 = vmatprep.subr.mxu0 0.0
    %2366 = vmatpush2.msra.mxu0 0.0
    %2367 = vmatprep.subr.mxu0 0.0
    %2368 = vmatpush2.msra.mxu0 0.0
    %2369 = vmatprep.subr.mxu0 0.0
    %2370 = vmatpush2.msra.mxu0 0.0
    %2371 = vmatprep.subr.mxu0 0.0
    %2372 = vmatpush2.msra.mxu0 0.0
    %2373 = vmatprep.subr.mxu0 0.0
    %2374 = vmatpush2.msra.mxu0 0.0
    %2375 = vmatprep.subr.mxu0 0.0
    %2376 = vmatpush2.msra.mxu0 0.0
    %2377 = vmatprep.mubr.f32.mxu0 0.0
    %2378 = vmatmul.mubr.f32.gmra.mxu0 %v2297
    %v2379 = vpop.f32.mrf.mxu0
    %v2380 = vadd.f32 0.0, %v2379
    %v2381 = vpop.f32.mrf.mxu0
    %2382 = vmatprep.mubr.f32.mxu0 0.0
    %2383 = vmatmul.mubr.f32.gmra.mxu0 %v2299
    %v2384 = vpop.f32.mrf.mxu0
    %v2385 = vadd.f32 0.0, %v2384
    %v2386 = vpop.f32.mrf.mxu0
    %2387 = vmatprep.mubr.f32.mxu0 0.0
    %2388 = vmatmul.mubr.f32.gmra.mxu0 %v2301
    %v2389 = vpop.f32.mrf.mxu0
    %v2390 = vadd.f32 0.0, %v2389
    %v2391 = vpop.f32.mrf.mxu0
    %2392 = vmatprep.mubr.f32.mxu0 0.0
    %2393 = vmatmul.mubr.f32.gmra.mxu0 %v2303
    %v2394 = vpop.f32.mrf.mxu0
    %v2395 = vadd.f32 0.0, %v2394
    %v2396 = vpop.f32.mrf.mxu0
    %2397 = vmatprep.mubr.f32.mxu0 0.0
    %2398 = vmatmul.mubr.f32.gmra.mxu0 %v2305
    %v2399 = vpop.f32.mrf.mxu0
    %v2400 = vadd.f32 0.0, %v2399
    %v2401 = vpop.f32.mrf.mxu0
    %2402 = vmatprep.mubr.f32.mxu0 0.0
    %2403 = vmatmul.mubr.f32.gmra.mxu0 %v2307
    %v2404 = vpop.f32.mrf.mxu0
    %v2405 = vadd.f32 0.0, %v2404
    %v2406 = vpop.f32.mrf.mxu0
    %2407 = vmatprep.mubr.f32.mxu0 0.0
    %2408 = vmatmul.mubr.f32.gmra.mxu0 %v2309
    %v2409 = vpop.f32.mrf.mxu0
    %v2410 = vadd.f32 0.0, %v2409
    %v2411 = vpop.f32.mrf.mxu0
    %2412 = vmatprep.mubr.f32.mxu0 0.0
    %2413 = vmatmul.mubr.f32.gmra.mxu0 %v2311
    %v2414 = vpop.f32.mrf.mxu0
    %v2415 = vadd.f32 0.0, %v2414
    %v2416 = vpop.f32.mrf.mxu0
    %2417 = vdwg.mxu0
    %v2418 = vsel %vm2296, %v2251, 0
    %v2420 = vsel %vm2296, %v2252, 0
    %v2422 = vsel %vm2296, %v2253, 0
    %v2424 = vsel %vm2296, %v2254, 0
    %v2426 = vsel %vm2296, %v2255, 0
    %v2428 = vsel %vm2296, %v2256, 0
    %v2430 = vsel %vm2296, %v2257, 0
    %v2432 = vsel %vm2296, %v2258, 0
    %2434 = vmatprep.subr.mxu0 0.0
    %2435 = vmatpush1.msra.mxu0 0.0
    %2436 = vmatprep.subr.mxu0 0.0
    %2437 = vmatpush1.msra.mxu0 0.0
    %2438 = vmatprep.subr.mxu0 0.0
    %2439 = vmatpush1.msra.mxu0 0.0
    %2440 = vmatprep.subr.mxu0 0.0
    %2441 = vmatpush1.msra.mxu0 0.0
    %2442 = vmatprep.subr.mxu0 0.0
    %2443 = vmatpush1.msra.mxu0 0.0
    %2444 = vmatprep.subr.mxu0 0.0
    %2445 = vmatpush1.msra.mxu0 0.0
    %2446 = vmatprep.subr.mxu0 0.0
    %2447 = vmatpush1.msra.mxu0 0.0
    %2448 = vmatprep.subr.mxu0 0.0
    %2449 = vmatpush1.msra.mxu0 0.0
    %2450 = vmatprep.subr.mxu0 0.0
    %2451 = vmatpush1.msra.mxu0 0.0
    %2452 = vmatprep.subr.mxu0 0.0
    %2453 = vmatpush1.msra.mxu0 0.0
    %2454 = vmatprep.subr.mxu0 0.0
    %2455 = vmatpush1.msra.mxu0 0.0
    %2456 = vmatprep.subr.mxu0 0.0
    %2457 = vmatpush1.msra.mxu0 0.0
    %2458 = vmatprep.subr.mxu0 0.0
    %2459 = vmatpush1.msra.mxu0 %v2263
    %2460 = vmatprep.subr.mxu0 0.0
    %2461 = vmatpush1.msra.mxu0 %v2262
    %2462 = vmatprep.subr.mxu0 0.0
    %2463 = vmatpush1.msra.mxu0 %v2261
    %2464 = vmatprep.subr.mxu0 0.0
    %2465 = vmatpush1.msra.mxu0 %v2260
    %2466 = vmatprep.subr.mxu0 0.0
    %2467 = vmatpush2.msra.mxu0 0.0
    %2468 = vmatprep.subr.mxu0 0.0
    %2469 = vmatpush2.msra.mxu0 0.0
    %2470 = vmatprep.subr.mxu0 0.0
    %2471 = vmatpush2.msra.mxu0 0.0
    %2472 = vmatprep.subr.mxu0 0.0
    %2473 = vmatpush2.msra.mxu0 0.0
    %2474 = vmatprep.subr.mxu0 0.0
    %2475 = vmatpush2.msra.mxu0 0.0
    %2476 = vmatprep.subr.mxu0 0.0
    %2477 = vmatpush2.msra.mxu0 0.0
    %2478 = vmatprep.subr.mxu0 0.0
    %2479 = vmatpush2.msra.mxu0 0.0
    %2480 = vmatprep.subr.mxu0 0.0
    %2481 = vmatpush2.msra.mxu0 0.0
    %2482 = vmatprep.subr.mxu0 0.0
    %2483 = vmatpush2.msra.mxu0 0.0
    %2484 = vmatprep.subr.mxu0 0.0
    %2485 = vmatpush2.msra.mxu0 0.0
    %2486 = vmatprep.subr.mxu0 0.0
    %2487 = vmatpush2.msra.mxu0 0.0
    %2488 = vmatprep.subr.mxu0 0.0
    %2489 = vmatpush2.msra.mxu0 0.0
    %2490 = vmatprep.subr.mxu0 0.0
    %2491 = vmatpush2.msra.mxu0 0.0
    %2492 = vmatprep.subr.mxu0 0.0
    %2493 = vmatpush2.msra.mxu0 0.0
    %2494 = vmatprep.subr.mxu0 0.0
    %2495 = vmatpush2.msra.mxu0 0.0
    %2496 = vmatprep.subr.mxu0 0.0
    %2497 = vmatpush2.msra.mxu0 0.0
    %2498 = vmatprep.mubr.f32.mxu0 0.0
    %2499 = vmatmul.mubr.f32.gmra.mxu0 %v2418
    %v2500 = vpop.f32.mrf.mxu0
    %v2501 = vadd.f32 %v2380, %v2500
    %v2502 = vpop.f32.mrf.mxu0
    %2503 = vmatprep.mubr.f32.mxu0 0.0
    %2504 = vmatmul.mubr.f32.gmra.mxu0 %v2420
    %v2505 = vpop.f32.mrf.mxu0
    %v2506 = vadd.f32 %v2385, %v2505
    %v2507 = vpop.f32.mrf.mxu0
    %2508 = vmatprep.mubr.f32.mxu0 0.0
    %2509 = vmatmul.mubr.f32.gmra.mxu0 %v2422
    %v2510 = vpop.f32.mrf.mxu0
    %v2511 = vadd.f32 %v2390, %v2510
    %v2512 = vpop.f32.mrf.mxu0
    %2513 = vmatprep.mubr.f32.mxu0 0.0
    %2514 = vmatmul.mubr.f32.gmra.mxu0 %v2424
    %v2515 = vpop.f32.mrf.mxu0
    %v2516 = vadd.f32 %v2395, %v2515
    %v2517 = vpop.f32.mrf.mxu0
    %2518 = vmatprep.mubr.f32.mxu0 0.0
    %2519 = vmatmul.mubr.f32.gmra.mxu0 %v2426
    %v2520 = vpop.f32.mrf.mxu0
    %v2521 = vadd.f32 %v2400, %v2520
    %v2522 = vpop.f32.mrf.mxu0
    %2523 = vmatprep.mubr.f32.mxu0 0.0
    %2524 = vmatmul.mubr.f32.gmra.mxu0 %v2428
    %v2525 = vpop.f32.mrf.mxu0
    %v2526 = vadd.f32 %v2405, %v2525
    %v2527 = vpop.f32.mrf.mxu0
    %2528 = vmatprep.mubr.f32.mxu0 0.0
    %2529 = vmatmul.mubr.f32.gmra.mxu0 %v2430
    %v2530 = vpop.f32.mrf.mxu0
    %v2531 = vadd.f32 %v2410, %v2530
    %v2532 = vpop.f32.mrf.mxu0
    %2533 = vmatprep.mubr.f32.mxu0 0.0
    %2534 = vmatmul.mubr.f32.gmra.mxu0 %v2432
    %v2535 = vpop.f32.mrf.mxu0
    %v2536 = vadd.f32 %v2415, %v2535
    %v2537 = vpop.f32.mrf.mxu0
    %2538 = vdwg.mxu0
    %s2539 = scalar_lea.vmem %s6, 64
    %v2540 = vld [vmem:[%s2539] sm:$0xff]
    %v2541 = vld [vmem:[%s2539 + $0x8] sm:$0xff]
    %v2542 = vld [vmem:[%s2539 + $0x10] sm:$0xff]
    %v2543 = vld [vmem:[%s2539 + $0x18] sm:$0xff]
    %vm2544 = vcmask 1045504
    %v2545 = vrot.slane %v2251, 2
    %v2546 = vrot.slane %v2252, 2
    %v2547 = vsel %vm2544, %v2545, %v2546
    %v2548 = vrot.slane %v2253, 2
    %v2549 = vsel %vm2544, %v2546, %v2548
    %v2550 = vrot.slane %v2254, 2
    %v2551 = vsel %vm2544, %v2548, %v2550
    %v2552 = vrot.slane %v2255, 2
    %v2553 = vsel %vm2544, %v2550, %v2552
    %v2554 = vrot.slane %v2256, 2
    %v2555 = vsel %vm2544, %v2552, %v2554
    %v2556 = vrot.slane %v2257, 2
    %v2557 = vsel %vm2544, %v2554, %v2556
    %v2558 = vrot.slane %v2258, 2
    %v2559 = vsel %vm2544, %v2556, %v2558
    %v2560 = vrot.slane %v2259, 2
    %v2561 = vsel %vm2544, %v2558, %v2560
    %v2562 = vsel %vm2296, %v2547, 0
    %v2564 = vsel %vm2296, %v2549, 0
    %v2566 = vsel %vm2296, %v2551, 0
    %v2568 = vsel %vm2296, %v2553, 0
    %v2570 = vsel %vm2296, %v2555, 0
    %v2572 = vsel %vm2296, %v2557, 0
    %v2574 = vsel %vm2296, %v2559, 0
    %v2576 = vsel %vm2296, %v2561, 0
    %2578 = vmatprep.subr.mxu0 0.0
    %2579 = vmatpush1.msra.mxu0 0.0
    %2580 = vmatprep.subr.mxu0 0.0
    %2581 = vmatpush1.msra.mxu0 0.0
    %2582 = vmatprep.subr.mxu0 0.0
    %2583 = vmatpush1.msra.mxu0 0.0
    %2584 = vmatprep.subr.mxu0 0.0
    %2585 = vmatpush1.msra.mxu0 0.0
    %2586 = vmatprep.subr.mxu0 0.0
    %2587 = vmatpush1.msra.mxu0 0.0
    %2588 = vmatprep.subr.mxu0 0.0
    %2589 = vmatpush1.msra.mxu0 0.0
    %2590 = vmatprep.subr.mxu0 0.0
    %2591 = vmatpush1.msra.mxu0 0.0
    %2592 = vmatprep.subr.mxu0 0.0
    %2593 = vmatpush1.msra.mxu0 0.0
    %2594 = vmatprep.subr.mxu0 0.0
    %2595 = vmatpush1.msra.mxu0 0.0
    %2596 = vmatprep.subr.mxu0 0.0
    %2597 = vmatpush1.msra.mxu0 0.0
    %2598 = vmatprep.subr.mxu0 0.0
    %2599 = vmatpush1.msra.mxu0 0.0
    %2600 = vmatprep.subr.mxu0 0.0
    %2601 = vmatpush1.msra.mxu0 0.0
    %2602 = vmatprep.subr.mxu0 0.0
    %2603 = vmatpush1.msra.mxu0 %v2543
    %2604 = vmatprep.subr.mxu0 0.0
    %2605 = vmatpush1.msra.mxu0 %v2542
    %2606 = vmatprep.subr.mxu0 0.0
    %2607 = vmatpush1.msra.mxu0 %v2541
    %2608 = vmatprep.subr.mxu0 0.0
    %2609 = vmatpush1.msra.mxu0 %v2540
    %2610 = vmatprep.subr.mxu0 0.0
    %2611 = vmatpush2.msra.mxu0 0.0
    %2612 = vmatprep.subr.mxu0 0.0
    %2613 = vmatpush2.msra.mxu0 0.0
    %2614 = vmatprep.subr.mxu0 0.0
    %2615 = vmatpush2.msra.mxu0 0.0
    %2616 = vmatprep.subr.mxu0 0.0
    %2617 = vmatpush2.msra.mxu0 0.0
    %2618 = vmatprep.subr.mxu0 0.0
    %2619 = vmatpush2.msra.mxu0 0.0
    %2620 = vmatprep.subr.mxu0 0.0
    %2621 = vmatpush2.msra.mxu0 0.0
    %2622 = vmatprep.subr.mxu0 0.0
    %2623 = vmatpush2.msra.mxu0 0.0
    %2624 = vmatprep.subr.mxu0 0.0
    %2625 = vmatpush2.msra.mxu0 0.0
    %2626 = vmatprep.subr.mxu0 0.0
    %2627 = vmatpush2.msra.mxu0 0.0
    %2628 = vmatprep.subr.mxu0 0.0
    %2629 = vmatpush2.msra.mxu0 0.0
    %2630 = vmatprep.subr.mxu0 0.0
    %2631 = vmatpush2.msra.mxu0 0.0
    %2632 = vmatprep.subr.mxu0 0.0
    %2633 = vmatpush2.msra.mxu0 0.0
    %2634 = vmatprep.subr.mxu0 0.0
    %2635 = vmatpush2.msra.mxu0 0.0
    %2636 = vmatprep.subr.mxu0 0.0
    %2637 = vmatpush2.msra.mxu0 0.0
    %2638 = vmatprep.subr.mxu0 0.0
    %2639 = vmatpush2.msra.mxu0 0.0
    %2640 = vmatprep.subr.mxu0 0.0
    %2641 = vmatpush2.msra.mxu0 0.0
    %2642 = vmatprep.mubr.f32.mxu0 0.0
    %2643 = vmatmul.mubr.f32.gmra.mxu0 %v2562
    %v2644 = vpop.f32.mrf.mxu0
    %v2645 = vadd.f32 0.0, %v2644
    %v2646 = vpop.f32.mrf.mxu0
    %2647 = vmatprep.mubr.f32.mxu0 0.0
    %2648 = vmatmul.mubr.f32.gmra.mxu0 %v2564
    %v2649 = vpop.f32.mrf.mxu0
    %v2650 = vadd.f32 0.0, %v2649
    %v2651 = vpop.f32.mrf.mxu0
    %2652 = vmatprep.mubr.f32.mxu0 0.0
    %2653 = vmatmul.mubr.f32.gmra.mxu0 %v2566
    %v2654 = vpop.f32.mrf.mxu0
    %v2655 = vadd.f32 0.0, %v2654
    %v2656 = vpop.f32.mrf.mxu0
    %2657 = vmatprep.mubr.f32.mxu0 0.0
    %2658 = vmatmul.mubr.f32.gmra.mxu0 %v2568
    %v2659 = vpop.f32.mrf.mxu0
    %v2660 = vadd.f32 0.0, %v2659
    %v2661 = vpop.f32.mrf.mxu0
    %2662 = vmatprep.mubr.f32.mxu0 0.0
    %2663 = vmatmul.mubr.f32.gmra.mxu0 %v2570
    %v2664 = vpop.f32.mrf.mxu0
    %v2665 = vadd.f32 0.0, %v2664
    %v2666 = vpop.f32.mrf.mxu0
    %2667 = vmatprep.mubr.f32.mxu0 0.0
    %2668 = vmatmul.mubr.f32.gmra.mxu0 %v2572
    %v2669 = vpop.f32.mrf.mxu0
    %v2670 = vadd.f32 0.0, %v2669
    %v2671 = vpop.f32.mrf.mxu0
    %2672 = vmatprep.mubr.f32.mxu0 0.0
    %2673 = vmatmul.mubr.f32.gmra.mxu0 %v2574
    %v2674 = vpop.f32.mrf.mxu0
    %v2675 = vadd.f32 0.0, %v2674
    %v2676 = vpop.f32.mrf.mxu0
    %2677 = vmatprep.mubr.f32.mxu0 0.0
    %2678 = vmatmul.mubr.f32.gmra.mxu0 %v2576
    %v2679 = vpop.f32.mrf.mxu0
    %v2680 = vadd.f32 0.0, %v2679
    %v2681 = vpop.f32.mrf.mxu0
    %2682 = vdwg.mxu0
    %v2683 = vadd.f32 %v2501, %v2645
    %v2684 = vadd.f32 %v2506, %v2650
    %v2685 = vadd.f32 %v2511, %v2655
    %v2686 = vadd.f32 %v2516, %v2660
    %v2687 = vadd.f32 %v2521, %v2665
    %v2688 = vadd.f32 %v2526, %v2670
    %v2689 = vadd.f32 %v2531, %v2675
    %v2690 = vadd.f32 %v2536, %v2680
    %s2691 = scalar_lea.vmem %s6, 96
    %v2692 = vld [vmem:[%s2691] sm:$0xff]
    %v2693 = vld [vmem:[%s2691 + $0x8] sm:$0xff]
    %v2694 = vld [vmem:[%s2691 + $0x10] sm:$0xff]
    %v2695 = vld [vmem:[%s2691 + $0x18] sm:$0xff]
    %vm2696 = vcmask 1044480
    %v2697 = vrot.slane %v2251, 3
    %v2698 = vrot.slane %v2252, 3
    %v2699 = vsel %vm2696, %v2697, %v2698
    %v2700 = vrot.slane %v2253, 3
    %v2701 = vsel %vm2696, %v2698, %v2700
    %v2702 = vrot.slane %v2254, 3
    %v2703 = vsel %vm2696, %v2700, %v2702
    %v2704 = vrot.slane %v2255, 3
    %v2705 = vsel %vm2696, %v2702, %v2704
    %v2706 = vrot.slane %v2256, 3
    %v2707 = vsel %vm2696, %v2704, %v2706
    %v2708 = vrot.slane %v2257, 3
    %v2709 = vsel %vm2696, %v2706, %v2708
    %v2710 = vrot.slane %v2258, 3
    %v2711 = vsel %vm2696, %v2708, %v2710
    %v2712 = vrot.slane %v2259, 3
    %v2713 = vsel %vm2696, %v2710, %v2712
    %v2714 = vsel %vm2296, %v2699, 0
    %v2716 = vsel %vm2296, %v2701, 0
    %v2718 = vsel %vm2296, %v2703, 0
    %v2720 = vsel %vm2296, %v2705, 0
    %v2722 = vsel %vm2296, %v2707, 0
    %v2724 = vsel %vm2296, %v2709, 0
    %v2726 = vsel %vm2296, %v2711, 0
    %v2728 = vsel %vm2296, %v2713, 0
    %2730 = vmatprep.subr.mxu0 0.0
    %2731 = vmatpush1.msra.mxu0 0.0
    %2732 = vmatprep.subr.mxu0 0.0
    %2733 = vmatpush1.msra.mxu0 0.0
    %2734 = vmatprep.subr.mxu0 0.0
    %2735 = vmatpush1.msra.mxu0 0.0
    %2736 = vmatprep.subr.mxu0 0.0
    %2737 = vmatpush1.msra.mxu0 0.0
    %2738 = vmatprep.subr.mxu0 0.0
    %2739 = vmatpush1.msra.mxu0 0.0
    %2740 = vmatprep.subr.mxu0 0.0
    %2741 = vmatpush1.msra.mxu0 0.0
    %2742 = vmatprep.subr.mxu0 0.0
    %2743 = vmatpush1.msra.mxu0 0.0
    %2744 = vmatprep.subr.mxu0 0.0
    %2745 = vmatpush1.msra.mxu0 0.0
    %2746 = vmatprep.subr.mxu0 0.0
    %2747 = vmatpush1.msra.mxu0 0.0
    %2748 = vmatprep.subr.mxu0 0.0
    %2749 = vmatpush1.msra.mxu0 0.0
    %2750 = vmatprep.subr.mxu0 0.0
    %2751 = vmatpush1.msra.mxu0 0.0
    %2752 = vmatprep.subr.mxu0 0.0
    %2753 = vmatpush1.msra.mxu0 0.0
    %2754 = vmatprep.subr.mxu0 0.0
    %2755 = vmatpush1.msra.mxu0 %v2695
    %2756 = vmatprep.subr.mxu0 0.0
    %2757 = vmatpush1.msra.mxu0 %v2694
    %2758 = vmatprep.subr.mxu0 0.0
    %2759 = vmatpush1.msra.mxu0 %v2693
    %2760 = vmatprep.subr.mxu0 0.0
    %2761 = vmatpush1.msra.mxu0 %v2692
    %2762 = vmatprep.subr.mxu0 0.0
    %2763 = vmatpush2.msra.mxu0 0.0
    %2764 = vmatprep.subr.mxu0 0.0
    %2765 = vmatpush2.msra.mxu0 0.0
    %2766 = vmatprep.subr.mxu0 0.0
    %2767 = vmatpush2.msra.mxu0 0.0
    %2768 = vmatprep.subr.mxu0 0.0
    %2769 = vmatpush2.msra.mxu0 0.0
    %2770 = vmatprep.subr.mxu0 0.0
    %2771 = vmatpush2.msra.mxu0 0.0
    %2772 = vmatprep.subr.mxu0 0.0
    %2773 = vmatpush2.msra.mxu0 0.0
    %2774 = vmatprep.subr.mxu0 0.0
    %2775 = vmatpush2.msra.mxu0 0.0
    %2776 = vmatprep.subr.mxu0 0.0
    %2777 = vmatpush2.msra.mxu0 0.0
    %2778 = vmatprep.subr.mxu0 0.0
    %2779 = vmatpush2.msra.mxu0 0.0
    %2780 = vmatprep.subr.mxu0 0.0
    %2781 = vmatpush2.msra.mxu0 0.0
    %2782 = vmatprep.subr.mxu0 0.0
    %2783 = vmatpush2.msra.mxu0 0.0
    %2784 = vmatprep.subr.mxu0 0.0
    %2785 = vmatpush2.msra.mxu0 0.0
    %2786 = vmatprep.subr.mxu0 0.0
    %2787 = vmatpush2.msra.mxu0 0.0
    %2788 = vmatprep.subr.mxu0 0.0
    %2789 = vmatpush2.msra.mxu0 0.0
    %2790 = vmatprep.subr.mxu0 0.0
    %2791 = vmatpush2.msra.mxu0 0.0
    %2792 = vmatprep.subr.mxu0 0.0
    %2793 = vmatpush2.msra.mxu0 0.0
    %2794 = vmatprep.mubr.f32.mxu0 0.0
    %2795 = vmatmul.mubr.f32.gmra.mxu0 %v2714
    %v2796 = vpop.f32.mrf.mxu0
    %v2797 = vadd.f32 0.0, %v2796
    %v2798 = vpop.f32.mrf.mxu0
    %2799 = vmatprep.mubr.f32.mxu0 0.0
    %2800 = vmatmul.mubr.f32.gmra.mxu0 %v2716
    %v2801 = vpop.f32.mrf.mxu0
    %v2802 = vadd.f32 0.0, %v2801
    %v2803 = vpop.f32.mrf.mxu0
    %2804 = vmatprep.mubr.f32.mxu0 0.0
    %2805 = vmatmul.mubr.f32.gmra.mxu0 %v2718
    %v2806 = vpop.f32.mrf.mxu0
    %v2807 = vadd.f32 0.0, %v2806
    %v2808 = vpop.f32.mrf.mxu0
    %2809 = vmatprep.mubr.f32.mxu0 0.0
    %2810 = vmatmul.mubr.f32.gmra.mxu0 %v2720
    %v2811 = vpop.f32.mrf.mxu0
    %v2812 = vadd.f32 0.0, %v2811
    %v2813 = vpop.f32.mrf.mxu0
    %2814 = vmatprep.mubr.f32.mxu0 0.0
    %2815 = vmatmul.mubr.f32.gmra.mxu0 %v2722
    %v2816 = vpop.f32.mrf.mxu0
    %v2817 = vadd.f32 0.0, %v2816
    %v2818 = vpop.f32.mrf.mxu0
    %2819 = vmatprep.mubr.f32.mxu0 0.0
    %2820 = vmatmul.mubr.f32.gmra.mxu0 %v2724
    %v2821 = vpop.f32.mrf.mxu0
    %v2822 = vadd.f32 0.0, %v2821
    %v2823 = vpop.f32.mrf.mxu0
    %2824 = vmatprep.mubr.f32.mxu0 0.0
    %2825 = vmatmul.mubr.f32.gmra.mxu0 %v2726
    %v2826 = vpop.f32.mrf.mxu0
    %v2827 = vadd.f32 0.0, %v2826
    %v2828 = vpop.f32.mrf.mxu0
    %2829 = vmatprep.mubr.f32.mxu0 0.0
    %2830 = vmatmul.mubr.f32.gmra.mxu0 %v2728
    %v2831 = vpop.f32.mrf.mxu0
    %v2832 = vadd.f32 0.0, %v2831
    %v2833 = vpop.f32.mrf.mxu0
    %2834 = vdwg.mxu0
    %v2835 = vadd.f32 %v2683, %v2797
    %v2836 = vadd.f32 %v2684, %v2802
    %v2837 = vadd.f32 %v2685, %v2807
    %v2838 = vadd.f32 %v2686, %v2812
    %v2839 = vadd.f32 %v2687, %v2817
    %v2840 = vadd.f32 %v2688, %v2822
    %v2841 = vadd.f32 %v2689, %v2827
    %v2842 = vadd.f32 %v2690, %v2832
    %s2843 = scalar_lea.vmem %s6, 128
    %v2844 = vld [vmem:[%s2843] sm:$0xff]
    %v2845 = vld [vmem:[%s2843 + $0x8] sm:$0xff]
    %v2846 = vld [vmem:[%s2843 + $0x10] sm:$0xff]
    %v2847 = vld [vmem:[%s2843 + $0x18] sm:$0xff]
    %v2848 = vrot.slane %v2251, 4
    %v2849 = vrot.slane %v2252, 4
    %v2850 = vsel %vm111, %v2848, %v2849
    %v2851 = vrot.slane %v2253, 4
    %v2852 = vsel %vm111, %v2849, %v2851
    %v2853 = vrot.slane %v2254, 4
    %v2854 = vsel %vm111, %v2851, %v2853
    %v2855 = vrot.slane %v2255, 4
    %v2856 = vsel %vm111, %v2853, %v2855
    %v2857 = vrot.slane %v2256, 4
    %v2858 = vsel %vm111, %v2855, %v2857
    %v2859 = vrot.slane %v2257, 4
    %v2860 = vsel %vm111, %v2857, %v2859
    %v2861 = vrot.slane %v2258, 4
    %v2862 = vsel %vm111, %v2859, %v2861
    %v2863 = vrot.slane %v2259, 4
    %v2864 = vsel %vm111, %v2861, %v2863
    %v2865 = vsel %vm2296, %v2850, 0
    %v2867 = vsel %vm2296, %v2852, 0
    %v2869 = vsel %vm2296, %v2854, 0
    %v2871 = vsel %vm2296, %v2856, 0
    %v2873 = vsel %vm2296, %v2858, 0
    %v2875 = vsel %vm2296, %v2860, 0
    %v2877 = vsel %vm2296, %v2862, 0
    %v2879 = vsel %vm2296, %v2864, 0
    %2881 = vmatprep.subr.mxu0 0.0
    %2882 = vmatpush1.msra.mxu0 0.0
    %2883 = vmatprep.subr.mxu0 0.0
    %2884 = vmatpush1.msra.mxu0 0.0
    %2885 = vmatprep.subr.mxu0 0.0
    %2886 = vmatpush1.msra.mxu0 0.0
    %2887 = vmatprep.subr.mxu0 0.0
    %2888 = vmatpush1.msra.mxu0 0.0
    %2889 = vmatprep.subr.mxu0 0.0
    %2890 = vmatpush1.msra.mxu0 0.0
    %2891 = vmatprep.subr.mxu0 0.0
    %2892 = vmatpush1.msra.mxu0 0.0
    %2893 = vmatprep.subr.mxu0 0.0
    %2894 = vmatpush1.msra.mxu0 0.0
    %2895 = vmatprep.subr.mxu0 0.0
    %2896 = vmatpush1.msra.mxu0 0.0
    %2897 = vmatprep.subr.mxu0 0.0
    %2898 = vmatpush1.msra.mxu0 0.0
    %2899 = vmatprep.subr.mxu0 0.0
    %2900 = vmatpush1.msra.mxu0 0.0
    %2901 = vmatprep.subr.mxu0 0.0
    %2902 = vmatpush1.msra.mxu0 0.0
    %2903 = vmatprep.subr.mxu0 0.0
    %2904 = vmatpush1.msra.mxu0 0.0
    %2905 = vmatprep.subr.mxu0 0.0
    %2906 = vmatpush1.msra.mxu0 %v2847
    %2907 = vmatprep.subr.mxu0 0.0
    %2908 = vmatpush1.msra.mxu0 %v2846
    %2909 = vmatprep.subr.mxu0 0.0
    %2910 = vmatpush1.msra.mxu0 %v2845
    %2911 = vmatprep.subr.mxu0 0.0
    %2912 = vmatpush1.msra.mxu0 %v2844
    %2913 = vmatprep.subr.mxu0 0.0
    %2914 = vmatpush2.msra.mxu0 0.0
    %2915 = vmatprep.subr.mxu0 0.0
    %2916 = vmatpush2.msra.mxu0 0.0
    %2917 = vmatprep.subr.mxu0 0.0
    %2918 = vmatpush2.msra.mxu0 0.0
    %2919 = vmatprep.subr.mxu0 0.0
    %2920 = vmatpush2.msra.mxu0 0.0
    %2921 = vmatprep.subr.mxu0 0.0
    %2922 = vmatpush2.msra.mxu0 0.0
    %2923 = vmatprep.subr.mxu0 0.0
    %2924 = vmatpush2.msra.mxu0 0.0
    %2925 = vmatprep.subr.mxu0 0.0
    %2926 = vmatpush2.msra.mxu0 0.0
    %2927 = vmatprep.subr.mxu0 0.0
    %2928 = vmatpush2.msra.mxu0 0.0
    %2929 = vmatprep.subr.mxu0 0.0
    %2930 = vmatpush2.msra.mxu0 0.0
    %2931 = vmatprep.subr.mxu0 0.0
    %2932 = vmatpush2.msra.mxu0 0.0
    %2933 = vmatprep.subr.mxu0 0.0
    %2934 = vmatpush2.msra.mxu0 0.0
    %2935 = vmatprep.subr.mxu0 0.0
    %2936 = vmatpush2.msra.mxu0 0.0
    %2937 = vmatprep.subr.mxu0 0.0
    %2938 = vmatpush2.msra.mxu0 0.0
    %2939 = vmatprep.subr.mxu0 0.0
    %2940 = vmatpush2.msra.mxu0 0.0
    %2941 = vmatprep.subr.mxu0 0.0
    %2942 = vmatpush2.msra.mxu0 0.0
    %2943 = vmatprep.subr.mxu0 0.0
    %2944 = vmatpush2.msra.mxu0 0.0
    %2945 = vmatprep.mubr.f32.mxu0 0.0
    %2946 = vmatmul.mubr.f32.gmra.mxu0 %v2865
    %v2947 = vpop.f32.mrf.mxu0
    %v2948 = vadd.f32 0.0, %v2947
    %v2949 = vpop.f32.mrf.mxu0
    %2950 = vmatprep.mubr.f32.mxu0 0.0
    %2951 = vmatmul.mubr.f32.gmra.mxu0 %v2867
    %v2952 = vpop.f32.mrf.mxu0
    %v2953 = vadd.f32 0.0, %v2952
    %v2954 = vpop.f32.mrf.mxu0
    %2955 = vmatprep.mubr.f32.mxu0 0.0
    %2956 = vmatmul.mubr.f32.gmra.mxu0 %v2869
    %v2957 = vpop.f32.mrf.mxu0
    %v2958 = vadd.f32 0.0, %v2957
    %v2959 = vpop.f32.mrf.mxu0
    %2960 = vmatprep.mubr.f32.mxu0 0.0
    %2961 = vmatmul.mubr.f32.gmra.mxu0 %v2871
    %v2962 = vpop.f32.mrf.mxu0
    %v2963 = vadd.f32 0.0, %v2962
    %v2964 = vpop.f32.mrf.mxu0
    %2965 = vmatprep.mubr.f32.mxu0 0.0
    %2966 = vmatmul.mubr.f32.gmra.mxu0 %v2873
    %v2967 = vpop.f32.mrf.mxu0
    %v2968 = vadd.f32 0.0, %v2967
    %v2969 = vpop.f32.mrf.mxu0
    %2970 = vmatprep.mubr.f32.mxu0 0.0
    %2971 = vmatmul.mubr.f32.gmra.mxu0 %v2875
    %v2972 = vpop.f32.mrf.mxu0
    %v2973 = vadd.f32 0.0, %v2972
    %v2974 = vpop.f32.mrf.mxu0
    %2975 = vmatprep.mubr.f32.mxu0 0.0
    %2976 = vmatmul.mubr.f32.gmra.mxu0 %v2877
    %v2977 = vpop.f32.mrf.mxu0
    %v2978 = vadd.f32 0.0, %v2977
    %v2979 = vpop.f32.mrf.mxu0
    %2980 = vmatprep.mubr.f32.mxu0 0.0
    %2981 = vmatmul.mubr.f32.gmra.mxu0 %v2879
    %v2982 = vpop.f32.mrf.mxu0
    %v2983 = vadd.f32 0.0, %v2982
    %v2984 = vpop.f32.mrf.mxu0
    %2985 = vdwg.mxu0
    %v2986 = vadd.f32 %v2835, %v2948
    %v2987 = vadd.f32 %v2836, %v2953
    %v2988 = vadd.f32 %v2837, %v2958
    %v2989 = vadd.f32 %v2838, %v2963
    %v2990 = vadd.f32 %v2839, %v2968
    %v2991 = vadd.f32 %v2840, %v2973
    %v2992 = vadd.f32 %v2841, %v2978
    %v2993 = vadd.f32 %v2842, %v2983
    %s2994 = scalar_lea.vmem %s6, 160
    %v2995 = vld [vmem:[%s2994] sm:$0xff]
    %v2996 = vld [vmem:[%s2994 + $0x8] sm:$0xff]
    %v2997 = vld [vmem:[%s2994 + $0x10] sm:$0xff]
    %v2998 = vld [vmem:[%s2994 + $0x18] sm:$0xff]
    %vm2999 = vcmask 1042432
    %v3000 = vrot.slane %v2251, 5
    %v3001 = vrot.slane %v2252, 5
    %v3002 = vsel %vm2999, %v3000, %v3001
    %v3003 = vrot.slane %v2253, 5
    %v3004 = vsel %vm2999, %v3001, %v3003
    %v3005 = vrot.slane %v2254, 5
    %v3006 = vsel %vm2999, %v3003, %v3005
    %v3007 = vrot.slane %v2255, 5
    %v3008 = vsel %vm2999, %v3005, %v3007
    %v3009 = vrot.slane %v2256, 5
    %v3010 = vsel %vm2999, %v3007, %v3009
    %v3011 = vrot.slane %v2257, 5
    %v3012 = vsel %vm2999, %v3009, %v3011
    %v3013 = vrot.slane %v2258, 5
    %v3014 = vsel %vm2999, %v3011, %v3013
    %v3015 = vrot.slane %v2259, 5
    %v3016 = vsel %vm2999, %v3013, %v3015
    %v3017 = vsel %vm2296, %v3002, 0
    %v3019 = vsel %vm2296, %v3004, 0
    %v3021 = vsel %vm2296, %v3006, 0
    %v3023 = vsel %vm2296, %v3008, 0
    %v3025 = vsel %vm2296, %v3010, 0
    %v3027 = vsel %vm2296, %v3012, 0
    %v3029 = vsel %vm2296, %v3014, 0
    %v3031 = vsel %vm2296, %v3016, 0
    %3033 = vmatprep.subr.mxu0 0.0
    %3034 = vmatpush1.msra.mxu0 0.0
    %3035 = vmatprep.subr.mxu0 0.0
    %3036 = vmatpush1.msra.mxu0 0.0
    %3037 = vmatprep.subr.mxu0 0.0
    %3038 = vmatpush1.msra.mxu0 0.0
    %3039 = vmatprep.subr.mxu0 0.0
    %3040 = vmatpush1.msra.mxu0 0.0
    %3041 = vmatprep.subr.mxu0 0.0
    %3042 = vmatpush1.msra.mxu0 0.0
    %3043 = vmatprep.subr.mxu0 0.0
    %3044 = vmatpush1.msra.mxu0 0.0
    %3045 = vmatprep.subr.mxu0 0.0
    %3046 = vmatpush1.msra.mxu0 0.0
    %3047 = vmatprep.subr.mxu0 0.0
    %3048 = vmatpush1.msra.mxu0 0.0
    %3049 = vmatprep.subr.mxu0 0.0
    %3050 = vmatpush1.msra.mxu0 0.0
    %3051 = vmatprep.subr.mxu0 0.0
    %3052 = vmatpush1.msra.mxu0 0.0
    %3053 = vmatprep.subr.mxu0 0.0
    %3054 = vmatpush1.msra.mxu0 0.0
    %3055 = vmatprep.subr.mxu0 0.0
    %3056 = vmatpush1.msra.mxu0 0.0
    %3057 = vmatprep.subr.mxu0 0.0
    %3058 = vmatpush1.msra.mxu0 %v2998
    %3059 = vmatprep.subr.mxu0 0.0
    %3060 = vmatpush1.msra.mxu0 %v2997
    %3061 = vmatprep.subr.mxu0 0.0
    %3062 = vmatpush1.msra.mxu0 %v2996
    %3063 = vmatprep.subr.mxu0 0.0
    %3064 = vmatpush1.msra.mxu0 %v2995
    %3065 = vmatprep.subr.mxu0 0.0
    %3066 = vmatpush2.msra.mxu0 0.0
    %3067 = vmatprep.subr.mxu0 0.0
    %3068 = vmatpush2.msra.mxu0 0.0
    %3069 = vmatprep.subr.mxu0 0.0
    %3070 = vmatpush2.msra.mxu0 0.0
    %3071 = vmatprep.subr.mxu0 0.0
    %3072 = vmatpush2.msra.mxu0 0.0
    %3073 = vmatprep.subr.mxu0 0.0
    %3074 = vmatpush2.msra.mxu0 0.0
    %3075 = vmatprep.subr.mxu0 0.0
    %3076 = vmatpush2.msra.mxu0 0.0
    %3077 = vmatprep.subr.mxu0 0.0
    %3078 = vmatpush2.msra.mxu0 0.0
    %3079 = vmatprep.subr.mxu0 0.0
    %3080 = vmatpush2.msra.mxu0 0.0
    %3081 = vmatprep.subr.mxu0 0.0
    %3082 = vmatpush2.msra.mxu0 0.0
    %3083 = vmatprep.subr.mxu0 0.0
    %3084 = vmatpush2.msra.mxu0 0.0
    %3085 = vmatprep.subr.mxu0 0.0
    %3086 = vmatpush2.msra.mxu0 0.0
    %3087 = vmatprep.subr.mxu0 0.0
    %3088 = vmatpush2.msra.mxu0 0.0
    %3089 = vmatprep.subr.mxu0 0.0
    %3090 = vmatpush2.msra.mxu0 0.0
    %3091 = vmatprep.subr.mxu0 0.0
    %3092 = vmatpush2.msra.mxu0 0.0
    %3093 = vmatprep.subr.mxu0 0.0
    %3094 = vmatpush2.msra.mxu0 0.0
    %3095 = vmatprep.subr.mxu0 0.0
    %3096 = vmatpush2.msra.mxu0 0.0
    %3097 = vmatprep.mubr.f32.mxu0 0.0
    %3098 = vmatmul.mubr.f32.gmra.mxu0 %v3017
    %v3099 = vpop.f32.mrf.mxu0
    %v3100 = vadd.f32 0.0, %v3099
    %v3101 = vpop.f32.mrf.mxu0
    %3102 = vmatprep.mubr.f32.mxu0 0.0
    %3103 = vmatmul.mubr.f32.gmra.mxu0 %v3019
    %v3104 = vpop.f32.mrf.mxu0
    %v3105 = vadd.f32 0.0, %v3104
    %v3106 = vpop.f32.mrf.mxu0
    %3107 = vmatprep.mubr.f32.mxu0 0.0
    %3108 = vmatmul.mubr.f32.gmra.mxu0 %v3021
    %v3109 = vpop.f32.mrf.mxu0
    %v3110 = vadd.f32 0.0, %v3109
    %v3111 = vpop.f32.mrf.mxu0
    %3112 = vmatprep.mubr.f32.mxu0 0.0
    %3113 = vmatmul.mubr.f32.gmra.mxu0 %v3023
    %v3114 = vpop.f32.mrf.mxu0
    %v3115 = vadd.f32 0.0, %v3114
    %v3116 = vpop.f32.mrf.mxu0
    %3117 = vmatprep.mubr.f32.mxu0 0.0
    %3118 = vmatmul.mubr.f32.gmra.mxu0 %v3025
    %v3119 = vpop.f32.mrf.mxu0
    %v3120 = vadd.f32 0.0, %v3119
    %v3121 = vpop.f32.mrf.mxu0
    %3122 = vmatprep.mubr.f32.mxu0 0.0
    %3123 = vmatmul.mubr.f32.gmra.mxu0 %v3027
    %v3124 = vpop.f32.mrf.mxu0
    %v3125 = vadd.f32 0.0, %v3124
    %v3126 = vpop.f32.mrf.mxu0
    %3127 = vmatprep.mubr.f32.mxu0 0.0
    %3128 = vmatmul.mubr.f32.gmra.mxu0 %v3029
    %v3129 = vpop.f32.mrf.mxu0
    %v3130 = vadd.f32 0.0, %v3129
    %v3131 = vpop.f32.mrf.mxu0
    %3132 = vmatprep.mubr.f32.mxu0 0.0
    %3133 = vmatmul.mubr.f32.gmra.mxu0 %v3031
    %v3134 = vpop.f32.mrf.mxu0
    %v3135 = vadd.f32 0.0, %v3134
    %v3136 = vpop.f32.mrf.mxu0
    %3137 = vdwg.mxu0
    %v3138 = vadd.f32 %v2986, %v3100
    %v3139 = vadd.f32 %v2987, %v3105
    %v3140 = vadd.f32 %v2988, %v3110
    %v3141 = vadd.f32 %v2989, %v3115
    %v3142 = vadd.f32 %v2990, %v3120
    %v3143 = vadd.f32 %v2991, %v3125
    %v3144 = vadd.f32 %v2992, %v3130
    %v3145 = vadd.f32 %v2993, %v3135
    %s3146 = scalar_lea.vmem %s6, 192
    %v3147 = vld [vmem:[%s3146] sm:$0xff]
    %v3148 = vld [vmem:[%s3146 + $0x8] sm:$0xff]
    %v3149 = vld [vmem:[%s3146 + $0x10] sm:$0xff]
    %v3150 = vld [vmem:[%s3146 + $0x18] sm:$0xff]
    %vm3151 = vcmask 1041408
    %v3152 = vrot.slane %v2251, 6
    %v3153 = vrot.slane %v2252, 6
    %v3154 = vsel %vm3151, %v3152, %v3153
    %v3155 = vrot.slane %v2253, 6
    %v3156 = vsel %vm3151, %v3153, %v3155
    %v3157 = vrot.slane %v2254, 6
    %v3158 = vsel %vm3151, %v3155, %v3157
    %v3159 = vrot.slane %v2255, 6
    %v3160 = vsel %vm3151, %v3157, %v3159
    %v3161 = vrot.slane %v2256, 6
    %v3162 = vsel %vm3151, %v3159, %v3161
    %v3163 = vrot.slane %v2257, 6
    %v3164 = vsel %vm3151, %v3161, %v3163
    %v3165 = vrot.slane %v2258, 6
    %v3166 = vsel %vm3151, %v3163, %v3165
    %v3167 = vrot.slane %v2259, 6
    %v3168 = vsel %vm3151, %v3165, %v3167
    %v3169 = vsel %vm2296, %v3154, 0
    %v3171 = vsel %vm2296, %v3156, 0
    %v3173 = vsel %vm2296, %v3158, 0
    %v3175 = vsel %vm2296, %v3160, 0
    %v3177 = vsel %vm2296, %v3162, 0
    %v3179 = vsel %vm2296, %v3164, 0
    %v3181 = vsel %vm2296, %v3166, 0
    %v3183 = vsel %vm2296, %v3168, 0
    %3185 = vmatprep.subr.mxu0 0.0
    %3186 = vmatpush1.msra.mxu0 0.0
    %3187 = vmatprep.subr.mxu0 0.0
    %3188 = vmatpush1.msra.mxu0 0.0
    %3189 = vmatprep.subr.mxu0 0.0
    %3190 = vmatpush1.msra.mxu0 0.0
    %3191 = vmatprep.subr.mxu0 0.0
    %3192 = vmatpush1.msra.mxu0 0.0
    %3193 = vmatprep.subr.mxu0 0.0
    %3194 = vmatpush1.msra.mxu0 0.0
    %3195 = vmatprep.subr.mxu0 0.0
    %3196 = vmatpush1.msra.mxu0 0.0
    %3197 = vmatprep.subr.mxu0 0.0
    %3198 = vmatpush1.msra.mxu0 0.0
    %3199 = vmatprep.subr.mxu0 0.0
    %3200 = vmatpush1.msra.mxu0 0.0
    %3201 = vmatprep.subr.mxu0 0.0
    %3202 = vmatpush1.msra.mxu0 0.0
    %3203 = vmatprep.subr.mxu0 0.0
    %3204 = vmatpush1.msra.mxu0 0.0
    %3205 = vmatprep.subr.mxu0 0.0
    %3206 = vmatpush1.msra.mxu0 0.0
    %3207 = vmatprep.subr.mxu0 0.0
    %3208 = vmatpush1.msra.mxu0 0.0
    %3209 = vmatprep.subr.mxu0 0.0
    %3210 = vmatpush1.msra.mxu0 %v3150
    %3211 = vmatprep.subr.mxu0 0.0
    %3212 = vmatpush1.msra.mxu0 %v3149
    %3213 = vmatprep.subr.mxu0 0.0
    %3214 = vmatpush1.msra.mxu0 %v3148
    %3215 = vmatprep.subr.mxu0 0.0
    %3216 = vmatpush1.msra.mxu0 %v3147
    %3217 = vmatprep.subr.mxu0 0.0
    %3218 = vmatpush2.msra.mxu0 0.0
    %3219 = vmatprep.subr.mxu0 0.0
    %3220 = vmatpush2.msra.mxu0 0.0
    %3221 = vmatprep.subr.mxu0 0.0
    %3222 = vmatpush2.msra.mxu0 0.0
    %3223 = vmatprep.subr.mxu0 0.0
    %3224 = vmatpush2.msra.mxu0 0.0
    %3225 = vmatprep.subr.mxu0 0.0
    %3226 = vmatpush2.msra.mxu0 0.0
    %3227 = vmatprep.subr.mxu0 0.0
    %3228 = vmatpush2.msra.mxu0 0.0
    %3229 = vmatprep.subr.mxu0 0.0
    %3230 = vmatpush2.msra.mxu0 0.0
    %3231 = vmatprep.subr.mxu0 0.0
    %3232 = vmatpush2.msra.mxu0 0.0
    %3233 = vmatprep.subr.mxu0 0.0
    %3234 = vmatpush2.msra.mxu0 0.0
    %3235 = vmatprep.subr.mxu0 0.0
    %3236 = vmatpush2.msra.mxu0 0.0
    %3237 = vmatprep.subr.mxu0 0.0
    %3238 = vmatpush2.msra.mxu0 0.0
    %3239 = vmatprep.subr.mxu0 0.0
    %3240 = vmatpush2.msra.mxu0 0.0
    %3241 = vmatprep.subr.mxu0 0.0
    %3242 = vmatpush2.msra.mxu0 0.0
    %3243 = vmatprep.subr.mxu0 0.0
    %3244 = vmatpush2.msra.mxu0 0.0
    %3245 = vmatprep.subr.mxu0 0.0
    %3246 = vmatpush2.msra.mxu0 0.0
    %3247 = vmatprep.subr.mxu0 0.0
    %3248 = vmatpush2.msra.mxu0 0.0
    %3249 = vmatprep.mubr.f32.mxu0 0.0
    %3250 = vmatmul.mubr.f32.gmra.mxu0 %v3169
    %v3251 = vpop.f32.mrf.mxu0
    %v3252 = vadd.f32 0.0, %v3251
    %v3253 = vpop.f32.mrf.mxu0
    %3254 = vmatprep.mubr.f32.mxu0 0.0
    %3255 = vmatmul.mubr.f32.gmra.mxu0 %v3171
    %v3256 = vpop.f32.mrf.mxu0
    %v3257 = vadd.f32 0.0, %v3256
    %v3258 = vpop.f32.mrf.mxu0
    %3259 = vmatprep.mubr.f32.mxu0 0.0
    %3260 = vmatmul.mubr.f32.gmra.mxu0 %v3173
    %v3261 = vpop.f32.mrf.mxu0
    %v3262 = vadd.f32 0.0, %v3261
    %v3263 = vpop.f32.mrf.mxu0
    %3264 = vmatprep.mubr.f32.mxu0 0.0
    %3265 = vmatmul.mubr.f32.gmra.mxu0 %v3175
    %v3266 = vpop.f32.mrf.mxu0
    %v3267 = vadd.f32 0.0, %v3266
    %v3268 = vpop.f32.mrf.mxu0
    %3269 = vmatprep.mubr.f32.mxu0 0.0
    %3270 = vmatmul.mubr.f32.gmra.mxu0 %v3177
    %v3271 = vpop.f32.mrf.mxu0
    %v3272 = vadd.f32 0.0, %v3271
    %v3273 = vpop.f32.mrf.mxu0
    %3274 = vmatprep.mubr.f32.mxu0 0.0
    %3275 = vmatmul.mubr.f32.gmra.mxu0 %v3179
    %v3276 = vpop.f32.mrf.mxu0
    %v3277 = vadd.f32 0.0, %v3276
    %v3278 = vpop.f32.mrf.mxu0
    %3279 = vmatprep.mubr.f32.mxu0 0.0
    %3280 = vmatmul.mubr.f32.gmra.mxu0 %v3181
    %v3281 = vpop.f32.mrf.mxu0
    %v3282 = vadd.f32 0.0, %v3281
    %v3283 = vpop.f32.mrf.mxu0
    %3284 = vmatprep.mubr.f32.mxu0 0.0
    %3285 = vmatmul.mubr.f32.gmra.mxu0 %v3183
    %v3286 = vpop.f32.mrf.mxu0
    %v3287 = vadd.f32 0.0, %v3286
    %v3288 = vpop.f32.mrf.mxu0
    %3289 = vdwg.mxu0
    %v3290 = vadd.f32 %v3138, %v3252
    %v3291 = vadd.f32 %v3139, %v3257
    %v3292 = vadd.f32 %v3140, %v3262
    %v3293 = vadd.f32 %v3141, %v3267
    %v3294 = vadd.f32 %v3142, %v3272
    %v3295 = vadd.f32 %v3143, %v3277
    %v3296 = vadd.f32 %v3144, %v3282
    %v3297 = vadd.f32 %v3145, %v3287
    %s3298 = scalar_lea.vmem %s6, 224
    %v3299 = vld [vmem:[%s3298] sm:$0xff]
    %v3300 = vld [vmem:[%s3298 + $0x8] sm:$0xff]
    %v3301 = vld [vmem:[%s3298 + $0x10] sm:$0xff]
    %v3302 = vld [vmem:[%s3298 + $0x18] sm:$0xff]
    %vm3303 = vcmask 1040384
    %v3304 = vrot.slane %v2251, 7
    %v3305 = vrot.slane %v2252, 7
    %v3306 = vsel %vm3303, %v3304, %v3305
    %v3307 = vrot.slane %v2253, 7
    %v3308 = vsel %vm3303, %v3305, %v3307
    %v3309 = vrot.slane %v2254, 7
    %v3310 = vsel %vm3303, %v3307, %v3309
    %v3311 = vrot.slane %v2255, 7
    %v3312 = vsel %vm3303, %v3309, %v3311
    %v3313 = vrot.slane %v2256, 7
    %v3314 = vsel %vm3303, %v3311, %v3313
    %v3315 = vrot.slane %v2257, 7
    %v3316 = vsel %vm3303, %v3313, %v3315
    %v3317 = vrot.slane %v2258, 7
    %v3318 = vsel %vm3303, %v3315, %v3317
    %v3319 = vrot.slane %v2259, 7
    %v3320 = vsel %vm3303, %v3317, %v3319
    %v3321 = vsel %vm2296, %v3306, 0
    %v3323 = vsel %vm2296, %v3308, 0
    %v3325 = vsel %vm2296, %v3310, 0
    %v3327 = vsel %vm2296, %v3312, 0
    %v3329 = vsel %vm2296, %v3314, 0
    %v3331 = vsel %vm2296, %v3316, 0
    %v3333 = vsel %vm2296, %v3318, 0
    %v3335 = vsel %vm2296, %v3320, 0
    %3337 = vmatprep.subr.mxu0 0.0
    %3338 = vmatpush1.msra.mxu0 0.0
    %3339 = vmatprep.subr.mxu0 0.0
    %3340 = vmatpush1.msra.mxu0 0.0
    %3341 = vmatprep.subr.mxu0 0.0
    %3342 = vmatpush1.msra.mxu0 0.0
    %3343 = vmatprep.subr.mxu0 0.0
    %3344 = vmatpush1.msra.mxu0 0.0
    %3345 = vmatprep.subr.mxu0 0.0
    %3346 = vmatpush1.msra.mxu0 0.0
    %3347 = vmatprep.subr.mxu0 0.0
    %3348 = vmatpush1.msra.mxu0 0.0
    %3349 = vmatprep.subr.mxu0 0.0
    %3350 = vmatpush1.msra.mxu0 0.0
    %3351 = vmatprep.subr.mxu0 0.0
    %3352 = vmatpush1.msra.mxu0 0.0
    %3353 = vmatprep.subr.mxu0 0.0
    %3354 = vmatpush1.msra.mxu0 0.0
    %3355 = vmatprep.subr.mxu0 0.0
    %3356 = vmatpush1.msra.mxu0 0.0
    %3357 = vmatprep.subr.mxu0 0.0
    %3358 = vmatpush1.msra.mxu0 0.0
    %3359 = vmatprep.subr.mxu0 0.0
    %3360 = vmatpush1.msra.mxu0 0.0
    %3361 = vmatprep.subr.mxu0 0.0
    %3362 = vmatpush1.msra.mxu0 %v3302
    %3363 = vmatprep.subr.mxu0 0.0
    %3364 = vmatpush1.msra.mxu0 %v3301
    %3365 = vmatprep.subr.mxu0 0.0
    %3366 = vmatpush1.msra.mxu0 %v3300
    %3367 = vmatprep.subr.mxu0 0.0
    %3368 = vmatpush1.msra.mxu0 %v3299
    %3369 = vmatprep.subr.mxu0 0.0
    %3370 = vmatpush2.msra.mxu0 0.0
    %3371 = vmatprep.subr.mxu0 0.0
    %3372 = vmatpush2.msra.mxu0 0.0
    %3373 = vmatprep.subr.mxu0 0.0
    %3374 = vmatpush2.msra.mxu0 0.0
    %3375 = vmatprep.subr.mxu0 0.0
    %3376 = vmatpush2.msra.mxu0 0.0
    %3377 = vmatprep.subr.mxu0 0.0
    %3378 = vmatpush2.msra.mxu0 0.0
    %3379 = vmatprep.subr.mxu0 0.0
    %3380 = vmatpush2.msra.mxu0 0.0
    %3381 = vmatprep.subr.mxu0 0.0
    %3382 = vmatpush2.msra.mxu0 0.0
    %3383 = vmatprep.subr.mxu0 0.0
    %3384 = vmatpush2.msra.mxu0 0.0
    %3385 = vmatprep.subr.mxu0 0.0
    %3386 = vmatpush2.msra.mxu0 0.0
    %3387 = vmatprep.subr.mxu0 0.0
    %3388 = vmatpush2.msra.mxu0 0.0
    %3389 = vmatprep.subr.mxu0 0.0
    %3390 = vmatpush2.msra.mxu0 0.0
    %3391 = vmatprep.subr.mxu0 0.0
    %3392 = vmatpush2.msra.mxu0 0.0
    %3393 = vmatprep.subr.mxu0 0.0
    %3394 = vmatpush2.msra.mxu0 0.0
    %3395 = vmatprep.subr.mxu0 0.0
    %3396 = vmatpush2.msra.mxu0 0.0
    %3397 = vmatprep.subr.mxu0 0.0
    %3398 = vmatpush2.msra.mxu0 0.0
    %3399 = vmatprep.subr.mxu0 0.0
    %3400 = vmatpush2.msra.mxu0 0.0
    %3401 = vmatprep.mubr.f32.mxu0 0.0
    %3402 = vmatmul.mubr.f32.gmra.mxu0 %v3321
    %v3403 = vpop.f32.mrf.mxu0
    %v3404 = vadd.f32 0.0, %v3403
    %v3405 = vpop.f32.mrf.mxu0
    %3406 = vmatprep.mubr.f32.mxu0 0.0
    %3407 = vmatmul.mubr.f32.gmra.mxu0 %v3323
    %v3408 = vpop.f32.mrf.mxu0
    %v3409 = vadd.f32 0.0, %v3408
    %v3410 = vpop.f32.mrf.mxu0
    %3411 = vmatprep.mubr.f32.mxu0 0.0
    %3412 = vmatmul.mubr.f32.gmra.mxu0 %v3325
    %v3413 = vpop.f32.mrf.mxu0
    %v3414 = vadd.f32 0.0, %v3413
    %v3415 = vpop.f32.mrf.mxu0
    %3416 = vmatprep.mubr.f32.mxu0 0.0
    %3417 = vmatmul.mubr.f32.gmra.mxu0 %v3327
    %v3418 = vpop.f32.mrf.mxu0
    %v3419 = vadd.f32 0.0, %v3418
    %v3420 = vpop.f32.mrf.mxu0
    %3421 = vmatprep.mubr.f32.mxu0 0.0
    %3422 = vmatmul.mubr.f32.gmra.mxu0 %v3329
    %v3423 = vpop.f32.mrf.mxu0
    %v3424 = vadd.f32 0.0, %v3423
    %v3425 = vpop.f32.mrf.mxu0
    %3426 = vmatprep.mubr.f32.mxu0 0.0
    %3427 = vmatmul.mubr.f32.gmra.mxu0 %v3331
    %v3428 = vpop.f32.mrf.mxu0
    %v3429 = vadd.f32 0.0, %v3428
    %v3430 = vpop.f32.mrf.mxu0
    %3431 = vmatprep.mubr.f32.mxu0 0.0
    %3432 = vmatmul.mubr.f32.gmra.mxu0 %v3333
    %v3433 = vpop.f32.mrf.mxu0
    %v3434 = vadd.f32 0.0, %v3433
    %v3435 = vpop.f32.mrf.mxu0
    %3436 = vmatprep.mubr.f32.mxu0 0.0
    %3437 = vmatmul.mubr.f32.gmra.mxu0 %v3335
    %v3438 = vpop.f32.mrf.mxu0
    %v3439 = vadd.f32 0.0, %v3438
    %v3440 = vpop.f32.mrf.mxu0
    %3441 = vdwg.mxu0
    %v3442 = vadd.f32 %v3290, %v3404
    %v3443 = vadd.f32 %v3291, %v3409
    %v3444 = vadd.f32 %v3292, %v3414
    %v3445 = vadd.f32 %v3293, %v3419
    %v3446 = vadd.f32 %v3294, %v3424
    %v3447 = vadd.f32 %v3295, %v3429
    %v3448 = vadd.f32 %v3296, %v3434
    %v3449 = vadd.f32 %v3297, %v3439
    %s3450 = scalar_lea.vmem %s6, 256
    %v3451 = vld [vmem:[%s3450] sm:$0xff]
    %v3452 = vld [vmem:[%s3450 + $0x8] sm:$0xff]
    %v3453 = vld [vmem:[%s3450 + $0x10] sm:$0xff]
    %v3454 = vld [vmem:[%s3450 + $0x18] sm:$0xff]
    %v3455 = vsel %vm2296, %v2259, 0
    %3457 = vmatprep.subr.mxu0 0.0
    %3458 = vmatpush1.msra.mxu0 0.0
    %3459 = vmatprep.subr.mxu0 0.0
    %3460 = vmatpush1.msra.mxu0 0.0
    %3461 = vmatprep.subr.mxu0 0.0
    %3462 = vmatpush1.msra.mxu0 0.0
    %3463 = vmatprep.subr.mxu0 0.0
    %3464 = vmatpush1.msra.mxu0 0.0
    %3465 = vmatprep.subr.mxu0 0.0
    %3466 = vmatpush1.msra.mxu0 0.0
    %3467 = vmatprep.subr.mxu0 0.0
    %3468 = vmatpush1.msra.mxu0 0.0
    %3469 = vmatprep.subr.mxu0 0.0
    %3470 = vmatpush1.msra.mxu0 0.0
    %3471 = vmatprep.subr.mxu0 0.0
    %3472 = vmatpush1.msra.mxu0 0.0
    %3473 = vmatprep.subr.mxu0 0.0
    %3474 = vmatpush1.msra.mxu0 0.0
    %3475 = vmatprep.subr.mxu0 0.0
    %3476 = vmatpush1.msra.mxu0 0.0
    %3477 = vmatprep.subr.mxu0 0.0
    %3478 = vmatpush1.msra.mxu0 0.0
    %3479 = vmatprep.subr.mxu0 0.0
    %3480 = vmatpush1.msra.mxu0 0.0
    %3481 = vmatprep.subr.mxu0 0.0
    %3482 = vmatpush1.msra.mxu0 %v3454
    %3483 = vmatprep.subr.mxu0 0.0
    %3484 = vmatpush1.msra.mxu0 %v3453
    %3485 = vmatprep.subr.mxu0 0.0
    %3486 = vmatpush1.msra.mxu0 %v3452
    %3487 = vmatprep.subr.mxu0 0.0
    %3488 = vmatpush1.msra.mxu0 %v3451
    %3489 = vmatprep.subr.mxu0 0.0
    %3490 = vmatpush2.msra.mxu0 0.0
    %3491 = vmatprep.subr.mxu0 0.0
    %3492 = vmatpush2.msra.mxu0 0.0
    %3493 = vmatprep.subr.mxu0 0.0
    %3494 = vmatpush2.msra.mxu0 0.0
    %3495 = vmatprep.subr.mxu0 0.0
    %3496 = vmatpush2.msra.mxu0 0.0
    %3497 = vmatprep.subr.mxu0 0.0
    %3498 = vmatpush2.msra.mxu0 0.0
    %3499 = vmatprep.subr.mxu0 0.0
    %3500 = vmatpush2.msra.mxu0 0.0
    %3501 = vmatprep.subr.mxu0 0.0
    %3502 = vmatpush2.msra.mxu0 0.0
    %3503 = vmatprep.subr.mxu0 0.0
    %3504 = vmatpush2.msra.mxu0 0.0
    %3505 = vmatprep.subr.mxu0 0.0
    %3506 = vmatpush2.msra.mxu0 0.0
    %3507 = vmatprep.subr.mxu0 0.0
    %3508 = vmatpush2.msra.mxu0 0.0
    %3509 = vmatprep.subr.mxu0 0.0
    %3510 = vmatpush2.msra.mxu0 0.0
    %3511 = vmatprep.subr.mxu0 0.0
    %3512 = vmatpush2.msra.mxu0 0.0
    %3513 = vmatprep.subr.mxu0 0.0
    %3514 = vmatpush2.msra.mxu0 0.0
    %3515 = vmatprep.subr.mxu0 0.0
    %3516 = vmatpush2.msra.mxu0 0.0
    %3517 = vmatprep.subr.mxu0 0.0
    %3518 = vmatpush2.msra.mxu0 0.0
    %3519 = vmatprep.subr.mxu0 0.0
    %3520 = vmatpush2.msra.mxu0 0.0
    %3521 = vmatprep.mubr.f32.mxu0 0.0
    %3522 = vmatmul.mubr.f32.gmra.mxu0 %v2420
    %v3523 = vpop.f32.mrf.mxu0
    %v3524 = vadd.f32 0.0, %v3523
    %v3525 = vpop.f32.mrf.mxu0
    %3526 = vmatprep.mubr.f32.mxu0 0.0
    %3527 = vmatmul.mubr.f32.gmra.mxu0 %v2422
    %v3528 = vpop.f32.mrf.mxu0
    %v3529 = vadd.f32 0.0, %v3528
    %v3530 = vpop.f32.mrf.mxu0
    %3531 = vmatprep.mubr.f32.mxu0 0.0
    %3532 = vmatmul.mubr.f32.gmra.mxu0 %v2424
    %v3533 = vpop.f32.mrf.mxu0
    %v3534 = vadd.f32 0.0, %v3533
    %v3535 = vpop.f32.mrf.mxu0
    %3536 = vmatprep.mubr.f32.mxu0 0.0
    %3537 = vmatmul.mubr.f32.gmra.mxu0 %v2426
    %v3538 = vpop.f32.mrf.mxu0
    %v3539 = vadd.f32 0.0, %v3538
    %v3540 = vpop.f32.mrf.mxu0
    %3541 = vmatprep.mubr.f32.mxu0 0.0
    %3542 = vmatmul.mubr.f32.gmra.mxu0 %v2428
    %v3543 = vpop.f32.mrf.mxu0
    %v3544 = vadd.f32 0.0, %v3543
    %v3545 = vpop.f32.mrf.mxu0
    %3546 = vmatprep.mubr.f32.mxu0 0.0
    %3547 = vmatmul.mubr.f32.gmra.mxu0 %v2430
    %v3548 = vpop.f32.mrf.mxu0
    %v3549 = vadd.f32 0.0, %v3548
    %v3550 = vpop.f32.mrf.mxu0
    %3551 = vmatprep.mubr.f32.mxu0 0.0
    %3552 = vmatmul.mubr.f32.gmra.mxu0 %v2432
    %v3553 = vpop.f32.mrf.mxu0
    %v3554 = vadd.f32 0.0, %v3553
    %v3555 = vpop.f32.mrf.mxu0
    %3556 = vmatprep.mubr.f32.mxu0 0.0
    %3557 = vmatmul.mubr.f32.gmra.mxu0 %v3455
    %v3558 = vpop.f32.mrf.mxu0
    %v3559 = vadd.f32 0.0, %v3558
    %v3560 = vpop.f32.mrf.mxu0
    %3561 = vdwg.mxu0
    %v3562 = vadd.f32 %v3442, %v3524
    %v3563 = vadd.f32 %v3443, %v3529
    %v3564 = vadd.f32 %v3444, %v3534
    %v3565 = vadd.f32 %v3445, %v3539
    %v3566 = vadd.f32 %v3446, %v3544
    %v3567 = vadd.f32 %v3447, %v3549
    %v3568 = vadd.f32 %v3448, %v3554
    %v3569 = vadd.f32 %v3449, %v3559
    %v3570 = vld [vmem:[%s7] sm:$0x1]
    %v3572 = vlaneseq
    %v3573 = vshrl.u32 %v3572, 7
    %v3574 = vsub.s32 0, %v3573
    %v3575 = vrot.slane %v3570, %v3574
    %v3577 = vadd.f32 %v3562, %v3575
    %v3578 = vadd.f32 %v3563, %v3575
    %v3579 = vadd.f32 %v3564, %v3575
    %v3580 = vadd.f32 %v3565, %v3575
    %v3581 = vadd.f32 %v3566, %v3575
    %v3582 = vadd.f32 %v3567, %v3575
    %v3583 = vadd.f32 %v3568, %v3575
    %v3584 = vadd.f32 %v3569, %v3575
    %v3585 = vld [vmem:[%s2] sm:$0xff]
    %v3586 = vld [vmem:[%s2 + $0x8] sm:$0xff]
    %v3587 = vld [vmem:[%s2 + $0x10] sm:$0xff]
    %v3588 = vld [vmem:[%s2 + $0x18] sm:$0xff]
    %v3589 = vld [vmem:[%s2 + $0x20] sm:$0xff]
    %v3590 = vld [vmem:[%s2 + $0x28] sm:$0xff]
    %v3591 = vld [vmem:[%s2 + $0x30] sm:$0xff]
    %v3592 = vld [vmem:[%s2 + $0x38] sm:$0xff]
    %v3593 = vld [vmem:[%s2 + $0x40] sm:$0xff]
    %vm3594 = vcmask 523264
    %v3596 = vsel %vm3594, %v3585, 0
    %v3599 = vsel %vm3594, %v3586, 0
    %v3602 = vsel %vm3594, %v3587, 0
    %v3605 = vsel %vm3594, %v3588, 0
    %v3608 = vsel %vm3594, %v3589, 0
    %v3611 = vsel %vm3594, %v3590, 0
    %v3614 = vsel %vm3594, %v3591, 0
    %v3617 = vsel %vm3594, %v3592, 0
    %v3620 = vsel %vm3594, %v3593, 0
    %3622 = vmatprep.subr.mxu0 0.0
    %3623 = vmatpush1.msra.mxu0 0.0
    %3624 = vmatprep.subr.mxu0 0.0
    %3625 = vmatpush1.msra.mxu0 0.0
    %3626 = vmatprep.subr.mxu0 0.0
    %3627 = vmatpush1.msra.mxu0 0.0
    %3628 = vmatprep.subr.mxu0 0.0
    %3629 = vmatpush1.msra.mxu0 0.0
    %3630 = vmatprep.subr.mxu0 0.0
    %3631 = vmatpush1.msra.mxu0 0.0
    %3632 = vmatprep.subr.mxu0 0.0
    %3633 = vmatpush1.msra.mxu0 0.0
    %3634 = vmatprep.subr.mxu0 0.0
    %3635 = vmatpush1.msra.mxu0 0.0
    %3636 = vmatprep.subr.mxu0 0.0
    %3637 = vmatpush1.msra.mxu0 0.0
    %3638 = vmatprep.subr.mxu0 0.0
    %v3639 = vand.u32 %v3584, 4294901760
    %3640 = vmatpush1.msra.mxu0 %v3639
    %3641 = vmatprep.subr.mxu0 0.0
    %v3642 = vand.u32 %v3583, 4294901760
    %3643 = vmatpush1.msra.mxu0 %v3642
    %3644 = vmatprep.subr.mxu0 0.0
    %v3645 = vand.u32 %v3582, 4294901760
    %3646 = vmatpush1.msra.mxu0 %v3645
    %3647 = vmatprep.subr.mxu0 0.0
    %v3648 = vand.u32 %v3581, 4294901760
    %3649 = vmatpush1.msra.mxu0 %v3648
    %3650 = vmatprep.subr.mxu0 0.0
    %v3651 = vand.u32 %v3580, 4294901760
    %3652 = vmatpush1.msra.mxu0 %v3651
    %3653 = vmatprep.subr.mxu0 0.0
    %v3654 = vand.u32 %v3579, 4294901760
    %3655 = vmatpush1.msra.mxu0 %v3654
    %3656 = vmatprep.subr.mxu0 0.0
    %v3657 = vand.u32 %v3578, 4294901760
    %3658 = vmatpush1.msra.mxu0 %v3657
    %3659 = vmatprep.subr.mxu0 0.0
    %v3660 = vand.u32 %v3577, 4294901760
    %3661 = vmatpush1.msra.mxu0 %v3660
    %3662 = vmatprep.subr.mxu0 0.0
    %3663 = vmatpush2.msra.mxu0 0.0
    %3664 = vmatprep.subr.mxu0 0.0
    %3665 = vmatpush2.msra.mxu0 0.0
    %3666 = vmatprep.subr.mxu0 0.0
    %3667 = vmatpush2.msra.mxu0 0.0
    %3668 = vmatprep.subr.mxu0 0.0
    %3669 = vmatpush2.msra.mxu0 0.0
    %3670 = vmatprep.subr.mxu0 0.0
    %3671 = vmatpush2.msra.mxu0 0.0
    %3672 = vmatprep.subr.mxu0 0.0
    %3673 = vmatpush2.msra.mxu0 0.0
    %3674 = vmatprep.subr.mxu0 0.0
    %3675 = vmatpush2.msra.mxu0 0.0
    %3676 = vmatprep.subr.mxu0 0.0
    %3677 = vmatpush2.msra.mxu0 0.0
    %3678 = vmatprep.subr.mxu0 0.0
    %3679 = vmatpush2.msra.mxu0 0.0
    %3680 = vmatprep.subr.mxu0 0.0
    %3681 = vmatpush2.msra.mxu0 0.0
    %3682 = vmatprep.subr.mxu0 0.0
    %3683 = vmatpush2.msra.mxu0 0.0
    %3684 = vmatprep.subr.mxu0 0.0
    %3685 = vmatpush2.msra.mxu0 0.0
    %3686 = vmatprep.subr.mxu0 0.0
    %3687 = vmatpush2.msra.mxu0 0.0
    %3688 = vmatprep.subr.mxu0 0.0
    %3689 = vmatpush2.msra.mxu0 0.0
    %3690 = vmatprep.subr.mxu0 0.0
    %3691 = vmatpush2.msra.mxu0 0.0
    %3692 = vmatprep.subr.mxu0 0.0
    %3693 = vmatpush2.msra.mxu0 0.0
    %3694 = vmatprep.mubr.f32.mxu0 0.0
    %v3695 = vand.u32 %v3596, 4294901760
    %v3696 = vsub.f32 %v3596, %v3695
    %v3697 = vand.u32 %v3696, 4294901760
    %v3698 = vsub.f32 %v3696, %v3697
    %v3699 = vand.u32 %v3698, 4294901760
    %3700 = vmatmul.mubr.f32.gmra.mxu0 %v3699
    %v3701 = vpop.f32.mrf.mxu0
    %v3702 = vadd.f32 0.0, %v3701
    %v3703 = vpop.f32.mrf.mxu0
    %3704 = vmatprep.mubr.f32.mxu0 0.0
    %v3705 = vand.u32 %v3599, 4294901760
    %v3706 = vsub.f32 %v3599, %v3705
    %v3707 = vand.u32 %v3706, 4294901760
    %v3708 = vsub.f32 %v3706, %v3707
    %v3709 = vand.u32 %v3708, 4294901760
    %3710 = vmatmul.mubr.f32.gmra.mxu0 %v3709
    %v3711 = vpop.f32.mrf.mxu0
    %v3712 = vadd.f32 0.0, %v3711
    %v3713 = vpop.f32.mrf.mxu0
    %3714 = vmatprep.mubr.f32.mxu0 0.0
    %v3715 = vand.u32 %v3602, 4294901760
    %v3716 = vsub.f32 %v3602, %v3715
    %v3717 = vand.u32 %v3716, 4294901760
    %v3718 = vsub.f32 %v3716, %v3717
    %v3719 = vand.u32 %v3718, 4294901760
    %3720 = vmatmul.mubr.f32.gmra.mxu0 %v3719
    %v3721 = vpop.f32.mrf.mxu0
    %v3722 = vadd.f32 0.0, %v3721
    %v3723 = vpop.f32.mrf.mxu0
    %3724 = vmatprep.mubr.f32.mxu0 0.0
    %v3725 = vand.u32 %v3605, 4294901760
    %v3726 = vsub.f32 %v3605, %v3725
    %v3727 = vand.u32 %v3726, 4294901760
    %v3728 = vsub.f32 %v3726, %v3727
    %v3729 = vand.u32 %v3728, 4294901760
    %3730 = vmatmul.mubr.f32.gmra.mxu0 %v3729
    %v3731 = vpop.f32.mrf.mxu0
    %v3732 = vadd.f32 0.0, %v3731
    %v3733 = vpop.f32.mrf.mxu0
    %3734 = vmatprep.mubr.f32.mxu0 0.0
    %v3735 = vand.u32 %v3608, 4294901760
    %v3736 = vsub.f32 %v3608, %v3735
    %v3737 = vand.u32 %v3736, 4294901760
    %v3738 = vsub.f32 %v3736, %v3737
    %v3739 = vand.u32 %v3738, 4294901760
    %3740 = vmatmul.mubr.f32.gmra.mxu0 %v3739
    %v3741 = vpop.f32.mrf.mxu0
    %v3742 = vadd.f32 0.0, %v3741
    %v3743 = vpop.f32.mrf.mxu0
    %3744 = vmatprep.mubr.f32.mxu0 0.0
    %v3745 = vand.u32 %v3611, 4294901760
    %v3746 = vsub.f32 %v3611, %v3745
    %v3747 = vand.u32 %v3746, 4294901760
    %v3748 = vsub.f32 %v3746, %v3747
    %v3749 = vand.u32 %v3748, 4294901760
    %3750 = vmatmul.mubr.f32.gmra.mxu0 %v3749
    %v3751 = vpop.f32.mrf.mxu0
    %v3752 = vadd.f32 0.0, %v3751
    %v3753 = vpop.f32.mrf.mxu0
    %3754 = vmatprep.mubr.f32.mxu0 0.0
    %v3755 = vand.u32 %v3614, 4294901760
    %v3756 = vsub.f32 %v3614, %v3755
    %v3757 = vand.u32 %v3756, 4294901760
    %v3758 = vsub.f32 %v3756, %v3757
    %v3759 = vand.u32 %v3758, 4294901760
    %3760 = vmatmul.mubr.f32.gmra.mxu0 %v3759
    %v3761 = vpop.f32.mrf.mxu0
    %v3762 = vadd.f32 0.0, %v3761
    %v3763 = vpop.f32.mrf.mxu0
    %3764 = vmatprep.mubr.f32.mxu0 0.0
    %v3765 = vand.u32 %v3617, 4294901760
    %v3766 = vsub.f32 %v3617, %v3765
    %v3767 = vand.u32 %v3766, 4294901760
    %v3768 = vsub.f32 %v3766, %v3767
    %v3769 = vand.u32 %v3768, 4294901760
    %3770 = vmatmul.mubr.f32.gmra.mxu0 %v3769
    %v3771 = vpop.f32.mrf.mxu0
    %v3772 = vadd.f32 0.0, %v3771
    %v3773 = vpop.f32.mrf.mxu0
    %3774 = vmatprep.mubr.f32.mxu0 0.0
    %v3775 = vand.u32 %v3620, 4294901760
    %v3776 = vsub.f32 %v3620, %v3775
    %v3777 = vand.u32 %v3776, 4294901760
    %v3778 = vsub.f32 %v3776, %v3777
    %v3779 = vand.u32 %v3778, 4294901760
    %3780 = vmatmul.mubr.f32.gmra.mxu0 %v3779
    %v3781 = vpop.f32.mrf.mxu0
    %v3782 = vadd.f32 0.0, %v3781
    %v3783 = vpop.f32.mrf.mxu0
    %3784 = vdwg.mxu0
    %3785 = vmatprep.subr.mxu0 0.0
    %3786 = vmatpush1.msra.mxu0 0.0
    %3787 = vmatprep.subr.mxu0 0.0
    %3788 = vmatpush1.msra.mxu0 0.0
    %3789 = vmatprep.subr.mxu0 0.0
    %3790 = vmatpush1.msra.mxu0 0.0
    %3791 = vmatprep.subr.mxu0 0.0
    %3792 = vmatpush1.msra.mxu0 0.0
    %3793 = vmatprep.subr.mxu0 0.0
    %3794 = vmatpush1.msra.mxu0 0.0
    %3795 = vmatprep.subr.mxu0 0.0
    %3796 = vmatpush1.msra.mxu0 0.0
    %3797 = vmatprep.subr.mxu0 0.0
    %3798 = vmatpush1.msra.mxu0 0.0
    %3799 = vmatprep.subr.mxu0 0.0
    %3800 = vmatpush1.msra.mxu0 0.0
    %3801 = vmatprep.subr.mxu0 0.0
    %v3802 = vand.u32 %v3584, 4294901760
    %v3803 = vsub.f32 %v3584, %v3802
    %v3804 = vand.u32 %v3803, 4294901760
    %v3805 = vsub.f32 %v3803, %v3804
    %v3806 = vand.u32 %v3805, 4294901760
    %3807 = vmatpush1.msra.mxu0 %v3806
    %3808 = vmatprep.subr.mxu0 0.0
    %v3809 = vand.u32 %v3583, 4294901760
    %v3810 = vsub.f32 %v3583, %v3809
    %v3811 = vand.u32 %v3810, 4294901760
    %v3812 = vsub.f32 %v3810, %v3811
    %v3813 = vand.u32 %v3812, 4294901760
    %3814 = vmatpush1.msra.mxu0 %v3813
    %3815 = vmatprep.subr.mxu0 0.0
    %v3816 = vand.u32 %v3582, 4294901760
    %v3817 = vsub.f32 %v3582, %v3816
    %v3818 = vand.u32 %v3817, 4294901760
    %v3819 = vsub.f32 %v3817, %v3818
    %v3820 = vand.u32 %v3819, 4294901760
    %3821 = vmatpush1.msra.mxu0 %v3820
    %3822 = vmatprep.subr.mxu0 0.0
    %v3823 = vand.u32 %v3581, 4294901760
    %v3824 = vsub.f32 %v3581, %v3823
    %v3825 = vand.u32 %v3824, 4294901760
    %v3826 = vsub.f32 %v3824, %v3825
    %v3827 = vand.u32 %v3826, 4294901760
    %3828 = vmatpush1.msra.mxu0 %v3827
    %3829 = vmatprep.subr.mxu0 0.0
    %v3830 = vand.u32 %v3580, 4294901760
    %v3831 = vsub.f32 %v3580, %v3830
    %v3832 = vand.u32 %v3831, 4294901760
    %v3833 = vsub.f32 %v3831, %v3832
    %v3834 = vand.u32 %v3833, 4294901760
    %3835 = vmatpush1.msra.mxu0 %v3834
    %3836 = vmatprep.subr.mxu0 0.0
    %v3837 = vand.u32 %v3579, 4294901760
    %v3838 = vsub.f32 %v3579, %v3837
    %v3839 = vand.u32 %v3838, 4294901760
    %v3840 = vsub.f32 %v3838, %v3839
    %v3841 = vand.u32 %v3840, 4294901760
    %3842 = vmatpush1.msra.mxu0 %v3841
    %3843 = vmatprep.subr.mxu0 0.0
    %v3844 = vand.u32 %v3578, 4294901760
    %v3845 = vsub.f32 %v3578, %v3844
    %v3846 = vand.u32 %v3845, 4294901760
    %v3847 = vsub.f32 %v3845, %v3846
    %v3848 = vand.u32 %v3847, 4294901760
    %3849 = vmatpush1.msra.mxu0 %v3848
    %3850 = vmatprep.subr.mxu0 0.0
    %v3851 = vand.u32 %v3577, 4294901760
    %v3852 = vsub.f32 %v3577, %v3851
    %v3853 = vand.u32 %v3852, 4294901760
    %v3854 = vsub.f32 %v3852, %v3853
    %v3855 = vand.u32 %v3854, 4294901760
    %3856 = vmatpush1.msra.mxu0 %v3855
    %3857 = vmatprep.subr.mxu0 0.0
    %3858 = vmatpush2.msra.mxu0 0.0
    %3859 = vmatprep.subr.mxu0 0.0
    %3860 = vmatpush2.msra.mxu0 0.0
    %3861 = vmatprep.subr.mxu0 0.0
    %3862 = vmatpush2.msra.mxu0 0.0
    %3863 = vmatprep.subr.mxu0 0.0
    %3864 = vmatpush2.msra.mxu0 0.0
    %3865 = vmatprep.subr.mxu0 0.0
    %3866 = vmatpush2.msra.mxu0 0.0
    %3867 = vmatprep.subr.mxu0 0.0
    %3868 = vmatpush2.msra.mxu0 0.0
    %3869 = vmatprep.subr.mxu0 0.0
    %3870 = vmatpush2.msra.mxu0 0.0
    %3871 = vmatprep.subr.mxu0 0.0
    %3872 = vmatpush2.msra.mxu0 0.0
    %3873 = vmatprep.subr.mxu0 0.0
    %3874 = vmatpush2.msra.mxu0 0.0
    %3875 = vmatprep.subr.mxu0 0.0
    %3876 = vmatpush2.msra.mxu0 0.0
    %3877 = vmatprep.subr.mxu0 0.0
    %3878 = vmatpush2.msra.mxu0 0.0
    %3879 = vmatprep.subr.mxu0 0.0
    %3880 = vmatpush2.msra.mxu0 0.0
    %3881 = vmatprep.subr.mxu0 0.0
    %3882 = vmatpush2.msra.mxu0 0.0
    %3883 = vmatprep.subr.mxu0 0.0
    %3884 = vmatpush2.msra.mxu0 0.0
    %3885 = vmatprep.subr.mxu0 0.0
    %3886 = vmatpush2.msra.mxu0 0.0
    %3887 = vmatprep.subr.mxu0 0.0
    %3888 = vmatpush2.msra.mxu0 0.0
    %3889 = vmatprep.mubr.f32.mxu0 0.0
    %v3890 = vand.u32 %v3596, 4294901760
    %3891 = vmatmul.mubr.f32.gmra.mxu0 %v3890
    %v3892 = vpop.f32.mrf.mxu0
    %v3893 = vadd.f32 %v3702, %v3892
    %v3894 = vpop.f32.mrf.mxu0
    %3895 = vmatprep.mubr.f32.mxu0 0.0
    %v3896 = vand.u32 %v3599, 4294901760
    %3897 = vmatmul.mubr.f32.gmra.mxu0 %v3896
    %v3898 = vpop.f32.mrf.mxu0
    %v3899 = vadd.f32 %v3712, %v3898
    %v3900 = vpop.f32.mrf.mxu0
    %3901 = vmatprep.mubr.f32.mxu0 0.0
    %v3902 = vand.u32 %v3602, 4294901760
    %3903 = vmatmul.mubr.f32.gmra.mxu0 %v3902
    %v3904 = vpop.f32.mrf.mxu0
    %v3905 = vadd.f32 %v3722, %v3904
    %v3906 = vpop.f32.mrf.mxu0
    %3907 = vmatprep.mubr.f32.mxu0 0.0
    %v3908 = vand.u32 %v3605, 4294901760
    %3909 = vmatmul.mubr.f32.gmra.mxu0 %v3908
    %v3910 = vpop.f32.mrf.mxu0
    %v3911 = vadd.f32 %v3732, %v3910
    %v3912 = vpop.f32.mrf.mxu0
    %3913 = vmatprep.mubr.f32.mxu0 0.0
    %v3914 = vand.u32 %v3608, 4294901760
    %3915 = vmatmul.mubr.f32.gmra.mxu0 %v3914
    %v3916 = vpop.f32.mrf.mxu0
    %v3917 = vadd.f32 %v3742, %v3916
    %v3918 = vpop.f32.mrf.mxu0
    %3919 = vmatprep.mubr.f32.mxu0 0.0
    %v3920 = vand.u32 %v3611, 4294901760
    %3921 = vmatmul.mubr.f32.gmra.mxu0 %v3920
    %v3922 = vpop.f32.mrf.mxu0
    %v3923 = vadd.f32 %v3752, %v3922
    %v3924 = vpop.f32.mrf.mxu0
    %3925 = vmatprep.mubr.f32.mxu0 0.0
    %v3926 = vand.u32 %v3614, 4294901760
    %3927 = vmatmul.mubr.f32.gmra.mxu0 %v3926
    %v3928 = vpop.f32.mrf.mxu0
    %v3929 = vadd.f32 %v3762, %v3928
    %v3930 = vpop.f32.mrf.mxu0
    %3931 = vmatprep.mubr.f32.mxu0 0.0
    %v3932 = vand.u32 %v3617, 4294901760
    %3933 = vmatmul.mubr.f32.gmra.mxu0 %v3932
    %v3934 = vpop.f32.mrf.mxu0
    %v3935 = vadd.f32 %v3772, %v3934
    %v3936 = vpop.f32.mrf.mxu0
    %3937 = vmatprep.mubr.f32.mxu0 0.0
    %v3938 = vand.u32 %v3620, 4294901760
    %3939 = vmatmul.mubr.f32.gmra.mxu0 %v3938
    %v3940 = vpop.f32.mrf.mxu0
    %v3941 = vadd.f32 %v3782, %v3940
    %v3942 = vpop.f32.mrf.mxu0
    %3943 = vdwg.mxu0
    %3944 = vmatprep.subr.mxu0 0.0
    %3945 = vmatpush1.msra.mxu0 0.0
    %3946 = vmatprep.subr.mxu0 0.0
    %3947 = vmatpush1.msra.mxu0 0.0
    %3948 = vmatprep.subr.mxu0 0.0
    %3949 = vmatpush1.msra.mxu0 0.0
    %3950 = vmatprep.subr.mxu0 0.0
    %3951 = vmatpush1.msra.mxu0 0.0
    %3952 = vmatprep.subr.mxu0 0.0
    %3953 = vmatpush1.msra.mxu0 0.0
    %3954 = vmatprep.subr.mxu0 0.0
    %3955 = vmatpush1.msra.mxu0 0.0
    %3956 = vmatprep.subr.mxu0 0.0
    %3957 = vmatpush1.msra.mxu0 0.0
    %3958 = vmatprep.subr.mxu0 0.0
    %3959 = vmatpush1.msra.mxu0 0.0
    %3960 = vmatprep.subr.mxu0 0.0
    %v3961 = vand.u32 %v3584, 4294901760
    %v3962 = vsub.f32 %v3584, %v3961
    %3963 = vmatpush1.msra.mxu0 %v3962
    %3964 = vmatprep.subr.mxu0 0.0
    %v3965 = vand.u32 %v3583, 4294901760
    %v3966 = vsub.f32 %v3583, %v3965
    %3967 = vmatpush1.msra.mxu0 %v3966
    %3968 = vmatprep.subr.mxu0 0.0
    %v3969 = vand.u32 %v3582, 4294901760
    %v3970 = vsub.f32 %v3582, %v3969
    %3971 = vmatpush1.msra.mxu0 %v3970
    %3972 = vmatprep.subr.mxu0 0.0
    %v3973 = vand.u32 %v3581, 4294901760
    %v3974 = vsub.f32 %v3581, %v3973
    %3975 = vmatpush1.msra.mxu0 %v3974
    %3976 = vmatprep.subr.mxu0 0.0
    %v3977 = vand.u32 %v3580, 4294901760
    %v3978 = vsub.f32 %v3580, %v3977
    %3979 = vmatpush1.msra.mxu0 %v3978
    %3980 = vmatprep.subr.mxu0 0.0
    %v3981 = vand.u32 %v3579, 4294901760
    %v3982 = vsub.f32 %v3579, %v3981
    %3983 = vmatpush1.msra.mxu0 %v3982
    %3984 = vmatprep.subr.mxu0 0.0
    %v3985 = vand.u32 %v3578, 4294901760
    %v3986 = vsub.f32 %v3578, %v3985
    %3987 = vmatpush1.msra.mxu0 %v3986
    %3988 = vmatprep.subr.mxu0 0.0
    %v3989 = vand.u32 %v3577, 4294901760
    %v3990 = vsub.f32 %v3577, %v3989
    %3991 = vmatpush1.msra.mxu0 %v3990
    %3992 = vmatprep.subr.mxu0 0.0
    %3993 = vmatpush2.msra.mxu0 0.0
    %3994 = vmatprep.subr.mxu0 0.0
    %3995 = vmatpush2.msra.mxu0 0.0
    %3996 = vmatprep.subr.mxu0 0.0
    %3997 = vmatpush2.msra.mxu0 0.0
    %3998 = vmatprep.subr.mxu0 0.0
    %3999 = vmatpush2.msra.mxu0 0.0
    %4000 = vmatprep.subr.mxu0 0.0
    %4001 = vmatpush2.msra.mxu0 0.0
    %4002 = vmatprep.subr.mxu0 0.0
    %4003 = vmatpush2.msra.mxu0 0.0
    %4004 = vmatprep.subr.mxu0 0.0
    %4005 = vmatpush2.msra.mxu0 0.0
    %4006 = vmatprep.subr.mxu0 0.0
    %4007 = vmatpush2.msra.mxu0 0.0
    %4008 = vmatprep.subr.mxu0 0.0
    %4009 = vmatpush2.msra.mxu0 0.0
    %4010 = vmatprep.subr.mxu0 0.0
    %4011 = vmatpush2.msra.mxu0 0.0
    %4012 = vmatprep.subr.mxu0 0.0
    %4013 = vmatpush2.msra.mxu0 0.0
    %4014 = vmatprep.subr.mxu0 0.0
    %4015 = vmatpush2.msra.mxu0 0.0
    %4016 = vmatprep.subr.mxu0 0.0
    %4017 = vmatpush2.msra.mxu0 0.0
    %4018 = vmatprep.subr.mxu0 0.0
    %4019 = vmatpush2.msra.mxu0 0.0
    %4020 = vmatprep.subr.mxu0 0.0
    %4021 = vmatpush2.msra.mxu0 0.0
    %4022 = vmatprep.subr.mxu0 0.0
    %4023 = vmatpush2.msra.mxu0 0.0
    %4024 = vmatprep.mubr.f32.mxu0 0.0
    %v4025 = vand.u32 %v3596, 4294901760
    %v4026 = vsub.f32 %v3596, %v4025
    %4027 = vmatmul.mubr.f32.gmra.mxu0 %v4026
    %v4028 = vpop.f32.mrf.mxu0
    %v4029 = vadd.f32 %v3893, %v4028
    %v4030 = vpop.f32.mrf.mxu0
    %4031 = vmatprep.mubr.f32.mxu0 0.0
    %v4032 = vand.u32 %v3599, 4294901760
    %v4033 = vsub.f32 %v3599, %v4032
    %4034 = vmatmul.mubr.f32.gmra.mxu0 %v4033
    %v4035 = vpop.f32.mrf.mxu0
    %v4036 = vadd.f32 %v3899, %v4035
    %v4037 = vpop.f32.mrf.mxu0
    %4038 = vmatprep.mubr.f32.mxu0 0.0
    %v4039 = vand.u32 %v3602, 4294901760
    %v4040 = vsub.f32 %v3602, %v4039
    %4041 = vmatmul.mubr.f32.gmra.mxu0 %v4040
    %v4042 = vpop.f32.mrf.mxu0
    %v4043 = vadd.f32 %v3905, %v4042
    %v4044 = vpop.f32.mrf.mxu0
    %4045 = vmatprep.mubr.f32.mxu0 0.0
    %v4046 = vand.u32 %v3605, 4294901760
    %v4047 = vsub.f32 %v3605, %v4046
    %4048 = vmatmul.mubr.f32.gmra.mxu0 %v4047
    %v4049 = vpop.f32.mrf.mxu0
    %v4050 = vadd.f32 %v3911, %v4049
    %v4051 = vpop.f32.mrf.mxu0
    %4052 = vmatprep.mubr.f32.mxu0 0.0
    %v4053 = vand.u32 %v3608, 4294901760
    %v4054 = vsub.f32 %v3608, %v4053
    %4055 = vmatmul.mubr.f32.gmra.mxu0 %v4054
    %v4056 = vpop.f32.mrf.mxu0
    %v4057 = vadd.f32 %v3917, %v4056
    %v4058 = vpop.f32.mrf.mxu0
    %4059 = vmatprep.mubr.f32.mxu0 0.0
    %v4060 = vand.u32 %v3611, 4294901760
    %v4061 = vsub.f32 %v3611, %v4060
    %4062 = vmatmul.mubr.f32.gmra.mxu0 %v4061
    %v4063 = vpop.f32.mrf.mxu0
    %v4064 = vadd.f32 %v3923, %v4063
    %v4065 = vpop.f32.mrf.mxu0
    %4066 = vmatprep.mubr.f32.mxu0 0.0
    %v4067 = vand.u32 %v3614, 4294901760
    %v4068 = vsub.f32 %v3614, %v4067
    %4069 = vmatmul.mubr.f32.gmra.mxu0 %v4068
    %v4070 = vpop.f32.mrf.mxu0
    %v4071 = vadd.f32 %v3929, %v4070
    %v4072 = vpop.f32.mrf.mxu0
    %4073 = vmatprep.mubr.f32.mxu0 0.0
    %v4074 = vand.u32 %v3617, 4294901760
    %v4075 = vsub.f32 %v3617, %v4074
    %4076 = vmatmul.mubr.f32.gmra.mxu0 %v4075
    %v4077 = vpop.f32.mrf.mxu0
    %v4078 = vadd.f32 %v3935, %v4077
    %v4079 = vpop.f32.mrf.mxu0
    %4080 = vmatprep.mubr.f32.mxu0 0.0
    %v4081 = vand.u32 %v3620, 4294901760
    %v4082 = vsub.f32 %v3620, %v4081
    %4083 = vmatmul.mubr.f32.gmra.mxu0 %v4082
    %v4084 = vpop.f32.mrf.mxu0
    %v4085 = vadd.f32 %v3941, %v4084
    %v4086 = vpop.f32.mrf.mxu0
    %4087 = vdwg.mxu0
    %4088 = vmatprep.subr.mxu0 0.0
    %4089 = vmatpush1.msra.mxu0 0.0
    %4090 = vmatprep.subr.mxu0 0.0
    %4091 = vmatpush1.msra.mxu0 0.0
    %4092 = vmatprep.subr.mxu0 0.0
    %4093 = vmatpush1.msra.mxu0 0.0
    %4094 = vmatprep.subr.mxu0 0.0
    %4095 = vmatpush1.msra.mxu0 0.0
    %4096 = vmatprep.subr.mxu0 0.0
    %4097 = vmatpush1.msra.mxu0 0.0
    %4098 = vmatprep.subr.mxu0 0.0
    %4099 = vmatpush1.msra.mxu0 0.0
    %4100 = vmatprep.subr.mxu0 0.0
    %4101 = vmatpush1.msra.mxu0 0.0
    %4102 = vmatprep.subr.mxu0 0.0
    %4103 = vmatpush1.msra.mxu0 0.0
    %4104 = vmatprep.subr.mxu0 0.0
    %v4105 = vand.u32 %v3584, 4294901760
    %4106 = vmatpush1.msra.mxu0 %v4105
    %4107 = vmatprep.subr.mxu0 0.0
    %v4108 = vand.u32 %v3583, 4294901760
    %4109 = vmatpush1.msra.mxu0 %v4108
    %4110 = vmatprep.subr.mxu0 0.0
    %v4111 = vand.u32 %v3582, 4294901760
    %4112 = vmatpush1.msra.mxu0 %v4111
    %4113 = vmatprep.subr.mxu0 0.0
    %v4114 = vand.u32 %v3581, 4294901760
    %4115 = vmatpush1.msra.mxu0 %v4114
    %4116 = vmatprep.subr.mxu0 0.0
    %v4117 = vand.u32 %v3580, 4294901760
    %4118 = vmatpush1.msra.mxu0 %v4117
    %4119 = vmatprep.subr.mxu0 0.0
    %v4120 = vand.u32 %v3579, 4294901760
    %4121 = vmatpush1.msra.mxu0 %v4120
    %4122 = vmatprep.subr.mxu0 0.0
    %v4123 = vand.u32 %v3578, 4294901760
    %4124 = vmatpush1.msra.mxu0 %v4123
    %4125 = vmatprep.subr.mxu0 0.0
    %v4126 = vand.u32 %v3577, 4294901760
    %4127 = vmatpush1.msra.mxu0 %v4126
    %4128 = vmatprep.subr.mxu0 0.0
    %4129 = vmatpush2.msra.mxu0 0.0
    %4130 = vmatprep.subr.mxu0 0.0
    %4131 = vmatpush2.msra.mxu0 0.0
    %4132 = vmatprep.subr.mxu0 0.0
    %4133 = vmatpush2.msra.mxu0 0.0
    %4134 = vmatprep.subr.mxu0 0.0
    %4135 = vmatpush2.msra.mxu0 0.0
    %4136 = vmatprep.subr.mxu0 0.0
    %4137 = vmatpush2.msra.mxu0 0.0
    %4138 = vmatprep.subr.mxu0 0.0
    %4139 = vmatpush2.msra.mxu0 0.0
    %4140 = vmatprep.subr.mxu0 0.0
    %4141 = vmatpush2.msra.mxu0 0.0
    %4142 = vmatprep.subr.mxu0 0.0
    %4143 = vmatpush2.msra.mxu0 0.0
    %4144 = vmatprep.subr.mxu0 0.0
    %4145 = vmatpush2.msra.mxu0 0.0
    %4146 = vmatprep.subr.mxu0 0.0
    %4147 = vmatpush2.msra.mxu0 0.0
    %4148 = vmatprep.subr.mxu0 0.0
    %4149 = vmatpush2.msra.mxu0 0.0
    %4150 = vmatprep.subr.mxu0 0.0
    %4151 = vmatpush2.msra.mxu0 0.0
    %4152 = vmatprep.subr.mxu0 0.0
    %4153 = vmatpush2.msra.mxu0 0.0
    %4154 = vmatprep.subr.mxu0 0.0
    %4155 = vmatpush2.msra.mxu0 0.0
    %4156 = vmatprep.subr.mxu0 0.0
    %4157 = vmatpush2.msra.mxu0 0.0
    %4158 = vmatprep.subr.mxu0 0.0
    %4159 = vmatpush2.msra.mxu0 0.0
    %4160 = vmatprep.mubr.f32.mxu0 0.0
    %v4161 = vand.u32 %v3596, 4294901760
    %v4162 = vsub.f32 %v3596, %v4161
    %v4163 = vand.u32 %v4162, 4294901760
    %4164 = vmatmul.mubr.f32.gmra.mxu0 %v4163
    %v4165 = vpop.f32.mrf.mxu0
    %v4166 = vadd.f32 %v4029, %v4165
    %v4167 = vpop.f32.mrf.mxu0
    %4168 = vmatprep.mubr.f32.mxu0 0.0
    %v4169 = vand.u32 %v3599, 4294901760
    %v4170 = vsub.f32 %v3599, %v4169
    %v4171 = vand.u32 %v4170, 4294901760
    %4172 = vmatmul.mubr.f32.gmra.mxu0 %v4171
    %v4173 = vpop.f32.mrf.mxu0
    %v4174 = vadd.f32 %v4036, %v4173
    %v4175 = vpop.f32.mrf.mxu0
    %4176 = vmatprep.mubr.f32.mxu0 0.0
    %v4177 = vand.u32 %v3602, 4294901760
    %v4178 = vsub.f32 %v3602, %v4177
    %v4179 = vand.u32 %v4178, 4294901760
    %4180 = vmatmul.mubr.f32.gmra.mxu0 %v4179
    %v4181 = vpop.f32.mrf.mxu0
    %v4182 = vadd.f32 %v4043, %v4181
    %v4183 = vpop.f32.mrf.mxu0
    %4184 = vmatprep.mubr.f32.mxu0 0.0
    %v4185 = vand.u32 %v3605, 4294901760
    %v4186 = vsub.f32 %v3605, %v4185
    %v4187 = vand.u32 %v4186, 4294901760
    %4188 = vmatmul.mubr.f32.gmra.mxu0 %v4187
    %v4189 = vpop.f32.mrf.mxu0
    %v4190 = vadd.f32 %v4050, %v4189
    %v4191 = vpop.f32.mrf.mxu0
    %4192 = vmatprep.mubr.f32.mxu0 0.0
    %v4193 = vand.u32 %v3608, 4294901760
    %v4194 = vsub.f32 %v3608, %v4193
    %v4195 = vand.u32 %v4194, 4294901760
    %4196 = vmatmul.mubr.f32.gmra.mxu0 %v4195
    %v4197 = vpop.f32.mrf.mxu0
    %v4198 = vadd.f32 %v4057, %v4197
    %v4199 = vpop.f32.mrf.mxu0
    %4200 = vmatprep.mubr.f32.mxu0 0.0
    %v4201 = vand.u32 %v3611, 4294901760
    %v4202 = vsub.f32 %v3611, %v4201
    %v4203 = vand.u32 %v4202, 4294901760
    %4204 = vmatmul.mubr.f32.gmra.mxu0 %v4203
    %v4205 = vpop.f32.mrf.mxu0
    %v4206 = vadd.f32 %v4064, %v4205
    %v4207 = vpop.f32.mrf.mxu0
    %4208 = vmatprep.mubr.f32.mxu0 0.0
    %v4209 = vand.u32 %v3614, 4294901760
    %v4210 = vsub.f32 %v3614, %v4209
    %v4211 = vand.u32 %v4210, 4294901760
    %4212 = vmatmul.mubr.f32.gmra.mxu0 %v4211
    %v4213 = vpop.f32.mrf.mxu0
    %v4214 = vadd.f32 %v4071, %v4213
    %v4215 = vpop.f32.mrf.mxu0
    %4216 = vmatprep.mubr.f32.mxu0 0.0
    %v4217 = vand.u32 %v3617, 4294901760
    %v4218 = vsub.f32 %v3617, %v4217
    %v4219 = vand.u32 %v4218, 4294901760
    %4220 = vmatmul.mubr.f32.gmra.mxu0 %v4219
    %v4221 = vpop.f32.mrf.mxu0
    %v4222 = vadd.f32 %v4078, %v4221
    %v4223 = vpop.f32.mrf.mxu0
    %4224 = vmatprep.mubr.f32.mxu0 0.0
    %v4225 = vand.u32 %v3620, 4294901760
    %v4226 = vsub.f32 %v3620, %v4225
    %v4227 = vand.u32 %v4226, 4294901760
    %4228 = vmatmul.mubr.f32.gmra.mxu0 %v4227
    %v4229 = vpop.f32.mrf.mxu0
    %v4230 = vadd.f32 %v4085, %v4229
    %v4231 = vpop.f32.mrf.mxu0
    %4232 = vdwg.mxu0
    %4233 = vmatprep.subr.mxu0 0.0
    %4234 = vmatpush1.msra.mxu0 0.0
    %4235 = vmatprep.subr.mxu0 0.0
    %4236 = vmatpush1.msra.mxu0 0.0
    %4237 = vmatprep.subr.mxu0 0.0
    %4238 = vmatpush1.msra.mxu0 0.0
    %4239 = vmatprep.subr.mxu0 0.0
    %4240 = vmatpush1.msra.mxu0 0.0
    %4241 = vmatprep.subr.mxu0 0.0
    %4242 = vmatpush1.msra.mxu0 0.0
    %4243 = vmatprep.subr.mxu0 0.0
    %4244 = vmatpush1.msra.mxu0 0.0
    %4245 = vmatprep.subr.mxu0 0.0
    %4246 = vmatpush1.msra.mxu0 0.0
    %4247 = vmatprep.subr.mxu0 0.0
    %4248 = vmatpush1.msra.mxu0 0.0
    %4249 = vmatprep.subr.mxu0 0.0
    %v4250 = vand.u32 %v3584, 4294901760
    %v4251 = vsub.f32 %v3584, %v4250
    %v4252 = vand.u32 %v4251, 4294901760
    %4253 = vmatpush1.msra.mxu0 %v4252
    %4254 = vmatprep.subr.mxu0 0.0
    %v4255 = vand.u32 %v3583, 4294901760
    %v4256 = vsub.f32 %v3583, %v4255
    %v4257 = vand.u32 %v4256, 4294901760
    %4258 = vmatpush1.msra.mxu0 %v4257
    %4259 = vmatprep.subr.mxu0 0.0
    %v4260 = vand.u32 %v3582, 4294901760
    %v4261 = vsub.f32 %v3582, %v4260
    %v4262 = vand.u32 %v4261, 4294901760
    %4263 = vmatpush1.msra.mxu0 %v4262
    %4264 = vmatprep.subr.mxu0 0.0
    %v4265 = vand.u32 %v3581, 4294901760
    %v4266 = vsub.f32 %v3581, %v4265
    %v4267 = vand.u32 %v4266, 4294901760
    %4268 = vmatpush1.msra.mxu0 %v4267
    %4269 = vmatprep.subr.mxu0 0.0
    %v4270 = vand.u32 %v3580, 4294901760
    %v4271 = vsub.f32 %v3580, %v4270
    %v4272 = vand.u32 %v4271, 4294901760
    %4273 = vmatpush1.msra.mxu0 %v4272
    %4274 = vmatprep.subr.mxu0 0.0
    %v4275 = vand.u32 %v3579, 4294901760
    %v4276 = vsub.f32 %v3579, %v4275
    %v4277 = vand.u32 %v4276, 4294901760
    %4278 = vmatpush1.msra.mxu0 %v4277
    %4279 = vmatprep.subr.mxu0 0.0
    %v4280 = vand.u32 %v3578, 4294901760
    %v4281 = vsub.f32 %v3578, %v4280
    %v4282 = vand.u32 %v4281, 4294901760
    %4283 = vmatpush1.msra.mxu0 %v4282
    %4284 = vmatprep.subr.mxu0 0.0
    %v4285 = vand.u32 %v3577, 4294901760
    %v4286 = vsub.f32 %v3577, %v4285
    %v4287 = vand.u32 %v4286, 4294901760
    %4288 = vmatpush1.msra.mxu0 %v4287
    %4289 = vmatprep.subr.mxu0 0.0
    %4290 = vmatpush2.msra.mxu0 0.0
    %4291 = vmatprep.subr.mxu0 0.0
    %4292 = vmatpush2.msra.mxu0 0.0
    %4293 = vmatprep.subr.mxu0 0.0
    %4294 = vmatpush2.msra.mxu0 0.0
    %4295 = vmatprep.subr.mxu0 0.0
    %4296 = vmatpush2.msra.mxu0 0.0
    %4297 = vmatprep.subr.mxu0 0.0
    %4298 = vmatpush2.msra.mxu0 0.0
    %4299 = vmatprep.subr.mxu0 0.0
    %4300 = vmatpush2.msra.mxu0 0.0
    %4301 = vmatprep.subr.mxu0 0.0
    %4302 = vmatpush2.msra.mxu0 0.0
    %4303 = vmatprep.subr.mxu0 0.0
    %4304 = vmatpush2.msra.mxu0 0.0
    %4305 = vmatprep.subr.mxu0 0.0
    %4306 = vmatpush2.msra.mxu0 0.0
    %4307 = vmatprep.subr.mxu0 0.0
    %4308 = vmatpush2.msra.mxu0 0.0
    %4309 = vmatprep.subr.mxu0 0.0
    %4310 = vmatpush2.msra.mxu0 0.0
    %4311 = vmatprep.subr.mxu0 0.0
    %4312 = vmatpush2.msra.mxu0 0.0
    %4313 = vmatprep.subr.mxu0 0.0
    %4314 = vmatpush2.msra.mxu0 0.0
    %4315 = vmatprep.subr.mxu0 0.0
    %4316 = vmatpush2.msra.mxu0 0.0
    %4317 = vmatprep.subr.mxu0 0.0
    %4318 = vmatpush2.msra.mxu0 0.0
    %4319 = vmatprep.subr.mxu0 0.0
    %4320 = vmatpush2.msra.mxu0 0.0
    %4321 = vmatprep.mubr.f32.mxu0 0.0
    %v4322 = vand.u32 %v3596, 4294901760
    %4323 = vmatmul.mubr.f32.gmra.mxu0 %v4322
    %v4324 = vpop.f32.mrf.mxu0
    %v4325 = vadd.f32 %v4166, %v4324
    %v4326 = vpop.f32.mrf.mxu0
    %4327 = vmatprep.mubr.f32.mxu0 0.0
    %v4328 = vand.u32 %v3599, 4294901760
    %4329 = vmatmul.mubr.f32.gmra.mxu0 %v4328
    %v4330 = vpop.f32.mrf.mxu0
    %v4331 = vadd.f32 %v4174, %v4330
    %v4332 = vpop.f32.mrf.mxu0
    %4333 = vmatprep.mubr.f32.mxu0 0.0
    %v4334 = vand.u32 %v3602, 4294901760
    %4335 = vmatmul.mubr.f32.gmra.mxu0 %v4334
    %v4336 = vpop.f32.mrf.mxu0
    %v4337 = vadd.f32 %v4182, %v4336
    %v4338 = vpop.f32.mrf.mxu0
    %4339 = vmatprep.mubr.f32.mxu0 0.0
    %v4340 = vand.u32 %v3605, 4294901760
    %4341 = vmatmul.mubr.f32.gmra.mxu0 %v4340
    %v4342 = vpop.f32.mrf.mxu0
    %v4343 = vadd.f32 %v4190, %v4342
    %v4344 = vpop.f32.mrf.mxu0
    %4345 = vmatprep.mubr.f32.mxu0 0.0
    %v4346 = vand.u32 %v3608, 4294901760
    %4347 = vmatmul.mubr.f32.gmra.mxu0 %v4346
    %v4348 = vpop.f32.mrf.mxu0
    %v4349 = vadd.f32 %v4198, %v4348
    %v4350 = vpop.f32.mrf.mxu0
    %4351 = vmatprep.mubr.f32.mxu0 0.0
    %v4352 = vand.u32 %v3611, 4294901760
    %4353 = vmatmul.mubr.f32.gmra.mxu0 %v4352
    %v4354 = vpop.f32.mrf.mxu0
    %v4355 = vadd.f32 %v4206, %v4354
    %v4356 = vpop.f32.mrf.mxu0
    %4357 = vmatprep.mubr.f32.mxu0 0.0
    %v4358 = vand.u32 %v3614, 4294901760
    %4359 = vmatmul.mubr.f32.gmra.mxu0 %v4358
    %v4360 = vpop.f32.mrf.mxu0
    %v4361 = vadd.f32 %v4214, %v4360
    %v4362 = vpop.f32.mrf.mxu0
    %4363 = vmatprep.mubr.f32.mxu0 0.0
    %v4364 = vand.u32 %v3617, 4294901760
    %4365 = vmatmul.mubr.f32.gmra.mxu0 %v4364
    %v4366 = vpop.f32.mrf.mxu0
    %v4367 = vadd.f32 %v4222, %v4366
    %v4368 = vpop.f32.mrf.mxu0
    %4369 = vmatprep.mubr.f32.mxu0 0.0
    %v4370 = vand.u32 %v3620, 4294901760
    %4371 = vmatmul.mubr.f32.gmra.mxu0 %v4370
    %v4372 = vpop.f32.mrf.mxu0
    %v4373 = vadd.f32 %v4230, %v4372
    %v4374 = vpop.f32.mrf.mxu0
    %4375 = vdwg.mxu0
    %4376 = vmatprep.subr.mxu0 0.0
    %4377 = vmatpush1.msra.mxu0 0.0
    %4378 = vmatprep.subr.mxu0 0.0
    %4379 = vmatpush1.msra.mxu0 0.0
    %4380 = vmatprep.subr.mxu0 0.0
    %4381 = vmatpush1.msra.mxu0 0.0
    %4382 = vmatprep.subr.mxu0 0.0
    %4383 = vmatpush1.msra.mxu0 0.0
    %4384 = vmatprep.subr.mxu0 0.0
    %4385 = vmatpush1.msra.mxu0 0.0
    %4386 = vmatprep.subr.mxu0 0.0
    %4387 = vmatpush1.msra.mxu0 0.0
    %4388 = vmatprep.subr.mxu0 0.0
    %4389 = vmatpush1.msra.mxu0 0.0
    %4390 = vmatprep.subr.mxu0 0.0
    %4391 = vmatpush1.msra.mxu0 0.0
    %4392 = vmatprep.subr.mxu0 0.0
    %v4393 = vand.u32 %v3584, 4294901760
    %4394 = vmatpush1.msra.mxu0 %v4393
    %4395 = vmatprep.subr.mxu0 0.0
    %v4396 = vand.u32 %v3583, 4294901760
    %4397 = vmatpush1.msra.mxu0 %v4396
    %4398 = vmatprep.subr.mxu0 0.0
    %v4399 = vand.u32 %v3582, 4294901760
    %4400 = vmatpush1.msra.mxu0 %v4399
    %4401 = vmatprep.subr.mxu0 0.0
    %v4402 = vand.u32 %v3581, 4294901760
    %4403 = vmatpush1.msra.mxu0 %v4402
    %4404 = vmatprep.subr.mxu0 0.0
    %v4405 = vand.u32 %v3580, 4294901760
    %4406 = vmatpush1.msra.mxu0 %v4405
    %4407 = vmatprep.subr.mxu0 0.0
    %v4408 = vand.u32 %v3579, 4294901760
    %4409 = vmatpush1.msra.mxu0 %v4408
    %4410 = vmatprep.subr.mxu0 0.0
    %v4411 = vand.u32 %v3578, 4294901760
    %4412 = vmatpush1.msra.mxu0 %v4411
    %4413 = vmatprep.subr.mxu0 0.0
    %v4414 = vand.u32 %v3577, 4294901760
    %4415 = vmatpush1.msra.mxu0 %v4414
    %4416 = vmatprep.subr.mxu0 0.0
    %4417 = vmatpush2.msra.mxu0 0.0
    %4418 = vmatprep.subr.mxu0 0.0
    %4419 = vmatpush2.msra.mxu0 0.0
    %4420 = vmatprep.subr.mxu0 0.0
    %4421 = vmatpush2.msra.mxu0 0.0
    %4422 = vmatprep.subr.mxu0 0.0
    %4423 = vmatpush2.msra.mxu0 0.0
    %4424 = vmatprep.subr.mxu0 0.0
    %4425 = vmatpush2.msra.mxu0 0.0
    %4426 = vmatprep.subr.mxu0 0.0
    %4427 = vmatpush2.msra.mxu0 0.0
    %4428 = vmatprep.subr.mxu0 0.0
    %4429 = vmatpush2.msra.mxu0 0.0
    %4430 = vmatprep.subr.mxu0 0.0
    %4431 = vmatpush2.msra.mxu0 0.0
    %4432 = vmatprep.subr.mxu0 0.0
    %4433 = vmatpush2.msra.mxu0 0.0
    %4434 = vmatprep.subr.mxu0 0.0
    %4435 = vmatpush2.msra.mxu0 0.0
    %4436 = vmatprep.subr.mxu0 0.0
    %4437 = vmatpush2.msra.mxu0 0.0
    %4438 = vmatprep.subr.mxu0 0.0
    %4439 = vmatpush2.msra.mxu0 0.0
    %4440 = vmatprep.subr.mxu0 0.0
    %4441 = vmatpush2.msra.mxu0 0.0
    %4442 = vmatprep.subr.mxu0 0.0
    %4443 = vmatpush2.msra.mxu0 0.0
    %4444 = vmatprep.subr.mxu0 0.0
    %4445 = vmatpush2.msra.mxu0 0.0
    %4446 = vmatprep.subr.mxu0 0.0
    %4447 = vmatpush2.msra.mxu0 0.0
    %4448 = vmatprep.mubr.f32.mxu0 0.0
    %v4449 = vand.u32 %v3596, 4294901760
    %4450 = vmatmul.mubr.f32.gmra.mxu0 %v4449
    %v4451 = vpop.f32.mrf.mxu0
    %v4452 = vadd.f32 %v4325, %v4451
    %v4453 = vpop.f32.mrf.mxu0
    %4454 = vmatprep.mubr.f32.mxu0 0.0
    %v4455 = vand.u32 %v3599, 4294901760
    %4456 = vmatmul.mubr.f32.gmra.mxu0 %v4455
    %v4457 = vpop.f32.mrf.mxu0
    %v4458 = vadd.f32 %v4331, %v4457
    %v4459 = vpop.f32.mrf.mxu0
    %4460 = vmatprep.mubr.f32.mxu0 0.0
    %v4461 = vand.u32 %v3602, 4294901760
    %4462 = vmatmul.mubr.f32.gmra.mxu0 %v4461
    %v4463 = vpop.f32.mrf.mxu0
    %v4464 = vadd.f32 %v4337, %v4463
    %v4465 = vpop.f32.mrf.mxu0
    %4466 = vmatprep.mubr.f32.mxu0 0.0
    %v4467 = vand.u32 %v3605, 4294901760
    %4468 = vmatmul.mubr.f32.gmra.mxu0 %v4467
    %v4469 = vpop.f32.mrf.mxu0
    %v4470 = vadd.f32 %v4343, %v4469
    %v4471 = vpop.f32.mrf.mxu0
    %4472 = vmatprep.mubr.f32.mxu0 0.0
    %v4473 = vand.u32 %v3608, 4294901760
    %4474 = vmatmul.mubr.f32.gmra.mxu0 %v4473
    %v4475 = vpop.f32.mrf.mxu0
    %v4476 = vadd.f32 %v4349, %v4475
    %v4477 = vpop.f32.mrf.mxu0
    %4478 = vmatprep.mubr.f32.mxu0 0.0
    %v4479 = vand.u32 %v3611, 4294901760
    %4480 = vmatmul.mubr.f32.gmra.mxu0 %v4479
    %v4481 = vpop.f32.mrf.mxu0
    %v4482 = vadd.f32 %v4355, %v4481
    %v4483 = vpop.f32.mrf.mxu0
    %4484 = vmatprep.mubr.f32.mxu0 0.0
    %v4485 = vand.u32 %v3614, 4294901760
    %4486 = vmatmul.mubr.f32.gmra.mxu0 %v4485
    %v4487 = vpop.f32.mrf.mxu0
    %v4488 = vadd.f32 %v4361, %v4487
    %v4489 = vpop.f32.mrf.mxu0
    %4490 = vmatprep.mubr.f32.mxu0 0.0
    %v4491 = vand.u32 %v3617, 4294901760
    %4492 = vmatmul.mubr.f32.gmra.mxu0 %v4491
    %v4493 = vpop.f32.mrf.mxu0
    %v4494 = vadd.f32 %v4367, %v4493
    %v4495 = vpop.f32.mrf.mxu0
    %4496 = vmatprep.mubr.f32.mxu0 0.0
    %v4497 = vand.u32 %v3620, 4294901760
    %4498 = vmatmul.mubr.f32.gmra.mxu0 %v4497
    %v4499 = vpop.f32.mrf.mxu0
    %v4500 = vadd.f32 %v4373, %v4499
    %v4501 = vpop.f32.mrf.mxu0
    %4502 = vdwg.mxu0
    %s4503 = scalar_lea.vmem %s2, 72
    %v4504 = vld [vmem:[%s4503] sm:$0xff]
    %v4505 = vld [vmem:[%s4503 + $0x8] sm:$0xff]
    %v4506 = vld [vmem:[%s4503 + $0x10] sm:$0xff]
    %v4507 = vld [vmem:[%s4503 + $0x18] sm:$0xff]
    %v4508 = vld [vmem:[%s4503 + $0x20] sm:$0xff]
    %v4509 = vld [vmem:[%s4503 + $0x28] sm:$0xff]
    %v4510 = vld [vmem:[%s4503 + $0x30] sm:$0xff]
    %v4511 = vld [vmem:[%s4503 + $0x38] sm:$0xff]
    %v4512 = vld [vmem:[%s4503 + $0x40] sm:$0xff]
    %v4514 = vsel %vm3594, %v4504, 0
    %v4517 = vsel %vm3594, %v4505, 0
    %v4520 = vsel %vm3594, %v4506, 0
    %v4523 = vsel %vm3594, %v4507, 0
    %v4526 = vsel %vm3594, %v4508, 0
    %v4529 = vsel %vm3594, %v4509, 0
    %v4532 = vsel %vm3594, %v4510, 0
    %v4535 = vsel %vm3594, %v4511, 0
    %v4538 = vsel %vm3594, %v4512, 0
    %4540 = vmatprep.subr.mxu0 0.0
    %4541 = vmatpush1.msra.mxu0 0.0
    %4542 = vmatprep.subr.mxu0 0.0
    %4543 = vmatpush1.msra.mxu0 0.0
    %4544 = vmatprep.subr.mxu0 0.0
    %4545 = vmatpush1.msra.mxu0 0.0
    %4546 = vmatprep.subr.mxu0 0.0
    %4547 = vmatpush1.msra.mxu0 0.0
    %4548 = vmatprep.subr.mxu0 0.0
    %4549 = vmatpush1.msra.mxu0 0.0
    %4550 = vmatprep.subr.mxu0 0.0
    %4551 = vmatpush1.msra.mxu0 0.0
    %4552 = vmatprep.subr.mxu0 0.0
    %4553 = vmatpush1.msra.mxu0 0.0
    %4554 = vmatprep.subr.mxu0 0.0
    %4555 = vmatpush1.msra.mxu0 0.0
    %4556 = vmatprep.subr.mxu0 0.0
    %v4557 = vand.u32 %v3584, 4294901760
    %4558 = vmatpush1.msra.mxu0 %v4557
    %4559 = vmatprep.subr.mxu0 0.0
    %v4560 = vand.u32 %v3583, 4294901760
    %4561 = vmatpush1.msra.mxu0 %v4560
    %4562 = vmatprep.subr.mxu0 0.0
    %v4563 = vand.u32 %v3582, 4294901760
    %4564 = vmatpush1.msra.mxu0 %v4563
    %4565 = vmatprep.subr.mxu0 0.0
    %v4566 = vand.u32 %v3581, 4294901760
    %4567 = vmatpush1.msra.mxu0 %v4566
    %4568 = vmatprep.subr.mxu0 0.0
    %v4569 = vand.u32 %v3580, 4294901760
    %4570 = vmatpush1.msra.mxu0 %v4569
    %4571 = vmatprep.subr.mxu0 0.0
    %v4572 = vand.u32 %v3579, 4294901760
    %4573 = vmatpush1.msra.mxu0 %v4572
    %4574 = vmatprep.subr.mxu0 0.0
    %v4575 = vand.u32 %v3578, 4294901760
    %4576 = vmatpush1.msra.mxu0 %v4575
    %4577 = vmatprep.subr.mxu0 0.0
    %v4578 = vand.u32 %v3577, 4294901760
    %4579 = vmatpush1.msra.mxu0 %v4578
    %4580 = vmatprep.subr.mxu0 0.0
    %4581 = vmatpush2.msra.mxu0 0.0
    %4582 = vmatprep.subr.mxu0 0.0
    %4583 = vmatpush2.msra.mxu0 0.0
    %4584 = vmatprep.subr.mxu0 0.0
    %4585 = vmatpush2.msra.mxu0 0.0
    %4586 = vmatprep.subr.mxu0 0.0
    %4587 = vmatpush2.msra.mxu0 0.0
    %4588 = vmatprep.subr.mxu0 0.0
    %4589 = vmatpush2.msra.mxu0 0.0
    %4590 = vmatprep.subr.mxu0 0.0
    %4591 = vmatpush2.msra.mxu0 0.0
    %4592 = vmatprep.subr.mxu0 0.0
    %4593 = vmatpush2.msra.mxu0 0.0
    %4594 = vmatprep.subr.mxu0 0.0
    %4595 = vmatpush2.msra.mxu0 0.0
    %4596 = vmatprep.subr.mxu0 0.0
    %4597 = vmatpush2.msra.mxu0 0.0
    %4598 = vmatprep.subr.mxu0 0.0
    %4599 = vmatpush2.msra.mxu0 0.0
    %4600 = vmatprep.subr.mxu0 0.0
    %4601 = vmatpush2.msra.mxu0 0.0
    %4602 = vmatprep.subr.mxu0 0.0
    %4603 = vmatpush2.msra.mxu0 0.0
    %4604 = vmatprep.subr.mxu0 0.0
    %4605 = vmatpush2.msra.mxu0 0.0
    %4606 = vmatprep.subr.mxu0 0.0
    %4607 = vmatpush2.msra.mxu0 0.0
    %4608 = vmatprep.subr.mxu0 0.0
    %4609 = vmatpush2.msra.mxu0 0.0
    %4610 = vmatprep.subr.mxu0 0.0
    %4611 = vmatpush2.msra.mxu0 0.0
    %4612 = vmatprep.mubr.f32.mxu0 0.0
    %v4613 = vand.u32 %v4514, 4294901760
    %v4614 = vsub.f32 %v4514, %v4613
    %v4615 = vand.u32 %v4614, 4294901760
    %v4616 = vsub.f32 %v4614, %v4615
    %v4617 = vand.u32 %v4616, 4294901760
    %4618 = vmatmul.mubr.f32.gmra.mxu0 %v4617
    %v4619 = vpop.f32.mrf.mxu0
    %v4620 = vadd.f32 0.0, %v4619
    %v4621 = vpop.f32.mrf.mxu0
    %4622 = vmatprep.mubr.f32.mxu0 0.0
    %v4623 = vand.u32 %v4517, 4294901760
    %v4624 = vsub.f32 %v4517, %v4623
    %v4625 = vand.u32 %v4624, 4294901760
    %v4626 = vsub.f32 %v4624, %v4625
    %v4627 = vand.u32 %v4626, 4294901760
    %4628 = vmatmul.mubr.f32.gmra.mxu0 %v4627
    %v4629 = vpop.f32.mrf.mxu0
    %v4630 = vadd.f32 0.0, %v4629
    %v4631 = vpop.f32.mrf.mxu0
    %4632 = vmatprep.mubr.f32.mxu0 0.0
    %v4633 = vand.u32 %v4520, 4294901760
    %v4634 = vsub.f32 %v4520, %v4633
    %v4635 = vand.u32 %v4634, 4294901760
    %v4636 = vsub.f32 %v4634, %v4635
    %v4637 = vand.u32 %v4636, 4294901760
    %4638 = vmatmul.mubr.f32.gmra.mxu0 %v4637
    %v4639 = vpop.f32.mrf.mxu0
    %v4640 = vadd.f32 0.0, %v4639
    %v4641 = vpop.f32.mrf.mxu0
    %4642 = vmatprep.mubr.f32.mxu0 0.0
    %v4643 = vand.u32 %v4523, 4294901760
    %v4644 = vsub.f32 %v4523, %v4643
    %v4645 = vand.u32 %v4644, 4294901760
    %v4646 = vsub.f32 %v4644, %v4645
    %v4647 = vand.u32 %v4646, 4294901760
    %4648 = vmatmul.mubr.f32.gmra.mxu0 %v4647
    %v4649 = vpop.f32.mrf.mxu0
    %v4650 = vadd.f32 0.0, %v4649
    %v4651 = vpop.f32.mrf.mxu0
    %4652 = vmatprep.mubr.f32.mxu0 0.0
    %v4653 = vand.u32 %v4526, 4294901760
    %v4654 = vsub.f32 %v4526, %v4653
    %v4655 = vand.u32 %v4654, 4294901760
    %v4656 = vsub.f32 %v4654, %v4655
    %v4657 = vand.u32 %v4656, 4294901760
    %4658 = vmatmul.mubr.f32.gmra.mxu0 %v4657
    %v4659 = vpop.f32.mrf.mxu0
    %v4660 = vadd.f32 0.0, %v4659
    %v4661 = vpop.f32.mrf.mxu0
    %4662 = vmatprep.mubr.f32.mxu0 0.0
    %v4663 = vand.u32 %v4529, 4294901760
    %v4664 = vsub.f32 %v4529, %v4663
    %v4665 = vand.u32 %v4664, 4294901760
    %v4666 = vsub.f32 %v4664, %v4665
    %v4667 = vand.u32 %v4666, 4294901760
    %4668 = vmatmul.mubr.f32.gmra.mxu0 %v4667
    %v4669 = vpop.f32.mrf.mxu0
    %v4670 = vadd.f32 0.0, %v4669
    %v4671 = vpop.f32.mrf.mxu0
    %4672 = vmatprep.mubr.f32.mxu0 0.0
    %v4673 = vand.u32 %v4532, 4294901760
    %v4674 = vsub.f32 %v4532, %v4673
    %v4675 = vand.u32 %v4674, 4294901760
    %v4676 = vsub.f32 %v4674, %v4675
    %v4677 = vand.u32 %v4676, 4294901760
    %4678 = vmatmul.mubr.f32.gmra.mxu0 %v4677
    %v4679 = vpop.f32.mrf.mxu0
    %v4680 = vadd.f32 0.0, %v4679
    %v4681 = vpop.f32.mrf.mxu0
    %4682 = vmatprep.mubr.f32.mxu0 0.0
    %v4683 = vand.u32 %v4535, 4294901760
    %v4684 = vsub.f32 %v4535, %v4683
    %v4685 = vand.u32 %v4684, 4294901760
    %v4686 = vsub.f32 %v4684, %v4685
    %v4687 = vand.u32 %v4686, 4294901760
    %4688 = vmatmul.mubr.f32.gmra.mxu0 %v4687
    %v4689 = vpop.f32.mrf.mxu0
    %v4690 = vadd.f32 0.0, %v4689
    %v4691 = vpop.f32.mrf.mxu0
    %4692 = vmatprep.mubr.f32.mxu0 0.0
    %v4693 = vand.u32 %v4538, 4294901760
    %v4694 = vsub.f32 %v4538, %v4693
    %v4695 = vand.u32 %v4694, 4294901760
    %v4696 = vsub.f32 %v4694, %v4695
    %v4697 = vand.u32 %v4696, 4294901760
    %4698 = vmatmul.mubr.f32.gmra.mxu0 %v4697
    %v4699 = vpop.f32.mrf.mxu0
    %v4700 = vadd.f32 0.0, %v4699
    %v4701 = vpop.f32.mrf.mxu0
    %4702 = vdwg.mxu0
    %4703 = vmatprep.subr.mxu0 0.0
    %4704 = vmatpush1.msra.mxu0 0.0
    %4705 = vmatprep.subr.mxu0 0.0
    %4706 = vmatpush1.msra.mxu0 0.0
    %4707 = vmatprep.subr.mxu0 0.0
    %4708 = vmatpush1.msra.mxu0 0.0
    %4709 = vmatprep.subr.mxu0 0.0
    %4710 = vmatpush1.msra.mxu0 0.0
    %4711 = vmatprep.subr.mxu0 0.0
    %4712 = vmatpush1.msra.mxu0 0.0
    %4713 = vmatprep.subr.mxu0 0.0
    %4714 = vmatpush1.msra.mxu0 0.0
    %4715 = vmatprep.subr.mxu0 0.0
    %4716 = vmatpush1.msra.mxu0 0.0
    %4717 = vmatprep.subr.mxu0 0.0
    %4718 = vmatpush1.msra.mxu0 0.0
    %4719 = vmatprep.subr.mxu0 0.0
    %v4720 = vand.u32 %v3584, 4294901760
    %v4721 = vsub.f32 %v3584, %v4720
    %v4722 = vand.u32 %v4721, 4294901760
    %v4723 = vsub.f32 %v4721, %v4722
    %v4724 = vand.u32 %v4723, 4294901760
    %4725 = vmatpush1.msra.mxu0 %v4724
    %4726 = vmatprep.subr.mxu0 0.0
    %v4727 = vand.u32 %v3583, 4294901760
    %v4728 = vsub.f32 %v3583, %v4727
    %v4729 = vand.u32 %v4728, 4294901760
    %v4730 = vsub.f32 %v4728, %v4729
    %v4731 = vand.u32 %v4730, 4294901760
    %4732 = vmatpush1.msra.mxu0 %v4731
    %4733 = vmatprep.subr.mxu0 0.0
    %v4734 = vand.u32 %v3582, 4294901760
    %v4735 = vsub.f32 %v3582, %v4734
    %v4736 = vand.u32 %v4735, 4294901760
    %v4737 = vsub.f32 %v4735, %v4736
    %v4738 = vand.u32 %v4737, 4294901760
    %4739 = vmatpush1.msra.mxu0 %v4738
    %4740 = vmatprep.subr.mxu0 0.0
    %v4741 = vand.u32 %v3581, 4294901760
    %v4742 = vsub.f32 %v3581, %v4741
    %v4743 = vand.u32 %v4742, 4294901760
    %v4744 = vsub.f32 %v4742, %v4743
    %v4745 = vand.u32 %v4744, 4294901760
    %4746 = vmatpush1.msra.mxu0 %v4745
    %4747 = vmatprep.subr.mxu0 0.0
    %v4748 = vand.u32 %v3580, 4294901760
    %v4749 = vsub.f32 %v3580, %v4748
    %v4750 = vand.u32 %v4749, 4294901760
    %v4751 = vsub.f32 %v4749, %v4750
    %v4752 = vand.u32 %v4751, 4294901760
    %4753 = vmatpush1.msra.mxu0 %v4752
    %4754 = vmatprep.subr.mxu0 0.0
    %v4755 = vand.u32 %v3579, 4294901760
    %v4756 = vsub.f32 %v3579, %v4755
    %v4757 = vand.u32 %v4756, 4294901760
    %v4758 = vsub.f32 %v4756, %v4757
    %v4759 = vand.u32 %v4758, 4294901760
    %4760 = vmatpush1.msra.mxu0 %v4759
    %4761 = vmatprep.subr.mxu0 0.0
    %v4762 = vand.u32 %v3578, 4294901760
    %v4763 = vsub.f32 %v3578, %v4762
    %v4764 = vand.u32 %v4763, 4294901760
    %v4765 = vsub.f32 %v4763, %v4764
    %v4766 = vand.u32 %v4765, 4294901760
    %4767 = vmatpush1.msra.mxu0 %v4766
    %4768 = vmatprep.subr.mxu0 0.0
    %v4769 = vand.u32 %v3577, 4294901760
    %v4770 = vsub.f32 %v3577, %v4769
    %v4771 = vand.u32 %v4770, 4294901760
    %v4772 = vsub.f32 %v4770, %v4771
    %v4773 = vand.u32 %v4772, 4294901760
    %4774 = vmatpush1.msra.mxu0 %v4773
    %4775 = vmatprep.subr.mxu0 0.0
    %4776 = vmatpush2.msra.mxu0 0.0
    %4777 = vmatprep.subr.mxu0 0.0
    %4778 = vmatpush2.msra.mxu0 0.0
    %4779 = vmatprep.subr.mxu0 0.0
    %4780 = vmatpush2.msra.mxu0 0.0
    %4781 = vmatprep.subr.mxu0 0.0
    %4782 = vmatpush2.msra.mxu0 0.0
    %4783 = vmatprep.subr.mxu0 0.0
    %4784 = vmatpush2.msra.mxu0 0.0
    %4785 = vmatprep.subr.mxu0 0.0
    %4786 = vmatpush2.msra.mxu0 0.0
    %4787 = vmatprep.subr.mxu0 0.0
    %4788 = vmatpush2.msra.mxu0 0.0
    %4789 = vmatprep.subr.mxu0 0.0
    %4790 = vmatpush2.msra.mxu0 0.0
    %4791 = vmatprep.subr.mxu0 0.0
    %4792 = vmatpush2.msra.mxu0 0.0
    %4793 = vmatprep.subr.mxu0 0.0
    %4794 = vmatpush2.msra.mxu0 0.0
    %4795 = vmatprep.subr.mxu0 0.0
    %4796 = vmatpush2.msra.mxu0 0.0
    %4797 = vmatprep.subr.mxu0 0.0
    %4798 = vmatpush2.msra.mxu0 0.0
    %4799 = vmatprep.subr.mxu0 0.0
    %4800 = vmatpush2.msra.mxu0 0.0
    %4801 = vmatprep.subr.mxu0 0.0
    %4802 = vmatpush2.msra.mxu0 0.0
    %4803 = vmatprep.subr.mxu0 0.0
    %4804 = vmatpush2.msra.mxu0 0.0
    %4805 = vmatprep.subr.mxu0 0.0
    %4806 = vmatpush2.msra.mxu0 0.0
    %4807 = vmatprep.mubr.f32.mxu0 0.0
    %v4808 = vand.u32 %v4514, 4294901760
    %4809 = vmatmul.mubr.f32.gmra.mxu0 %v4808
    %v4810 = vpop.f32.mrf.mxu0
    %v4811 = vadd.f32 %v4620, %v4810
    %v4812 = vpop.f32.mrf.mxu0
    %4813 = vmatprep.mubr.f32.mxu0 0.0
    %v4814 = vand.u32 %v4517, 4294901760
    %4815 = vmatmul.mubr.f32.gmra.mxu0 %v4814
    %v4816 = vpop.f32.mrf.mxu0
    %v4817 = vadd.f32 %v4630, %v4816
    %v4818 = vpop.f32.mrf.mxu0
    %4819 = vmatprep.mubr.f32.mxu0 0.0
    %v4820 = vand.u32 %v4520, 4294901760
    %4821 = vmatmul.mubr.f32.gmra.mxu0 %v4820
    %v4822 = vpop.f32.mrf.mxu0
    %v4823 = vadd.f32 %v4640, %v4822
    %v4824 = vpop.f32.mrf.mxu0
    %4825 = vmatprep.mubr.f32.mxu0 0.0
    %v4826 = vand.u32 %v4523, 4294901760
    %4827 = vmatmul.mubr.f32.gmra.mxu0 %v4826
    %v4828 = vpop.f32.mrf.mxu0
    %v4829 = vadd.f32 %v4650, %v4828
    %v4830 = vpop.f32.mrf.mxu0
    %4831 = vmatprep.mubr.f32.mxu0 0.0
    %v4832 = vand.u32 %v4526, 4294901760
    %4833 = vmatmul.mubr.f32.gmra.mxu0 %v4832
    %v4834 = vpop.f32.mrf.mxu0
    %v4835 = vadd.f32 %v4660, %v4834
    %v4836 = vpop.f32.mrf.mxu0
    %4837 = vmatprep.mubr.f32.mxu0 0.0
    %v4838 = vand.u32 %v4529, 4294901760
    %4839 = vmatmul.mubr.f32.gmra.mxu0 %v4838
    %v4840 = vpop.f32.mrf.mxu0
    %v4841 = vadd.f32 %v4670, %v4840
    %v4842 = vpop.f32.mrf.mxu0
    %4843 = vmatprep.mubr.f32.mxu0 0.0
    %v4844 = vand.u32 %v4532, 4294901760
    %4845 = vmatmul.mubr.f32.gmra.mxu0 %v4844
    %v4846 = vpop.f32.mrf.mxu0
    %v4847 = vadd.f32 %v4680, %v4846
    %v4848 = vpop.f32.mrf.mxu0
    %4849 = vmatprep.mubr.f32.mxu0 0.0
    %v4850 = vand.u32 %v4535, 4294901760
    %4851 = vmatmul.mubr.f32.gmra.mxu0 %v4850
    %v4852 = vpop.f32.mrf.mxu0
    %v4853 = vadd.f32 %v4690, %v4852
    %v4854 = vpop.f32.mrf.mxu0
    %4855 = vmatprep.mubr.f32.mxu0 0.0
    %v4856 = vand.u32 %v4538, 4294901760
    %4857 = vmatmul.mubr.f32.gmra.mxu0 %v4856
    %v4858 = vpop.f32.mrf.mxu0
    %v4859 = vadd.f32 %v4700, %v4858
    %v4860 = vpop.f32.mrf.mxu0
    %4861 = vdwg.mxu0
    %4862 = vmatprep.subr.mxu0 0.0
    %4863 = vmatpush1.msra.mxu0 0.0
    %4864 = vmatprep.subr.mxu0 0.0
    %4865 = vmatpush1.msra.mxu0 0.0
    %4866 = vmatprep.subr.mxu0 0.0
    %4867 = vmatpush1.msra.mxu0 0.0
    %4868 = vmatprep.subr.mxu0 0.0
    %4869 = vmatpush1.msra.mxu0 0.0
    %4870 = vmatprep.subr.mxu0 0.0
    %4871 = vmatpush1.msra.mxu0 0.0
    %4872 = vmatprep.subr.mxu0 0.0
    %4873 = vmatpush1.msra.mxu0 0.0
    %4874 = vmatprep.subr.mxu0 0.0
    %4875 = vmatpush1.msra.mxu0 0.0
    %4876 = vmatprep.subr.mxu0 0.0
    %4877 = vmatpush1.msra.mxu0 0.0
    %4878 = vmatprep.subr.mxu0 0.0
    %v4879 = vand.u32 %v3584, 4294901760
    %v4880 = vsub.f32 %v3584, %v4879
    %4881 = vmatpush1.msra.mxu0 %v4880
    %4882 = vmatprep.subr.mxu0 0.0
    %v4883 = vand.u32 %v3583, 4294901760
    %v4884 = vsub.f32 %v3583, %v4883
    %4885 = vmatpush1.msra.mxu0 %v4884
    %4886 = vmatprep.subr.mxu0 0.0
    %v4887 = vand.u32 %v3582, 4294901760
    %v4888 = vsub.f32 %v3582, %v4887
    %4889 = vmatpush1.msra.mxu0 %v4888
    %4890 = vmatprep.subr.mxu0 0.0
    %v4891 = vand.u32 %v3581, 4294901760
    %v4892 = vsub.f32 %v3581, %v4891
    %4893 = vmatpush1.msra.mxu0 %v4892
    %4894 = vmatprep.subr.mxu0 0.0
    %v4895 = vand.u32 %v3580, 4294901760
    %v4896 = vsub.f32 %v3580, %v4895
    %4897 = vmatpush1.msra.mxu0 %v4896
    %4898 = vmatprep.subr.mxu0 0.0
    %v4899 = vand.u32 %v3579, 4294901760
    %v4900 = vsub.f32 %v3579, %v4899
    %4901 = vmatpush1.msra.mxu0 %v4900
    %4902 = vmatprep.subr.mxu0 0.0
    %v4903 = vand.u32 %v3578, 4294901760
    %v4904 = vsub.f32 %v3578, %v4903
    %4905 = vmatpush1.msra.mxu0 %v4904
    %4906 = vmatprep.subr.mxu0 0.0
    %v4907 = vand.u32 %v3577, 4294901760
    %v4908 = vsub.f32 %v3577, %v4907
    %4909 = vmatpush1.msra.mxu0 %v4908
    %4910 = vmatprep.subr.mxu0 0.0
    %4911 = vmatpush2.msra.mxu0 0.0
    %4912 = vmatprep.subr.mxu0 0.0
    %4913 = vmatpush2.msra.mxu0 0.0
    %4914 = vmatprep.subr.mxu0 0.0
    %4915 = vmatpush2.msra.mxu0 0.0
    %4916 = vmatprep.subr.mxu0 0.0
    %4917 = vmatpush2.msra.mxu0 0.0
    %4918 = vmatprep.subr.mxu0 0.0
    %4919 = vmatpush2.msra.mxu0 0.0
    %4920 = vmatprep.subr.mxu0 0.0
    %4921 = vmatpush2.msra.mxu0 0.0
    %4922 = vmatprep.subr.mxu0 0.0
    %4923 = vmatpush2.msra.mxu0 0.0
    %4924 = vmatprep.subr.mxu0 0.0
    %4925 = vmatpush2.msra.mxu0 0.0
    %4926 = vmatprep.subr.mxu0 0.0
    %4927 = vmatpush2.msra.mxu0 0.0
    %4928 = vmatprep.subr.mxu0 0.0
    %4929 = vmatpush2.msra.mxu0 0.0
    %4930 = vmatprep.subr.mxu0 0.0
    %4931 = vmatpush2.msra.mxu0 0.0
    %4932 = vmatprep.subr.mxu0 0.0
    %4933 = vmatpush2.msra.mxu0 0.0
    %4934 = vmatprep.subr.mxu0 0.0
    %4935 = vmatpush2.msra.mxu0 0.0
    %4936 = vmatprep.subr.mxu0 0.0
    %4937 = vmatpush2.msra.mxu0 0.0
    %4938 = vmatprep.subr.mxu0 0.0
    %4939 = vmatpush2.msra.mxu0 0.0
    %4940 = vmatprep.subr.mxu0 0.0
    %4941 = vmatpush2.msra.mxu0 0.0
    %4942 = vmatprep.mubr.f32.mxu0 0.0
    %v4943 = vand.u32 %v4514, 4294901760
    %v4944 = vsub.f32 %v4514, %v4943
    %4945 = vmatmul.mubr.f32.gmra.mxu0 %v4944
    %v4946 = vpop.f32.mrf.mxu0
    %v4947 = vadd.f32 %v4811, %v4946
    %v4948 = vpop.f32.mrf.mxu0
    %4949 = vmatprep.mubr.f32.mxu0 0.0
    %v4950 = vand.u32 %v4517, 4294901760
    %v4951 = vsub.f32 %v4517, %v4950
    %4952 = vmatmul.mubr.f32.gmra.mxu0 %v4951
    %v4953 = vpop.f32.mrf.mxu0
    %v4954 = vadd.f32 %v4817, %v4953
    %v4955 = vpop.f32.mrf.mxu0
    %4956 = vmatprep.mubr.f32.mxu0 0.0
    %v4957 = vand.u32 %v4520, 4294901760
    %v4958 = vsub.f32 %v4520, %v4957
    %4959 = vmatmul.mubr.f32.gmra.mxu0 %v4958
    %v4960 = vpop.f32.mrf.mxu0
    %v4961 = vadd.f32 %v4823, %v4960
    %v4962 = vpop.f32.mrf.mxu0
    %4963 = vmatprep.mubr.f32.mxu0 0.0
    %v4964 = vand.u32 %v4523, 4294901760
    %v4965 = vsub.f32 %v4523, %v4964
    %4966 = vmatmul.mubr.f32.gmra.mxu0 %v4965
    %v4967 = vpop.f32.mrf.mxu0
    %v4968 = vadd.f32 %v4829, %v4967
    %v4969 = vpop.f32.mrf.mxu0
    %4970 = vmatprep.mubr.f32.mxu0 0.0
    %v4971 = vand.u32 %v4526, 4294901760
    %v4972 = vsub.f32 %v4526, %v4971
    %4973 = vmatmul.mubr.f32.gmra.mxu0 %v4972
    %v4974 = vpop.f32.mrf.mxu0
    %v4975 = vadd.f32 %v4835, %v4974
    %v4976 = vpop.f32.mrf.mxu0
    %4977 = vmatprep.mubr.f32.mxu0 0.0
    %v4978 = vand.u32 %v4529, 4294901760
    %v4979 = vsub.f32 %v4529, %v4978
    %4980 = vmatmul.mubr.f32.gmra.mxu0 %v4979
    %v4981 = vpop.f32.mrf.mxu0
    %v4982 = vadd.f32 %v4841, %v4981
    %v4983 = vpop.f32.mrf.mxu0
    %4984 = vmatprep.mubr.f32.mxu0 0.0
    %v4985 = vand.u32 %v4532, 4294901760
    %v4986 = vsub.f32 %v4532, %v4985
    %4987 = vmatmul.mubr.f32.gmra.mxu0 %v4986
    %v4988 = vpop.f32.mrf.mxu0
    %v4989 = vadd.f32 %v4847, %v4988
    %v4990 = vpop.f32.mrf.mxu0
    %4991 = vmatprep.mubr.f32.mxu0 0.0
    %v4992 = vand.u32 %v4535, 4294901760
    %v4993 = vsub.f32 %v4535, %v4992
    %4994 = vmatmul.mubr.f32.gmra.mxu0 %v4993
    %v4995 = vpop.f32.mrf.mxu0
    %v4996 = vadd.f32 %v4853, %v4995
    %v4997 = vpop.f32.mrf.mxu0
    %4998 = vmatprep.mubr.f32.mxu0 0.0
    %v4999 = vand.u32 %v4538, 4294901760
    %v5000 = vsub.f32 %v4538, %v4999
    %5001 = vmatmul.mubr.f32.gmra.mxu0 %v5000
    %v5002 = vpop.f32.mrf.mxu0
    %v5003 = vadd.f32 %v4859, %v5002
    %v5004 = vpop.f32.mrf.mxu0
    %5005 = vdwg.mxu0
    %5006 = vmatprep.subr.mxu0 0.0
    %5007 = vmatpush1.msra.mxu0 0.0
    %5008 = vmatprep.subr.mxu0 0.0
    %5009 = vmatpush1.msra.mxu0 0.0
    %5010 = vmatprep.subr.mxu0 0.0
    %5011 = vmatpush1.msra.mxu0 0.0
    %5012 = vmatprep.subr.mxu0 0.0
    %5013 = vmatpush1.msra.mxu0 0.0
    %5014 = vmatprep.subr.mxu0 0.0
    %5015 = vmatpush1.msra.mxu0 0.0
    %5016 = vmatprep.subr.mxu0 0.0
    %5017 = vmatpush1.msra.mxu0 0.0
    %5018 = vmatprep.subr.mxu0 0.0
    %5019 = vmatpush1.msra.mxu0 0.0
    %5020 = vmatprep.subr.mxu0 0.0
    %5021 = vmatpush1.msra.mxu0 0.0
    %5022 = vmatprep.subr.mxu0 0.0
    %v5023 = vand.u32 %v3584, 4294901760
    %5024 = vmatpush1.msra.mxu0 %v5023
    %5025 = vmatprep.subr.mxu0 0.0
    %v5026 = vand.u32 %v3583, 4294901760
    %5027 = vmatpush1.msra.mxu0 %v5026
    %5028 = vmatprep.subr.mxu0 0.0
    %v5029 = vand.u32 %v3582, 4294901760
    %5030 = vmatpush1.msra.mxu0 %v5029
    %5031 = vmatprep.subr.mxu0 0.0
    %v5032 = vand.u32 %v3581, 4294901760
    %5033 = vmatpush1.msra.mxu0 %v5032
    %5034 = vmatprep.subr.mxu0 0.0
    %v5035 = vand.u32 %v3580, 4294901760
    %5036 = vmatpush1.msra.mxu0 %v5035
    %5037 = vmatprep.subr.mxu0 0.0
    %v5038 = vand.u32 %v3579, 4294901760
    %5039 = vmatpush1.msra.mxu0 %v5038
    %5040 = vmatprep.subr.mxu0 0.0
    %v5041 = vand.u32 %v3578, 4294901760
    %5042 = vmatpush1.msra.mxu0 %v5041
    %5043 = vmatprep.subr.mxu0 0.0
    %v5044 = vand.u32 %v3577, 4294901760
    %5045 = vmatpush1.msra.mxu0 %v5044
    %5046 = vmatprep.subr.mxu0 0.0
    %5047 = vmatpush2.msra.mxu0 0.0
    %5048 = vmatprep.subr.mxu0 0.0
    %5049 = vmatpush2.msra.mxu0 0.0
    %5050 = vmatprep.subr.mxu0 0.0
    %5051 = vmatpush2.msra.mxu0 0.0
    %5052 = vmatprep.subr.mxu0 0.0
    %5053 = vmatpush2.msra.mxu0 0.0
    %5054 = vmatprep.subr.mxu0 0.0
    %5055 = vmatpush2.msra.mxu0 0.0
    %5056 = vmatprep.subr.mxu0 0.0
    %5057 = vmatpush2.msra.mxu0 0.0
    %5058 = vmatprep.subr.mxu0 0.0
    %5059 = vmatpush2.msra.mxu0 0.0
    %5060 = vmatprep.subr.mxu0 0.0
    %5061 = vmatpush2.msra.mxu0 0.0
    %5062 = vmatprep.subr.mxu0 0.0
    %5063 = vmatpush2.msra.mxu0 0.0
    %5064 = vmatprep.subr.mxu0 0.0
    %5065 = vmatpush2.msra.mxu0 0.0
    %5066 = vmatprep.subr.mxu0 0.0
    %5067 = vmatpush2.msra.mxu0 0.0
    %5068 = vmatprep.subr.mxu0 0.0
    %5069 = vmatpush2.msra.mxu0 0.0
    %5070 = vmatprep.subr.mxu0 0.0
    %5071 = vmatpush2.msra.mxu0 0.0
    %5072 = vmatprep.subr.mxu0 0.0
    %5073 = vmatpush2.msra.mxu0 0.0
    %5074 = vmatprep.subr.mxu0 0.0
    %5075 = vmatpush2.msra.mxu0 0.0
    %5076 = vmatprep.subr.mxu0 0.0
    %5077 = vmatpush2.msra.mxu0 0.0
    %5078 = vmatprep.mubr.f32.mxu0 0.0
    %v5079 = vand.u32 %v4514, 4294901760
    %v5080 = vsub.f32 %v4514, %v5079
    %v5081 = vand.u32 %v5080, 4294901760
    %5082 = vmatmul.mubr.f32.gmra.mxu0 %v5081
    %v5083 = vpop.f32.mrf.mxu0
    %v5084 = vadd.f32 %v4947, %v5083
    %v5085 = vpop.f32.mrf.mxu0
    %5086 = vmatprep.mubr.f32.mxu0 0.0
    %v5087 = vand.u32 %v4517, 4294901760
    %v5088 = vsub.f32 %v4517, %v5087
    %v5089 = vand.u32 %v5088, 4294901760
    %5090 = vmatmul.mubr.f32.gmra.mxu0 %v5089
    %v5091 = vpop.f32.mrf.mxu0
    %v5092 = vadd.f32 %v4954, %v5091
    %v5093 = vpop.f32.mrf.mxu0
    %5094 = vmatprep.mubr.f32.mxu0 0.0
    %v5095 = vand.u32 %v4520, 4294901760
    %v5096 = vsub.f32 %v4520, %v5095
    %v5097 = vand.u32 %v5096, 4294901760
    %5098 = vmatmul.mubr.f32.gmra.mxu0 %v5097
    %v5099 = vpop.f32.mrf.mxu0
    %v5100 = vadd.f32 %v4961, %v5099
    %v5101 = vpop.f32.mrf.mxu0
    %5102 = vmatprep.mubr.f32.mxu0 0.0
    %v5103 = vand.u32 %v4523, 4294901760
    %v5104 = vsub.f32 %v4523, %v5103
    %v5105 = vand.u32 %v5104, 4294901760
    %5106 = vmatmul.mubr.f32.gmra.mxu0 %v5105
    %v5107 = vpop.f32.mrf.mxu0
    %v5108 = vadd.f32 %v4968, %v5107
    %v5109 = vpop.f32.mrf.mxu0
    %5110 = vmatprep.mubr.f32.mxu0 0.0
    %v5111 = vand.u32 %v4526, 4294901760
    %v5112 = vsub.f32 %v4526, %v5111
    %v5113 = vand.u32 %v5112, 4294901760
    %5114 = vmatmul.mubr.f32.gmra.mxu0 %v5113
    %v5115 = vpop.f32.mrf.mxu0
    %v5116 = vadd.f32 %v4975, %v5115
    %v5117 = vpop.f32.mrf.mxu0
    %5118 = vmatprep.mubr.f32.mxu0 0.0
    %v5119 = vand.u32 %v4529, 4294901760
    %v5120 = vsub.f32 %v4529, %v5119
    %v5121 = vand.u32 %v5120, 4294901760
    %5122 = vmatmul.mubr.f32.gmra.mxu0 %v5121
    %v5123 = vpop.f32.mrf.mxu0
    %v5124 = vadd.f32 %v4982, %v5123
    %v5125 = vpop.f32.mrf.mxu0
    %5126 = vmatprep.mubr.f32.mxu0 0.0
    %v5127 = vand.u32 %v4532, 4294901760
    %v5128 = vsub.f32 %v4532, %v5127
    %v5129 = vand.u32 %v5128, 4294901760
    %5130 = vmatmul.mubr.f32.gmra.mxu0 %v5129
    %v5131 = vpop.f32.mrf.mxu0
    %v5132 = vadd.f32 %v4989, %v5131
    %v5133 = vpop.f32.mrf.mxu0
    %5134 = vmatprep.mubr.f32.mxu0 0.0
    %v5135 = vand.u32 %v4535, 4294901760
    %v5136 = vsub.f32 %v4535, %v5135
    %v5137 = vand.u32 %v5136, 4294901760
    %5138 = vmatmul.mubr.f32.gmra.mxu0 %v5137
    %v5139 = vpop.f32.mrf.mxu0
    %v5140 = vadd.f32 %v4996, %v5139
    %v5141 = vpop.f32.mrf.mxu0
    %5142 = vmatprep.mubr.f32.mxu0 0.0
    %v5143 = vand.u32 %v4538, 4294901760
    %v5144 = vsub.f32 %v4538, %v5143
    %v5145 = vand.u32 %v5144, 4294901760
    %5146 = vmatmul.mubr.f32.gmra.mxu0 %v5145
    %v5147 = vpop.f32.mrf.mxu0
    %v5148 = vadd.f32 %v5003, %v5147
    %v5149 = vpop.f32.mrf.mxu0
    %5150 = vdwg.mxu0
    %5151 = vmatprep.subr.mxu0 0.0
    %5152 = vmatpush1.msra.mxu0 0.0
    %5153 = vmatprep.subr.mxu0 0.0
    %5154 = vmatpush1.msra.mxu0 0.0
    %5155 = vmatprep.subr.mxu0 0.0
    %5156 = vmatpush1.msra.mxu0 0.0
    %5157 = vmatprep.subr.mxu0 0.0
    %5158 = vmatpush1.msra.mxu0 0.0
    %5159 = vmatprep.subr.mxu0 0.0
    %5160 = vmatpush1.msra.mxu0 0.0
    %5161 = vmatprep.subr.mxu0 0.0
    %5162 = vmatpush1.msra.mxu0 0.0
    %5163 = vmatprep.subr.mxu0 0.0
    %5164 = vmatpush1.msra.mxu0 0.0
    %5165 = vmatprep.subr.mxu0 0.0
    %5166 = vmatpush1.msra.mxu0 0.0
    %5167 = vmatprep.subr.mxu0 0.0
    %v5168 = vand.u32 %v3584, 4294901760
    %v5169 = vsub.f32 %v3584, %v5168
    %v5170 = vand.u32 %v5169, 4294901760
    %5171 = vmatpush1.msra.mxu0 %v5170
    %5172 = vmatprep.subr.mxu0 0.0
    %v5173 = vand.u32 %v3583, 4294901760
    %v5174 = vsub.f32 %v3583, %v5173
    %v5175 = vand.u32 %v5174, 4294901760
    %5176 = vmatpush1.msra.mxu0 %v5175
    %5177 = vmatprep.subr.mxu0 0.0
    %v5178 = vand.u32 %v3582, 4294901760
    %v5179 = vsub.f32 %v3582, %v5178
    %v5180 = vand.u32 %v5179, 4294901760
    %5181 = vmatpush1.msra.mxu0 %v5180
    %5182 = vmatprep.subr.mxu0 0.0
    %v5183 = vand.u32 %v3581, 4294901760
    %v5184 = vsub.f32 %v3581, %v5183
    %v5185 = vand.u32 %v5184, 4294901760
    %5186 = vmatpush1.msra.mxu0 %v5185
    %5187 = vmatprep.subr.mxu0 0.0
    %v5188 = vand.u32 %v3580, 4294901760
    %v5189 = vsub.f32 %v3580, %v5188
    %v5190 = vand.u32 %v5189, 4294901760
    %5191 = vmatpush1.msra.mxu0 %v5190
    %5192 = vmatprep.subr.mxu0 0.0
    %v5193 = vand.u32 %v3579, 4294901760
    %v5194 = vsub.f32 %v3579, %v5193
    %v5195 = vand.u32 %v5194, 4294901760
    %5196 = vmatpush1.msra.mxu0 %v5195
    %5197 = vmatprep.subr.mxu0 0.0
    %v5198 = vand.u32 %v3578, 4294901760
    %v5199 = vsub.f32 %v3578, %v5198
    %v5200 = vand.u32 %v5199, 4294901760
    %5201 = vmatpush1.msra.mxu0 %v5200
    %5202 = vmatprep.subr.mxu0 0.0
    %v5203 = vand.u32 %v3577, 4294901760
    %v5204 = vsub.f32 %v3577, %v5203
    %v5205 = vand.u32 %v5204, 4294901760
    %5206 = vmatpush1.msra.mxu0 %v5205
    %5207 = vmatprep.subr.mxu0 0.0
    %5208 = vmatpush2.msra.mxu0 0.0
    %5209 = vmatprep.subr.mxu0 0.0
    %5210 = vmatpush2.msra.mxu0 0.0
    %5211 = vmatprep.subr.mxu0 0.0
    %5212 = vmatpush2.msra.mxu0 0.0
    %5213 = vmatprep.subr.mxu0 0.0
    %5214 = vmatpush2.msra.mxu0 0.0
    %5215 = vmatprep.subr.mxu0 0.0
    %5216 = vmatpush2.msra.mxu0 0.0
    %5217 = vmatprep.subr.mxu0 0.0
    %5218 = vmatpush2.msra.mxu0 0.0
    %5219 = vmatprep.subr.mxu0 0.0
    %5220 = vmatpush2.msra.mxu0 0.0
    %5221 = vmatprep.subr.mxu0 0.0
    %5222 = vmatpush2.msra.mxu0 0.0
    %5223 = vmatprep.subr.mxu0 0.0
    %5224 = vmatpush2.msra.mxu0 0.0
    %5225 = vmatprep.subr.mxu0 0.0
    %5226 = vmatpush2.msra.mxu0 0.0
    %5227 = vmatprep.subr.mxu0 0.0
    %5228 = vmatpush2.msra.mxu0 0.0
    %5229 = vmatprep.subr.mxu0 0.0
    %5230 = vmatpush2.msra.mxu0 0.0
    %5231 = vmatprep.subr.mxu0 0.0
    %5232 = vmatpush2.msra.mxu0 0.0
    %5233 = vmatprep.subr.mxu0 0.0
    %5234 = vmatpush2.msra.mxu0 0.0
    %5235 = vmatprep.subr.mxu0 0.0
    %5236 = vmatpush2.msra.mxu0 0.0
    %5237 = vmatprep.subr.mxu0 0.0
    %5238 = vmatpush2.msra.mxu0 0.0
    %5239 = vmatprep.mubr.f32.mxu0 0.0
    %v5240 = vand.u32 %v4514, 4294901760
    %5241 = vmatmul.mubr.f32.gmra.mxu0 %v5240
    %v5242 = vpop.f32.mrf.mxu0
    %v5243 = vadd.f32 %v5084, %v5242
    %v5244 = vpop.f32.mrf.mxu0
    %5245 = vmatprep.mubr.f32.mxu0 0.0
    %v5246 = vand.u32 %v4517, 4294901760
    %5247 = vmatmul.mubr.f32.gmra.mxu0 %v5246
    %v5248 = vpop.f32.mrf.mxu0
    %v5249 = vadd.f32 %v5092, %v5248
    %v5250 = vpop.f32.mrf.mxu0
    %5251 = vmatprep.mubr.f32.mxu0 0.0
    %v5252 = vand.u32 %v4520, 4294901760
    %5253 = vmatmul.mubr.f32.gmra.mxu0 %v5252
    %v5254 = vpop.f32.mrf.mxu0
    %v5255 = vadd.f32 %v5100, %v5254
    %v5256 = vpop.f32.mrf.mxu0
    %5257 = vmatprep.mubr.f32.mxu0 0.0
    %v5258 = vand.u32 %v4523, 4294901760
    %5259 = vmatmul.mubr.f32.gmra.mxu0 %v5258
    %v5260 = vpop.f32.mrf.mxu0
    %v5261 = vadd.f32 %v5108, %v5260
    %v5262 = vpop.f32.mrf.mxu0
    %5263 = vmatprep.mubr.f32.mxu0 0.0
    %v5264 = vand.u32 %v4526, 4294901760
    %5265 = vmatmul.mubr.f32.gmra.mxu0 %v5264
    %v5266 = vpop.f32.mrf.mxu0
    %v5267 = vadd.f32 %v5116, %v5266
    %v5268 = vpop.f32.mrf.mxu0
    %5269 = vmatprep.mubr.f32.mxu0 0.0
    %v5270 = vand.u32 %v4529, 4294901760
    %5271 = vmatmul.mubr.f32.gmra.mxu0 %v5270
    %v5272 = vpop.f32.mrf.mxu0
    %v5273 = vadd.f32 %v5124, %v5272
    %v5274 = vpop.f32.mrf.mxu0
    %5275 = vmatprep.mubr.f32.mxu0 0.0
    %v5276 = vand.u32 %v4532, 4294901760
    %5277 = vmatmul.mubr.f32.gmra.mxu0 %v5276
    %v5278 = vpop.f32.mrf.mxu0
    %v5279 = vadd.f32 %v5132, %v5278
    %v5280 = vpop.f32.mrf.mxu0
    %5281 = vmatprep.mubr.f32.mxu0 0.0
    %v5282 = vand.u32 %v4535, 4294901760
    %5283 = vmatmul.mubr.f32.gmra.mxu0 %v5282
    %v5284 = vpop.f32.mrf.mxu0
    %v5285 = vadd.f32 %v5140, %v5284
    %v5286 = vpop.f32.mrf.mxu0
    %5287 = vmatprep.mubr.f32.mxu0 0.0
    %v5288 = vand.u32 %v4538, 4294901760
    %5289 = vmatmul.mubr.f32.gmra.mxu0 %v5288
    %v5290 = vpop.f32.mrf.mxu0
    %v5291 = vadd.f32 %v5148, %v5290
    %v5292 = vpop.f32.mrf.mxu0
    %5293 = vdwg.mxu0
    %5294 = vmatprep.subr.mxu0 0.0
    %5295 = vmatpush1.msra.mxu0 0.0
    %5296 = vmatprep.subr.mxu0 0.0
    %5297 = vmatpush1.msra.mxu0 0.0
    %5298 = vmatprep.subr.mxu0 0.0
    %5299 = vmatpush1.msra.mxu0 0.0
    %5300 = vmatprep.subr.mxu0 0.0
    %5301 = vmatpush1.msra.mxu0 0.0
    %5302 = vmatprep.subr.mxu0 0.0
    %5303 = vmatpush1.msra.mxu0 0.0
    %5304 = vmatprep.subr.mxu0 0.0
    %5305 = vmatpush1.msra.mxu0 0.0
    %5306 = vmatprep.subr.mxu0 0.0
    %5307 = vmatpush1.msra.mxu0 0.0
    %5308 = vmatprep.subr.mxu0 0.0
    %5309 = vmatpush1.msra.mxu0 0.0
    %5310 = vmatprep.subr.mxu0 0.0
    %v5311 = vand.u32 %v3584, 4294901760
    %5312 = vmatpush1.msra.mxu0 %v5311
    %5313 = vmatprep.subr.mxu0 0.0
    %v5314 = vand.u32 %v3583, 4294901760
    %5315 = vmatpush1.msra.mxu0 %v5314
    %5316 = vmatprep.subr.mxu0 0.0
    %v5317 = vand.u32 %v3582, 4294901760
    %5318 = vmatpush1.msra.mxu0 %v5317
    %5319 = vmatprep.subr.mxu0 0.0
    %v5320 = vand.u32 %v3581, 4294901760
    %5321 = vmatpush1.msra.mxu0 %v5320
    %5322 = vmatprep.subr.mxu0 0.0
    %v5323 = vand.u32 %v3580, 4294901760
    %5324 = vmatpush1.msra.mxu0 %v5323
    %5325 = vmatprep.subr.mxu0 0.0
    %v5326 = vand.u32 %v3579, 4294901760
    %5327 = vmatpush1.msra.mxu0 %v5326
    %5328 = vmatprep.subr.mxu0 0.0
    %v5329 = vand.u32 %v3578, 4294901760
    %5330 = vmatpush1.msra.mxu0 %v5329
    %5331 = vmatprep.subr.mxu0 0.0
    %v5332 = vand.u32 %v3577, 4294901760
    %5333 = vmatpush1.msra.mxu0 %v5332
    %5334 = vmatprep.subr.mxu0 0.0
    %5335 = vmatpush2.msra.mxu0 0.0
    %5336 = vmatprep.subr.mxu0 0.0
    %5337 = vmatpush2.msra.mxu0 0.0
    %5338 = vmatprep.subr.mxu0 0.0
    %5339 = vmatpush2.msra.mxu0 0.0
    %5340 = vmatprep.subr.mxu0 0.0
    %5341 = vmatpush2.msra.mxu0 0.0
    %5342 = vmatprep.subr.mxu0 0.0
    %5343 = vmatpush2.msra.mxu0 0.0
    %5344 = vmatprep.subr.mxu0 0.0
    %5345 = vmatpush2.msra.mxu0 0.0
    %5346 = vmatprep.subr.mxu0 0.0
    %5347 = vmatpush2.msra.mxu0 0.0
    %5348 = vmatprep.subr.mxu0 0.0
    %5349 = vmatpush2.msra.mxu0 0.0
    %5350 = vmatprep.subr.mxu0 0.0
    %5351 = vmatpush2.msra.mxu0 0.0
    %5352 = vmatprep.subr.mxu0 0.0
    %5353 = vmatpush2.msra.mxu0 0.0
    %5354 = vmatprep.subr.mxu0 0.0
    %5355 = vmatpush2.msra.mxu0 0.0
    %5356 = vmatprep.subr.mxu0 0.0
    %5357 = vmatpush2.msra.mxu0 0.0
    %5358 = vmatprep.subr.mxu0 0.0
    %5359 = vmatpush2.msra.mxu0 0.0
    %5360 = vmatprep.subr.mxu0 0.0
    %5361 = vmatpush2.msra.mxu0 0.0
    %5362 = vmatprep.subr.mxu0 0.0
    %5363 = vmatpush2.msra.mxu0 0.0
    %5364 = vmatprep.subr.mxu0 0.0
    %5365 = vmatpush2.msra.mxu0 0.0
    %5366 = vmatprep.mubr.f32.mxu0 0.0
    %v5367 = vand.u32 %v4514, 4294901760
    %5368 = vmatmul.mubr.f32.gmra.mxu0 %v5367
    %v5369 = vpop.f32.mrf.mxu0
    %v5370 = vadd.f32 %v5243, %v5369
    %v5371 = vpop.f32.mrf.mxu0
    %5372 = vmatprep.mubr.f32.mxu0 0.0
    %v5373 = vand.u32 %v4517, 4294901760
    %5374 = vmatmul.mubr.f32.gmra.mxu0 %v5373
    %v5375 = vpop.f32.mrf.mxu0
    %v5376 = vadd.f32 %v5249, %v5375
    %v5377 = vpop.f32.mrf.mxu0
    %5378 = vmatprep.mubr.f32.mxu0 0.0
    %v5379 = vand.u32 %v4520, 4294901760
    %5380 = vmatmul.mubr.f32.gmra.mxu0 %v5379
    %v5381 = vpop.f32.mrf.mxu0
    %v5382 = vadd.f32 %v5255, %v5381
    %v5383 = vpop.f32.mrf.mxu0
    %5384 = vmatprep.mubr.f32.mxu0 0.0
    %v5385 = vand.u32 %v4523, 4294901760
    %5386 = vmatmul.mubr.f32.gmra.mxu0 %v5385
    %v5387 = vpop.f32.mrf.mxu0
    %v5388 = vadd.f32 %v5261, %v5387
    %v5389 = vpop.f32.mrf.mxu0
    %5390 = vmatprep.mubr.f32.mxu0 0.0
    %v5391 = vand.u32 %v4526, 4294901760
    %5392 = vmatmul.mubr.f32.gmra.mxu0 %v5391
    %v5393 = vpop.f32.mrf.mxu0
    %v5394 = vadd.f32 %v5267, %v5393
    %v5395 = vpop.f32.mrf.mxu0
    %5396 = vmatprep.mubr.f32.mxu0 0.0
    %v5397 = vand.u32 %v4529, 4294901760
    %5398 = vmatmul.mubr.f32.gmra.mxu0 %v5397
    %v5399 = vpop.f32.mrf.mxu0
    %v5400 = vadd.f32 %v5273, %v5399
    %v5401 = vpop.f32.mrf.mxu0
    %5402 = vmatprep.mubr.f32.mxu0 0.0
    %v5403 = vand.u32 %v4532, 4294901760
    %5404 = vmatmul.mubr.f32.gmra.mxu0 %v5403
    %v5405 = vpop.f32.mrf.mxu0
    %v5406 = vadd.f32 %v5279, %v5405
    %v5407 = vpop.f32.mrf.mxu0
    %5408 = vmatprep.mubr.f32.mxu0 0.0
    %v5409 = vand.u32 %v4535, 4294901760
    %5410 = vmatmul.mubr.f32.gmra.mxu0 %v5409
    %v5411 = vpop.f32.mrf.mxu0
    %v5412 = vadd.f32 %v5285, %v5411
    %v5413 = vpop.f32.mrf.mxu0
    %5414 = vmatprep.mubr.f32.mxu0 0.0
    %v5415 = vand.u32 %v4538, 4294901760
    %5416 = vmatmul.mubr.f32.gmra.mxu0 %v5415
    %v5417 = vpop.f32.mrf.mxu0
    %v5418 = vadd.f32 %v5291, %v5417
    %v5419 = vpop.f32.mrf.mxu0
    %5420 = vdwg.mxu0
    %v5421 = vmax.f32 %v4452, %v5370
    %v5422 = vmax.f32 %v4458, %v5376
    %v5423 = vmax.f32 %v4464, %v5382
    %v5424 = vmax.f32 %v4470, %v5388
    %v5425 = vmax.f32 %v4476, %v5394
    %v5426 = vmax.f32 %v4482, %v5400
    %v5427 = vmax.f32 %v4488, %v5406
    %v5428 = vmax.f32 %v4494, %v5412
    %v5429 = vmax.f32 %v4500, %v5418
    %v5430 = vmax.f32 %v5421, 0.0
    %v5431 = vmax.f32 %v5422, 0.0
    %v5432 = vmax.f32 %v5423, 0.0
    %v5433 = vmax.f32 %v5424, 0.0
    %v5434 = vmax.f32 %v5425, 0.0
    %v5435 = vmax.f32 %v5426, 0.0
    %v5436 = vmax.f32 %v5427, 0.0
    %v5437 = vmax.f32 %v5428, 0.0
    %v5438 = vmax.f32 %v5429, 0.0
    %v5439 = vld [vmem:[%s8] sm:$0xff]
    %v5440 = vld [vmem:[%s8 + $0x8] sm:$0xff]
    %v5441 = vld [vmem:[%s8 + $0x10] sm:$0xff]
    %v5442 = vld [vmem:[%s8 + $0x18] sm:$0xff]
    %s5443 = scalar_lea.vmem %s8, 32
    %v5444 = vld [vmem:[%s5443] sm:$0xff]
    %v5445 = vld [vmem:[%s5443 + $0x8] sm:$0xff]
    %v5446 = vld [vmem:[%s5443 + $0x10] sm:$0xff]
    %v5447 = vld [vmem:[%s5443 + $0x18] sm:$0xff]
    %v5457 = vrot.slane %v5430, 1
    %v5458 = vrot.slane %v5431, 1
    %v5459 = vsel %vm2278, %v5457, %v5458
    %v5460 = vrot.slane %v5432, 1
    %v5461 = vsel %vm2278, %v5458, %v5460
    %v5462 = vrot.slane %v5433, 1
    %v5463 = vsel %vm2278, %v5460, %v5462
    %v5464 = vrot.slane %v5434, 1
    %v5465 = vsel %vm2278, %v5462, %v5464
    %v5466 = vrot.slane %v5435, 1
    %v5467 = vsel %vm2278, %v5464, %v5466
    %v5468 = vrot.slane %v5436, 1
    %v5469 = vsel %vm2278, %v5466, %v5468
    %v5470 = vrot.slane %v5437, 1
    %v5471 = vsel %vm2278, %v5468, %v5470
    %v5472 = vrot.slane %v5438, 1
    %v5473 = vsel %vm2278, %v5470, %v5472
    %v5474 = vsel %vm2296, %v5459, 0
    %v5476 = vsel %vm2296, %v5461, 0
    %v5478 = vsel %vm2296, %v5463, 0
    %v5480 = vsel %vm2296, %v5465, 0
    %v5482 = vsel %vm2296, %v5467, 0
    %v5484 = vsel %vm2296, %v5469, 0
    %v5486 = vsel %vm2296, %v5471, 0
    %v5488 = vsel %vm2296, %v5473, 0
    %5490 = vmatprep.subr.mxu0 0.0
    %5491 = vmatpush1.msra.mxu0 0.0
    %5492 = vmatprep.subr.mxu0 0.0
    %5493 = vmatpush1.msra.mxu0 0.0
    %5494 = vmatprep.subr.mxu0 0.0
    %5495 = vmatpush1.msra.mxu0 0.0
    %5496 = vmatprep.subr.mxu0 0.0
    %5497 = vmatpush1.msra.mxu0 0.0
    %5498 = vmatprep.subr.mxu0 0.0
    %5499 = vmatpush1.msra.mxu0 0.0
    %5500 = vmatprep.subr.mxu0 0.0
    %5501 = vmatpush1.msra.mxu0 0.0
    %5502 = vmatprep.subr.mxu0 0.0
    %5503 = vmatpush1.msra.mxu0 0.0
    %5504 = vmatprep.subr.mxu0 0.0
    %5505 = vmatpush1.msra.mxu0 0.0
    %5506 = vmatprep.subr.mxu0 0.0
    %5507 = vmatpush1.msra.mxu0 0.0
    %5508 = vmatprep.subr.mxu0 0.0
    %5509 = vmatpush1.msra.mxu0 0.0
    %5510 = vmatprep.subr.mxu0 0.0
    %5511 = vmatpush1.msra.mxu0 0.0
    %5512 = vmatprep.subr.mxu0 0.0
    %5513 = vmatpush1.msra.mxu0 0.0
    %5514 = vmatprep.subr.mxu0 0.0
    %5515 = vmatpush1.msra.mxu0 %v5447
    %5516 = vmatprep.subr.mxu0 0.0
    %5517 = vmatpush1.msra.mxu0 %v5446
    %5518 = vmatprep.subr.mxu0 0.0
    %5519 = vmatpush1.msra.mxu0 %v5445
    %5520 = vmatprep.subr.mxu0 0.0
    %5521 = vmatpush1.msra.mxu0 %v5444
    %5522 = vmatprep.subr.mxu0 0.0
    %5523 = vmatpush2.msra.mxu0 0.0
    %5524 = vmatprep.subr.mxu0 0.0
    %5525 = vmatpush2.msra.mxu0 0.0
    %5526 = vmatprep.subr.mxu0 0.0
    %5527 = vmatpush2.msra.mxu0 0.0
    %5528 = vmatprep.subr.mxu0 0.0
    %5529 = vmatpush2.msra.mxu0 0.0
    %5530 = vmatprep.subr.mxu0 0.0
    %5531 = vmatpush2.msra.mxu0 0.0
    %5532 = vmatprep.subr.mxu0 0.0
    %5533 = vmatpush2.msra.mxu0 0.0
    %5534 = vmatprep.subr.mxu0 0.0
    %5535 = vmatpush2.msra.mxu0 0.0
    %5536 = vmatprep.subr.mxu0 0.0
    %5537 = vmatpush2.msra.mxu0 0.0
    %5538 = vmatprep.subr.mxu0 0.0
    %5539 = vmatpush2.msra.mxu0 0.0
    %5540 = vmatprep.subr.mxu0 0.0
    %5541 = vmatpush2.msra.mxu0 0.0
    %5542 = vmatprep.subr.mxu0 0.0
    %5543 = vmatpush2.msra.mxu0 0.0
    %5544 = vmatprep.subr.mxu0 0.0
    %5545 = vmatpush2.msra.mxu0 0.0
    %5546 = vmatprep.subr.mxu0 0.0
    %5547 = vmatpush2.msra.mxu0 0.0
    %5548 = vmatprep.subr.mxu0 0.0
    %5549 = vmatpush2.msra.mxu0 0.0
    %5550 = vmatprep.subr.mxu0 0.0
    %5551 = vmatpush2.msra.mxu0 0.0
    %5552 = vmatprep.subr.mxu0 0.0
    %5553 = vmatpush2.msra.mxu0 0.0
    %5554 = vmatprep.mubr.f32.mxu0 0.0
    %5555 = vmatmul.mubr.f32.gmra.mxu0 %v5474
    %v5556 = vpop.f32.mrf.mxu0
    %v5557 = vadd.f32 0.0, %v5556
    %v5558 = vpop.f32.mrf.mxu0
    %5559 = vmatprep.mubr.f32.mxu0 0.0
    %5560 = vmatmul.mubr.f32.gmra.mxu0 %v5476
    %v5561 = vpop.f32.mrf.mxu0
    %v5562 = vadd.f32 0.0, %v5561
    %v5563 = vpop.f32.mrf.mxu0
    %5564 = vmatprep.mubr.f32.mxu0 0.0
    %5565 = vmatmul.mubr.f32.gmra.mxu0 %v5478
    %v5566 = vpop.f32.mrf.mxu0
    %v5567 = vadd.f32 0.0, %v5566
    %v5568 = vpop.f32.mrf.mxu0
    %5569 = vmatprep.mubr.f32.mxu0 0.0
    %5570 = vmatmul.mubr.f32.gmra.mxu0 %v5480
    %v5571 = vpop.f32.mrf.mxu0
    %v5572 = vadd.f32 0.0, %v5571
    %v5573 = vpop.f32.mrf.mxu0
    %5574 = vmatprep.mubr.f32.mxu0 0.0
    %5575 = vmatmul.mubr.f32.gmra.mxu0 %v5482
    %v5576 = vpop.f32.mrf.mxu0
    %v5577 = vadd.f32 0.0, %v5576
    %v5578 = vpop.f32.mrf.mxu0
    %5579 = vmatprep.mubr.f32.mxu0 0.0
    %5580 = vmatmul.mubr.f32.gmra.mxu0 %v5484
    %v5581 = vpop.f32.mrf.mxu0
    %v5582 = vadd.f32 0.0, %v5581
    %v5583 = vpop.f32.mrf.mxu0
    %5584 = vmatprep.mubr.f32.mxu0 0.0
    %5585 = vmatmul.mubr.f32.gmra.mxu0 %v5486
    %v5586 = vpop.f32.mrf.mxu0
    %v5587 = vadd.f32 0.0, %v5586
    %v5588 = vpop.f32.mrf.mxu0
    %5589 = vmatprep.mubr.f32.mxu0 0.0
    %5590 = vmatmul.mubr.f32.gmra.mxu0 %v5488
    %v5591 = vpop.f32.mrf.mxu0
    %v5592 = vadd.f32 0.0, %v5591
    %v5593 = vpop.f32.mrf.mxu0
    %5594 = vdwg.mxu0
    %v5595 = vsel %vm2296, %v5430, 0
    %v5597 = vsel %vm2296, %v5431, 0
    %v5599 = vsel %vm2296, %v5432, 0
    %v5601 = vsel %vm2296, %v5433, 0
    %v5603 = vsel %vm2296, %v5434, 0
    %v5605 = vsel %vm2296, %v5435, 0
    %v5607 = vsel %vm2296, %v5436, 0
    %v5609 = vsel %vm2296, %v5437, 0
    %5611 = vmatprep.subr.mxu0 0.0
    %5612 = vmatpush1.msra.mxu0 0.0
    %5613 = vmatprep.subr.mxu0 0.0
    %5614 = vmatpush1.msra.mxu0 0.0
    %5615 = vmatprep.subr.mxu0 0.0
    %5616 = vmatpush1.msra.mxu0 0.0
    %5617 = vmatprep.subr.mxu0 0.0
    %5618 = vmatpush1.msra.mxu0 0.0
    %5619 = vmatprep.subr.mxu0 0.0
    %5620 = vmatpush1.msra.mxu0 0.0
    %5621 = vmatprep.subr.mxu0 0.0
    %5622 = vmatpush1.msra.mxu0 0.0
    %5623 = vmatprep.subr.mxu0 0.0
    %5624 = vmatpush1.msra.mxu0 0.0
    %5625 = vmatprep.subr.mxu0 0.0
    %5626 = vmatpush1.msra.mxu0 0.0
    %5627 = vmatprep.subr.mxu0 0.0
    %5628 = vmatpush1.msra.mxu0 0.0
    %5629 = vmatprep.subr.mxu0 0.0
    %5630 = vmatpush1.msra.mxu0 0.0
    %5631 = vmatprep.subr.mxu0 0.0
    %5632 = vmatpush1.msra.mxu0 0.0
    %5633 = vmatprep.subr.mxu0 0.0
    %5634 = vmatpush1.msra.mxu0 0.0
    %5635 = vmatprep.subr.mxu0 0.0
    %5636 = vmatpush1.msra.mxu0 %v5442
    %5637 = vmatprep.subr.mxu0 0.0
    %5638 = vmatpush1.msra.mxu0 %v5441
    %5639 = vmatprep.subr.mxu0 0.0
    %5640 = vmatpush1.msra.mxu0 %v5440
    %5641 = vmatprep.subr.mxu0 0.0
    %5642 = vmatpush1.msra.mxu0 %v5439
    %5643 = vmatprep.subr.mxu0 0.0
    %5644 = vmatpush2.msra.mxu0 0.0
    %5645 = vmatprep.subr.mxu0 0.0
    %5646 = vmatpush2.msra.mxu0 0.0
    %5647 = vmatprep.subr.mxu0 0.0
    %5648 = vmatpush2.msra.mxu0 0.0
    %5649 = vmatprep.subr.mxu0 0.0
    %5650 = vmatpush2.msra.mxu0 0.0
    %5651 = vmatprep.subr.mxu0 0.0
    %5652 = vmatpush2.msra.mxu0 0.0
    %5653 = vmatprep.subr.mxu0 0.0
    %5654 = vmatpush2.msra.mxu0 0.0
    %5655 = vmatprep.subr.mxu0 0.0
    %5656 = vmatpush2.msra.mxu0 0.0
    %5657 = vmatprep.subr.mxu0 0.0
    %5658 = vmatpush2.msra.mxu0 0.0
    %5659 = vmatprep.subr.mxu0 0.0
    %5660 = vmatpush2.msra.mxu0 0.0
    %5661 = vmatprep.subr.mxu0 0.0
    %5662 = vmatpush2.msra.mxu0 0.0
    %5663 = vmatprep.subr.mxu0 0.0
    %5664 = vmatpush2.msra.mxu0 0.0
    %5665 = vmatprep.subr.mxu0 0.0
    %5666 = vmatpush2.msra.mxu0 0.0
    %5667 = vmatprep.subr.mxu0 0.0
    %5668 = vmatpush2.msra.mxu0 0.0
    %5669 = vmatprep.subr.mxu0 0.0
    %5670 = vmatpush2.msra.mxu0 0.0
    %5671 = vmatprep.subr.mxu0 0.0
    %5672 = vmatpush2.msra.mxu0 0.0
    %5673 = vmatprep.subr.mxu0 0.0
    %5674 = vmatpush2.msra.mxu0 0.0
    %5675 = vmatprep.mubr.f32.mxu0 0.0
    %5676 = vmatmul.mubr.f32.gmra.mxu0 %v5595
    %v5677 = vpop.f32.mrf.mxu0
    %v5678 = vadd.f32 %v5557, %v5677
    %v5679 = vpop.f32.mrf.mxu0
    %5680 = vmatprep.mubr.f32.mxu0 0.0
    %5681 = vmatmul.mubr.f32.gmra.mxu0 %v5597
    %v5682 = vpop.f32.mrf.mxu0
    %v5683 = vadd.f32 %v5562, %v5682
    %v5684 = vpop.f32.mrf.mxu0
    %5685 = vmatprep.mubr.f32.mxu0 0.0
    %5686 = vmatmul.mubr.f32.gmra.mxu0 %v5599
    %v5687 = vpop.f32.mrf.mxu0
    %v5688 = vadd.f32 %v5567, %v5687
    %v5689 = vpop.f32.mrf.mxu0
    %5690 = vmatprep.mubr.f32.mxu0 0.0
    %5691 = vmatmul.mubr.f32.gmra.mxu0 %v5601
    %v5692 = vpop.f32.mrf.mxu0
    %v5693 = vadd.f32 %v5572, %v5692
    %v5694 = vpop.f32.mrf.mxu0
    %5695 = vmatprep.mubr.f32.mxu0 0.0
    %5696 = vmatmul.mubr.f32.gmra.mxu0 %v5603
    %v5697 = vpop.f32.mrf.mxu0
    %v5698 = vadd.f32 %v5577, %v5697
    %v5699 = vpop.f32.mrf.mxu0
    %5700 = vmatprep.mubr.f32.mxu0 0.0
    %5701 = vmatmul.mubr.f32.gmra.mxu0 %v5605
    %v5702 = vpop.f32.mrf.mxu0
    %v5703 = vadd.f32 %v5582, %v5702
    %v5704 = vpop.f32.mrf.mxu0
    %5705 = vmatprep.mubr.f32.mxu0 0.0
    %5706 = vmatmul.mubr.f32.gmra.mxu0 %v5607
    %v5707 = vpop.f32.mrf.mxu0
    %v5708 = vadd.f32 %v5587, %v5707
    %v5709 = vpop.f32.mrf.mxu0
    %5710 = vmatprep.mubr.f32.mxu0 0.0
    %5711 = vmatmul.mubr.f32.gmra.mxu0 %v5609
    %v5712 = vpop.f32.mrf.mxu0
    %v5713 = vadd.f32 %v5592, %v5712
    %v5714 = vpop.f32.mrf.mxu0
    %5715 = vdwg.mxu0
    %s5716 = scalar_lea.vmem %s8, 64
    %v5717 = vld [vmem:[%s5716] sm:$0xff]
    %v5718 = vld [vmem:[%s5716 + $0x8] sm:$0xff]
    %v5719 = vld [vmem:[%s5716 + $0x10] sm:$0xff]
    %v5720 = vld [vmem:[%s5716 + $0x18] sm:$0xff]
    %v5721 = vrot.slane %v5430, 2
    %v5722 = vrot.slane %v5431, 2
    %v5723 = vsel %vm2544, %v5721, %v5722
    %v5724 = vrot.slane %v5432, 2
    %v5725 = vsel %vm2544, %v5722, %v5724
    %v5726 = vrot.slane %v5433, 2
    %v5727 = vsel %vm2544, %v5724, %v5726
    %v5728 = vrot.slane %v5434, 2
    %v5729 = vsel %vm2544, %v5726, %v5728
    %v5730 = vrot.slane %v5435, 2
    %v5731 = vsel %vm2544, %v5728, %v5730
    %v5732 = vrot.slane %v5436, 2
    %v5733 = vsel %vm2544, %v5730, %v5732
    %v5734 = vrot.slane %v5437, 2
    %v5735 = vsel %vm2544, %v5732, %v5734
    %v5736 = vrot.slane %v5438, 2
    %v5737 = vsel %vm2544, %v5734, %v5736
    %v5738 = vsel %vm2296, %v5723, 0
    %v5740 = vsel %vm2296, %v5725, 0
    %v5742 = vsel %vm2296, %v5727, 0
    %v5744 = vsel %vm2296, %v5729, 0
    %v5746 = vsel %vm2296, %v5731, 0
    %v5748 = vsel %vm2296, %v5733, 0
    %v5750 = vsel %vm2296, %v5735, 0
    %v5752 = vsel %vm2296, %v5737, 0
    %5754 = vmatprep.subr.mxu0 0.0
    %5755 = vmatpush1.msra.mxu0 0.0
    %5756 = vmatprep.subr.mxu0 0.0
    %5757 = vmatpush1.msra.mxu0 0.0
    %5758 = vmatprep.subr.mxu0 0.0
    %5759 = vmatpush1.msra.mxu0 0.0
    %5760 = vmatprep.subr.mxu0 0.0
    %5761 = vmatpush1.msra.mxu0 0.0
    %5762 = vmatprep.subr.mxu0 0.0
    %5763 = vmatpush1.msra.mxu0 0.0
    %5764 = vmatprep.subr.mxu0 0.0
    %5765 = vmatpush1.msra.mxu0 0.0
    %5766 = vmatprep.subr.mxu0 0.0
    %5767 = vmatpush1.msra.mxu0 0.0
    %5768 = vmatprep.subr.mxu0 0.0
    %5769 = vmatpush1.msra.mxu0 0.0
    %5770 = vmatprep.subr.mxu0 0.0
    %5771 = vmatpush1.msra.mxu0 0.0
    %5772 = vmatprep.subr.mxu0 0.0
    %5773 = vmatpush1.msra.mxu0 0.0
    %5774 = vmatprep.subr.mxu0 0.0
    %5775 = vmatpush1.msra.mxu0 0.0
    %5776 = vmatprep.subr.mxu0 0.0
    %5777 = vmatpush1.msra.mxu0 0.0
    %5778 = vmatprep.subr.mxu0 0.0
    %5779 = vmatpush1.msra.mxu0 %v5720
    %5780 = vmatprep.subr.mxu0 0.0
    %5781 = vmatpush1.msra.mxu0 %v5719
    %5782 = vmatprep.subr.mxu0 0.0
    %5783 = vmatpush1.msra.mxu0 %v5718
    %5784 = vmatprep.subr.mxu0 0.0
    %5785 = vmatpush1.msra.mxu0 %v5717
    %5786 = vmatprep.subr.mxu0 0.0
    %5787 = vmatpush2.msra.mxu0 0.0
    %5788 = vmatprep.subr.mxu0 0.0
    %5789 = vmatpush2.msra.mxu0 0.0
    %5790 = vmatprep.subr.mxu0 0.0
    %5791 = vmatpush2.msra.mxu0 0.0
    %5792 = vmatprep.subr.mxu0 0.0
    %5793 = vmatpush2.msra.mxu0 0.0
    %5794 = vmatprep.subr.mxu0 0.0
    %5795 = vmatpush2.msra.mxu0 0.0
    %5796 = vmatprep.subr.mxu0 0.0
    %5797 = vmatpush2.msra.mxu0 0.0
    %5798 = vmatprep.subr.mxu0 0.0
    %5799 = vmatpush2.msra.mxu0 0.0
    %5800 = vmatprep.subr.mxu0 0.0
    %5801 = vmatpush2.msra.mxu0 0.0
    %5802 = vmatprep.subr.mxu0 0.0
    %5803 = vmatpush2.msra.mxu0 0.0
    %5804 = vmatprep.subr.mxu0 0.0
    %5805 = vmatpush2.msra.mxu0 0.0
    %5806 = vmatprep.subr.mxu0 0.0
    %5807 = vmatpush2.msra.mxu0 0.0
    %5808 = vmatprep.subr.mxu0 0.0
    %5809 = vmatpush2.msra.mxu0 0.0
    %5810 = vmatprep.subr.mxu0 0.0
    %5811 = vmatpush2.msra.mxu0 0.0
    %5812 = vmatprep.subr.mxu0 0.0
    %5813 = vmatpush2.msra.mxu0 0.0
    %5814 = vmatprep.subr.mxu0 0.0
    %5815 = vmatpush2.msra.mxu0 0.0
    %5816 = vmatprep.subr.mxu0 0.0
    %5817 = vmatpush2.msra.mxu0 0.0
    %5818 = vmatprep.mubr.f32.mxu0 0.0
    %5819 = vmatmul.mubr.f32.gmra.mxu0 %v5738
    %v5820 = vpop.f32.mrf.mxu0
    %v5821 = vadd.f32 0.0, %v5820
    %v5822 = vpop.f32.mrf.mxu0
    %5823 = vmatprep.mubr.f32.mxu0 0.0
    %5824 = vmatmul.mubr.f32.gmra.mxu0 %v5740
    %v5825 = vpop.f32.mrf.mxu0
    %v5826 = vadd.f32 0.0, %v5825
    %v5827 = vpop.f32.mrf.mxu0
    %5828 = vmatprep.mubr.f32.mxu0 0.0
    %5829 = vmatmul.mubr.f32.gmra.mxu0 %v5742
    %v5830 = vpop.f32.mrf.mxu0
    %v5831 = vadd.f32 0.0, %v5830
    %v5832 = vpop.f32.mrf.mxu0
    %5833 = vmatprep.mubr.f32.mxu0 0.0
    %5834 = vmatmul.mubr.f32.gmra.mxu0 %v5744
    %v5835 = vpop.f32.mrf.mxu0
    %v5836 = vadd.f32 0.0, %v5835
    %v5837 = vpop.f32.mrf.mxu0
    %5838 = vmatprep.mubr.f32.mxu0 0.0
    %5839 = vmatmul.mubr.f32.gmra.mxu0 %v5746
    %v5840 = vpop.f32.mrf.mxu0
    %v5841 = vadd.f32 0.0, %v5840
    %v5842 = vpop.f32.mrf.mxu0
    %5843 = vmatprep.mubr.f32.mxu0 0.0
    %5844 = vmatmul.mubr.f32.gmra.mxu0 %v5748
    %v5845 = vpop.f32.mrf.mxu0
    %v5846 = vadd.f32 0.0, %v5845
    %v5847 = vpop.f32.mrf.mxu0
    %5848 = vmatprep.mubr.f32.mxu0 0.0
    %5849 = vmatmul.mubr.f32.gmra.mxu0 %v5750
    %v5850 = vpop.f32.mrf.mxu0
    %v5851 = vadd.f32 0.0, %v5850
    %v5852 = vpop.f32.mrf.mxu0
    %5853 = vmatprep.mubr.f32.mxu0 0.0
    %5854 = vmatmul.mubr.f32.gmra.mxu0 %v5752
    %v5855 = vpop.f32.mrf.mxu0
    %v5856 = vadd.f32 0.0, %v5855
    %v5857 = vpop.f32.mrf.mxu0
    %5858 = vdwg.mxu0
    %v5859 = vadd.f32 %v5678, %v5821
    %v5860 = vadd.f32 %v5683, %v5826
    %v5861 = vadd.f32 %v5688, %v5831
    %v5862 = vadd.f32 %v5693, %v5836
    %v5863 = vadd.f32 %v5698, %v5841
    %v5864 = vadd.f32 %v5703, %v5846
    %v5865 = vadd.f32 %v5708, %v5851
    %v5866 = vadd.f32 %v5713, %v5856
    %s5867 = scalar_lea.vmem %s8, 96
    %v5868 = vld [vmem:[%s5867] sm:$0xff]
    %v5869 = vld [vmem:[%s5867 + $0x8] sm:$0xff]
    %v5870 = vld [vmem:[%s5867 + $0x10] sm:$0xff]
    %v5871 = vld [vmem:[%s5867 + $0x18] sm:$0xff]
    %v5872 = vrot.slane %v5430, 3
    %v5873 = vrot.slane %v5431, 3
    %v5874 = vsel %vm2696, %v5872, %v5873
    %v5875 = vrot.slane %v5432, 3
    %v5876 = vsel %vm2696, %v5873, %v5875
    %v5877 = vrot.slane %v5433, 3
    %v5878 = vsel %vm2696, %v5875, %v5877
    %v5879 = vrot.slane %v5434, 3
    %v5880 = vsel %vm2696, %v5877, %v5879
    %v5881 = vrot.slane %v5435, 3
    %v5882 = vsel %vm2696, %v5879, %v5881
    %v5883 = vrot.slane %v5436, 3
    %v5884 = vsel %vm2696, %v5881, %v5883
    %v5885 = vrot.slane %v5437, 3
    %v5886 = vsel %vm2696, %v5883, %v5885
    %v5887 = vrot.slane %v5438, 3
    %v5888 = vsel %vm2696, %v5885, %v5887
    %v5889 = vsel %vm2296, %v5874, 0
    %v5891 = vsel %vm2296, %v5876, 0
    %v5893 = vsel %vm2296, %v5878, 0
    %v5895 = vsel %vm2296, %v5880, 0
    %v5897 = vsel %vm2296, %v5882, 0
    %v5899 = vsel %vm2296, %v5884, 0
    %v5901 = vsel %vm2296, %v5886, 0
    %v5903 = vsel %vm2296, %v5888, 0
    %5905 = vmatprep.subr.mxu0 0.0
    %5906 = vmatpush1.msra.mxu0 0.0
    %5907 = vmatprep.subr.mxu0 0.0
    %5908 = vmatpush1.msra.mxu0 0.0
    %5909 = vmatprep.subr.mxu0 0.0
    %5910 = vmatpush1.msra.mxu0 0.0
    %5911 = vmatprep.subr.mxu0 0.0
    %5912 = vmatpush1.msra.mxu0 0.0
    %5913 = vmatprep.subr.mxu0 0.0
    %5914 = vmatpush1.msra.mxu0 0.0
    %5915 = vmatprep.subr.mxu0 0.0
    %5916 = vmatpush1.msra.mxu0 0.0
    %5917 = vmatprep.subr.mxu0 0.0
    %5918 = vmatpush1.msra.mxu0 0.0
    %5919 = vmatprep.subr.mxu0 0.0
    %5920 = vmatpush1.msra.mxu0 0.0
    %5921 = vmatprep.subr.mxu0 0.0
    %5922 = vmatpush1.msra.mxu0 0.0
    %5923 = vmatprep.subr.mxu0 0.0
    %5924 = vmatpush1.msra.mxu0 0.0
    %5925 = vmatprep.subr.mxu0 0.0
    %5926 = vmatpush1.msra.mxu0 0.0
    %5927 = vmatprep.subr.mxu0 0.0
    %5928 = vmatpush1.msra.mxu0 0.0
    %5929 = vmatprep.subr.mxu0 0.0
    %5930 = vmatpush1.msra.mxu0 %v5871
    %5931 = vmatprep.subr.mxu0 0.0
    %5932 = vmatpush1.msra.mxu0 %v5870
    %5933 = vmatprep.subr.mxu0 0.0
    %5934 = vmatpush1.msra.mxu0 %v5869
    %5935 = vmatprep.subr.mxu0 0.0
    %5936 = vmatpush1.msra.mxu0 %v5868
    %5937 = vmatprep.subr.mxu0 0.0
    %5938 = vmatpush2.msra.mxu0 0.0
    %5939 = vmatprep.subr.mxu0 0.0
    %5940 = vmatpush2.msra.mxu0 0.0
    %5941 = vmatprep.subr.mxu0 0.0
    %5942 = vmatpush2.msra.mxu0 0.0
    %5943 = vmatprep.subr.mxu0 0.0
    %5944 = vmatpush2.msra.mxu0 0.0
    %5945 = vmatprep.subr.mxu0 0.0
    %5946 = vmatpush2.msra.mxu0 0.0
    %5947 = vmatprep.subr.mxu0 0.0
    %5948 = vmatpush2.msra.mxu0 0.0
    %5949 = vmatprep.subr.mxu0 0.0
    %5950 = vmatpush2.msra.mxu0 0.0
    %5951 = vmatprep.subr.mxu0 0.0
    %5952 = vmatpush2.msra.mxu0 0.0
    %5953 = vmatprep.subr.mxu0 0.0
    %5954 = vmatpush2.msra.mxu0 0.0
    %5955 = vmatprep.subr.mxu0 0.0
    %5956 = vmatpush2.msra.mxu0 0.0
    %5957 = vmatprep.subr.mxu0 0.0
    %5958 = vmatpush2.msra.mxu0 0.0
    %5959 = vmatprep.subr.mxu0 0.0
    %5960 = vmatpush2.msra.mxu0 0.0
    %5961 = vmatprep.subr.mxu0 0.0
    %5962 = vmatpush2.msra.mxu0 0.0
    %5963 = vmatprep.subr.mxu0 0.0
    %5964 = vmatpush2.msra.mxu0 0.0
    %5965 = vmatprep.subr.mxu0 0.0
    %5966 = vmatpush2.msra.mxu0 0.0
    %5967 = vmatprep.subr.mxu0 0.0
    %5968 = vmatpush2.msra.mxu0 0.0
    %5969 = vmatprep.mubr.f32.mxu0 0.0
    %5970 = vmatmul.mubr.f32.gmra.mxu0 %v5889
    %v5971 = vpop.f32.mrf.mxu0
    %v5972 = vadd.f32 0.0, %v5971
    %v5973 = vpop.f32.mrf.mxu0
    %5974 = vmatprep.mubr.f32.mxu0 0.0
    %5975 = vmatmul.mubr.f32.gmra.mxu0 %v5891
    %v5976 = vpop.f32.mrf.mxu0
    %v5977 = vadd.f32 0.0, %v5976
    %v5978 = vpop.f32.mrf.mxu0
    %5979 = vmatprep.mubr.f32.mxu0 0.0
    %5980 = vmatmul.mubr.f32.gmra.mxu0 %v5893
    %v5981 = vpop.f32.mrf.mxu0
    %v5982 = vadd.f32 0.0, %v5981
    %v5983 = vpop.f32.mrf.mxu0
    %5984 = vmatprep.mubr.f32.mxu0 0.0
    %5985 = vmatmul.mubr.f32.gmra.mxu0 %v5895
    %v5986 = vpop.f32.mrf.mxu0
    %v5987 = vadd.f32 0.0, %v5986
    %v5988 = vpop.f32.mrf.mxu0
    %5989 = vmatprep.mubr.f32.mxu0 0.0
    %5990 = vmatmul.mubr.f32.gmra.mxu0 %v5897
    %v5991 = vpop.f32.mrf.mxu0
    %v5992 = vadd.f32 0.0, %v5991
    %v5993 = vpop.f32.mrf.mxu0
    %5994 = vmatprep.mubr.f32.mxu0 0.0
    %5995 = vmatmul.mubr.f32.gmra.mxu0 %v5899
    %v5996 = vpop.f32.mrf.mxu0
    %v5997 = vadd.f32 0.0, %v5996
    %v5998 = vpop.f32.mrf.mxu0
    %5999 = vmatprep.mubr.f32.mxu0 0.0
    %6000 = vmatmul.mubr.f32.gmra.mxu0 %v5901
    %v6001 = vpop.f32.mrf.mxu0
    %v6002 = vadd.f32 0.0, %v6001
    %v6003 = vpop.f32.mrf.mxu0
    %6004 = vmatprep.mubr.f32.mxu0 0.0
    %6005 = vmatmul.mubr.f32.gmra.mxu0 %v5903
    %v6006 = vpop.f32.mrf.mxu0
    %v6007 = vadd.f32 0.0, %v6006
    %v6008 = vpop.f32.mrf.mxu0
    %6009 = vdwg.mxu0
    %v6010 = vadd.f32 %v5859, %v5972
    %v6011 = vadd.f32 %v5860, %v5977
    %v6012 = vadd.f32 %v5861, %v5982
    %v6013 = vadd.f32 %v5862, %v5987
    %v6014 = vadd.f32 %v5863, %v5992
    %v6015 = vadd.f32 %v5864, %v5997
    %v6016 = vadd.f32 %v5865, %v6002
    %v6017 = vadd.f32 %v5866, %v6007
    %s6018 = scalar_lea.vmem %s8, 128
    %v6019 = vld [vmem:[%s6018] sm:$0xff]
    %v6020 = vld [vmem:[%s6018 + $0x8] sm:$0xff]
    %v6021 = vld [vmem:[%s6018 + $0x10] sm:$0xff]
    %v6022 = vld [vmem:[%s6018 + $0x18] sm:$0xff]
    %v6023 = vrot.slane %v5430, 4
    %v6024 = vrot.slane %v5431, 4
    %v6025 = vsel %vm111, %v6023, %v6024
    %v6026 = vrot.slane %v5432, 4
    %v6027 = vsel %vm111, %v6024, %v6026
    %v6028 = vrot.slane %v5433, 4
    %v6029 = vsel %vm111, %v6026, %v6028
    %v6030 = vrot.slane %v5434, 4
    %v6031 = vsel %vm111, %v6028, %v6030
    %v6032 = vrot.slane %v5435, 4
    %v6033 = vsel %vm111, %v6030, %v6032
    %v6034 = vrot.slane %v5436, 4
    %v6035 = vsel %vm111, %v6032, %v6034
    %v6036 = vrot.slane %v5437, 4
    %v6037 = vsel %vm111, %v6034, %v6036
    %v6038 = vrot.slane %v5438, 4
    %v6039 = vsel %vm111, %v6036, %v6038
    %v6040 = vsel %vm2296, %v6025, 0
    %v6042 = vsel %vm2296, %v6027, 0
    %v6044 = vsel %vm2296, %v6029, 0
    %v6046 = vsel %vm2296, %v6031, 0
    %v6048 = vsel %vm2296, %v6033, 0
    %v6050 = vsel %vm2296, %v6035, 0
    %v6052 = vsel %vm2296, %v6037, 0
    %v6054 = vsel %vm2296, %v6039, 0
    %6056 = vmatprep.subr.mxu0 0.0
    %6057 = vmatpush1.msra.mxu0 0.0
    %6058 = vmatprep.subr.mxu0 0.0
    %6059 = vmatpush1.msra.mxu0 0.0
    %6060 = vmatprep.subr.mxu0 0.0
    %6061 = vmatpush1.msra.mxu0 0.0
    %6062 = vmatprep.subr.mxu0 0.0
    %6063 = vmatpush1.msra.mxu0 0.0
    %6064 = vmatprep.subr.mxu0 0.0
    %6065 = vmatpush1.msra.mxu0 0.0
    %6066 = vmatprep.subr.mxu0 0.0
    %6067 = vmatpush1.msra.mxu0 0.0
    %6068 = vmatprep.subr.mxu0 0.0
    %6069 = vmatpush1.msra.mxu0 0.0
    %6070 = vmatprep.subr.mxu0 0.0
    %6071 = vmatpush1.msra.mxu0 0.0
    %6072 = vmatprep.subr.mxu0 0.0
    %6073 = vmatpush1.msra.mxu0 0.0
    %6074 = vmatprep.subr.mxu0 0.0
    %6075 = vmatpush1.msra.mxu0 0.0
    %6076 = vmatprep.subr.mxu0 0.0
    %6077 = vmatpush1.msra.mxu0 0.0
    %6078 = vmatprep.subr.mxu0 0.0
    %6079 = vmatpush1.msra.mxu0 0.0
    %6080 = vmatprep.subr.mxu0 0.0
    %6081 = vmatpush1.msra.mxu0 %v6022
    %6082 = vmatprep.subr.mxu0 0.0
    %6083 = vmatpush1.msra.mxu0 %v6021
    %6084 = vmatprep.subr.mxu0 0.0
    %6085 = vmatpush1.msra.mxu0 %v6020
    %6086 = vmatprep.subr.mxu0 0.0
    %6087 = vmatpush1.msra.mxu0 %v6019
    %6088 = vmatprep.subr.mxu0 0.0
    %6089 = vmatpush2.msra.mxu0 0.0
    %6090 = vmatprep.subr.mxu0 0.0
    %6091 = vmatpush2.msra.mxu0 0.0
    %6092 = vmatprep.subr.mxu0 0.0
    %6093 = vmatpush2.msra.mxu0 0.0
    %6094 = vmatprep.subr.mxu0 0.0
    %6095 = vmatpush2.msra.mxu0 0.0
    %6096 = vmatprep.subr.mxu0 0.0
    %6097 = vmatpush2.msra.mxu0 0.0
    %6098 = vmatprep.subr.mxu0 0.0
    %6099 = vmatpush2.msra.mxu0 0.0
    %6100 = vmatprep.subr.mxu0 0.0
    %6101 = vmatpush2.msra.mxu0 0.0
    %6102 = vmatprep.subr.mxu0 0.0
    %6103 = vmatpush2.msra.mxu0 0.0
    %6104 = vmatprep.subr.mxu0 0.0
    %6105 = vmatpush2.msra.mxu0 0.0
    %6106 = vmatprep.subr.mxu0 0.0
    %6107 = vmatpush2.msra.mxu0 0.0
    %6108 = vmatprep.subr.mxu0 0.0
    %6109 = vmatpush2.msra.mxu0 0.0
    %6110 = vmatprep.subr.mxu0 0.0
    %6111 = vmatpush2.msra.mxu0 0.0
    %6112 = vmatprep.subr.mxu0 0.0
    %6113 = vmatpush2.msra.mxu0 0.0
    %6114 = vmatprep.subr.mxu0 0.0
    %6115 = vmatpush2.msra.mxu0 0.0
    %6116 = vmatprep.subr.mxu0 0.0
    %6117 = vmatpush2.msra.mxu0 0.0
    %6118 = vmatprep.subr.mxu0 0.0
    %6119 = vmatpush2.msra.mxu0 0.0
    %6120 = vmatprep.mubr.f32.mxu0 0.0
    %6121 = vmatmul.mubr.f32.gmra.mxu0 %v6040
    %v6122 = vpop.f32.mrf.mxu0
    %v6123 = vadd.f32 0.0, %v6122
    %v6124 = vpop.f32.mrf.mxu0
    %6125 = vmatprep.mubr.f32.mxu0 0.0
    %6126 = vmatmul.mubr.f32.gmra.mxu0 %v6042
    %v6127 = vpop.f32.mrf.mxu0
    %v6128 = vadd.f32 0.0, %v6127
    %v6129 = vpop.f32.mrf.mxu0
    %6130 = vmatprep.mubr.f32.mxu0 0.0
    %6131 = vmatmul.mubr.f32.gmra.mxu0 %v6044
    %v6132 = vpop.f32.mrf.mxu0
    %v6133 = vadd.f32 0.0, %v6132
    %v6134 = vpop.f32.mrf.mxu0
    %6135 = vmatprep.mubr.f32.mxu0 0.0
    %6136 = vmatmul.mubr.f32.gmra.mxu0 %v6046
    %v6137 = vpop.f32.mrf.mxu0
    %v6138 = vadd.f32 0.0, %v6137
    %v6139 = vpop.f32.mrf.mxu0
    %6140 = vmatprep.mubr.f32.mxu0 0.0
    %6141 = vmatmul.mubr.f32.gmra.mxu0 %v6048
    %v6142 = vpop.f32.mrf.mxu0
    %v6143 = vadd.f32 0.0, %v6142
    %v6144 = vpop.f32.mrf.mxu0
    %6145 = vmatprep.mubr.f32.mxu0 0.0
    %6146 = vmatmul.mubr.f32.gmra.mxu0 %v6050
    %v6147 = vpop.f32.mrf.mxu0
    %v6148 = vadd.f32 0.0, %v6147
    %v6149 = vpop.f32.mrf.mxu0
    %6150 = vmatprep.mubr.f32.mxu0 0.0
    %6151 = vmatmul.mubr.f32.gmra.mxu0 %v6052
    %v6152 = vpop.f32.mrf.mxu0
    %v6153 = vadd.f32 0.0, %v6152
    %v6154 = vpop.f32.mrf.mxu0
    %6155 = vmatprep.mubr.f32.mxu0 0.0
    %6156 = vmatmul.mubr.f32.gmra.mxu0 %v6054
    %v6157 = vpop.f32.mrf.mxu0
    %v6158 = vadd.f32 0.0, %v6157
    %v6159 = vpop.f32.mrf.mxu0
    %6160 = vdwg.mxu0
    %v6161 = vadd.f32 %v6010, %v6123
    %v6162 = vadd.f32 %v6011, %v6128
    %v6163 = vadd.f32 %v6012, %v6133
    %v6164 = vadd.f32 %v6013, %v6138
    %v6165 = vadd.f32 %v6014, %v6143
    %v6166 = vadd.f32 %v6015, %v6148
    %v6167 = vadd.f32 %v6016, %v6153
    %v6168 = vadd.f32 %v6017, %v6158
    %s6169 = scalar_lea.vmem %s8, 160
    %v6170 = vld [vmem:[%s6169] sm:$0xff]
    %v6171 = vld [vmem:[%s6169 + $0x8] sm:$0xff]
    %v6172 = vld [vmem:[%s6169 + $0x10] sm:$0xff]
    %v6173 = vld [vmem:[%s6169 + $0x18] sm:$0xff]
    %v6174 = vrot.slane %v5430, 5
    %v6175 = vrot.slane %v5431, 5
    %v6176 = vsel %vm2999, %v6174, %v6175
    %v6177 = vrot.slane %v5432, 5
    %v6178 = vsel %vm2999, %v6175, %v6177
    %v6179 = vrot.slane %v5433, 5
    %v6180 = vsel %vm2999, %v6177, %v6179
    %v6181 = vrot.slane %v5434, 5
    %v6182 = vsel %vm2999, %v6179, %v6181
    %v6183 = vrot.slane %v5435, 5
    %v6184 = vsel %vm2999, %v6181, %v6183
    %v6185 = vrot.slane %v5436, 5
    %v6186 = vsel %vm2999, %v6183, %v6185
    %v6187 = vrot.slane %v5437, 5
    %v6188 = vsel %vm2999, %v6185, %v6187
    %v6189 = vrot.slane %v5438, 5
    %v6190 = vsel %vm2999, %v6187, %v6189
    %v6191 = vsel %vm2296, %v6176, 0
    %v6193 = vsel %vm2296, %v6178, 0
    %v6195 = vsel %vm2296, %v6180, 0
    %v6197 = vsel %vm2296, %v6182, 0
    %v6199 = vsel %vm2296, %v6184, 0
    %v6201 = vsel %vm2296, %v6186, 0
    %v6203 = vsel %vm2296, %v6188, 0
    %v6205 = vsel %vm2296, %v6190, 0
    %6207 = vmatprep.subr.mxu0 0.0
    %6208 = vmatpush1.msra.mxu0 0.0
    %6209 = vmatprep.subr.mxu0 0.0
    %6210 = vmatpush1.msra.mxu0 0.0
    %6211 = vmatprep.subr.mxu0 0.0
    %6212 = vmatpush1.msra.mxu0 0.0
    %6213 = vmatprep.subr.mxu0 0.0
    %6214 = vmatpush1.msra.mxu0 0.0
    %6215 = vmatprep.subr.mxu0 0.0
    %6216 = vmatpush1.msra.mxu0 0.0
    %6217 = vmatprep.subr.mxu0 0.0
    %6218 = vmatpush1.msra.mxu0 0.0
    %6219 = vmatprep.subr.mxu0 0.0
    %6220 = vmatpush1.msra.mxu0 0.0
    %6221 = vmatprep.subr.mxu0 0.0
    %6222 = vmatpush1.msra.mxu0 0.0
    %6223 = vmatprep.subr.mxu0 0.0
    %6224 = vmatpush1.msra.mxu0 0.0
    %6225 = vmatprep.subr.mxu0 0.0
    %6226 = vmatpush1.msra.mxu0 0.0
    %6227 = vmatprep.subr.mxu0 0.0
    %6228 = vmatpush1.msra.mxu0 0.0
    %6229 = vmatprep.subr.mxu0 0.0
    %6230 = vmatpush1.msra.mxu0 0.0
    %6231 = vmatprep.subr.mxu0 0.0
    %6232 = vmatpush1.msra.mxu0 %v6173
    %6233 = vmatprep.subr.mxu0 0.0
    %6234 = vmatpush1.msra.mxu0 %v6172
    %6235 = vmatprep.subr.mxu0 0.0
    %6236 = vmatpush1.msra.mxu0 %v6171
    %6237 = vmatprep.subr.mxu0 0.0
    %6238 = vmatpush1.msra.mxu0 %v6170
    %6239 = vmatprep.subr.mxu0 0.0
    %6240 = vmatpush2.msra.mxu0 0.0
    %6241 = vmatprep.subr.mxu0 0.0
    %6242 = vmatpush2.msra.mxu0 0.0
    %6243 = vmatprep.subr.mxu0 0.0
    %6244 = vmatpush2.msra.mxu0 0.0
    %6245 = vmatprep.subr.mxu0 0.0
    %6246 = vmatpush2.msra.mxu0 0.0
    %6247 = vmatprep.subr.mxu0 0.0
    %6248 = vmatpush2.msra.mxu0 0.0
    %6249 = vmatprep.subr.mxu0 0.0
    %6250 = vmatpush2.msra.mxu0 0.0
    %6251 = vmatprep.subr.mxu0 0.0
    %6252 = vmatpush2.msra.mxu0 0.0
    %6253 = vmatprep.subr.mxu0 0.0
    %6254 = vmatpush2.msra.mxu0 0.0
    %6255 = vmatprep.subr.mxu0 0.0
    %6256 = vmatpush2.msra.mxu0 0.0
    %6257 = vmatprep.subr.mxu0 0.0
    %6258 = vmatpush2.msra.mxu0 0.0
    %6259 = vmatprep.subr.mxu0 0.0
    %6260 = vmatpush2.msra.mxu0 0.0
    %6261 = vmatprep.subr.mxu0 0.0
    %6262 = vmatpush2.msra.mxu0 0.0
    %6263 = vmatprep.subr.mxu0 0.0
    %6264 = vmatpush2.msra.mxu0 0.0
    %6265 = vmatprep.subr.mxu0 0.0
    %6266 = vmatpush2.msra.mxu0 0.0
    %6267 = vmatprep.subr.mxu0 0.0
    %6268 = vmatpush2.msra.mxu0 0.0
    %6269 = vmatprep.subr.mxu0 0.0
    %6270 = vmatpush2.msra.mxu0 0.0
    %6271 = vmatprep.mubr.f32.mxu0 0.0
    %6272 = vmatmul.mubr.f32.gmra.mxu0 %v6191
    %v6273 = vpop.f32.mrf.mxu0
    %v6274 = vadd.f32 0.0, %v6273
    %v6275 = vpop.f32.mrf.mxu0
    %6276 = vmatprep.mubr.f32.mxu0 0.0
    %6277 = vmatmul.mubr.f32.gmra.mxu0 %v6193
    %v6278 = vpop.f32.mrf.mxu0
    %v6279 = vadd.f32 0.0, %v6278
    %v6280 = vpop.f32.mrf.mxu0
    %6281 = vmatprep.mubr.f32.mxu0 0.0
    %6282 = vmatmul.mubr.f32.gmra.mxu0 %v6195
    %v6283 = vpop.f32.mrf.mxu0
    %v6284 = vadd.f32 0.0, %v6283
    %v6285 = vpop.f32.mrf.mxu0
    %6286 = vmatprep.mubr.f32.mxu0 0.0
    %6287 = vmatmul.mubr.f32.gmra.mxu0 %v6197
    %v6288 = vpop.f32.mrf.mxu0
    %v6289 = vadd.f32 0.0, %v6288
    %v6290 = vpop.f32.mrf.mxu0
    %6291 = vmatprep.mubr.f32.mxu0 0.0
    %6292 = vmatmul.mubr.f32.gmra.mxu0 %v6199
    %v6293 = vpop.f32.mrf.mxu0
    %v6294 = vadd.f32 0.0, %v6293
    %v6295 = vpop.f32.mrf.mxu0
    %6296 = vmatprep.mubr.f32.mxu0 0.0
    %6297 = vmatmul.mubr.f32.gmra.mxu0 %v6201
    %v6298 = vpop.f32.mrf.mxu0
    %v6299 = vadd.f32 0.0, %v6298
    %v6300 = vpop.f32.mrf.mxu0
    %6301 = vmatprep.mubr.f32.mxu0 0.0
    %6302 = vmatmul.mubr.f32.gmra.mxu0 %v6203
    %v6303 = vpop.f32.mrf.mxu0
    %v6304 = vadd.f32 0.0, %v6303
    %v6305 = vpop.f32.mrf.mxu0
    %6306 = vmatprep.mubr.f32.mxu0 0.0
    %6307 = vmatmul.mubr.f32.gmra.mxu0 %v6205
    %v6308 = vpop.f32.mrf.mxu0
    %v6309 = vadd.f32 0.0, %v6308
    %v6310 = vpop.f32.mrf.mxu0
    %6311 = vdwg.mxu0
    %v6312 = vadd.f32 %v6161, %v6274
    %v6313 = vadd.f32 %v6162, %v6279
    %v6314 = vadd.f32 %v6163, %v6284
    %v6315 = vadd.f32 %v6164, %v6289
    %v6316 = vadd.f32 %v6165, %v6294
    %v6317 = vadd.f32 %v6166, %v6299
    %v6318 = vadd.f32 %v6167, %v6304
    %v6319 = vadd.f32 %v6168, %v6309
    %s6320 = scalar_lea.vmem %s8, 192
    %v6321 = vld [vmem:[%s6320] sm:$0xff]
    %v6322 = vld [vmem:[%s6320 + $0x8] sm:$0xff]
    %v6323 = vld [vmem:[%s6320 + $0x10] sm:$0xff]
    %v6324 = vld [vmem:[%s6320 + $0x18] sm:$0xff]
    %v6325 = vrot.slane %v5430, 6
    %v6326 = vrot.slane %v5431, 6
    %v6327 = vsel %vm3151, %v6325, %v6326
    %v6328 = vrot.slane %v5432, 6
    %v6329 = vsel %vm3151, %v6326, %v6328
    %v6330 = vrot.slane %v5433, 6
    %v6331 = vsel %vm3151, %v6328, %v6330
    %v6332 = vrot.slane %v5434, 6
    %v6333 = vsel %vm3151, %v6330, %v6332
    %v6334 = vrot.slane %v5435, 6
    %v6335 = vsel %vm3151, %v6332, %v6334
    %v6336 = vrot.slane %v5436, 6
    %v6337 = vsel %vm3151, %v6334, %v6336
    %v6338 = vrot.slane %v5437, 6
    %v6339 = vsel %vm3151, %v6336, %v6338
    %v6340 = vrot.slane %v5438, 6
    %v6341 = vsel %vm3151, %v6338, %v6340
    %v6342 = vsel %vm2296, %v6327, 0
    %v6344 = vsel %vm2296, %v6329, 0
    %v6346 = vsel %vm2296, %v6331, 0
    %v6348 = vsel %vm2296, %v6333, 0
    %v6350 = vsel %vm2296, %v6335, 0
    %v6352 = vsel %vm2296, %v6337, 0
    %v6354 = vsel %vm2296, %v6339, 0
    %v6356 = vsel %vm2296, %v6341, 0
    %6358 = vmatprep.subr.mxu0 0.0
    %6359 = vmatpush1.msra.mxu0 0.0
    %6360 = vmatprep.subr.mxu0 0.0
    %6361 = vmatpush1.msra.mxu0 0.0
    %6362 = vmatprep.subr.mxu0 0.0
    %6363 = vmatpush1.msra.mxu0 0.0
    %6364 = vmatprep.subr.mxu0 0.0
    %6365 = vmatpush1.msra.mxu0 0.0
    %6366 = vmatprep.subr.mxu0 0.0
    %6367 = vmatpush1.msra.mxu0 0.0
    %6368 = vmatprep.subr.mxu0 0.0
    %6369 = vmatpush1.msra.mxu0 0.0
    %6370 = vmatprep.subr.mxu0 0.0
    %6371 = vmatpush1.msra.mxu0 0.0
    %6372 = vmatprep.subr.mxu0 0.0
    %6373 = vmatpush1.msra.mxu0 0.0
    %6374 = vmatprep.subr.mxu0 0.0
    %6375 = vmatpush1.msra.mxu0 0.0
    %6376 = vmatprep.subr.mxu0 0.0
    %6377 = vmatpush1.msra.mxu0 0.0
    %6378 = vmatprep.subr.mxu0 0.0
    %6379 = vmatpush1.msra.mxu0 0.0
    %6380 = vmatprep.subr.mxu0 0.0
    %6381 = vmatpush1.msra.mxu0 0.0
    %6382 = vmatprep.subr.mxu0 0.0
    %6383 = vmatpush1.msra.mxu0 %v6324
    %6384 = vmatprep.subr.mxu0 0.0
    %6385 = vmatpush1.msra.mxu0 %v6323
    %6386 = vmatprep.subr.mxu0 0.0
    %6387 = vmatpush1.msra.mxu0 %v6322
    %6388 = vmatprep.subr.mxu0 0.0
    %6389 = vmatpush1.msra.mxu0 %v6321
    %6390 = vmatprep.subr.mxu0 0.0
    %6391 = vmatpush2.msra.mxu0 0.0
    %6392 = vmatprep.subr.mxu0 0.0
    %6393 = vmatpush2.msra.mxu0 0.0
    %6394 = vmatprep.subr.mxu0 0.0
    %6395 = vmatpush2.msra.mxu0 0.0
    %6396 = vmatprep.subr.mxu0 0.0
    %6397 = vmatpush2.msra.mxu0 0.0
    %6398 = vmatprep.subr.mxu0 0.0
    %6399 = vmatpush2.msra.mxu0 0.0
    %6400 = vmatprep.subr.mxu0 0.0
    %6401 = vmatpush2.msra.mxu0 0.0
    %6402 = vmatprep.subr.mxu0 0.0
    %6403 = vmatpush2.msra.mxu0 0.0
    %6404 = vmatprep.subr.mxu0 0.0
    %6405 = vmatpush2.msra.mxu0 0.0
    %6406 = vmatprep.subr.mxu0 0.0
    %6407 = vmatpush2.msra.mxu0 0.0
    %6408 = vmatprep.subr.mxu0 0.0
    %6409 = vmatpush2.msra.mxu0 0.0
    %6410 = vmatprep.subr.mxu0 0.0
    %6411 = vmatpush2.msra.mxu0 0.0
    %6412 = vmatprep.subr.mxu0 0.0
    %6413 = vmatpush2.msra.mxu0 0.0
    %6414 = vmatprep.subr.mxu0 0.0
    %6415 = vmatpush2.msra.mxu0 0.0
    %6416 = vmatprep.subr.mxu0 0.0
    %6417 = vmatpush2.msra.mxu0 0.0
    %6418 = vmatprep.subr.mxu0 0.0
    %6419 = vmatpush2.msra.mxu0 0.0
    %6420 = vmatprep.subr.mxu0 0.0
    %6421 = vmatpush2.msra.mxu0 0.0
    %6422 = vmatprep.mubr.f32.mxu0 0.0
    %6423 = vmatmul.mubr.f32.gmra.mxu0 %v6342
    %v6424 = vpop.f32.mrf.mxu0
    %v6425 = vadd.f32 0.0, %v6424
    %v6426 = vpop.f32.mrf.mxu0
    %6427 = vmatprep.mubr.f32.mxu0 0.0
    %6428 = vmatmul.mubr.f32.gmra.mxu0 %v6344
    %v6429 = vpop.f32.mrf.mxu0
    %v6430 = vadd.f32 0.0, %v6429
    %v6431 = vpop.f32.mrf.mxu0
    %6432 = vmatprep.mubr.f32.mxu0 0.0
    %6433 = vmatmul.mubr.f32.gmra.mxu0 %v6346
    %v6434 = vpop.f32.mrf.mxu0
    %v6435 = vadd.f32 0.0, %v6434
    %v6436 = vpop.f32.mrf.mxu0
    %6437 = vmatprep.mubr.f32.mxu0 0.0
    %6438 = vmatmul.mubr.f32.gmra.mxu0 %v6348
    %v6439 = vpop.f32.mrf.mxu0
    %v6440 = vadd.f32 0.0, %v6439
    %v6441 = vpop.f32.mrf.mxu0
    %6442 = vmatprep.mubr.f32.mxu0 0.0
    %6443 = vmatmul.mubr.f32.gmra.mxu0 %v6350
    %v6444 = vpop.f32.mrf.mxu0
    %v6445 = vadd.f32 0.0, %v6444
    %v6446 = vpop.f32.mrf.mxu0
    %6447 = vmatprep.mubr.f32.mxu0 0.0
    %6448 = vmatmul.mubr.f32.gmra.mxu0 %v6352
    %v6449 = vpop.f32.mrf.mxu0
    %v6450 = vadd.f32 0.0, %v6449
    %v6451 = vpop.f32.mrf.mxu0
    %6452 = vmatprep.mubr.f32.mxu0 0.0
    %6453 = vmatmul.mubr.f32.gmra.mxu0 %v6354
    %v6454 = vpop.f32.mrf.mxu0
    %v6455 = vadd.f32 0.0, %v6454
    %v6456 = vpop.f32.mrf.mxu0
    %6457 = vmatprep.mubr.f32.mxu0 0.0
    %6458 = vmatmul.mubr.f32.gmra.mxu0 %v6356
    %v6459 = vpop.f32.mrf.mxu0
    %v6460 = vadd.f32 0.0, %v6459
    %v6461 = vpop.f32.mrf.mxu0
    %6462 = vdwg.mxu0
    %v6463 = vadd.f32 %v6312, %v6425
    %v6464 = vadd.f32 %v6313, %v6430
    %v6465 = vadd.f32 %v6314, %v6435
    %v6466 = vadd.f32 %v6315, %v6440
    %v6467 = vadd.f32 %v6316, %v6445
    %v6468 = vadd.f32 %v6317, %v6450
    %v6469 = vadd.f32 %v6318, %v6455
    %v6470 = vadd.f32 %v6319, %v6460
    %s6471 = scalar_lea.vmem %s8, 224
    %v6472 = vld [vmem:[%s6471] sm:$0xff]
    %v6473 = vld [vmem:[%s6471 + $0x8] sm:$0xff]
    %v6474 = vld [vmem:[%s6471 + $0x10] sm:$0xff]
    %v6475 = vld [vmem:[%s6471 + $0x18] sm:$0xff]
    %v6476 = vrot.slane %v5430, 7
    %v6477 = vrot.slane %v5431, 7
    %v6478 = vsel %vm3303, %v6476, %v6477
    %v6479 = vrot.slane %v5432, 7
    %v6480 = vsel %vm3303, %v6477, %v6479
    %v6481 = vrot.slane %v5433, 7
    %v6482 = vsel %vm3303, %v6479, %v6481
    %v6483 = vrot.slane %v5434, 7
    %v6484 = vsel %vm3303, %v6481, %v6483
    %v6485 = vrot.slane %v5435, 7
    %v6486 = vsel %vm3303, %v6483, %v6485
    %v6487 = vrot.slane %v5436, 7
    %v6488 = vsel %vm3303, %v6485, %v6487
    %v6489 = vrot.slane %v5437, 7
    %v6490 = vsel %vm3303, %v6487, %v6489
    %v6491 = vrot.slane %v5438, 7
    %v6492 = vsel %vm3303, %v6489, %v6491
    %v6493 = vsel %vm2296, %v6478, 0
    %v6495 = vsel %vm2296, %v6480, 0
    %v6497 = vsel %vm2296, %v6482, 0
    %v6499 = vsel %vm2296, %v6484, 0
    %v6501 = vsel %vm2296, %v6486, 0
    %v6503 = vsel %vm2296, %v6488, 0
    %v6505 = vsel %vm2296, %v6490, 0
    %v6507 = vsel %vm2296, %v6492, 0
    %6509 = vmatprep.subr.mxu0 0.0
    %6510 = vmatpush1.msra.mxu0 0.0
    %6511 = vmatprep.subr.mxu0 0.0
    %6512 = vmatpush1.msra.mxu0 0.0
    %6513 = vmatprep.subr.mxu0 0.0
    %6514 = vmatpush1.msra.mxu0 0.0
    %6515 = vmatprep.subr.mxu0 0.0
    %6516 = vmatpush1.msra.mxu0 0.0
    %6517 = vmatprep.subr.mxu0 0.0
    %6518 = vmatpush1.msra.mxu0 0.0
    %6519 = vmatprep.subr.mxu0 0.0
    %6520 = vmatpush1.msra.mxu0 0.0
    %6521 = vmatprep.subr.mxu0 0.0
    %6522 = vmatpush1.msra.mxu0 0.0
    %6523 = vmatprep.subr.mxu0 0.0
    %6524 = vmatpush1.msra.mxu0 0.0
    %6525 = vmatprep.subr.mxu0 0.0
    %6526 = vmatpush1.msra.mxu0 0.0
    %6527 = vmatprep.subr.mxu0 0.0
    %6528 = vmatpush1.msra.mxu0 0.0
    %6529 = vmatprep.subr.mxu0 0.0
    %6530 = vmatpush1.msra.mxu0 0.0
    %6531 = vmatprep.subr.mxu0 0.0
    %6532 = vmatpush1.msra.mxu0 0.0
    %6533 = vmatprep.subr.mxu0 0.0
    %6534 = vmatpush1.msra.mxu0 %v6475
    %6535 = vmatprep.subr.mxu0 0.0
    %6536 = vmatpush1.msra.mxu0 %v6474
    %6537 = vmatprep.subr.mxu0 0.0
    %6538 = vmatpush1.msra.mxu0 %v6473
    %6539 = vmatprep.subr.mxu0 0.0
    %6540 = vmatpush1.msra.mxu0 %v6472
    %6541 = vmatprep.subr.mxu0 0.0
    %6542 = vmatpush2.msra.mxu0 0.0
    %6543 = vmatprep.subr.mxu0 0.0
    %6544 = vmatpush2.msra.mxu0 0.0
    %6545 = vmatprep.subr.mxu0 0.0
    %6546 = vmatpush2.msra.mxu0 0.0
    %6547 = vmatprep.subr.mxu0 0.0
    %6548 = vmatpush2.msra.mxu0 0.0
    %6549 = vmatprep.subr.mxu0 0.0
    %6550 = vmatpush2.msra.mxu0 0.0
    %6551 = vmatprep.subr.mxu0 0.0
    %6552 = vmatpush2.msra.mxu0 0.0
    %6553 = vmatprep.subr.mxu0 0.0
    %6554 = vmatpush2.msra.mxu0 0.0
    %6555 = vmatprep.subr.mxu0 0.0
    %6556 = vmatpush2.msra.mxu0 0.0
    %6557 = vmatprep.subr.mxu0 0.0
    %6558 = vmatpush2.msra.mxu0 0.0
    %6559 = vmatprep.subr.mxu0 0.0
    %6560 = vmatpush2.msra.mxu0 0.0
    %6561 = vmatprep.subr.mxu0 0.0
    %6562 = vmatpush2.msra.mxu0 0.0
    %6563 = vmatprep.subr.mxu0 0.0
    %6564 = vmatpush2.msra.mxu0 0.0
    %6565 = vmatprep.subr.mxu0 0.0
    %6566 = vmatpush2.msra.mxu0 0.0
    %6567 = vmatprep.subr.mxu0 0.0
    %6568 = vmatpush2.msra.mxu0 0.0
    %6569 = vmatprep.subr.mxu0 0.0
    %6570 = vmatpush2.msra.mxu0 0.0
    %6571 = vmatprep.subr.mxu0 0.0
    %6572 = vmatpush2.msra.mxu0 0.0
    %6573 = vmatprep.mubr.f32.mxu0 0.0
    %6574 = vmatmul.mubr.f32.gmra.mxu0 %v6493
    %v6575 = vpop.f32.mrf.mxu0
    %v6576 = vadd.f32 0.0, %v6575
    %v6577 = vpop.f32.mrf.mxu0
    %6578 = vmatprep.mubr.f32.mxu0 0.0
    %6579 = vmatmul.mubr.f32.gmra.mxu0 %v6495
    %v6580 = vpop.f32.mrf.mxu0
    %v6581 = vadd.f32 0.0, %v6580
    %v6582 = vpop.f32.mrf.mxu0
    %6583 = vmatprep.mubr.f32.mxu0 0.0
    %6584 = vmatmul.mubr.f32.gmra.mxu0 %v6497
    %v6585 = vpop.f32.mrf.mxu0
    %v6586 = vadd.f32 0.0, %v6585
    %v6587 = vpop.f32.mrf.mxu0
    %6588 = vmatprep.mubr.f32.mxu0 0.0
    %6589 = vmatmul.mubr.f32.gmra.mxu0 %v6499
    %v6590 = vpop.f32.mrf.mxu0
    %v6591 = vadd.f32 0.0, %v6590
    %v6592 = vpop.f32.mrf.mxu0
    %6593 = vmatprep.mubr.f32.mxu0 0.0
    %6594 = vmatmul.mubr.f32.gmra.mxu0 %v6501
    %v6595 = vpop.f32.mrf.mxu0
    %v6596 = vadd.f32 0.0, %v6595
    %v6597 = vpop.f32.mrf.mxu0
    %6598 = vmatprep.mubr.f32.mxu0 0.0
    %6599 = vmatmul.mubr.f32.gmra.mxu0 %v6503
    %v6600 = vpop.f32.mrf.mxu0
    %v6601 = vadd.f32 0.0, %v6600
    %v6602 = vpop.f32.mrf.mxu0
    %6603 = vmatprep.mubr.f32.mxu0 0.0
    %6604 = vmatmul.mubr.f32.gmra.mxu0 %v6505
    %v6605 = vpop.f32.mrf.mxu0
    %v6606 = vadd.f32 0.0, %v6605
    %v6607 = vpop.f32.mrf.mxu0
    %6608 = vmatprep.mubr.f32.mxu0 0.0
    %6609 = vmatmul.mubr.f32.gmra.mxu0 %v6507
    %v6610 = vpop.f32.mrf.mxu0
    %v6611 = vadd.f32 0.0, %v6610
    %v6612 = vpop.f32.mrf.mxu0
    %6613 = vdwg.mxu0
    %v6614 = vadd.f32 %v6463, %v6576
    %v6615 = vadd.f32 %v6464, %v6581
    %v6616 = vadd.f32 %v6465, %v6586
    %v6617 = vadd.f32 %v6466, %v6591
    %v6618 = vadd.f32 %v6467, %v6596
    %v6619 = vadd.f32 %v6468, %v6601
    %v6620 = vadd.f32 %v6469, %v6606
    %v6621 = vadd.f32 %v6470, %v6611
    %s6622 = scalar_lea.vmem %s8, 256
    %v6623 = vld [vmem:[%s6622] sm:$0xff]
    %v6624 = vld [vmem:[%s6622 + $0x8] sm:$0xff]
    %v6625 = vld [vmem:[%s6622 + $0x10] sm:$0xff]
    %v6626 = vld [vmem:[%s6622 + $0x18] sm:$0xff]
    %v6627 = vsel %vm2296, %v5438, 0
    %6629 = vmatprep.subr.mxu0 0.0
    %6630 = vmatpush1.msra.mxu0 0.0
    %6631 = vmatprep.subr.mxu0 0.0
    %6632 = vmatpush1.msra.mxu0 0.0
    %6633 = vmatprep.subr.mxu0 0.0
    %6634 = vmatpush1.msra.mxu0 0.0
    %6635 = vmatprep.subr.mxu0 0.0
    %6636 = vmatpush1.msra.mxu0 0.0
    %6637 = vmatprep.subr.mxu0 0.0
    %6638 = vmatpush1.msra.mxu0 0.0
    %6639 = vmatprep.subr.mxu0 0.0
    %6640 = vmatpush1.msra.mxu0 0.0
    %6641 = vmatprep.subr.mxu0 0.0
    %6642 = vmatpush1.msra.mxu0 0.0
    %6643 = vmatprep.subr.mxu0 0.0
    %6644 = vmatpush1.msra.mxu0 0.0
    %6645 = vmatprep.subr.mxu0 0.0
    %6646 = vmatpush1.msra.mxu0 0.0
    %6647 = vmatprep.subr.mxu0 0.0
    %6648 = vmatpush1.msra.mxu0 0.0
    %6649 = vmatprep.subr.mxu0 0.0
    %6650 = vmatpush1.msra.mxu0 0.0
    %6651 = vmatprep.subr.mxu0 0.0
    %6652 = vmatpush1.msra.mxu0 0.0
    %6653 = vmatprep.subr.mxu0 0.0
    %6654 = vmatpush1.msra.mxu0 %v6626
    %6655 = vmatprep.subr.mxu0 0.0
    %6656 = vmatpush1.msra.mxu0 %v6625
    %6657 = vmatprep.subr.mxu0 0.0
    %6658 = vmatpush1.msra.mxu0 %v6624
    %6659 = vmatprep.subr.mxu0 0.0
    %6660 = vmatpush1.msra.mxu0 %v6623
    %6661 = vmatprep.subr.mxu0 0.0
    %6662 = vmatpush2.msra.mxu0 0.0
    %6663 = vmatprep.subr.mxu0 0.0
    %6664 = vmatpush2.msra.mxu0 0.0
    %6665 = vmatprep.subr.mxu0 0.0
    %6666 = vmatpush2.msra.mxu0 0.0
    %6667 = vmatprep.subr.mxu0 0.0
    %6668 = vmatpush2.msra.mxu0 0.0
    %6669 = vmatprep.subr.mxu0 0.0
    %6670 = vmatpush2.msra.mxu0 0.0
    %6671 = vmatprep.subr.mxu0 0.0
    %6672 = vmatpush2.msra.mxu0 0.0
    %6673 = vmatprep.subr.mxu0 0.0
    %6674 = vmatpush2.msra.mxu0 0.0
    %6675 = vmatprep.subr.mxu0 0.0
    %6676 = vmatpush2.msra.mxu0 0.0
    %6677 = vmatprep.subr.mxu0 0.0
    %6678 = vmatpush2.msra.mxu0 0.0
    %6679 = vmatprep.subr.mxu0 0.0
    %6680 = vmatpush2.msra.mxu0 0.0
    %6681 = vmatprep.subr.mxu0 0.0
    %6682 = vmatpush2.msra.mxu0 0.0
    %6683 = vmatprep.subr.mxu0 0.0
    %6684 = vmatpush2.msra.mxu0 0.0
    %6685 = vmatprep.subr.mxu0 0.0
    %6686 = vmatpush2.msra.mxu0 0.0
    %6687 = vmatprep.subr.mxu0 0.0
    %6688 = vmatpush2.msra.mxu0 0.0
    %6689 = vmatprep.subr.mxu0 0.0
    %6690 = vmatpush2.msra.mxu0 0.0
    %6691 = vmatprep.subr.mxu0 0.0
    %6692 = vmatpush2.msra.mxu0 0.0
    %6693 = vmatprep.mubr.f32.mxu0 0.0
    %6694 = vmatmul.mubr.f32.gmra.mxu0 %v5597
    %v6695 = vpop.f32.mrf.mxu0
    %v6696 = vadd.f32 0.0, %v6695
    %v6697 = vpop.f32.mrf.mxu0
    %6698 = vmatprep.mubr.f32.mxu0 0.0
    %6699 = vmatmul.mubr.f32.gmra.mxu0 %v5599
    %v6700 = vpop.f32.mrf.mxu0
    %v6701 = vadd.f32 0.0, %v6700
    %v6702 = vpop.f32.mrf.mxu0
    %6703 = vmatprep.mubr.f32.mxu0 0.0
    %6704 = vmatmul.mubr.f32.gmra.mxu0 %v5601
    %v6705 = vpop.f32.mrf.mxu0
    %v6706 = vadd.f32 0.0, %v6705
    %v6707 = vpop.f32.mrf.mxu0
    %6708 = vmatprep.mubr.f32.mxu0 0.0
    %6709 = vmatmul.mubr.f32.gmra.mxu0 %v5603
    %v6710 = vpop.f32.mrf.mxu0
    %v6711 = vadd.f32 0.0, %v6710
    %v6712 = vpop.f32.mrf.mxu0
    %6713 = vmatprep.mubr.f32.mxu0 0.0
    %6714 = vmatmul.mubr.f32.gmra.mxu0 %v5605
    %v6715 = vpop.f32.mrf.mxu0
    %v6716 = vadd.f32 0.0, %v6715
    %v6717 = vpop.f32.mrf.mxu0
    %6718 = vmatprep.mubr.f32.mxu0 0.0
    %6719 = vmatmul.mubr.f32.gmra.mxu0 %v5607
    %v6720 = vpop.f32.mrf.mxu0
    %v6721 = vadd.f32 0.0, %v6720
    %v6722 = vpop.f32.mrf.mxu0
    %6723 = vmatprep.mubr.f32.mxu0 0.0
    %6724 = vmatmul.mubr.f32.gmra.mxu0 %v5609
    %v6725 = vpop.f32.mrf.mxu0
    %v6726 = vadd.f32 0.0, %v6725
    %v6727 = vpop.f32.mrf.mxu0
    %6728 = vmatprep.mubr.f32.mxu0 0.0
    %6729 = vmatmul.mubr.f32.gmra.mxu0 %v6627
    %v6730 = vpop.f32.mrf.mxu0
    %v6731 = vadd.f32 0.0, %v6730
    %v6732 = vpop.f32.mrf.mxu0
    %6733 = vdwg.mxu0
    %v6734 = vadd.f32 %v6614, %v6696
    %v6735 = vadd.f32 %v6615, %v6701
    %v6736 = vadd.f32 %v6616, %v6706
    %v6737 = vadd.f32 %v6617, %v6711
    %v6738 = vadd.f32 %v6618, %v6716
    %v6739 = vadd.f32 %v6619, %v6721
    %v6740 = vadd.f32 %v6620, %v6726
    %v6741 = vadd.f32 %v6621, %v6731
    %v6742 = vld [vmem:[%s9] sm:$0x1]
    %v6744 = vlaneseq
    %v6745 = vshrl.u32 %v6744, 7
    %v6746 = vsub.s32 0, %v6745
    %v6747 = vrot.slane %v6742, %v6746
    %v6749 = vadd.f32 %v6734, %v6747
    %v6750 = vadd.f32 %v6735, %v6747
    %v6751 = vadd.f32 %v6736, %v6747
    %v6752 = vadd.f32 %v6737, %v6747
    %v6753 = vadd.f32 %v6738, %v6747
    %v6754 = vadd.f32 %v6739, %v6747
    %v6755 = vadd.f32 %v6740, %v6747
    %v6756 = vadd.f32 %v6741, %v6747
    %v6757 = vld [vmem:[%s3] sm:$0x3]
    %v6759 = vsel %vm3594, %v6757, 0
    %6761 = vmatprep.subr.mxu0 0.0
    %6762 = vmatpush1.msra.mxu0 0.0
    %6763 = vmatprep.subr.mxu0 0.0
    %6764 = vmatpush1.msra.mxu0 0.0
    %6765 = vmatprep.subr.mxu0 0.0
    %6766 = vmatpush1.msra.mxu0 0.0
    %6767 = vmatprep.subr.mxu0 0.0
    %6768 = vmatpush1.msra.mxu0 0.0
    %6769 = vmatprep.subr.mxu0 0.0
    %6770 = vmatpush1.msra.mxu0 0.0
    %6771 = vmatprep.subr.mxu0 0.0
    %6772 = vmatpush1.msra.mxu0 0.0
    %6773 = vmatprep.subr.mxu0 0.0
    %6774 = vmatpush1.msra.mxu0 0.0
    %6775 = vmatprep.subr.mxu0 0.0
    %6776 = vmatpush1.msra.mxu0 0.0
    %6777 = vmatprep.subr.mxu0 0.0
    %v6778 = vand.u32 %v6756, 4294901760
    %6779 = vmatpush1.msra.mxu0 %v6778
    %6780 = vmatprep.subr.mxu0 0.0
    %v6781 = vand.u32 %v6755, 4294901760
    %6782 = vmatpush1.msra.mxu0 %v6781
    %6783 = vmatprep.subr.mxu0 0.0
    %v6784 = vand.u32 %v6754, 4294901760
    %6785 = vmatpush1.msra.mxu0 %v6784
    %6786 = vmatprep.subr.mxu0 0.0
    %v6787 = vand.u32 %v6753, 4294901760
    %6788 = vmatpush1.msra.mxu0 %v6787
    %6789 = vmatprep.subr.mxu0 0.0
    %v6790 = vand.u32 %v6752, 4294901760
    %6791 = vmatpush1.msra.mxu0 %v6790
    %6792 = vmatprep.subr.mxu0 0.0
    %v6793 = vand.u32 %v6751, 4294901760
    %6794 = vmatpush1.msra.mxu0 %v6793
    %6795 = vmatprep.subr.mxu0 0.0
    %v6796 = vand.u32 %v6750, 4294901760
    %6797 = vmatpush1.msra.mxu0 %v6796
    %6798 = vmatprep.subr.mxu0 0.0
    %v6799 = vand.u32 %v6749, 4294901760
    %6800 = vmatpush1.msra.mxu0 %v6799
    %6801 = vmatprep.subr.mxu0 0.0
    %6802 = vmatpush2.msra.mxu0 0.0
    %6803 = vmatprep.subr.mxu0 0.0
    %6804 = vmatpush2.msra.mxu0 0.0
    %6805 = vmatprep.subr.mxu0 0.0
    %6806 = vmatpush2.msra.mxu0 0.0
    %6807 = vmatprep.subr.mxu0 0.0
    %6808 = vmatpush2.msra.mxu0 0.0
    %6809 = vmatprep.subr.mxu0 0.0
    %6810 = vmatpush2.msra.mxu0 0.0
    %6811 = vmatprep.subr.mxu0 0.0
    %6812 = vmatpush2.msra.mxu0 0.0
    %6813 = vmatprep.subr.mxu0 0.0
    %6814 = vmatpush2.msra.mxu0 0.0
    %6815 = vmatprep.subr.mxu0 0.0
    %6816 = vmatpush2.msra.mxu0 0.0
    %6817 = vmatprep.subr.mxu0 0.0
    %6818 = vmatpush2.msra.mxu0 0.0
    %6819 = vmatprep.subr.mxu0 0.0
    %6820 = vmatpush2.msra.mxu0 0.0
    %6821 = vmatprep.subr.mxu0 0.0
    %6822 = vmatpush2.msra.mxu0 0.0
    %6823 = vmatprep.subr.mxu0 0.0
    %6824 = vmatpush2.msra.mxu0 0.0
    %6825 = vmatprep.subr.mxu0 0.0
    %6826 = vmatpush2.msra.mxu0 0.0
    %6827 = vmatprep.subr.mxu0 0.0
    %6828 = vmatpush2.msra.mxu0 0.0
    %6829 = vmatprep.subr.mxu0 0.0
    %6830 = vmatpush2.msra.mxu0 0.0
    %6831 = vmatprep.subr.mxu0 0.0
    %6832 = vmatpush2.msra.mxu0 0.0
    %6833 = vmatprep.mubr.f32.mxu0 0.0
    %v6834 = vand.u32 %v6759, 4294901760
    %v6835 = vsub.f32 %v6759, %v6834
    %v6836 = vand.u32 %v6835, 4294901760
    %v6837 = vsub.f32 %v6835, %v6836
    %v6838 = vand.u32 %v6837, 4294901760
    %6839 = vmatmul.mubr.f32.gmra.mxu0 %v6838
    %v6840 = vpop.f32.mrf.mxu0
    %v6841 = vadd.f32 0.0, %v6840
    %v6842 = vpop.f32.mrf.mxu0
    %6843 = vdwg.mxu0
    %6844 = vmatprep.subr.mxu0 0.0
    %6845 = vmatpush1.msra.mxu0 0.0
    %6846 = vmatprep.subr.mxu0 0.0
    %6847 = vmatpush1.msra.mxu0 0.0
    %6848 = vmatprep.subr.mxu0 0.0
    %6849 = vmatpush1.msra.mxu0 0.0
    %6850 = vmatprep.subr.mxu0 0.0
    %6851 = vmatpush1.msra.mxu0 0.0
    %6852 = vmatprep.subr.mxu0 0.0
    %6853 = vmatpush1.msra.mxu0 0.0
    %6854 = vmatprep.subr.mxu0 0.0
    %6855 = vmatpush1.msra.mxu0 0.0
    %6856 = vmatprep.subr.mxu0 0.0
    %6857 = vmatpush1.msra.mxu0 0.0
    %6858 = vmatprep.subr.mxu0 0.0
    %6859 = vmatpush1.msra.mxu0 0.0
    %6860 = vmatprep.subr.mxu0 0.0
    %v6861 = vand.u32 %v6756, 4294901760
    %v6862 = vsub.f32 %v6756, %v6861
    %v6863 = vand.u32 %v6862, 4294901760
    %v6864 = vsub.f32 %v6862, %v6863
    %v6865 = vand.u32 %v6864, 4294901760
    %6866 = vmatpush1.msra.mxu0 %v6865
    %6867 = vmatprep.subr.mxu0 0.0
    %v6868 = vand.u32 %v6755, 4294901760
    %v6869 = vsub.f32 %v6755, %v6868
    %v6870 = vand.u32 %v6869, 4294901760
    %v6871 = vsub.f32 %v6869, %v6870
    %v6872 = vand.u32 %v6871, 4294901760
    %6873 = vmatpush1.msra.mxu0 %v6872
    %6874 = vmatprep.subr.mxu0 0.0
    %v6875 = vand.u32 %v6754, 4294901760
    %v6876 = vsub.f32 %v6754, %v6875
    %v6877 = vand.u32 %v6876, 4294901760
    %v6878 = vsub.f32 %v6876, %v6877
    %v6879 = vand.u32 %v6878, 4294901760
    %6880 = vmatpush1.msra.mxu0 %v6879
    %6881 = vmatprep.subr.mxu0 0.0
    %v6882 = vand.u32 %v6753, 4294901760
    %v6883 = vsub.f32 %v6753, %v6882
    %v6884 = vand.u32 %v6883, 4294901760
    %v6885 = vsub.f32 %v6883, %v6884
    %v6886 = vand.u32 %v6885, 4294901760
    %6887 = vmatpush1.msra.mxu0 %v6886
    %6888 = vmatprep.subr.mxu0 0.0
    %v6889 = vand.u32 %v6752, 4294901760
    %v6890 = vsub.f32 %v6752, %v6889
    %v6891 = vand.u32 %v6890, 4294901760
    %v6892 = vsub.f32 %v6890, %v6891
    %v6893 = vand.u32 %v6892, 4294901760
    %6894 = vmatpush1.msra.mxu0 %v6893
    %6895 = vmatprep.subr.mxu0 0.0
    %v6896 = vand.u32 %v6751, 4294901760
    %v6897 = vsub.f32 %v6751, %v6896
    %v6898 = vand.u32 %v6897, 4294901760
    %v6899 = vsub.f32 %v6897, %v6898
    %v6900 = vand.u32 %v6899, 4294901760
    %6901 = vmatpush1.msra.mxu0 %v6900
    %6902 = vmatprep.subr.mxu0 0.0
    %v6903 = vand.u32 %v6750, 4294901760
    %v6904 = vsub.f32 %v6750, %v6903
    %v6905 = vand.u32 %v6904, 4294901760
    %v6906 = vsub.f32 %v6904, %v6905
    %v6907 = vand.u32 %v6906, 4294901760
    %6908 = vmatpush1.msra.mxu0 %v6907
    %6909 = vmatprep.subr.mxu0 0.0
    %v6910 = vand.u32 %v6749, 4294901760
    %v6911 = vsub.f32 %v6749, %v6910
    %v6912 = vand.u32 %v6911, 4294901760
    %v6913 = vsub.f32 %v6911, %v6912
    %v6914 = vand.u32 %v6913, 4294901760
    %6915 = vmatpush1.msra.mxu0 %v6914
    %6916 = vmatprep.subr.mxu0 0.0
    %6917 = vmatpush2.msra.mxu0 0.0
    %6918 = vmatprep.subr.mxu0 0.0
    %6919 = vmatpush2.msra.mxu0 0.0
    %6920 = vmatprep.subr.mxu0 0.0
    %6921 = vmatpush2.msra.mxu0 0.0
    %6922 = vmatprep.subr.mxu0 0.0
    %6923 = vmatpush2.msra.mxu0 0.0
    %6924 = vmatprep.subr.mxu0 0.0
    %6925 = vmatpush2.msra.mxu0 0.0
    %6926 = vmatprep.subr.mxu0 0.0
    %6927 = vmatpush2.msra.mxu0 0.0
    %6928 = vmatprep.subr.mxu0 0.0
    %6929 = vmatpush2.msra.mxu0 0.0
    %6930 = vmatprep.subr.mxu0 0.0
    %6931 = vmatpush2.msra.mxu0 0.0
    %6932 = vmatprep.subr.mxu0 0.0
    %6933 = vmatpush2.msra.mxu0 0.0
    %6934 = vmatprep.subr.mxu0 0.0
    %6935 = vmatpush2.msra.mxu0 0.0
    %6936 = vmatprep.subr.mxu0 0.0
    %6937 = vmatpush2.msra.mxu0 0.0
    %6938 = vmatprep.subr.mxu0 0.0
    %6939 = vmatpush2.msra.mxu0 0.0
    %6940 = vmatprep.subr.mxu0 0.0
    %6941 = vmatpush2.msra.mxu0 0.0
    %6942 = vmatprep.subr.mxu0 0.0
    %6943 = vmatpush2.msra.mxu0 0.0
    %6944 = vmatprep.subr.mxu0 0.0
    %6945 = vmatpush2.msra.mxu0 0.0
    %6946 = vmatprep.subr.mxu0 0.0
    %6947 = vmatpush2.msra.mxu0 0.0
    %6948 = vmatprep.mubr.f32.mxu0 0.0
    %v6949 = vand.u32 %v6759, 4294901760
    %6950 = vmatmul.mubr.f32.gmra.mxu0 %v6949
    %v6951 = vpop.f32.mrf.mxu0
    %v6952 = vadd.f32 %v6841, %v6951
    %v6953 = vpop.f32.mrf.mxu0
    %6954 = vdwg.mxu0
    %6955 = vmatprep.subr.mxu0 0.0
    %6956 = vmatpush1.msra.mxu0 0.0
    %6957 = vmatprep.subr.mxu0 0.0
    %6958 = vmatpush1.msra.mxu0 0.0
    %6959 = vmatprep.subr.mxu0 0.0
    %6960 = vmatpush1.msra.mxu0 0.0
    %6961 = vmatprep.subr.mxu0 0.0
    %6962 = vmatpush1.msra.mxu0 0.0
    %6963 = vmatprep.subr.mxu0 0.0
    %6964 = vmatpush1.msra.mxu0 0.0
    %6965 = vmatprep.subr.mxu0 0.0
    %6966 = vmatpush1.msra.mxu0 0.0
    %6967 = vmatprep.subr.mxu0 0.0
    %6968 = vmatpush1.msra.mxu0 0.0
    %6969 = vmatprep.subr.mxu0 0.0
    %6970 = vmatpush1.msra.mxu0 0.0
    %6971 = vmatprep.subr.mxu0 0.0
    %v6972 = vand.u32 %v6756, 4294901760
    %v6973 = vsub.f32 %v6756, %v6972
    %6974 = vmatpush1.msra.mxu0 %v6973
    %6975 = vmatprep.subr.mxu0 0.0
    %v6976 = vand.u32 %v6755, 4294901760
    %v6977 = vsub.f32 %v6755, %v6976
    %6978 = vmatpush1.msra.mxu0 %v6977
    %6979 = vmatprep.subr.mxu0 0.0
    %v6980 = vand.u32 %v6754, 4294901760
    %v6981 = vsub.f32 %v6754, %v6980
    %6982 = vmatpush1.msra.mxu0 %v6981
    %6983 = vmatprep.subr.mxu0 0.0
    %v6984 = vand.u32 %v6753, 4294901760
    %v6985 = vsub.f32 %v6753, %v6984
    %6986 = vmatpush1.msra.mxu0 %v6985
    %6987 = vmatprep.subr.mxu0 0.0
    %v6988 = vand.u32 %v6752, 4294901760
    %v6989 = vsub.f32 %v6752, %v6988
    %6990 = vmatpush1.msra.mxu0 %v6989
    %6991 = vmatprep.subr.mxu0 0.0
    %v6992 = vand.u32 %v6751, 4294901760
    %v6993 = vsub.f32 %v6751, %v6992
    %6994 = vmatpush1.msra.mxu0 %v6993
    %6995 = vmatprep.subr.mxu0 0.0
    %v6996 = vand.u32 %v6750, 4294901760
    %v6997 = vsub.f32 %v6750, %v6996
    %6998 = vmatpush1.msra.mxu0 %v6997
    %6999 = vmatprep.subr.mxu0 0.0
    %v7000 = vand.u32 %v6749, 4294901760
    %v7001 = vsub.f32 %v6749, %v7000
    %7002 = vmatpush1.msra.mxu0 %v7001
    %7003 = vmatprep.subr.mxu0 0.0
    %7004 = vmatpush2.msra.mxu0 0.0
    %7005 = vmatprep.subr.mxu0 0.0
    %7006 = vmatpush2.msra.mxu0 0.0
    %7007 = vmatprep.subr.mxu0 0.0
    %7008 = vmatpush2.msra.mxu0 0.0
    %7009 = vmatprep.subr.mxu0 0.0
    %7010 = vmatpush2.msra.mxu0 0.0
    %7011 = vmatprep.subr.mxu0 0.0
    %7012 = vmatpush2.msra.mxu0 0.0
    %7013 = vmatprep.subr.mxu0 0.0
    %7014 = vmatpush2.msra.mxu0 0.0
    %7015 = vmatprep.subr.mxu0 0.0
    %7016 = vmatpush2.msra.mxu0 0.0
    %7017 = vmatprep.subr.mxu0 0.0
    %7018 = vmatpush2.msra.mxu0 0.0
    %7019 = vmatprep.subr.mxu0 0.0
    %7020 = vmatpush2.msra.mxu0 0.0
    %7021 = vmatprep.subr.mxu0 0.0
    %7022 = vmatpush2.msra.mxu0 0.0
    %7023 = vmatprep.subr.mxu0 0.0
    %7024 = vmatpush2.msra.mxu0 0.0
    %7025 = vmatprep.subr.mxu0 0.0
    %7026 = vmatpush2.msra.mxu0 0.0
    %7027 = vmatprep.subr.mxu0 0.0
    %7028 = vmatpush2.msra.mxu0 0.0
    %7029 = vmatprep.subr.mxu0 0.0
    %7030 = vmatpush2.msra.mxu0 0.0
    %7031 = vmatprep.subr.mxu0 0.0
    %7032 = vmatpush2.msra.mxu0 0.0
    %7033 = vmatprep.subr.mxu0 0.0
    %7034 = vmatpush2.msra.mxu0 0.0
    %7035 = vmatprep.mubr.f32.mxu0 0.0
    %v7036 = vand.u32 %v6759, 4294901760
    %v7037 = vsub.f32 %v6759, %v7036
    %7038 = vmatmul.mubr.f32.gmra.mxu0 %v7037
    %v7039 = vpop.f32.mrf.mxu0
    %v7040 = vadd.f32 %v6952, %v7039
    %v7041 = vpop.f32.mrf.mxu0
    %7042 = vdwg.mxu0
    %7043 = vmatprep.subr.mxu0 0.0
    %7044 = vmatpush1.msra.mxu0 0.0
    %7045 = vmatprep.subr.mxu0 0.0
    %7046 = vmatpush1.msra.mxu0 0.0
    %7047 = vmatprep.subr.mxu0 0.0
    %7048 = vmatpush1.msra.mxu0 0.0
    %7049 = vmatprep.subr.mxu0 0.0
    %7050 = vmatpush1.msra.mxu0 0.0
    %7051 = vmatprep.subr.mxu0 0.0
    %7052 = vmatpush1.msra.mxu0 0.0
    %7053 = vmatprep.subr.mxu0 0.0
    %7054 = vmatpush1.msra.mxu0 0.0
    %7055 = vmatprep.subr.mxu0 0.0
    %7056 = vmatpush1.msra.mxu0 0.0
    %7057 = vmatprep.subr.mxu0 0.0
    %7058 = vmatpush1.msra.mxu0 0.0
    %7059 = vmatprep.subr.mxu0 0.0
    %v7060 = vand.u32 %v6756, 4294901760
    %7061 = vmatpush1.msra.mxu0 %v7060
    %7062 = vmatprep.subr.mxu0 0.0
    %v7063 = vand.u32 %v6755, 4294901760
    %7064 = vmatpush1.msra.mxu0 %v7063
    %7065 = vmatprep.subr.mxu0 0.0
    %v7066 = vand.u32 %v6754, 4294901760
    %7067 = vmatpush1.msra.mxu0 %v7066
    %7068 = vmatprep.subr.mxu0 0.0
    %v7069 = vand.u32 %v6753, 4294901760
    %7070 = vmatpush1.msra.mxu0 %v7069
    %7071 = vmatprep.subr.mxu0 0.0
    %v7072 = vand.u32 %v6752, 4294901760
    %7073 = vmatpush1.msra.mxu0 %v7072
    %7074 = vmatprep.subr.mxu0 0.0
    %v7075 = vand.u32 %v6751, 4294901760
    %7076 = vmatpush1.msra.mxu0 %v7075
    %7077 = vmatprep.subr.mxu0 0.0
    %v7078 = vand.u32 %v6750, 4294901760
    %7079 = vmatpush1.msra.mxu0 %v7078
    %7080 = vmatprep.subr.mxu0 0.0
    %v7081 = vand.u32 %v6749, 4294901760
    %7082 = vmatpush1.msra.mxu0 %v7081
    %7083 = vmatprep.subr.mxu0 0.0
    %7084 = vmatpush2.msra.mxu0 0.0
    %7085 = vmatprep.subr.mxu0 0.0
    %7086 = vmatpush2.msra.mxu0 0.0
    %7087 = vmatprep.subr.mxu0 0.0
    %7088 = vmatpush2.msra.mxu0 0.0
    %7089 = vmatprep.subr.mxu0 0.0
    %7090 = vmatpush2.msra.mxu0 0.0
    %7091 = vmatprep.subr.mxu0 0.0
    %7092 = vmatpush2.msra.mxu0 0.0
    %7093 = vmatprep.subr.mxu0 0.0
    %7094 = vmatpush2.msra.mxu0 0.0
    %7095 = vmatprep.subr.mxu0 0.0
    %7096 = vmatpush2.msra.mxu0 0.0
    %7097 = vmatprep.subr.mxu0 0.0
    %7098 = vmatpush2.msra.mxu0 0.0
    %7099 = vmatprep.subr.mxu0 0.0
    %7100 = vmatpush2.msra.mxu0 0.0
    %7101 = vmatprep.subr.mxu0 0.0
    %7102 = vmatpush2.msra.mxu0 0.0
    %7103 = vmatprep.subr.mxu0 0.0
    %7104 = vmatpush2.msra.mxu0 0.0
    %7105 = vmatprep.subr.mxu0 0.0
    %7106 = vmatpush2.msra.mxu0 0.0
    %7107 = vmatprep.subr.mxu0 0.0
    %7108 = vmatpush2.msra.mxu0 0.0
    %7109 = vmatprep.subr.mxu0 0.0
    %7110 = vmatpush2.msra.mxu0 0.0
    %7111 = vmatprep.subr.mxu0 0.0
    %7112 = vmatpush2.msra.mxu0 0.0
    %7113 = vmatprep.subr.mxu0 0.0
    %7114 = vmatpush2.msra.mxu0 0.0
    %7115 = vmatprep.mubr.f32.mxu0 0.0
    %v7116 = vand.u32 %v6759, 4294901760
    %v7117 = vsub.f32 %v6759, %v7116
    %v7118 = vand.u32 %v7117, 4294901760
    %7119 = vmatmul.mubr.f32.gmra.mxu0 %v7118
    %v7120 = vpop.f32.mrf.mxu0
    %v7121 = vadd.f32 %v7040, %v7120
    %v7122 = vpop.f32.mrf.mxu0
    %7123 = vdwg.mxu0
    %7124 = vmatprep.subr.mxu0 0.0
    %7125 = vmatpush1.msra.mxu0 0.0
    %7126 = vmatprep.subr.mxu0 0.0
    %7127 = vmatpush1.msra.mxu0 0.0
    %7128 = vmatprep.subr.mxu0 0.0
    %7129 = vmatpush1.msra.mxu0 0.0
    %7130 = vmatprep.subr.mxu0 0.0
    %7131 = vmatpush1.msra.mxu0 0.0
    %7132 = vmatprep.subr.mxu0 0.0
    %7133 = vmatpush1.msra.mxu0 0.0
    %7134 = vmatprep.subr.mxu0 0.0
    %7135 = vmatpush1.msra.mxu0 0.0
    %7136 = vmatprep.subr.mxu0 0.0
    %7137 = vmatpush1.msra.mxu0 0.0
    %7138 = vmatprep.subr.mxu0 0.0
    %7139 = vmatpush1.msra.mxu0 0.0
    %7140 = vmatprep.subr.mxu0 0.0
    %v7141 = vand.u32 %v6756, 4294901760
    %v7142 = vsub.f32 %v6756, %v7141
    %v7143 = vand.u32 %v7142, 4294901760
    %7144 = vmatpush1.msra.mxu0 %v7143
    %7145 = vmatprep.subr.mxu0 0.0
    %v7146 = vand.u32 %v6755, 4294901760
    %v7147 = vsub.f32 %v6755, %v7146
    %v7148 = vand.u32 %v7147, 4294901760
    %7149 = vmatpush1.msra.mxu0 %v7148
    %7150 = vmatprep.subr.mxu0 0.0
    %v7151 = vand.u32 %v6754, 4294901760
    %v7152 = vsub.f32 %v6754, %v7151
    %v7153 = vand.u32 %v7152, 4294901760
    %7154 = vmatpush1.msra.mxu0 %v7153
    %7155 = vmatprep.subr.mxu0 0.0
    %v7156 = vand.u32 %v6753, 4294901760
    %v7157 = vsub.f32 %v6753, %v7156
    %v7158 = vand.u32 %v7157, 4294901760
    %7159 = vmatpush1.msra.mxu0 %v7158
    %7160 = vmatprep.subr.mxu0 0.0
    %v7161 = vand.u32 %v6752, 4294901760
    %v7162 = vsub.f32 %v6752, %v7161
    %v7163 = vand.u32 %v7162, 4294901760
    %7164 = vmatpush1.msra.mxu0 %v7163
    %7165 = vmatprep.subr.mxu0 0.0
    %v7166 = vand.u32 %v6751, 4294901760
    %v7167 = vsub.f32 %v6751, %v7166
    %v7168 = vand.u32 %v7167, 4294901760
    %7169 = vmatpush1.msra.mxu0 %v7168
    %7170 = vmatprep.subr.mxu0 0.0
    %v7171 = vand.u32 %v6750, 4294901760
    %v7172 = vsub.f32 %v6750, %v7171
    %v7173 = vand.u32 %v7172, 4294901760
    %7174 = vmatpush1.msra.mxu0 %v7173
    %7175 = vmatprep.subr.mxu0 0.0
    %v7176 = vand.u32 %v6749, 4294901760
    %v7177 = vsub.f32 %v6749, %v7176
    %v7178 = vand.u32 %v7177, 4294901760
    %7179 = vmatpush1.msra.mxu0 %v7178
    %7180 = vmatprep.subr.mxu0 0.0
    %7181 = vmatpush2.msra.mxu0 0.0
    %7182 = vmatprep.subr.mxu0 0.0
    %7183 = vmatpush2.msra.mxu0 0.0
    %7184 = vmatprep.subr.mxu0 0.0
    %7185 = vmatpush2.msra.mxu0 0.0
    %7186 = vmatprep.subr.mxu0 0.0
    %7187 = vmatpush2.msra.mxu0 0.0
    %7188 = vmatprep.subr.mxu0 0.0
    %7189 = vmatpush2.msra.mxu0 0.0
    %7190 = vmatprep.subr.mxu0 0.0
    %7191 = vmatpush2.msra.mxu0 0.0
    %7192 = vmatprep.subr.mxu0 0.0
    %7193 = vmatpush2.msra.mxu0 0.0
    %7194 = vmatprep.subr.mxu0 0.0
    %7195 = vmatpush2.msra.mxu0 0.0
    %7196 = vmatprep.subr.mxu0 0.0
    %7197 = vmatpush2.msra.mxu0 0.0
    %7198 = vmatprep.subr.mxu0 0.0
    %7199 = vmatpush2.msra.mxu0 0.0
    %7200 = vmatprep.subr.mxu0 0.0
    %7201 = vmatpush2.msra.mxu0 0.0
    %7202 = vmatprep.subr.mxu0 0.0
    %7203 = vmatpush2.msra.mxu0 0.0
    %7204 = vmatprep.subr.mxu0 0.0
    %7205 = vmatpush2.msra.mxu0 0.0
    %7206 = vmatprep.subr.mxu0 0.0
    %7207 = vmatpush2.msra.mxu0 0.0
    %7208 = vmatprep.subr.mxu0 0.0
    %7209 = vmatpush2.msra.mxu0 0.0
    %7210 = vmatprep.subr.mxu0 0.0
    %7211 = vmatpush2.msra.mxu0 0.0
    %7212 = vmatprep.mubr.f32.mxu0 0.0
    %v7213 = vand.u32 %v6759, 4294901760
    %7214 = vmatmul.mubr.f32.gmra.mxu0 %v7213
    %v7215 = vpop.f32.mrf.mxu0
    %v7216 = vadd.f32 %v7121, %v7215
    %v7217 = vpop.f32.mrf.mxu0
    %7218 = vdwg.mxu0
    %7219 = vmatprep.subr.mxu0 0.0
    %7220 = vmatpush1.msra.mxu0 0.0
    %7221 = vmatprep.subr.mxu0 0.0
    %7222 = vmatpush1.msra.mxu0 0.0
    %7223 = vmatprep.subr.mxu0 0.0
    %7224 = vmatpush1.msra.mxu0 0.0
    %7225 = vmatprep.subr.mxu0 0.0
    %7226 = vmatpush1.msra.mxu0 0.0
    %7227 = vmatprep.subr.mxu0 0.0
    %7228 = vmatpush1.msra.mxu0 0.0
    %7229 = vmatprep.subr.mxu0 0.0
    %7230 = vmatpush1.msra.mxu0 0.0
    %7231 = vmatprep.subr.mxu0 0.0
    %7232 = vmatpush1.msra.mxu0 0.0
    %7233 = vmatprep.subr.mxu0 0.0
    %7234 = vmatpush1.msra.mxu0 0.0
    %7235 = vmatprep.subr.mxu0 0.0
    %v7236 = vand.u32 %v6756, 4294901760
    %7237 = vmatpush1.msra.mxu0 %v7236
    %7238 = vmatprep.subr.mxu0 0.0
    %v7239 = vand.u32 %v6755, 4294901760
    %7240 = vmatpush1.msra.mxu0 %v7239
    %7241 = vmatprep.subr.mxu0 0.0
    %v7242 = vand.u32 %v6754, 4294901760
    %7243 = vmatpush1.msra.mxu0 %v7242
    %7244 = vmatprep.subr.mxu0 0.0
    %v7245 = vand.u32 %v6753, 4294901760
    %7246 = vmatpush1.msra.mxu0 %v7245
    %7247 = vmatprep.subr.mxu0 0.0
    %v7248 = vand.u32 %v6752, 4294901760
    %7249 = vmatpush1.msra.mxu0 %v7248
    %7250 = vmatprep.subr.mxu0 0.0
    %v7251 = vand.u32 %v6751, 4294901760
    %7252 = vmatpush1.msra.mxu0 %v7251
    %7253 = vmatprep.subr.mxu0 0.0
    %v7254 = vand.u32 %v6750, 4294901760
    %7255 = vmatpush1.msra.mxu0 %v7254
    %7256 = vmatprep.subr.mxu0 0.0
    %v7257 = vand.u32 %v6749, 4294901760
    %7258 = vmatpush1.msra.mxu0 %v7257
    %7259 = vmatprep.subr.mxu0 0.0
    %7260 = vmatpush2.msra.mxu0 0.0
    %7261 = vmatprep.subr.mxu0 0.0
    %7262 = vmatpush2.msra.mxu0 0.0
    %7263 = vmatprep.subr.mxu0 0.0
    %7264 = vmatpush2.msra.mxu0 0.0
    %7265 = vmatprep.subr.mxu0 0.0
    %7266 = vmatpush2.msra.mxu0 0.0
    %7267 = vmatprep.subr.mxu0 0.0
    %7268 = vmatpush2.msra.mxu0 0.0
    %7269 = vmatprep.subr.mxu0 0.0
    %7270 = vmatpush2.msra.mxu0 0.0
    %7271 = vmatprep.subr.mxu0 0.0
    %7272 = vmatpush2.msra.mxu0 0.0
    %7273 = vmatprep.subr.mxu0 0.0
    %7274 = vmatpush2.msra.mxu0 0.0
    %7275 = vmatprep.subr.mxu0 0.0
    %7276 = vmatpush2.msra.mxu0 0.0
    %7277 = vmatprep.subr.mxu0 0.0
    %7278 = vmatpush2.msra.mxu0 0.0
    %7279 = vmatprep.subr.mxu0 0.0
    %7280 = vmatpush2.msra.mxu0 0.0
    %7281 = vmatprep.subr.mxu0 0.0
    %7282 = vmatpush2.msra.mxu0 0.0
    %7283 = vmatprep.subr.mxu0 0.0
    %7284 = vmatpush2.msra.mxu0 0.0
    %7285 = vmatprep.subr.mxu0 0.0
    %7286 = vmatpush2.msra.mxu0 0.0
    %7287 = vmatprep.subr.mxu0 0.0
    %7288 = vmatpush2.msra.mxu0 0.0
    %7289 = vmatprep.subr.mxu0 0.0
    %7290 = vmatpush2.msra.mxu0 0.0
    %7291 = vmatprep.mubr.f32.mxu0 0.0
    %v7292 = vand.u32 %v6759, 4294901760
    %7293 = vmatmul.mubr.f32.gmra.mxu0 %v7292
    %v7294 = vpop.f32.mrf.mxu0
    %v7295 = vadd.f32 %v7216, %v7294
    %v7296 = vpop.f32.mrf.mxu0
    %7297 = vdwg.mxu0
    %s7298 = scalar_lea.vmem %s3, 2
    %v7299 = vld [vmem:[%s7298] sm:$0x3]
    %v7301 = vsel %vm3594, %v7299, 0
    %7303 = vmatprep.subr.mxu0 0.0
    %7304 = vmatpush1.msra.mxu0 0.0
    %7305 = vmatprep.subr.mxu0 0.0
    %7306 = vmatpush1.msra.mxu0 0.0
    %7307 = vmatprep.subr.mxu0 0.0
    %7308 = vmatpush1.msra.mxu0 0.0
    %7309 = vmatprep.subr.mxu0 0.0
    %7310 = vmatpush1.msra.mxu0 0.0
    %7311 = vmatprep.subr.mxu0 0.0
    %7312 = vmatpush1.msra.mxu0 0.0
    %7313 = vmatprep.subr.mxu0 0.0
    %7314 = vmatpush1.msra.mxu0 0.0
    %7315 = vmatprep.subr.mxu0 0.0
    %7316 = vmatpush1.msra.mxu0 0.0
    %7317 = vmatprep.subr.mxu0 0.0
    %7318 = vmatpush1.msra.mxu0 0.0
    %7319 = vmatprep.subr.mxu0 0.0
    %v7320 = vand.u32 %v6756, 4294901760
    %7321 = vmatpush1.msra.mxu0 %v7320
    %7322 = vmatprep.subr.mxu0 0.0
    %v7323 = vand.u32 %v6755, 4294901760
    %7324 = vmatpush1.msra.mxu0 %v7323
    %7325 = vmatprep.subr.mxu0 0.0
    %v7326 = vand.u32 %v6754, 4294901760
    %7327 = vmatpush1.msra.mxu0 %v7326
    %7328 = vmatprep.subr.mxu0 0.0
    %v7329 = vand.u32 %v6753, 4294901760
    %7330 = vmatpush1.msra.mxu0 %v7329
    %7331 = vmatprep.subr.mxu0 0.0
    %v7332 = vand.u32 %v6752, 4294901760
    %7333 = vmatpush1.msra.mxu0 %v7332
    %7334 = vmatprep.subr.mxu0 0.0
    %v7335 = vand.u32 %v6751, 4294901760
    %7336 = vmatpush1.msra.mxu0 %v7335
    %7337 = vmatprep.subr.mxu0 0.0
    %v7338 = vand.u32 %v6750, 4294901760
    %7339 = vmatpush1.msra.mxu0 %v7338
    %7340 = vmatprep.subr.mxu0 0.0
    %v7341 = vand.u32 %v6749, 4294901760
    %7342 = vmatpush1.msra.mxu0 %v7341
    %7343 = vmatprep.subr.mxu0 0.0
    %7344 = vmatpush2.msra.mxu0 0.0
    %7345 = vmatprep.subr.mxu0 0.0
    %7346 = vmatpush2.msra.mxu0 0.0
    %7347 = vmatprep.subr.mxu0 0.0
    %7348 = vmatpush2.msra.mxu0 0.0
    %7349 = vmatprep.subr.mxu0 0.0
    %7350 = vmatpush2.msra.mxu0 0.0
    %7351 = vmatprep.subr.mxu0 0.0
    %7352 = vmatpush2.msra.mxu0 0.0
    %7353 = vmatprep.subr.mxu0 0.0
    %7354 = vmatpush2.msra.mxu0 0.0
    %7355 = vmatprep.subr.mxu0 0.0
    %7356 = vmatpush2.msra.mxu0 0.0
    %7357 = vmatprep.subr.mxu0 0.0
    %7358 = vmatpush2.msra.mxu0 0.0
    %7359 = vmatprep.subr.mxu0 0.0
    %7360 = vmatpush2.msra.mxu0 0.0
    %7361 = vmatprep.subr.mxu0 0.0
    %7362 = vmatpush2.msra.mxu0 0.0
    %7363 = vmatprep.subr.mxu0 0.0
    %7364 = vmatpush2.msra.mxu0 0.0
    %7365 = vmatprep.subr.mxu0 0.0
    %7366 = vmatpush2.msra.mxu0 0.0
    %7367 = vmatprep.subr.mxu0 0.0
    %7368 = vmatpush2.msra.mxu0 0.0
    %7369 = vmatprep.subr.mxu0 0.0
    %7370 = vmatpush2.msra.mxu0 0.0
    %7371 = vmatprep.subr.mxu0 0.0
    %7372 = vmatpush2.msra.mxu0 0.0
    %7373 = vmatprep.subr.mxu0 0.0
    %7374 = vmatpush2.msra.mxu0 0.0
    %7375 = vmatprep.mubr.f32.mxu0 0.0
    %v7376 = vand.u32 %v7301, 4294901760
    %v7377 = vsub.f32 %v7301, %v7376
    %v7378 = vand.u32 %v7377, 4294901760
    %v7379 = vsub.f32 %v7377, %v7378
    %v7380 = vand.u32 %v7379, 4294901760
    %7381 = vmatmul.mubr.f32.gmra.mxu0 %v7380
    %v7382 = vpop.f32.mrf.mxu0
    %v7383 = vadd.f32 0.0, %v7382
    %v7384 = vpop.f32.mrf.mxu0
    %7385 = vdwg.mxu0
    %7386 = vmatprep.subr.mxu0 0.0
    %7387 = vmatpush1.msra.mxu0 0.0
    %7388 = vmatprep.subr.mxu0 0.0
    %7389 = vmatpush1.msra.mxu0 0.0
    %7390 = vmatprep.subr.mxu0 0.0
    %7391 = vmatpush1.msra.mxu0 0.0
    %7392 = vmatprep.subr.mxu0 0.0
    %7393 = vmatpush1.msra.mxu0 0.0
    %7394 = vmatprep.subr.mxu0 0.0
    %7395 = vmatpush1.msra.mxu0 0.0
    %7396 = vmatprep.subr.mxu0 0.0
    %7397 = vmatpush1.msra.mxu0 0.0
    %7398 = vmatprep.subr.mxu0 0.0
    %7399 = vmatpush1.msra.mxu0 0.0
    %7400 = vmatprep.subr.mxu0 0.0
    %7401 = vmatpush1.msra.mxu0 0.0
    %7402 = vmatprep.subr.mxu0 0.0
    %v7403 = vand.u32 %v6756, 4294901760
    %v7404 = vsub.f32 %v6756, %v7403
    %v7405 = vand.u32 %v7404, 4294901760
    %v7406 = vsub.f32 %v7404, %v7405
    %v7407 = vand.u32 %v7406, 4294901760
    %7408 = vmatpush1.msra.mxu0 %v7407
    %7409 = vmatprep.subr.mxu0 0.0
    %v7410 = vand.u32 %v6755, 4294901760
    %v7411 = vsub.f32 %v6755, %v7410
    %v7412 = vand.u32 %v7411, 4294901760
    %v7413 = vsub.f32 %v7411, %v7412
    %v7414 = vand.u32 %v7413, 4294901760
    %7415 = vmatpush1.msra.mxu0 %v7414
    %7416 = vmatprep.subr.mxu0 0.0
    %v7417 = vand.u32 %v6754, 4294901760
    %v7418 = vsub.f32 %v6754, %v7417
    %v7419 = vand.u32 %v7418, 4294901760
    %v7420 = vsub.f32 %v7418, %v7419
    %v7421 = vand.u32 %v7420, 4294901760
    %7422 = vmatpush1.msra.mxu0 %v7421
    %7423 = vmatprep.subr.mxu0 0.0
    %v7424 = vand.u32 %v6753, 4294901760
    %v7425 = vsub.f32 %v6753, %v7424
    %v7426 = vand.u32 %v7425, 4294901760
    %v7427 = vsub.f32 %v7425, %v7426
    %v7428 = vand.u32 %v7427, 4294901760
    %7429 = vmatpush1.msra.mxu0 %v7428
    %7430 = vmatprep.subr.mxu0 0.0
    %v7431 = vand.u32 %v6752, 4294901760
    %v7432 = vsub.f32 %v6752, %v7431
    %v7433 = vand.u32 %v7432, 4294901760
    %v7434 = vsub.f32 %v7432, %v7433
    %v7435 = vand.u32 %v7434, 4294901760
    %7436 = vmatpush1.msra.mxu0 %v7435
    %7437 = vmatprep.subr.mxu0 0.0
    %v7438 = vand.u32 %v6751, 4294901760
    %v7439 = vsub.f32 %v6751, %v7438
    %v7440 = vand.u32 %v7439, 4294901760
    %v7441 = vsub.f32 %v7439, %v7440
    %v7442 = vand.u32 %v7441, 4294901760
    %7443 = vmatpush1.msra.mxu0 %v7442
    %7444 = vmatprep.subr.mxu0 0.0
    %v7445 = vand.u32 %v6750, 4294901760
    %v7446 = vsub.f32 %v6750, %v7445
    %v7447 = vand.u32 %v7446, 4294901760
    %v7448 = vsub.f32 %v7446, %v7447
    %v7449 = vand.u32 %v7448, 4294901760
    %7450 = vmatpush1.msra.mxu0 %v7449
    %7451 = vmatprep.subr.mxu0 0.0
    %v7452 = vand.u32 %v6749, 4294901760
    %v7453 = vsub.f32 %v6749, %v7452
    %v7454 = vand.u32 %v7453, 4294901760
    %v7455 = vsub.f32 %v7453, %v7454
    %v7456 = vand.u32 %v7455, 4294901760
    %7457 = vmatpush1.msra.mxu0 %v7456
    %7458 = vmatprep.subr.mxu0 0.0
    %7459 = vmatpush2.msra.mxu0 0.0
    %7460 = vmatprep.subr.mxu0 0.0
    %7461 = vmatpush2.msra.mxu0 0.0
    %7462 = vmatprep.subr.mxu0 0.0
    %7463 = vmatpush2.msra.mxu0 0.0
    %7464 = vmatprep.subr.mxu0 0.0
    %7465 = vmatpush2.msra.mxu0 0.0
    %7466 = vmatprep.subr.mxu0 0.0
    %7467 = vmatpush2.msra.mxu0 0.0
    %7468 = vmatprep.subr.mxu0 0.0
    %7469 = vmatpush2.msra.mxu0 0.0
    %7470 = vmatprep.subr.mxu0 0.0
    %7471 = vmatpush2.msra.mxu0 0.0
    %7472 = vmatprep.subr.mxu0 0.0
    %7473 = vmatpush2.msra.mxu0 0.0
    %7474 = vmatprep.subr.mxu0 0.0
    %7475 = vmatpush2.msra.mxu0 0.0
    %7476 = vmatprep.subr.mxu0 0.0
    %7477 = vmatpush2.msra.mxu0 0.0
    %7478 = vmatprep.subr.mxu0 0.0
    %7479 = vmatpush2.msra.mxu0 0.0
    %7480 = vmatprep.subr.mxu0 0.0
    %7481 = vmatpush2.msra.mxu0 0.0
    %7482 = vmatprep.subr.mxu0 0.0
    %7483 = vmatpush2.msra.mxu0 0.0
    %7484 = vmatprep.subr.mxu0 0.0
    %7485 = vmatpush2.msra.mxu0 0.0
    %7486 = vmatprep.subr.mxu0 0.0
    %7487 = vmatpush2.msra.mxu0 0.0
    %7488 = vmatprep.subr.mxu0 0.0
    %7489 = vmatpush2.msra.mxu0 0.0
    %7490 = vmatprep.mubr.f32.mxu0 0.0
    %v7491 = vand.u32 %v7301, 4294901760
    %7492 = vmatmul.mubr.f32.gmra.mxu0 %v7491
    %v7493 = vpop.f32.mrf.mxu0
    %v7494 = vadd.f32 %v7383, %v7493
    %v7495 = vpop.f32.mrf.mxu0
    %7496 = vdwg.mxu0
    %7497 = vmatprep.subr.mxu0 0.0
    %7498 = vmatpush1.msra.mxu0 0.0
    %7499 = vmatprep.subr.mxu0 0.0
    %7500 = vmatpush1.msra.mxu0 0.0
    %7501 = vmatprep.subr.mxu0 0.0
    %7502 = vmatpush1.msra.mxu0 0.0
    %7503 = vmatprep.subr.mxu0 0.0
    %7504 = vmatpush1.msra.mxu0 0.0
    %7505 = vmatprep.subr.mxu0 0.0
    %7506 = vmatpush1.msra.mxu0 0.0
    %7507 = vmatprep.subr.mxu0 0.0
    %7508 = vmatpush1.msra.mxu0 0.0
    %7509 = vmatprep.subr.mxu0 0.0
    %7510 = vmatpush1.msra.mxu0 0.0
    %7511 = vmatprep.subr.mxu0 0.0
    %7512 = vmatpush1.msra.mxu0 0.0
    %7513 = vmatprep.subr.mxu0 0.0
    %v7514 = vand.u32 %v6756, 4294901760
    %v7515 = vsub.f32 %v6756, %v7514
    %7516 = vmatpush1.msra.mxu0 %v7515
    %7517 = vmatprep.subr.mxu0 0.0
    %v7518 = vand.u32 %v6755, 4294901760
    %v7519 = vsub.f32 %v6755, %v7518
    %7520 = vmatpush1.msra.mxu0 %v7519
    %7521 = vmatprep.subr.mxu0 0.0
    %v7522 = vand.u32 %v6754, 4294901760
    %v7523 = vsub.f32 %v6754, %v7522
    %7524 = vmatpush1.msra.mxu0 %v7523
    %7525 = vmatprep.subr.mxu0 0.0
    %v7526 = vand.u32 %v6753, 4294901760
    %v7527 = vsub.f32 %v6753, %v7526
    %7528 = vmatpush1.msra.mxu0 %v7527
    %7529 = vmatprep.subr.mxu0 0.0
    %v7530 = vand.u32 %v6752, 4294901760
    %v7531 = vsub.f32 %v6752, %v7530
    %7532 = vmatpush1.msra.mxu0 %v7531
    %7533 = vmatprep.subr.mxu0 0.0
    %v7534 = vand.u32 %v6751, 4294901760
    %v7535 = vsub.f32 %v6751, %v7534
    %7536 = vmatpush1.msra.mxu0 %v7535
    %7537 = vmatprep.subr.mxu0 0.0
    %v7538 = vand.u32 %v6750, 4294901760
    %v7539 = vsub.f32 %v6750, %v7538
    %7540 = vmatpush1.msra.mxu0 %v7539
    %7541 = vmatprep.subr.mxu0 0.0
    %v7542 = vand.u32 %v6749, 4294901760
    %v7543 = vsub.f32 %v6749, %v7542
    %7544 = vmatpush1.msra.mxu0 %v7543
    %7545 = vmatprep.subr.mxu0 0.0
    %7546 = vmatpush2.msra.mxu0 0.0
    %7547 = vmatprep.subr.mxu0 0.0
    %7548 = vmatpush2.msra.mxu0 0.0
    %7549 = vmatprep.subr.mxu0 0.0
    %7550 = vmatpush2.msra.mxu0 0.0
    %7551 = vmatprep.subr.mxu0 0.0
    %7552 = vmatpush2.msra.mxu0 0.0
    %7553 = vmatprep.subr.mxu0 0.0
    %7554 = vmatpush2.msra.mxu0 0.0
    %7555 = vmatprep.subr.mxu0 0.0
    %7556 = vmatpush2.msra.mxu0 0.0
    %7557 = vmatprep.subr.mxu0 0.0
    %7558 = vmatpush2.msra.mxu0 0.0
    %7559 = vmatprep.subr.mxu0 0.0
    %7560 = vmatpush2.msra.mxu0 0.0
    %7561 = vmatprep.subr.mxu0 0.0
    %7562 = vmatpush2.msra.mxu0 0.0
    %7563 = vmatprep.subr.mxu0 0.0
    %7564 = vmatpush2.msra.mxu0 0.0
    %7565 = vmatprep.subr.mxu0 0.0
    %7566 = vmatpush2.msra.mxu0 0.0
    %7567 = vmatprep.subr.mxu0 0.0
    %7568 = vmatpush2.msra.mxu0 0.0
    %7569 = vmatprep.subr.mxu0 0.0
    %7570 = vmatpush2.msra.mxu0 0.0
    %7571 = vmatprep.subr.mxu0 0.0
    %7572 = vmatpush2.msra.mxu0 0.0
    %7573 = vmatprep.subr.mxu0 0.0
    %7574 = vmatpush2.msra.mxu0 0.0
    %7575 = vmatprep.subr.mxu0 0.0
    %7576 = vmatpush2.msra.mxu0 0.0
    %7577 = vmatprep.mubr.f32.mxu0 0.0
    %v7578 = vand.u32 %v7301, 4294901760
    %v7579 = vsub.f32 %v7301, %v7578
    %7580 = vmatmul.mubr.f32.gmra.mxu0 %v7579
    %v7581 = vpop.f32.mrf.mxu0
    %v7582 = vadd.f32 %v7494, %v7581
    %v7583 = vpop.f32.mrf.mxu0
    %7584 = vdwg.mxu0
    %7585 = vmatprep.subr.mxu0 0.0
    %7586 = vmatpush1.msra.mxu0 0.0
    %7587 = vmatprep.subr.mxu0 0.0
    %7588 = vmatpush1.msra.mxu0 0.0
    %7589 = vmatprep.subr.mxu0 0.0
    %7590 = vmatpush1.msra.mxu0 0.0
    %7591 = vmatprep.subr.mxu0 0.0
    %7592 = vmatpush1.msra.mxu0 0.0
    %7593 = vmatprep.subr.mxu0 0.0
    %7594 = vmatpush1.msra.mxu0 0.0
    %7595 = vmatprep.subr.mxu0 0.0
    %7596 = vmatpush1.msra.mxu0 0.0
    %7597 = vmatprep.subr.mxu0 0.0
    %7598 = vmatpush1.msra.mxu0 0.0
    %7599 = vmatprep.subr.mxu0 0.0
    %7600 = vmatpush1.msra.mxu0 0.0
    %7601 = vmatprep.subr.mxu0 0.0
    %v7602 = vand.u32 %v6756, 4294901760
    %7603 = vmatpush1.msra.mxu0 %v7602
    %7604 = vmatprep.subr.mxu0 0.0
    %v7605 = vand.u32 %v6755, 4294901760
    %7606 = vmatpush1.msra.mxu0 %v7605
    %7607 = vmatprep.subr.mxu0 0.0
    %v7608 = vand.u32 %v6754, 4294901760
    %7609 = vmatpush1.msra.mxu0 %v7608
    %7610 = vmatprep.subr.mxu0 0.0
    %v7611 = vand.u32 %v6753, 4294901760
    %7612 = vmatpush1.msra.mxu0 %v7611
    %7613 = vmatprep.subr.mxu0 0.0
    %v7614 = vand.u32 %v6752, 4294901760
    %7615 = vmatpush1.msra.mxu0 %v7614
    %7616 = vmatprep.subr.mxu0 0.0
    %v7617 = vand.u32 %v6751, 4294901760
    %7618 = vmatpush1.msra.mxu0 %v7617
    %7619 = vmatprep.subr.mxu0 0.0
    %v7620 = vand.u32 %v6750, 4294901760
    %7621 = vmatpush1.msra.mxu0 %v7620
    %7622 = vmatprep.subr.mxu0 0.0
    %v7623 = vand.u32 %v6749, 4294901760
    %7624 = vmatpush1.msra.mxu0 %v7623
    %7625 = vmatprep.subr.mxu0 0.0
    %7626 = vmatpush2.msra.mxu0 0.0
    %7627 = vmatprep.subr.mxu0 0.0
    %7628 = vmatpush2.msra.mxu0 0.0
    %7629 = vmatprep.subr.mxu0 0.0
    %7630 = vmatpush2.msra.mxu0 0.0
    %7631 = vmatprep.subr.mxu0 0.0
    %7632 = vmatpush2.msra.mxu0 0.0
    %7633 = vmatprep.subr.mxu0 0.0
    %7634 = vmatpush2.msra.mxu0 0.0
    %7635 = vmatprep.subr.mxu0 0.0
    %7636 = vmatpush2.msra.mxu0 0.0
    %7637 = vmatprep.subr.mxu0 0.0
    %7638 = vmatpush2.msra.mxu0 0.0
    %7639 = vmatprep.subr.mxu0 0.0
    %7640 = vmatpush2.msra.mxu0 0.0
    %7641 = vmatprep.subr.mxu0 0.0
    %7642 = vmatpush2.msra.mxu0 0.0
    %7643 = vmatprep.subr.mxu0 0.0
    %7644 = vmatpush2.msra.mxu0 0.0
    %7645 = vmatprep.subr.mxu0 0.0
    %7646 = vmatpush2.msra.mxu0 0.0
    %7647 = vmatprep.subr.mxu0 0.0
    %7648 = vmatpush2.msra.mxu0 0.0
    %7649 = vmatprep.subr.mxu0 0.0
    %7650 = vmatpush2.msra.mxu0 0.0
    %7651 = vmatprep.subr.mxu0 0.0
    %7652 = vmatpush2.msra.mxu0 0.0
    %7653 = vmatprep.subr.mxu0 0.0
    %7654 = vmatpush2.msra.mxu0 0.0
    %7655 = vmatprep.subr.mxu0 0.0
    %7656 = vmatpush2.msra.mxu0 0.0
    %7657 = vmatprep.mubr.f32.mxu0 0.0
    %v7658 = vand.u32 %v7301, 4294901760
    %v7659 = vsub.f32 %v7301, %v7658
    %v7660 = vand.u32 %v7659, 4294901760
    %7661 = vmatmul.mubr.f32.gmra.mxu0 %v7660
    %v7662 = vpop.f32.mrf.mxu0
    %v7663 = vadd.f32 %v7582, %v7662
    %v7664 = vpop.f32.mrf.mxu0
    %7665 = vdwg.mxu0
    %7666 = vmatprep.subr.mxu0 0.0
    %7667 = vmatpush1.msra.mxu0 0.0
    %7668 = vmatprep.subr.mxu0 0.0
    %7669 = vmatpush1.msra.mxu0 0.0
    %7670 = vmatprep.subr.mxu0 0.0
    %7671 = vmatpush1.msra.mxu0 0.0
    %7672 = vmatprep.subr.mxu0 0.0
    %7673 = vmatpush1.msra.mxu0 0.0
    %7674 = vmatprep.subr.mxu0 0.0
    %7675 = vmatpush1.msra.mxu0 0.0
    %7676 = vmatprep.subr.mxu0 0.0
    %7677 = vmatpush1.msra.mxu0 0.0
    %7678 = vmatprep.subr.mxu0 0.0
    %7679 = vmatpush1.msra.mxu0 0.0
    %7680 = vmatprep.subr.mxu0 0.0
    %7681 = vmatpush1.msra.mxu0 0.0
    %7682 = vmatprep.subr.mxu0 0.0
    %v7683 = vand.u32 %v6756, 4294901760
    %v7684 = vsub.f32 %v6756, %v7683
    %v7685 = vand.u32 %v7684, 4294901760
    %7686 = vmatpush1.msra.mxu0 %v7685
    %7687 = vmatprep.subr.mxu0 0.0
    %v7688 = vand.u32 %v6755, 4294901760
    %v7689 = vsub.f32 %v6755, %v7688
    %v7690 = vand.u32 %v7689, 4294901760
    %7691 = vmatpush1.msra.mxu0 %v7690
    %7692 = vmatprep.subr.mxu0 0.0
    %v7693 = vand.u32 %v6754, 4294901760
    %v7694 = vsub.f32 %v6754, %v7693
    %v7695 = vand.u32 %v7694, 4294901760
    %7696 = vmatpush1.msra.mxu0 %v7695
    %7697 = vmatprep.subr.mxu0 0.0
    %v7698 = vand.u32 %v6753, 4294901760
    %v7699 = vsub.f32 %v6753, %v7698
    %v7700 = vand.u32 %v7699, 4294901760
    %7701 = vmatpush1.msra.mxu0 %v7700
    %7702 = vmatprep.subr.mxu0 0.0
    %v7703 = vand.u32 %v6752, 4294901760
    %v7704 = vsub.f32 %v6752, %v7703
    %v7705 = vand.u32 %v7704, 4294901760
    %7706 = vmatpush1.msra.mxu0 %v7705
    %7707 = vmatprep.subr.mxu0 0.0
    %v7708 = vand.u32 %v6751, 4294901760
    %v7709 = vsub.f32 %v6751, %v7708
    %v7710 = vand.u32 %v7709, 4294901760
    %7711 = vmatpush1.msra.mxu0 %v7710
    %7712 = vmatprep.subr.mxu0 0.0
    %v7713 = vand.u32 %v6750, 4294901760
    %v7714 = vsub.f32 %v6750, %v7713
    %v7715 = vand.u32 %v7714, 4294901760
    %7716 = vmatpush1.msra.mxu0 %v7715
    %7717 = vmatprep.subr.mxu0 0.0
    %v7718 = vand.u32 %v6749, 4294901760
    %v7719 = vsub.f32 %v6749, %v7718
    %v7720 = vand.u32 %v7719, 4294901760
    %7721 = vmatpush1.msra.mxu0 %v7720
    %7722 = vmatprep.subr.mxu0 0.0
    %7723 = vmatpush2.msra.mxu0 0.0
    %7724 = vmatprep.subr.mxu0 0.0
    %7725 = vmatpush2.msra.mxu0 0.0
    %7726 = vmatprep.subr.mxu0 0.0
    %7727 = vmatpush2.msra.mxu0 0.0
    %7728 = vmatprep.subr.mxu0 0.0
    %7729 = vmatpush2.msra.mxu0 0.0
    %7730 = vmatprep.subr.mxu0 0.0
    %7731 = vmatpush2.msra.mxu0 0.0
    %7732 = vmatprep.subr.mxu0 0.0
    %7733 = vmatpush2.msra.mxu0 0.0
    %7734 = vmatprep.subr.mxu0 0.0
    %7735 = vmatpush2.msra.mxu0 0.0
    %7736 = vmatprep.subr.mxu0 0.0
    %7737 = vmatpush2.msra.mxu0 0.0
    %7738 = vmatprep.subr.mxu0 0.0
    %7739 = vmatpush2.msra.mxu0 0.0
    %7740 = vmatprep.subr.mxu0 0.0
    %7741 = vmatpush2.msra.mxu0 0.0
    %7742 = vmatprep.subr.mxu0 0.0
    %7743 = vmatpush2.msra.mxu0 0.0
    %7744 = vmatprep.subr.mxu0 0.0
    %7745 = vmatpush2.msra.mxu0 0.0
    %7746 = vmatprep.subr.mxu0 0.0
    %7747 = vmatpush2.msra.mxu0 0.0
    %7748 = vmatprep.subr.mxu0 0.0
    %7749 = vmatpush2.msra.mxu0 0.0
    %7750 = vmatprep.subr.mxu0 0.0
    %7751 = vmatpush2.msra.mxu0 0.0
    %7752 = vmatprep.subr.mxu0 0.0
    %7753 = vmatpush2.msra.mxu0 0.0
    %7754 = vmatprep.mubr.f32.mxu0 0.0
    %v7755 = vand.u32 %v7301, 4294901760
    %7756 = vmatmul.mubr.f32.gmra.mxu0 %v7755
    %v7757 = vpop.f32.mrf.mxu0
    %v7758 = vadd.f32 %v7663, %v7757
    %v7759 = vpop.f32.mrf.mxu0
    %7760 = vdwg.mxu0
    %7761 = vmatprep.subr.mxu0 0.0
    %7762 = vmatpush1.msra.mxu0 0.0
    %7763 = vmatprep.subr.mxu0 0.0
    %7764 = vmatpush1.msra.mxu0 0.0
    %7765 = vmatprep.subr.mxu0 0.0
    %7766 = vmatpush1.msra.mxu0 0.0
    %7767 = vmatprep.subr.mxu0 0.0
    %7768 = vmatpush1.msra.mxu0 0.0
    %7769 = vmatprep.subr.mxu0 0.0
    %7770 = vmatpush1.msra.mxu0 0.0
    %7771 = vmatprep.subr.mxu0 0.0
    %7772 = vmatpush1.msra.mxu0 0.0
    %7773 = vmatprep.subr.mxu0 0.0
    %7774 = vmatpush1.msra.mxu0 0.0
    %7775 = vmatprep.subr.mxu0 0.0
    %7776 = vmatpush1.msra.mxu0 0.0
    %7777 = vmatprep.subr.mxu0 0.0
    %v7778 = vand.u32 %v6756, 4294901760
    %7779 = vmatpush1.msra.mxu0 %v7778
    %7780 = vmatprep.subr.mxu0 0.0
    %v7781 = vand.u32 %v6755, 4294901760
    %7782 = vmatpush1.msra.mxu0 %v7781
    %7783 = vmatprep.subr.mxu0 0.0
    %v7784 = vand.u32 %v6754, 4294901760
    %7785 = vmatpush1.msra.mxu0 %v7784
    %7786 = vmatprep.subr.mxu0 0.0
    %v7787 = vand.u32 %v6753, 4294901760
    %7788 = vmatpush1.msra.mxu0 %v7787
    %7789 = vmatprep.subr.mxu0 0.0
    %v7790 = vand.u32 %v6752, 4294901760
    %7791 = vmatpush1.msra.mxu0 %v7790
    %7792 = vmatprep.subr.mxu0 0.0
    %v7793 = vand.u32 %v6751, 4294901760
    %7794 = vmatpush1.msra.mxu0 %v7793
    %7795 = vmatprep.subr.mxu0 0.0
    %v7796 = vand.u32 %v6750, 4294901760
    %7797 = vmatpush1.msra.mxu0 %v7796
    %7798 = vmatprep.subr.mxu0 0.0
    %v7799 = vand.u32 %v6749, 4294901760
    %7800 = vmatpush1.msra.mxu0 %v7799
    %7801 = vmatprep.subr.mxu0 0.0
    %7802 = vmatpush2.msra.mxu0 0.0
    %7803 = vmatprep.subr.mxu0 0.0
    %7804 = vmatpush2.msra.mxu0 0.0
    %7805 = vmatprep.subr.mxu0 0.0
    %7806 = vmatpush2.msra.mxu0 0.0
    %7807 = vmatprep.subr.mxu0 0.0
    %7808 = vmatpush2.msra.mxu0 0.0
    %7809 = vmatprep.subr.mxu0 0.0
    %7810 = vmatpush2.msra.mxu0 0.0
    %7811 = vmatprep.subr.mxu0 0.0
    %7812 = vmatpush2.msra.mxu0 0.0
    %7813 = vmatprep.subr.mxu0 0.0
    %7814 = vmatpush2.msra.mxu0 0.0
    %7815 = vmatprep.subr.mxu0 0.0
    %7816 = vmatpush2.msra.mxu0 0.0
    %7817 = vmatprep.subr.mxu0 0.0
    %7818 = vmatpush2.msra.mxu0 0.0
    %7819 = vmatprep.subr.mxu0 0.0
    %7820 = vmatpush2.msra.mxu0 0.0
    %7821 = vmatprep.subr.mxu0 0.0
    %7822 = vmatpush2.msra.mxu0 0.0
    %7823 = vmatprep.subr.mxu0 0.0
    %7824 = vmatpush2.msra.mxu0 0.0
    %7825 = vmatprep.subr.mxu0 0.0
    %7826 = vmatpush2.msra.mxu0 0.0
    %7827 = vmatprep.subr.mxu0 0.0
    %7828 = vmatpush2.msra.mxu0 0.0
    %7829 = vmatprep.subr.mxu0 0.0
    %7830 = vmatpush2.msra.mxu0 0.0
    %7831 = vmatprep.subr.mxu0 0.0
    %7832 = vmatpush2.msra.mxu0 0.0
    %7833 = vmatprep.mubr.f32.mxu0 0.0
    %v7834 = vand.u32 %v7301, 4294901760
    %7835 = vmatmul.mubr.f32.gmra.mxu0 %v7834
    %v7836 = vpop.f32.mrf.mxu0
    %v7837 = vadd.f32 %v7758, %v7836
    %v7838 = vpop.f32.mrf.mxu0
    %7839 = vdwg.mxu0
    %v7840 = vmax.f32 %v7295, %v7837
    %v7841 = vmax.f32 %v7840, 0.0
    %v7842 = vld [vmem:[%s10] sm:$0xff]
    %v7843 = vld [vmem:[%s10 + $0x8] sm:$0xff]
    %v7844 = vld [vmem:[%s10 + $0x10] sm:$0xff]
    %v7845 = vld [vmem:[%s10 + $0x18] sm:$0xff]
    %v7846 = vld [vmem:[%s11] sm:$0x1]
    %v7848 = vlaneseq
    %v7849 = vshrl.u32 %v7848, 7
    %v7850 = vsub.s32 0, %v7849
    %v7851 = vrot.slane %v7846, %v7850
    %v7854 = vsel %vm2296, %v7841, 0
    %7856 = vmatprep.subr.mxu0 0.0
    %7857 = vmatpush1.msra.mxu0 0.0
    %7858 = vmatprep.subr.mxu0 0.0
    %7859 = vmatpush1.msra.mxu0 0.0
    %7860 = vmatprep.subr.mxu0 0.0
    %7861 = vmatpush1.msra.mxu0 0.0
    %7862 = vmatprep.subr.mxu0 0.0
    %7863 = vmatpush1.msra.mxu0 0.0
    %7864 = vmatprep.subr.mxu0 0.0
    %7865 = vmatpush1.msra.mxu0 0.0
    %7866 = vmatprep.subr.mxu0 0.0
    %7867 = vmatpush1.msra.mxu0 0.0
    %7868 = vmatprep.subr.mxu0 0.0
    %7869 = vmatpush1.msra.mxu0 0.0
    %7870 = vmatprep.subr.mxu0 0.0
    %7871 = vmatpush1.msra.mxu0 0.0
    %7872 = vmatprep.subr.mxu0 0.0
    %7873 = vmatpush1.msra.mxu0 0.0
    %7874 = vmatprep.subr.mxu0 0.0
    %7875 = vmatpush1.msra.mxu0 0.0
    %7876 = vmatprep.subr.mxu0 0.0
    %7877 = vmatpush1.msra.mxu0 0.0
    %7878 = vmatprep.subr.mxu0 0.0
    %7879 = vmatpush1.msra.mxu0 0.0
    %7880 = vmatprep.subr.mxu0 0.0
    %7881 = vmatpush1.msra.mxu0 %v7845
    %7882 = vmatprep.subr.mxu0 0.0
    %7883 = vmatpush1.msra.mxu0 %v7844
    %7884 = vmatprep.subr.mxu0 0.0
    %7885 = vmatpush1.msra.mxu0 %v7843
    %7886 = vmatprep.subr.mxu0 0.0
    %7887 = vmatpush1.msra.mxu0 %v7842
    %7888 = vmatprep.subr.mxu0 0.0
    %7889 = vmatpush2.msra.mxu0 0.0
    %7890 = vmatprep.subr.mxu0 0.0
    %7891 = vmatpush2.msra.mxu0 0.0
    %7892 = vmatprep.subr.mxu0 0.0
    %7893 = vmatpush2.msra.mxu0 0.0
    %7894 = vmatprep.subr.mxu0 0.0
    %7895 = vmatpush2.msra.mxu0 0.0
    %7896 = vmatprep.subr.mxu0 0.0
    %7897 = vmatpush2.msra.mxu0 0.0
    %7898 = vmatprep.subr.mxu0 0.0
    %7899 = vmatpush2.msra.mxu0 0.0
    %7900 = vmatprep.subr.mxu0 0.0
    %7901 = vmatpush2.msra.mxu0 0.0
    %7902 = vmatprep.subr.mxu0 0.0
    %7903 = vmatpush2.msra.mxu0 0.0
    %7904 = vmatprep.subr.mxu0 0.0
    %7905 = vmatpush2.msra.mxu0 0.0
    %7906 = vmatprep.subr.mxu0 0.0
    %7907 = vmatpush2.msra.mxu0 0.0
    %7908 = vmatprep.subr.mxu0 0.0
    %7909 = vmatpush2.msra.mxu0 0.0
    %7910 = vmatprep.subr.mxu0 0.0
    %7911 = vmatpush2.msra.mxu0 0.0
    %7912 = vmatprep.subr.mxu0 0.0
    %7913 = vmatpush2.msra.mxu0 0.0
    %7914 = vmatprep.subr.mxu0 0.0
    %7915 = vmatpush2.msra.mxu0 0.0
    %7916 = vmatprep.subr.mxu0 0.0
    %7917 = vmatpush2.msra.mxu0 0.0
    %7918 = vmatprep.subr.mxu0 0.0
    %7919 = vmatpush2.msra.mxu0 0.0
    %7920 = vmatprep.mubr.f32.mxu0 0.0
    %7921 = vmatmul.mubr.f32.gmra.mxu0 %v7854
    %v7922 = vpop.f32.mrf.mxu0
    %v7923 = vadd.f32 %v7851, %v7922
    %v7924 = vpop.f32.mrf.mxu0
    %7925 = vdwg.mxu0
    %v7926 = vsub.f32 0.0, %v7923
    %v7927 = vmul.f32 %v7926, 1.442695
    %v7928 = vpow.pop %v7927
    %v7929 = vadd.f32 %v7928, 1.0
    %v7930 = vrcp.pop %v7929
    %vm7931 = vcmask 58368
    %7932 = vst.msk [vmem:[#allocation2] sm:$0x3] %vm7931, %v7930
    // Predicated region
    $region50: #{binary_model_forward.1} parent=1 // pred_check
      _
    $region51: #{binary_model_forward.1} parent=1 // pred_check_branch
      %7934 = sbr.rel (0) target = $region53
    $region52: #{binary_model_forward.1} parent=1 // pred_region
      %s7936 = ssub.s32 32, 32
      %7937 = vsyncadd [#allocation3], %s7936
      %s7939 = sshll.u32 [#allocation2], 4
      %s7940 = int_to_ptr.vmem [resolvable:$true] %s7939
      %7942 = dma.vmem_to_hbm [thread:$0]  %s7940, 32, %s12, [#allocation3]
    $region53: #{binary_model_forward.1} parent=1 // pred_fallthru
      _
    // Predicated region
    $region54: #{binary_model_forward.1} parent=1 // pred_check
      _
    $region55: #{binary_model_forward.1} parent=1 // pred_check_branch
      %7944 = sbr.rel (0) target = $region57
    $region56: #{binary_model_forward.1} parent=1 // pred_region
      %7945 = dma.done [#allocation3], 32
    $region57: #{binary_model_forward.1} parent=1 // pred_fallthru
      _
    %7946 = vsyncpa [#allocation3], 1

</llo_original>
